<compile_context>
chip_gen: v6e
topology: v6e:2x2x1
jax: 0.10.0
libtpu: 0.0.40
codegen_flags: <defaults>
</compile_context>

<pallas_src>
import functools

import jax
import jax.numpy as jnp
import numpy as np
from jax import lax
from jax.experimental import pallas as pl
from jax.experimental.pallas import tpu as pltpu

EPS = 1e-5  # nn.GroupNorm default
HIGH = lax.Precision.HIGHEST


# ------------------------------ kernel ------------------------------

def deep_resnet_kernel(x_ref, pa_ref, pb_ref, o_ref, *, B, L, din, dout):
    BL = B * L
    x = x_ref[...]                                           # (B*L, din)

    # Per-batch sequence-boundary masks, computed once (hoisted out of the
    # three conv calls; JAX does not CSE broadcast_in_dim).
    pos = lax.broadcasted_iota(jnp.int32, (BL, din), 0) % L
    first = pos == 0                                         # l == 0   rows
    last = pos == L - 1                                      # l == L-1 rows

    def conv3(h, w_ref, base, bias):
        """'same' k=3 conv as three accumulated per-tap matmuls.

        w_ref[base + k*din : base + (k+1)*din, :] is the (din, cout) weight for
        tap k (k=0 multiplies x[l-1], k=1 x[l], k=2 x[l+1]).
        """
        hm = jnp.where(first, 0.0, pltpu.roll(h, shift=1, axis=0))       # x[l-1]
        hp = jnp.where(last, 0.0, pltpu.roll(h, shift=BL - 1, axis=0))   # x[l+1]
        y = jnp.dot(h, w_ref[base + din:base + 2 * din, :],
                    precision=HIGH, preferred_element_type=jnp.float32)
        y = y + jnp.dot(hm, w_ref[base:base + din, :],
                        precision=HIGH, preferred_element_type=jnp.float32)
        y = y + jnp.dot(hp, w_ref[base + 2 * din:base + 3 * din, :],
                        precision=HIGH, preferred_element_type=jnp.float32)
        return y + bias

    def gnorm(y, mg, gamma, beta):
        """GroupNorm with per-(batch, group) stats in the (B*L, C) layout.

        mg: (C, C) same-group indicator pre-scaled by 1/(L * channels_per_group)
        so the lane matmul + per-batch sublane sum yield E[x], E[x^2] directly.
        """
        C = y.shape[1]
        grp = jnp.dot(jnp.concatenate([y, y * y], axis=0), mg,
                      precision=HIGH, preferred_element_type=jnp.float32)  # (2BL, C)
        grp = jnp.sum(grp.reshape(2 * B, L, C), axis=1, keepdims=True)     # (2B,1,C)
        grp = jnp.broadcast_to(grp, (2 * B, L, C)).reshape(2 * BL, C)
        mean, ex2 = grp[:BL], grp[BL:]                                     # 8-aligned
        var = jnp.maximum(ex2 - mean * mean, 0.0)      # guard cancellation
        inv = lax.rsqrt(var + EPS)                     # EUP slot
        return (y - mean) * inv * gamma + beta

    # ---- unpack the two weight slabs (static, 8-row-aligned offsets) ----
    mg_in = pa_ref[6 * din:7 * din, :]                       # (din, din)
    p = 7 * din
    b1, g1, be1 = pa_ref[p:p + 1, :], pa_ref[p + 1:p + 2, :], pa_ref[p + 2:p + 3, :]
    b2, g2, be2 = pa_ref[p + 3:p + 4, :], pa_ref[p + 4:p + 5, :], pa_ref[p + 5:p + 6, :]

    mg_out = pb_ref[4 * din:4 * din + dout, :]               # (dout, dout)
    q = 4 * din + dout
    b3, g3, be3 = pb_ref[q:q + 1, :], pb_ref[q + 1:q + 2, :], pb_ref[q + 2:q + 3, :]

    # shortcut: 1x1 conv, no bias
    residual = jnp.dot(x, pb_ref[3 * din:4 * din, :],
                       precision=HIGH, preferred_element_type=jnp.float32)

    # block1 + ReLU
    h = jnp.maximum(gnorm(conv3(x, pa_ref, 0, b1), mg_in, g1, be1), 0.0)
    # block2 + ReLU
    h = jnp.maximum(gnorm(conv3(h, pa_ref, 3 * din, b2), mg_in, g2, be2), 0.0)
    # block3 (no activation before residual add)
    h = gnorm(conv3(h, pb_ref, 0, b3), mg_out, g3, be3)

    o_ref[...] = jnp.maximum(residual + h, 0.0)              # (B*L, dout)


# ------------------------------ wrapper ------------------------------

def pack_params(params, groups, L):
    """ONE-TIME preprocessing (run at parameter load, not per forward).

    Packs every weight / GN parameter into two lane-aligned f32 slabs so the
    kernel takes only 3 operands (x, packA, packB):

      packA (lanes = din):  [w1 taps (3*din) | w2 taps (3*din) | mg_in (din) |
                             b1 g1 be1 b2 g2 be2 (6 rows)]
      packB (lanes = dout): [w3 taps (3*din) | ws (din) | mg_out (dout) |
                             b3 g3 be3 (3 rows)]
    """
    din = params["w1"].shape[1]
    dout = params["ws"].shape[0]

    def taps(w):  # torch (cout, cin, 3) -> (3*cin, cout), tap-major rows
        return jnp.transpose(w, (2, 1, 0)).reshape(3 * w.shape[1], w.shape[0])

    def gmat(C):  # same-group indicator pre-scaled by 1/n_per_group
        cg = C // groups
        ids = jnp.arange(C) // cg
        return (ids[:, None] == ids[None, :]).astype(jnp.float32) / float(L * cg)

    def pad8(a):
        return jnp.pad(a, ((0, (-a.shape[0]) % 8), (0, 0)))

    vec_in = jnp.stack([params["b1"], params["g1"], params["be1"],
                        params["b2"], params["g2"], params["be2"]], axis=0)
    pa = pad8(jnp.concatenate(
        [taps(params["w1"]), taps(params["w2"]), gmat(din), vec_in],
        axis=0)).astype(jnp.float32)

    vec_out = jnp.stack([params["b3"], params["g3"], params["be3"]], axis=0)
    pb = pad8(jnp.concatenate(
        [taps(params["w3"]), jnp.transpose(params["ws"][:, :, 0]),
         gmat(dout), vec_out],
        axis=0)).astype(jnp.float32)
    return pa, pb


@jax.jit
def deep_resnet_block1d(x, pa, pb):
    """x: (B, dims, L) float32 (PyTorch NCL). Returns (B, out_dims, L)."""
    B, din, L = x.shape
    dout = pb.shape[1]

    # (B, din, L) -> (B*L, din): batch on the sublane axis, channels on lanes.
    x_t = jnp.transpose(x, (0, 2, 1)).reshape(B * L, din).astype(jnp.float32)

    # Single grid-less invocation: everything is tiny and fully VMEM-resident,
    # so a grid would only add per-step pipeline overhead.
    out = pl.pallas_call(
        functools.partial(deep_resnet_kernel, B=B, L=L, din=din, dout=dout),
        out_shape=jax.ShapeDtypeStruct((B * L, dout), jnp.float32),
    )(x_t, pa, pb)

    # (B*L, dout) -> (B, dout, L)
    return jnp.transpose(out.reshape(B, L, dout), (0, 2, 1))


# ----------------------- pure-JAX reference -----------------------

def reference_forward(x, params, groups):
    def conv1d(x, w, b, pad):
        y = lax.conv_general_dilated(
            x, w, window_strides=(1,), padding=[(pad, pad)],
            dimension_numbers=("NCH", "OIH", "NCH"))
        if b is not None:
            y = y + b[None, :, None]
        return y

    def gnorm(x, gamma, beta):
        B, C, L = x.shape
        xg = x.reshape(B, groups, C // groups, L)
        mean = xg.mean(axis=(2, 3), keepdims=True)
        var = xg.var(axis=(2, 3), keepdims=True)
        xg = (xg - mean) / jnp.sqrt(var + EPS)
        y = xg.reshape(B, C, L)
        return y * gamma[None, :, None] + beta[None, :, None]

    residual = conv1d(x, params["ws"], None, 0)
    h = jax.nn.relu(gnorm(conv1d(x, params["w1"], params["b1"], 1), params["g1"], params["be1"]))
    h = jax.nn.relu(gnorm(conv1d(h, params["w2"], params["b2"], 1), params["g2"], params["be2"]))
    h = gnorm(conv1d(h, params["w3"], params["b3"], 1), params["g3"], params["be3"])
    return jax.nn.relu(residual + h)


# ------------------------------ main ------------------------------

if __name__ == "__main__":
    B, dims, out_dims, L, groups = 2, 32, 64, 16, 16

    key = jax.random.PRNGKey(0)
    keys = jax.random.split(key, 16)

    params = {
        # shortcut 1x1 conv (no bias): (out_dims, dims, 1)
        "ws": 0.1 * jax.random.normal(keys[0], (out_dims, dims, 1), jnp.float32),
        # block1: conv (dims, dims, 3) + GroupNorm(groups, dims)
        "w1": 0.1 * jax.random.normal(keys[1], (dims, dims, 3), jnp.float32),
        "b1": 0.1 * jax.random.normal(keys[2], (dims,), jnp.float32),
        "g1": 1.0 + 0.1 * jax.random.normal(keys[3], (dims,), jnp.float32),
        "be1": 0.1 * jax.random.normal(keys[4], (dims,), jnp.float32),
        # block2
        "w2": 0.1 * jax.random.normal(keys[5], (dims, dims, 3), jnp.float32),
        "b2": 0.1 * jax.random.normal(keys[6], (dims,), jnp.float32),
        "g2": 1.0 + 0.1 * jax.random.normal(keys[7], (dims,), jnp.float32),
        "be2": 0.1 * jax.random.normal(keys[8], (dims,), jnp.float32),
        # block3: conv (out_dims, dims, 3) + GroupNorm(groups, out_dims)
        "w3": 0.1 * jax.random.normal(keys[9], (out_dims, dims, 3), jnp.float32),
        "b3": 0.1 * jax.random.normal(keys[10], (out_dims,), jnp.float32),
        "g3": 1.0 + 0.1 * jax.random.normal(keys[11], (out_dims,), jnp.float32),
        "be3": 0.1 * jax.random.normal(keys[12], (out_dims,), jnp.float32),
    }

    x = jax.random.normal(keys[13], (B, dims, L), jnp.float32)

    # One-time parameter packing (off the per-call hot path).
    pa, pb = pack_params(params, groups, L)
    pa, pb = jax.block_until_ready((pa, pb))

    out = jax.block_until_ready(deep_resnet_block1d(x, pa, pb))
    ref = jax.block_until_ready(reference_forward(x, params, groups))

    assert out.shape == (B, out_dims, L), out.shape
    np.testing.assert_allclose(np.asarray(out), np.asarray(ref), rtol=2e-4, atol=2e-4)

    print("KERNEL_OK")
</pallas_src>

<mosaic_0001>
module attributes {stable_mosaic.version = 11 : i64} {
  func.func @deep_resnet_kernel(%arg0: memref<32x32xf32, #tpu.memory_space<vmem>>, %arg1: memref<232x32xf32, #tpu.memory_space<vmem>>, %arg2: memref<200x64xf32, #tpu.memory_space<vmem>>, %arg3: memref<32x64xf32, #tpu.memory_space<vmem>>) attributes {dimension_semantics = [], scalar_prefetch = 0 : i64, scratch_operands = 0 : i64, tpu.core_type = #tpu.core_type<tc>} {
    %c0 = arith.constant 0 : index
    %c0_0 = arith.constant 0 : index
    %0 = vector.load %arg0[%c0, %c0_0] : memref<32x32xf32, #tpu.memory_space<vmem>>, vector<32x32xf32>
    %1 = tpu.iota {dimensions = array<i32: 0>} : vector<32x32xi32>
    %c16_i32 = arith.constant 16 : i32
    %c0_i32 = arith.constant 0 : i32
    %2 = arith.cmpi eq, %c16_i32, %c0_i32 : i32
    %c1_i32 = arith.constant 1 : i32
    %3 = arith.select %2, %c1_i32, %c16_i32 : i32
    %4 = vector.broadcast %3 : i32 to vector<32x32xi32>
    %5 = arith.remsi %1, %4 : vector<32x32xi32>
    %c0_i32_1 = arith.constant 0 : i32
    %6 = vector.broadcast %c0_i32_1 : i32 to vector<32x32xi32>
    %7 = arith.cmpi ne, %5, %6 : vector<32x32xi32>
    %c0_i32_2 = arith.constant 0 : i32
    %8 = vector.broadcast %c0_i32_2 : i32 to vector<32x32xi32>
    %9 = arith.cmpi slt, %5, %8 : vector<32x32xi32>
    %c0_i32_3 = arith.constant 0 : i32
    %10 = arith.cmpi slt, %3, %c0_i32_3 : i32
    %11 = vector.broadcast %10 : i1 to vector<32x32xi1>
    %12 = vector.broadcast %11 : vector<32x32xi1> to vector<32x32xi1>
    %13 = arith.xori %9, %12 : vector<32x32xi1>
    %14 = arith.andi %13, %7 : vector<32x32xi1>
    %15 = vector.broadcast %3 : i32 to vector<32x32xi32>
    %16 = arith.addi %5, %15 : vector<32x32xi32>
    %17 = arith.select %14, %16, %5 : vector<32x32xi1>, vector<32x32xi32>
    %c0_i32_4 = arith.constant 0 : i32
    %18 = vector.broadcast %c0_i32_4 : i32 to vector<32x32xi32>
    %19 = arith.cmpi eq, %17, %18 : vector<32x32xi32>
    %c15_i32 = arith.constant 15 : i32
    %20 = vector.broadcast %c15_i32 : i32 to vector<32x32xi32>
    %21 = arith.cmpi eq, %17, %20 : vector<32x32xi32>
    %c192 = arith.constant 192 : index
    %c0_5 = arith.constant 0 : index
    %22 = vector.load %arg1[%c192, %c0_5] : memref<232x32xf32, #tpu.memory_space<vmem>>, vector<32x32xf32>
    %c224 = arith.constant 224 : index
    %c0_6 = arith.constant 0 : index
    %23 = vector.load %arg1[%c224, %c0_6] : memref<232x32xf32, #tpu.memory_space<vmem>>, vector<1x32xf32>
    %c225 = arith.constant 225 : index
    %c0_7 = arith.constant 0 : index
    %24 = vector.load %arg1[%c225, %c0_7] : memref<232x32xf32, #tpu.memory_space<vmem>>, vector<1x32xf32>
    %c226 = arith.constant 226 : index
    %c0_8 = arith.constant 0 : index
    %25 = vector.load %arg1[%c226, %c0_8] : memref<232x32xf32, #tpu.memory_space<vmem>>, vector<1x32xf32>
    %c227 = arith.constant 227 : index
    %c0_9 = arith.constant 0 : index
    %26 = vector.load %arg1[%c227, %c0_9] : memref<232x32xf32, #tpu.memory_space<vmem>>, vector<1x32xf32>
    %c228 = arith.constant 228 : index
    %c0_10 = arith.constant 0 : index
    %27 = vector.load %arg1[%c228, %c0_10] : memref<232x32xf32, #tpu.memory_space<vmem>>, vector<1x32xf32>
    %c229 = arith.constant 229 : index
    %c0_11 = arith.constant 0 : index
    %28 = vector.load %arg1[%c229, %c0_11] : memref<232x32xf32, #tpu.memory_space<vmem>>, vector<1x32xf32>
    %c128 = arith.constant 128 : index
    %c0_12 = arith.constant 0 : index
    %29 = vector.load %arg2[%c128, %c0_12] : memref<200x64xf32, #tpu.memory_space<vmem>>, vector<64x64xf32>
    %c192_13 = arith.constant 192 : index
    %c0_14 = arith.constant 0 : index
    %30 = vector.load %arg2[%c192_13, %c0_14] : memref<200x64xf32, #tpu.memory_space<vmem>>, vector<1x64xf32>
    %c193 = arith.constant 193 : index
    %c0_15 = arith.constant 0 : index
    %31 = vector.load %arg2[%c193, %c0_15] : memref<200x64xf32, #tpu.memory_space<vmem>>, vector<1x64xf32>
    %c194 = arith.constant 194 : index
    %c0_16 = arith.constant 0 : index
    %32 = vector.load %arg2[%c194, %c0_16] : memref<200x64xf32, #tpu.memory_space<vmem>>, vector<1x64xf32>
    %c96 = arith.constant 96 : index
    %c0_17 = arith.constant 0 : index
    %33 = vector.load %arg2[%c96, %c0_17] : memref<200x64xf32, #tpu.memory_space<vmem>>, vector<32x64xf32>
    %cst = arith.constant dense<0.000000e+00> : vector<32x64xf32>
    %34 = tpu.matmul %0, %33, %cst {dimension_numbers = #tpu.dot_dimension_numbers<[1], [0], [0], [1], [0, 0, 1, 1], [], []>, precision = #tpu.contract_precision<fp32>} : vector<32x32xf32>, vector<32x64xf32>, vector<32x64xf32> -> vector<32x64xf32>
    %c1_i32_18 = arith.constant 1 : i32
    %35 = tpu.dynamic_rotate %0 by %c1_i32_18 dim 0 : vector<32x32xf32>, i32 -> vector<32x32xf32>
    %cst_19 = arith.constant 0.000000e+00 : f32
    %36 = vector.broadcast %cst_19 : f32 to vector<32x32xf32>
    %37 = arith.select %19, %36, %35 : vector<32x32xi1>, vector<32x32xf32>
    %c31_i32 = arith.constant 31 : i32
    %38 = tpu.dynamic_rotate %0 by %c31_i32 dim 0 : vector<32x32xf32>, i32 -> vector<32x32xf32>
    %cst_20 = arith.constant 0.000000e+00 : f32
    %39 = vector.broadcast %cst_20 : f32 to vector<32x32xf32>
    %40 = arith.select %21, %39, %38 : vector<32x32xi1>, vector<32x32xf32>
    %c32 = arith.constant 32 : index
    %c0_21 = arith.constant 0 : index
    %41 = vector.load %arg1[%c32, %c0_21] : memref<232x32xf32, #tpu.memory_space<vmem>>, vector<32x32xf32>
    %cst_22 = arith.constant dense<0.000000e+00> : vector<32x32xf32>
    %42 = tpu.matmul %0, %41, %cst_22 {dimension_numbers = #tpu.dot_dimension_numbers<[1], [0], [0], [1], [0, 0, 1, 1], [], []>, precision = #tpu.contract_precision<fp32>} : vector<32x32xf32>, vector<32x32xf32>, vector<32x32xf32> -> vector<32x32xf32>
    %c0_23 = arith.constant 0 : index
    %c0_24 = arith.constant 0 : index
    %43 = vector.load %arg1[%c0_23, %c0_24] : memref<232x32xf32, #tpu.memory_space<vmem>>, vector<32x32xf32>
    %cst_25 = arith.constant dense<0.000000e+00> : vector<32x32xf32>
    %44 = tpu.matmul %37, %43, %cst_25 {dimension_numbers = #tpu.dot_dimension_numbers<[1], [0], [0], [1], [0, 0, 1, 1], [], []>, precision = #tpu.contract_precision<fp32>} : vector<32x32xf32>, vector<32x32xf32>, vector<32x32xf32> -> vector<32x32xf32>
    %45 = arith.addf %42, %44 : vector<32x32xf32>
    %c64 = arith.constant 64 : index
    %c0_26 = arith.constant 0 : index
    %46 = vector.load %arg1[%c64, %c0_26] : memref<232x32xf32, #tpu.memory_space<vmem>>, vector<32x32xf32>
    %cst_27 = arith.constant dense<0.000000e+00> : vector<32x32xf32>
    %47 = tpu.matmul %40, %46, %cst_27 {dimension_numbers = #tpu.dot_dimension_numbers<[1], [0], [0], [1], [0, 0, 1, 1], [], []>, precision = #tpu.contract_precision<fp32>} : vector<32x32xf32>, vector<32x32xf32>, vector<32x32xf32> -> vector<32x32xf32>
    %48 = arith.addf %45, %47 : vector<32x32xf32>
    %49 = vector.broadcast %23 : vector<1x32xf32> to vector<32x32xf32>
    %50 = arith.addf %48, %49 : vector<32x32xf32>
    %51 = arith.mulf %50, %50 : vector<32x32xf32>
    %52 = tpu.concatenate %50, %51 in 0 : vector<32x32xf32>, vector<32x32xf32> -> vector<64x32xf32>
    %cst_28 = arith.constant dense<0.000000e+00> : vector<64x32xf32>
    %53 = tpu.matmul %52, %22, %cst_28 {dimension_numbers = #tpu.dot_dimension_numbers<[1], [0], [0], [1], [0, 0, 1, 1], [], []>, precision = #tpu.contract_precision<fp32>} : vector<64x32xf32>, vector<32x32xf32>, vector<64x32xf32> -> vector<64x32xf32>
    %54 = vector.shape_cast %53 : vector<64x32xf32> to vector<4x16x32xf32>
    %cst_29 = arith.constant dense<0.000000e+00> : vector<4x32xf32>
    %55 = vector.multi_reduction <add>, %54, %cst_29 [1] : vector<4x16x32xf32> to vector<4x32xf32>
    %56 = vector.shape_cast %55 : vector<4x32xf32> to vector<4x1x32xf32>
    %57 = vector.shape_cast %56 : vector<4x1x32xf32> to vector<4x1x32xf32>
    %58 = vector.broadcast %57 : vector<4x1x32xf32> to vector<4x16x32xf32>
    %59 = vector.shape_cast %58 : vector<4x16x32xf32> to vector<64x32xf32>
    %60 = vector.extract_strided_slice %59 {offsets = [0, 0], sizes = [32, 32], strides = [1, 1]} : vector<64x32xf32> to vector<32x32xf32>
    %61 = vector.extract_strided_slice %59 {offsets = [32, 0], sizes = [32, 32], strides = [1, 1]} : vector<64x32xf32> to vector<32x32xf32>
    %62 = arith.mulf %60, %60 : vector<32x32xf32>
    %63 = arith.subf %61, %62 : vector<32x32xf32>
    %cst_30 = arith.constant 0.000000e+00 : f32
    %64 = vector.broadcast %cst_30 : f32 to vector<32x32xf32>
    %65 = arith.maximumf %63, %64 : vector<32x32xf32>
    %cst_31 = arith.constant 9.99999974E-6 : f32
    %66 = vector.broadcast %cst_31 : f32 to vector<32x32xf32>
    %67 = arith.addf %65, %66 : vector<32x32xf32>
    %68 = math.rsqrt %67 : vector<32x32xf32>
    %69 = arith.subf %50, %60 : vector<32x32xf32>
    %70 = arith.mulf %69, %68 : vector<32x32xf32>
    %71 = vector.broadcast %24 : vector<1x32xf32> to vector<32x32xf32>
    %72 = arith.mulf %70, %71 : vector<32x32xf32>
    %73 = vector.broadcast %25 : vector<1x32xf32> to vector<32x32xf32>
    %74 = arith.addf %72, %73 : vector<32x32xf32>
    %cst_32 = arith.constant 0.000000e+00 : f32
    %75 = vector.broadcast %cst_32 : f32 to vector<32x32xf32>
    %76 = arith.maximumf %74, %75 : vector<32x32xf32>
    %c1_i32_33 = arith.constant 1 : i32
    %77 = tpu.dynamic_rotate %76 by %c1_i32_33 dim 0 : vector<32x32xf32>, i32 -> vector<32x32xf32>
    %cst_34 = arith.constant 0.000000e+00 : f32
    %78 = vector.broadcast %cst_34 : f32 to vector<32x32xf32>
    %79 = arith.select %19, %78, %77 : vector<32x32xi1>, vector<32x32xf32>
    %c31_i32_35 = arith.constant 31 : i32
    %80 = tpu.dynamic_rotate %76 by %c31_i32_35 dim 0 : vector<32x32xf32>, i32 -> vector<32x32xf32>
    %cst_36 = arith.constant 0.000000e+00 : f32
    %81 = vector.broadcast %cst_36 : f32 to vector<32x32xf32>
    %82 = arith.select %21, %81, %80 : vector<32x32xi1>, vector<32x32xf32>
    %c128_37 = arith.constant 128 : index
    %c0_38 = arith.constant 0 : index
    %83 = vector.load %arg1[%c128_37, %c0_38] : memref<232x32xf32, #tpu.memory_space<vmem>>, vector<32x32xf32>
    %cst_39 = arith.constant dense<0.000000e+00> : vector<32x32xf32>
    %84 = tpu.matmul %76, %83, %cst_39 {dimension_numbers = #tpu.dot_dimension_numbers<[1], [0], [0], [1], [0, 0, 1, 1], [], []>, precision = #tpu.contract_precision<fp32>} : vector<32x32xf32>, vector<32x32xf32>, vector<32x32xf32> -> vector<32x32xf32>
    %c96_40 = arith.constant 96 : index
    %c0_41 = arith.constant 0 : index
    %85 = vector.load %arg1[%c96_40, %c0_41] : memref<232x32xf32, #tpu.memory_space<vmem>>, vector<32x32xf32>
    %cst_42 = arith.constant dense<0.000000e+00> : vector<32x32xf32>
    %86 = tpu.matmul %79, %85, %cst_42 {dimension_numbers = #tpu.dot_dimension_numbers<[1], [0], [0], [1], [0, 0, 1, 1], [], []>, precision = #tpu.contract_precision<fp32>} : vector<32x32xf32>, vector<32x32xf32>, vector<32x32xf32> -> vector<32x32xf32>
    %87 = arith.addf %84, %86 : vector<32x32xf32>
    %c160 = arith.constant 160 : index
    %c0_43 = arith.constant 0 : index
    %88 = vector.load %arg1[%c160, %c0_43] : memref<232x32xf32, #tpu.memory_space<vmem>>, vector<32x32xf32>
    %cst_44 = arith.constant dense<0.000000e+00> : vector<32x32xf32>
    %89 = tpu.matmul %82, %88, %cst_44 {dimension_numbers = #tpu.dot_dimension_numbers<[1], [0], [0], [1], [0, 0, 1, 1], [], []>, precision = #tpu.contract_precision<fp32>} : vector<32x32xf32>, vector<32x32xf32>, vector<32x32xf32> -> vector<32x32xf32>
    %90 = arith.addf %87, %89 : vector<32x32xf32>
    %91 = vector.broadcast %26 : vector<1x32xf32> to vector<32x32xf32>
    %92 = arith.addf %90, %91 : vector<32x32xf32>
    %93 = arith.mulf %92, %92 : vector<32x32xf32>
    %94 = tpu.concatenate %92, %93 in 0 : vector<32x32xf32>, vector<32x32xf32> -> vector<64x32xf32>
    %cst_45 = arith.constant dense<0.000000e+00> : vector<64x32xf32>
    %95 = tpu.matmul %94, %22, %cst_45 {dimension_numbers = #tpu.dot_dimension_numbers<[1], [0], [0], [1], [0, 0, 1, 1], [], []>, precision = #tpu.contract_precision<fp32>} : vector<64x32xf32>, vector<32x32xf32>, vector<64x32xf32> -> vector<64x32xf32>
    %96 = vector.shape_cast %95 : vector<64x32xf32> to vector<4x16x32xf32>
    %cst_46 = arith.constant dense<0.000000e+00> : vector<4x32xf32>
    %97 = vector.multi_reduction <add>, %96, %cst_46 [1] : vector<4x16x32xf32> to vector<4x32xf32>
    %98 = vector.shape_cast %97 : vector<4x32xf32> to vector<4x1x32xf32>
    %99 = vector.shape_cast %98 : vector<4x1x32xf32> to vector<4x1x32xf32>
    %100 = vector.broadcast %99 : vector<4x1x32xf32> to vector<4x16x32xf32>
    %101 = vector.shape_cast %100 : vector<4x16x32xf32> to vector<64x32xf32>
    %102 = vector.extract_strided_slice %101 {offsets = [0, 0], sizes = [32, 32], strides = [1, 1]} : vector<64x32xf32> to vector<32x32xf32>
    %103 = vector.extract_strided_slice %101 {offsets = [32, 0], sizes = [32, 32], strides = [1, 1]} : vector<64x32xf32> to vector<32x32xf32>
    %104 = arith.mulf %102, %102 : vector<32x32xf32>
    %105 = arith.subf %103, %104 : vector<32x32xf32>
    %cst_47 = arith.constant 0.000000e+00 : f32
    %106 = vector.broadcast %cst_47 : f32 to vector<32x32xf32>
    %107 = arith.maximumf %105, %106 : vector<32x32xf32>
    %cst_48 = arith.constant 9.99999974E-6 : f32
    %108 = vector.broadcast %cst_48 : f32 to vector<32x32xf32>
    %109 = arith.addf %107, %108 : vector<32x32xf32>
    %110 = math.rsqrt %109 : vector<32x32xf32>
    %111 = arith.subf %92, %102 : vector<32x32xf32>
    %112 = arith.mulf %111, %110 : vector<32x32xf32>
    %113 = vector.broadcast %27 : vector<1x32xf32> to vector<32x32xf32>
    %114 = arith.mulf %112, %113 : vector<32x32xf32>
    %115 = vector.broadcast %28 : vector<1x32xf32> to vector<32x32xf32>
    %116 = arith.addf %114, %115 : vector<32x32xf32>
    %cst_49 = arith.constant 0.000000e+00 : f32
    %117 = vector.broadcast %cst_49 : f32 to vector<32x32xf32>
    %118 = arith.maximumf %116, %117 : vector<32x32xf32>
    %c1_i32_50 = arith.constant 1 : i32
    %119 = tpu.dynamic_rotate %118 by %c1_i32_50 dim 0 : vector<32x32xf32>, i32 -> vector<32x32xf32>
    %cst_51 = arith.constant 0.000000e+00 : f32
    %120 = vector.broadcast %cst_51 : f32 to vector<32x32xf32>
    %121 = arith.select %19, %120, %119 : vector<32x32xi1>, vector<32x32xf32>
    %c31_i32_52 = arith.constant 31 : i32
    %122 = tpu.dynamic_rotate %118 by %c31_i32_52 dim 0 : vector<32x32xf32>, i32 -> vector<32x32xf32>
    %cst_53 = arith.constant 0.000000e+00 : f32
    %123 = vector.broadcast %cst_53 : f32 to vector<32x32xf32>
    %124 = arith.select %21, %123, %122 : vector<32x32xi1>, vector<32x32xf32>
    %c32_54 = arith.constant 32 : index
    %c0_55 = arith.constant 0 : index
    %125 = vector.load %arg2[%c32_54, %c0_55] : memref<200x64xf32, #tpu.memory_space<vmem>>, vector<32x64xf32>
    %cst_56 = arith.constant dense<0.000000e+00> : vector<32x64xf32>
    %126 = tpu.matmul %118, %125, %cst_56 {dimension_numbers = #tpu.dot_dimension_numbers<[1], [0], [0], [1], [0, 0, 1, 1], [], []>, precision = #tpu.contract_precision<fp32>} : vector<32x32xf32>, vector<32x64xf32>, vector<32x64xf32> -> vector<32x64xf32>
    %c0_57 = arith.constant 0 : index
    %c0_58 = arith.constant 0 : index
    %127 = vector.load %arg2[%c0_57, %c0_58] : memref<200x64xf32, #tpu.memory_space<vmem>>, vector<32x64xf32>
    %cst_59 = arith.constant dense<0.000000e+00> : vector<32x64xf32>
    %128 = tpu.matmul %121, %127, %cst_59 {dimension_numbers = #tpu.dot_dimension_numbers<[1], [0], [0], [1], [0, 0, 1, 1], [], []>, precision = #tpu.contract_precision<fp32>} : vector<32x32xf32>, vector<32x64xf32>, vector<32x64xf32> -> vector<32x64xf32>
    %129 = arith.addf %126, %128 : vector<32x64xf32>
    %c64_60 = arith.constant 64 : index
    %c0_61 = arith.constant 0 : index
    %130 = vector.load %arg2[%c64_60, %c0_61] : memref<200x64xf32, #tpu.memory_space<vmem>>, vector<32x64xf32>
    %cst_62 = arith.constant dense<0.000000e+00> : vector<32x64xf32>
    %131 = tpu.matmul %124, %130, %cst_62 {dimension_numbers = #tpu.dot_dimension_numbers<[1], [0], [0], [1], [0, 0, 1, 1], [], []>, precision = #tpu.contract_precision<fp32>} : vector<32x32xf32>, vector<32x64xf32>, vector<32x64xf32> -> vector<32x64xf32>
    %132 = arith.addf %129, %131 : vector<32x64xf32>
    %133 = vector.broadcast %30 : vector<1x64xf32> to vector<32x64xf32>
    %134 = arith.addf %132, %133 : vector<32x64xf32>
    %135 = arith.mulf %134, %134 : vector<32x64xf32>
    %136 = tpu.concatenate %134, %135 in 0 : vector<32x64xf32>, vector<32x64xf32> -> vector<64x64xf32>
    %cst_63 = arith.constant dense<0.000000e+00> : vector<64x64xf32>
    %137 = tpu.matmul %136, %29, %cst_63 {dimension_numbers = #tpu.dot_dimension_numbers<[1], [0], [0], [1], [0, 0, 1, 1], [], []>, precision = #tpu.contract_precision<fp32>} : vector<64x64xf32>, vector<64x64xf32>, vector<64x64xf32> -> vector<64x64xf32>
    %138 = vector.shape_cast %137 : vector<64x64xf32> to vector<4x16x64xf32>
    %cst_64 = arith.constant dense<0.000000e+00> : vector<4x64xf32>
    %139 = vector.multi_reduction <add>, %138, %cst_64 [1] : vector<4x16x64xf32> to vector<4x64xf32>
    %140 = vector.shape_cast %139 : vector<4x64xf32> to vector<4x1x64xf32>
    %141 = vector.shape_cast %140 : vector<4x1x64xf32> to vector<4x1x64xf32>
    %142 = vector.broadcast %141 : vector<4x1x64xf32> to vector<4x16x64xf32>
    %143 = vector.shape_cast %142 : vector<4x16x64xf32> to vector<64x64xf32>
    %144 = vector.extract_strided_slice %143 {offsets = [0, 0], sizes = [32, 64], strides = [1, 1]} : vector<64x64xf32> to vector<32x64xf32>
    %145 = vector.extract_strided_slice %143 {offsets = [32, 0], sizes = [32, 64], strides = [1, 1]} : vector<64x64xf32> to vector<32x64xf32>
    %146 = arith.mulf %144, %144 : vector<32x64xf32>
    %147 = arith.subf %145, %146 : vector<32x64xf32>
    %cst_65 = arith.constant 0.000000e+00 : f32
    %148 = vector.broadcast %cst_65 : f32 to vector<32x64xf32>
    %149 = arith.maximumf %147, %148 : vector<32x64xf32>
    %cst_66 = arith.constant 9.99999974E-6 : f32
    %150 = vector.broadcast %cst_66 : f32 to vector<32x64xf32>
    %151 = arith.addf %149, %150 : vector<32x64xf32>
    %152 = math.rsqrt %151 : vector<32x64xf32>
    %153 = arith.subf %134, %144 : vector<32x64xf32>
    %154 = arith.mulf %153, %152 : vector<32x64xf32>
    %155 = vector.broadcast %31 : vector<1x64xf32> to vector<32x64xf32>
    %156 = arith.mulf %154, %155 : vector<32x64xf32>
    %157 = vector.broadcast %32 : vector<1x64xf32> to vector<32x64xf32>
    %158 = arith.addf %156, %157 : vector<32x64xf32>
    %159 = arith.addf %34, %158 : vector<32x64xf32>
    %cst_67 = arith.constant 0.000000e+00 : f32
    %160 = vector.broadcast %cst_67 : f32 to vector<32x64xf32>
    %161 = arith.maximumf %159, %160 : vector<32x64xf32>
    %c0_68 = arith.constant 0 : index
    %c0_69 = arith.constant 0 : index
    %162 = vector.load %arg3[%c0_68, %c0_69] : memref<32x64xf32, #tpu.memory_space<vmem>>, vector<32x64xf32>
    tpu.vector_store %arg3[%c0_68, %c0_69], %161 {strides = array<i32>} : memref<32x64xf32, #tpu.memory_space<vmem>>, vector<32x64xf32>,
    return
  }
}

</mosaic_0001>

<llo_original>
// kernel: deep_resnet_block1d.1
$region0: #{deep_resnet_block1d.1}
  #allocation0 [shape = 'u32[]', space=smem, size = 0x4, offset = 0x4, fixed_abs, tag = 'smem constant byte address 0x4 - core index']
  #allocation1 [shape = 'u32[144,128]{1,0:T(1,128)}', space=vmem, size = 0x12000, scoped, tag = 'internal scratch']
  %s0 = inlined_call_operand.vmem [shape: f32[32,32], index: 0, kind: input, shape index: {}]
  %s1 = inlined_call_operand.vmem [shape: f32[232,32], index: 1, kind: input, shape index: {}]
  %s2 = inlined_call_operand.vmem [shape: f32[200,64], index: 2, kind: input, shape index: {}]
  %s3 = inlined_call_operand.hbm [shape: f32[32,64], index: 3, kind: output, shape index: {}]
  %s4 = sld [smem:[#allocation0]]
  $region22: #{deep_resnet_block1d.1} parent=0
    _
  %s6 = ssub.s32 1, %s4
  %s7 = scalar_select 0, %s6, %s4
  $region1: #{deep_resnet_block1d.1} parent=0
    #allocation2 [shape = 'u8[16384]{0}', space=vmem, size = 0x4000, scoped, tag = 'output window, operand 0, single buffered']
    #allocation3 [shape = 's32[1]{0}', space=sflag, size = 0x4, scoped, tag = 'scoped memory for deep_resnet_block1d.1']
    %8 = vsyncpa [#allocation3], 0
    // Predicated region
    $region2: #{deep_resnet_block1d.1} parent=1 // pred_check
      _
    $region3: #{deep_resnet_block1d.1} parent=1 // pred_check_branch
      %10 = sbr.rel (0) target = $region5
    $region4: #{deep_resnet_block1d.1} parent=1 // pred_region
      _
    $region5: #{deep_resnet_block1d.1} parent=1 // pred_fallthru
      _
    // Predicated region
    $region6: #{deep_resnet_block1d.1} parent=1 // pred_check
      _
    $region7: #{deep_resnet_block1d.1} parent=1 // pred_check_branch
      %12 = sbr.rel (0) target = $region9
    $region8: #{deep_resnet_block1d.1} parent=1 // pred_region
      _
    $region9: #{deep_resnet_block1d.1} parent=1 // pred_fallthru
      _
    // Predicated region
    $region10: #{deep_resnet_block1d.1} parent=1 // pred_check
      _
    $region11: #{deep_resnet_block1d.1} parent=1 // pred_check_branch
      %14 = sbr.rel (0) target = $region13
    $region12: #{deep_resnet_block1d.1} parent=1 // pred_region
      _
    $region13: #{deep_resnet_block1d.1} parent=1 // pred_fallthru
      _
    %v15 = vld [vmem:[%s0] sm:$0xff]
    %v16 = vld [vmem:[%s0 + $0x8] sm:$0xff]
    %v17 = vld [vmem:[%s0 + $0x10] sm:$0xff]
    %v18 = vld [vmem:[%s0 + $0x18] sm:$0xff]
    %v19 = vlaneseq
    %v20 = vshrl.u32 %v19, 7
    %v21 = vadd.s32 %v20, 8
    %v22 = vadd.s32 %v20, 16
    %v23 = vadd.s32 %v20, 24
    %vm24 = vcmp.lt.s32.totalorder %v20, 0
    %v25 = vsub.s32 0, %v20
    %v26 = vsel %vm24, %v25, %v20
    %v27 = vshrl.u32 %v26, 4
    %v28 = vand.u32 %v26, 15
    %v29 = vsub.s32 0, %v28
    %v30 = vsel %vm24, %v29, %v28
    %vm31 = vcmp.lt.s32.totalorder %v21, 0
    %v32 = vsub.s32 0, %v21
    %v33 = vsel %vm31, %v32, %v21
    %v34 = vshrl.u32 %v33, 4
    %v35 = vand.u32 %v33, 15
    %v36 = vsub.s32 0, %v35
    %v37 = vsel %vm31, %v36, %v35
    %vm38 = vcmp.lt.s32.totalorder %v22, 0
    %v39 = vsub.s32 0, %v22
    %v40 = vsel %vm38, %v39, %v22
    %v41 = vshrl.u32 %v40, 4
    %v42 = vand.u32 %v40, 15
    %v43 = vsub.s32 0, %v42
    %v44 = vsel %vm38, %v43, %v42
    %vm45 = vcmp.lt.s32.totalorder %v23, 0
    %v46 = vsub.s32 0, %v23
    %v47 = vsel %vm45, %v46, %v23
    %v48 = vshrl.u32 %v47, 4
    %v49 = vand.u32 %v47, 15
    %v50 = vsub.s32 0, %v49
    %v51 = vsel %vm45, %v50, %v49
    %vm52 = vcmp.ne.s32.totalorder %v30, 0
    %vm53 = vcmp.ne.s32.totalorder %v37, 0
    %vm54 = vcmp.ne.s32.totalorder %v44, 0
    %vm55 = vcmp.ne.s32.totalorder %v51, 0
    %vm56 = vcmp.lt.s32.totalorder %v30, 0
    %vm57 = vcmp.lt.s32.totalorder %v37, 0
    %vm58 = vcmp.lt.s32.totalorder %v44, 0
    %vm59 = vcmp.lt.s32.totalorder %v51, 0
    %vm60 = vmand %vm56, %vm52
    %vm61 = vmand %vm57, %vm53
    %vm62 = vmand %vm58, %vm54
    %vm63 = vmand %vm59, %vm55
    %v64 = vadd.s32 %v30, 16
    %v65 = vadd.s32 %v37, 16
    %v66 = vadd.s32 %v44, 16
    %v67 = vadd.s32 %v51, 16
    %v68 = vsel %vm60, %v64, %v30
    %v69 = vsel %vm61, %v65, %v37
    %v70 = vsel %vm62, %v66, %v44
    %v71 = vsel %vm63, %v67, %v51
    %vm72 = vcmp.eq.s32.totalorder %v68, 0
    %vm73 = vcmp.eq.s32.totalorder %v69, 0
    %vm74 = vcmp.eq.s32.totalorder %v70, 0
    %vm75 = vcmp.eq.s32.totalorder %v71, 0
    %vm76 = vcmp.eq.s32.totalorder %v68, 15
    %vm77 = vcmp.eq.s32.totalorder %v69, 15
    %vm78 = vcmp.eq.s32.totalorder %v70, 15
    %vm79 = vcmp.eq.s32.totalorder %v71, 15
    %v80 = vld [vmem:[%s1 + $0xc0] sm:$0xff]
    %v81 = vld [vmem:[%s1 + $0xc8] sm:$0xff]
    %v82 = vld [vmem:[%s1 + $0xd0] sm:$0xff]
    %v83 = vld [vmem:[%s1 + $0xd8] sm:$0xff]
    %v84 = vld [vmem:[%s1 + $0xe0] sm:$0x1]
    %v85 = vld [vmem:[%s1 + $0xe1] sm:$0x1]
    %v86 = vld [vmem:[%s1 + $0xe2] sm:$0x1]
    %v87 = vld [vmem:[%s1 + $0xe3] sm:$0x1]
    %v88 = vld [vmem:[%s1 + $0xe4] sm:$0x1]
    %v89 = vld [vmem:[%s1 + $0xe5] sm:$0x1]
    %v90 = vld [vmem:[%s2 + $0x80] sm:$0xff]
    %v91 = vld [vmem:[%s2 + $0x88] sm:$0xff]
    %v92 = vld [vmem:[%s2 + $0x90] sm:$0xff]
    %v93 = vld [vmem:[%s2 + $0x98] sm:$0xff]
    %v94 = vld [vmem:[%s2 + $0xa0] sm:$0xff]
    %v95 = vld [vmem:[%s2 + $0xa8] sm:$0xff]
    %v96 = vld [vmem:[%s2 + $0xb0] sm:$0xff]
    %v97 = vld [vmem:[%s2 + $0xb8] sm:$0xff]
    %v98 = vld [vmem:[%s2 + $0xc0] sm:$0x1]
    %v99 = vld [vmem:[%s2 + $0xc1] sm:$0x1]
    %v100 = vld [vmem:[%s2 + $0xc2] sm:$0x1]
    %v101 = vld [vmem:[%s2 + $0x60] sm:$0xff]
    %v102 = vld [vmem:[%s2 + $0x68] sm:$0xff]
    %v103 = vld [vmem:[%s2 + $0x70] sm:$0xff]
    %v104 = vld [vmem:[%s2 + $0x78] sm:$0xff]
    %v105 = vrot.slane %v15, 7
    %v106 = vrot.slane %v16, 7
    %v107 = vrot.slane %v17, 7
    %v108 = vrot.slane %v18, 7
    %vm109 = vcmp.lt.s32.totalorder %v20, 1
    %v110 = vsel %vm109, %v107, %v108
    %v111 = vsel %vm109, %v106, %v107
    %v112 = vsel %vm109, %v105, %v106
    %v113 = vsel %vm109, %v108, %v105
    %v114 = vsel %vm72, 0.0, %v113
    %v115 = vsel %vm73, 0.0, %v112
    %v116 = vsel %vm74, 0.0, %v111
    %v117 = vsel %vm75, 0.0, %v110
    %v118 = vrot.slane %v15, 1
    %v119 = vrot.slane %v16, 1
    %v120 = vrot.slane %v17, 1
    %v121 = vrot.slane %v18, 1
    %vm122 = vcmp.lt.s32.totalorder %v20, 7
    %v123 = vsel %vm122, %v120, %v121
    %v124 = vsel %vm122, %v119, %v120
    %v125 = vsel %vm122, %v118, %v119
    %v126 = vsel %vm122, %v121, %v118
    %v127 = vsel %vm76, 0.0, %v125
    %v128 = vsel %vm77, 0.0, %v124
    %v129 = vsel %vm78, 0.0, %v123
    %v130 = vsel %vm79, 0.0, %v126
    %v131 = vld [vmem:[%s1 + $0x20] sm:$0xff]
    %v132 = vld [vmem:[%s1 + $0x28] sm:$0xff]
    %v133 = vld [vmem:[%s1 + $0x30] sm:$0xff]
    %v134 = vld [vmem:[%s1 + $0x38] sm:$0xff]
    %v135 = vld [vmem:[%s1] sm:$0xff]
    %v136 = vld [vmem:[%s1 + $0x8] sm:$0xff]
    %v137 = vld [vmem:[%s1 + $0x10] sm:$0xff]
    %v138 = vld [vmem:[%s1 + $0x18] sm:$0xff]
    %vm139 = vcmask 261120
    %v141 = vsel %vm139, %v114, 0
    %v144 = vsel %vm139, %v115, 0
    %v147 = vsel %vm139, %v116, 0
    %v150 = vsel %vm139, %v117, 0
    %152 = vmatprep.subr.mxu0 0.0
    %153 = vmatpush1.msra.mxu0 0.0
    %154 = vmatprep.subr.mxu0 0.0
    %155 = vmatpush1.msra.mxu0 0.0
    %156 = vmatprep.subr.mxu0 0.0
    %157 = vmatpush1.msra.mxu0 0.0
    %158 = vmatprep.subr.mxu0 0.0
    %159 = vmatpush1.msra.mxu0 0.0
    %160 = vmatprep.subr.mxu0 0.0
    %161 = vmatpush1.msra.mxu0 0.0
    %162 = vmatprep.subr.mxu0 0.0
    %163 = vmatpush1.msra.mxu0 0.0
    %164 = vmatprep.subr.mxu0 0.0
    %165 = vmatpush1.msra.mxu0 0.0
    %166 = vmatprep.subr.mxu0 0.0
    %167 = vmatpush1.msra.mxu0 0.0
    %168 = vmatprep.subr.mxu0 0.0
    %169 = vmatpush1.msra.mxu0 0.0
    %170 = vmatprep.subr.mxu0 0.0
    %171 = vmatpush1.msra.mxu0 0.0
    %172 = vmatprep.subr.mxu0 0.0
    %173 = vmatpush1.msra.mxu0 0.0
    %174 = vmatprep.subr.mxu0 0.0
    %175 = vmatpush1.msra.mxu0 0.0
    %176 = vmatprep.subr.mxu0 0.0
    %v177 = vand.u32 %v138, 4294901760
    %178 = vmatpush1.msra.mxu0 %v177
    %179 = vmatprep.subr.mxu0 0.0
    %v180 = vand.u32 %v137, 4294901760
    %181 = vmatpush1.msra.mxu0 %v180
    %182 = vmatprep.subr.mxu0 0.0
    %v183 = vand.u32 %v136, 4294901760
    %184 = vmatpush1.msra.mxu0 %v183
    %185 = vmatprep.subr.mxu0 0.0
    %v186 = vand.u32 %v135, 4294901760
    %187 = vmatpush1.msra.mxu0 %v186
    %188 = vmatprep.subr.mxu0 0.0
    %189 = vmatpush2.msra.mxu0 0.0
    %190 = vmatprep.subr.mxu0 0.0
    %191 = vmatpush2.msra.mxu0 0.0
    %192 = vmatprep.subr.mxu0 0.0
    %193 = vmatpush2.msra.mxu0 0.0
    %194 = vmatprep.subr.mxu0 0.0
    %195 = vmatpush2.msra.mxu0 0.0
    %196 = vmatprep.subr.mxu0 0.0
    %197 = vmatpush2.msra.mxu0 0.0
    %198 = vmatprep.subr.mxu0 0.0
    %199 = vmatpush2.msra.mxu0 0.0
    %200 = vmatprep.subr.mxu0 0.0
    %201 = vmatpush2.msra.mxu0 0.0
    %202 = vmatprep.subr.mxu0 0.0
    %203 = vmatpush2.msra.mxu0 0.0
    %204 = vmatprep.subr.mxu0 0.0
    %205 = vmatpush2.msra.mxu0 0.0
    %206 = vmatprep.subr.mxu0 0.0
    %207 = vmatpush2.msra.mxu0 0.0
    %208 = vmatprep.subr.mxu0 0.0
    %209 = vmatpush2.msra.mxu0 0.0
    %210 = vmatprep.subr.mxu0 0.0
    %211 = vmatpush2.msra.mxu0 0.0
    %212 = vmatprep.subr.mxu0 0.0
    %213 = vmatpush2.msra.mxu0 0.0
    %214 = vmatprep.subr.mxu0 0.0
    %215 = vmatpush2.msra.mxu0 0.0
    %216 = vmatprep.subr.mxu0 0.0
    %217 = vmatpush2.msra.mxu0 0.0
    %218 = vmatprep.subr.mxu0 0.0
    %219 = vmatpush2.msra.mxu0 0.0
    %220 = vmatprep.mubr.f32.mxu0 0.0
    %v221 = vand.u32 %v141, 4294901760
    %v222 = vsub.f32 %v141, %v221
    %v223 = vand.u32 %v222, 4294901760
    %v224 = vsub.f32 %v222, %v223
    %v225 = vand.u32 %v224, 4294901760
    %226 = vmatmul.mubr.f32.gmra.mxu0 %v225
    %v227 = vpop.f32.mrf.mxu0
    %v228 = vadd.f32 0.0, %v227
    %v229 = vpop.f32.mrf.mxu0
    %230 = vmatprep.mubr.f32.mxu0 0.0
    %v231 = vand.u32 %v144, 4294901760
    %v232 = vsub.f32 %v144, %v231
    %v233 = vand.u32 %v232, 4294901760
    %v234 = vsub.f32 %v232, %v233
    %v235 = vand.u32 %v234, 4294901760
    %236 = vmatmul.mubr.f32.gmra.mxu0 %v235
    %v237 = vpop.f32.mrf.mxu0
    %v238 = vadd.f32 0.0, %v237
    %v239 = vpop.f32.mrf.mxu0
    %240 = vmatprep.mubr.f32.mxu0 0.0
    %v241 = vand.u32 %v147, 4294901760
    %v242 = vsub.f32 %v147, %v241
    %v243 = vand.u32 %v242, 4294901760
    %v244 = vsub.f32 %v242, %v243
    %v245 = vand.u32 %v244, 4294901760
    %246 = vmatmul.mubr.f32.gmra.mxu0 %v245
    %v247 = vpop.f32.mrf.mxu0
    %v248 = vadd.f32 0.0, %v247
    %v249 = vpop.f32.mrf.mxu0
    %250 = vmatprep.mubr.f32.mxu0 0.0
    %v251 = vand.u32 %v150, 4294901760
    %v252 = vsub.f32 %v150, %v251
    %v253 = vand.u32 %v252, 4294901760
    %v254 = vsub.f32 %v252, %v253
    %v255 = vand.u32 %v254, 4294901760
    %256 = vmatmul.mubr.f32.gmra.mxu0 %v255
    %v257 = vpop.f32.mrf.mxu0
    %v258 = vadd.f32 0.0, %v257
    %v259 = vpop.f32.mrf.mxu0
    %260 = vdwg.mxu0
    %261 = vmatprep.subr.mxu0 0.0
    %262 = vmatpush1.msra.mxu0 0.0
    %263 = vmatprep.subr.mxu0 0.0
    %264 = vmatpush1.msra.mxu0 0.0
    %265 = vmatprep.subr.mxu0 0.0
    %266 = vmatpush1.msra.mxu0 0.0
    %267 = vmatprep.subr.mxu0 0.0
    %268 = vmatpush1.msra.mxu0 0.0
    %269 = vmatprep.subr.mxu0 0.0
    %270 = vmatpush1.msra.mxu0 0.0
    %271 = vmatprep.subr.mxu0 0.0
    %272 = vmatpush1.msra.mxu0 0.0
    %273 = vmatprep.subr.mxu0 0.0
    %274 = vmatpush1.msra.mxu0 0.0
    %275 = vmatprep.subr.mxu0 0.0
    %276 = vmatpush1.msra.mxu0 0.0
    %277 = vmatprep.subr.mxu0 0.0
    %278 = vmatpush1.msra.mxu0 0.0
    %279 = vmatprep.subr.mxu0 0.0
    %280 = vmatpush1.msra.mxu0 0.0
    %281 = vmatprep.subr.mxu0 0.0
    %282 = vmatpush1.msra.mxu0 0.0
    %283 = vmatprep.subr.mxu0 0.0
    %284 = vmatpush1.msra.mxu0 0.0
    %285 = vmatprep.subr.mxu0 0.0
    %v286 = vand.u32 %v138, 4294901760
    %v287 = vsub.f32 %v138, %v286
    %v288 = vand.u32 %v287, 4294901760
    %v289 = vsub.f32 %v287, %v288
    %v290 = vand.u32 %v289, 4294901760
    %291 = vmatpush1.msra.mxu0 %v290
    %292 = vmatprep.subr.mxu0 0.0
    %v293 = vand.u32 %v137, 4294901760
    %v294 = vsub.f32 %v137, %v293
    %v295 = vand.u32 %v294, 4294901760
    %v296 = vsub.f32 %v294, %v295
    %v297 = vand.u32 %v296, 4294901760
    %298 = vmatpush1.msra.mxu0 %v297
    %299 = vmatprep.subr.mxu0 0.0
    %v300 = vand.u32 %v136, 4294901760
    %v301 = vsub.f32 %v136, %v300
    %v302 = vand.u32 %v301, 4294901760
    %v303 = vsub.f32 %v301, %v302
    %v304 = vand.u32 %v303, 4294901760
    %305 = vmatpush1.msra.mxu0 %v304
    %306 = vmatprep.subr.mxu0 0.0
    %v307 = vand.u32 %v135, 4294901760
    %v308 = vsub.f32 %v135, %v307
    %v309 = vand.u32 %v308, 4294901760
    %v310 = vsub.f32 %v308, %v309
    %v311 = vand.u32 %v310, 4294901760
    %312 = vmatpush1.msra.mxu0 %v311
    %313 = vmatprep.subr.mxu0 0.0
    %314 = vmatpush2.msra.mxu0 0.0
    %315 = vmatprep.subr.mxu0 0.0
    %316 = vmatpush2.msra.mxu0 0.0
    %317 = vmatprep.subr.mxu0 0.0
    %318 = vmatpush2.msra.mxu0 0.0
    %319 = vmatprep.subr.mxu0 0.0
    %320 = vmatpush2.msra.mxu0 0.0
    %321 = vmatprep.subr.mxu0 0.0
    %322 = vmatpush2.msra.mxu0 0.0
    %323 = vmatprep.subr.mxu0 0.0
    %324 = vmatpush2.msra.mxu0 0.0
    %325 = vmatprep.subr.mxu0 0.0
    %326 = vmatpush2.msra.mxu0 0.0
    %327 = vmatprep.subr.mxu0 0.0
    %328 = vmatpush2.msra.mxu0 0.0
    %329 = vmatprep.subr.mxu0 0.0
    %330 = vmatpush2.msra.mxu0 0.0
    %331 = vmatprep.subr.mxu0 0.0
    %332 = vmatpush2.msra.mxu0 0.0
    %333 = vmatprep.subr.mxu0 0.0
    %334 = vmatpush2.msra.mxu0 0.0
    %335 = vmatprep.subr.mxu0 0.0
    %336 = vmatpush2.msra.mxu0 0.0
    %337 = vmatprep.subr.mxu0 0.0
    %338 = vmatpush2.msra.mxu0 0.0
    %339 = vmatprep.subr.mxu0 0.0
    %340 = vmatpush2.msra.mxu0 0.0
    %341 = vmatprep.subr.mxu0 0.0
    %342 = vmatpush2.msra.mxu0 0.0
    %343 = vmatprep.subr.mxu0 0.0
    %344 = vmatpush2.msra.mxu0 0.0
    %345 = vmatprep.mubr.f32.mxu0 0.0
    %v346 = vand.u32 %v141, 4294901760
    %347 = vmatmul.mubr.f32.gmra.mxu0 %v346
    %v348 = vpop.f32.mrf.mxu0
    %v349 = vadd.f32 %v228, %v348
    %v350 = vpop.f32.mrf.mxu0
    %351 = vmatprep.mubr.f32.mxu0 0.0
    %v352 = vand.u32 %v144, 4294901760
    %353 = vmatmul.mubr.f32.gmra.mxu0 %v352
    %v354 = vpop.f32.mrf.mxu0
    %v355 = vadd.f32 %v238, %v354
    %v356 = vpop.f32.mrf.mxu0
    %357 = vmatprep.mubr.f32.mxu0 0.0
    %v358 = vand.u32 %v147, 4294901760
    %359 = vmatmul.mubr.f32.gmra.mxu0 %v358
    %v360 = vpop.f32.mrf.mxu0
    %v361 = vadd.f32 %v248, %v360
    %v362 = vpop.f32.mrf.mxu0
    %363 = vmatprep.mubr.f32.mxu0 0.0
    %v364 = vand.u32 %v150, 4294901760
    %365 = vmatmul.mubr.f32.gmra.mxu0 %v364
    %v366 = vpop.f32.mrf.mxu0
    %v367 = vadd.f32 %v258, %v366
    %v368 = vpop.f32.mrf.mxu0
    %369 = vdwg.mxu0
    %370 = vmatprep.subr.mxu0 0.0
    %371 = vmatpush1.msra.mxu0 0.0
    %372 = vmatprep.subr.mxu0 0.0
    %373 = vmatpush1.msra.mxu0 0.0
    %374 = vmatprep.subr.mxu0 0.0
    %375 = vmatpush1.msra.mxu0 0.0
    %376 = vmatprep.subr.mxu0 0.0
    %377 = vmatpush1.msra.mxu0 0.0
    %378 = vmatprep.subr.mxu0 0.0
    %379 = vmatpush1.msra.mxu0 0.0
    %380 = vmatprep.subr.mxu0 0.0
    %381 = vmatpush1.msra.mxu0 0.0
    %382 = vmatprep.subr.mxu0 0.0
    %383 = vmatpush1.msra.mxu0 0.0
    %384 = vmatprep.subr.mxu0 0.0
    %385 = vmatpush1.msra.mxu0 0.0
    %386 = vmatprep.subr.mxu0 0.0
    %387 = vmatpush1.msra.mxu0 0.0
    %388 = vmatprep.subr.mxu0 0.0
    %389 = vmatpush1.msra.mxu0 0.0
    %390 = vmatprep.subr.mxu0 0.0
    %391 = vmatpush1.msra.mxu0 0.0
    %392 = vmatprep.subr.mxu0 0.0
    %393 = vmatpush1.msra.mxu0 0.0
    %394 = vmatprep.subr.mxu0 0.0
    %v395 = vand.u32 %v138, 4294901760
    %v396 = vsub.f32 %v138, %v395
    %397 = vmatpush1.msra.mxu0 %v396
    %398 = vmatprep.subr.mxu0 0.0
    %v399 = vand.u32 %v137, 4294901760
    %v400 = vsub.f32 %v137, %v399
    %401 = vmatpush1.msra.mxu0 %v400
    %402 = vmatprep.subr.mxu0 0.0
    %v403 = vand.u32 %v136, 4294901760
    %v404 = vsub.f32 %v136, %v403
    %405 = vmatpush1.msra.mxu0 %v404
    %406 = vmatprep.subr.mxu0 0.0
    %v407 = vand.u32 %v135, 4294901760
    %v408 = vsub.f32 %v135, %v407
    %409 = vmatpush1.msra.mxu0 %v408
    %410 = vmatprep.subr.mxu0 0.0
    %411 = vmatpush2.msra.mxu0 0.0
    %412 = vmatprep.subr.mxu0 0.0
    %413 = vmatpush2.msra.mxu0 0.0
    %414 = vmatprep.subr.mxu0 0.0
    %415 = vmatpush2.msra.mxu0 0.0
    %416 = vmatprep.subr.mxu0 0.0
    %417 = vmatpush2.msra.mxu0 0.0
    %418 = vmatprep.subr.mxu0 0.0
    %419 = vmatpush2.msra.mxu0 0.0
    %420 = vmatprep.subr.mxu0 0.0
    %421 = vmatpush2.msra.mxu0 0.0
    %422 = vmatprep.subr.mxu0 0.0
    %423 = vmatpush2.msra.mxu0 0.0
    %424 = vmatprep.subr.mxu0 0.0
    %425 = vmatpush2.msra.mxu0 0.0
    %426 = vmatprep.subr.mxu0 0.0
    %427 = vmatpush2.msra.mxu0 0.0
    %428 = vmatprep.subr.mxu0 0.0
    %429 = vmatpush2.msra.mxu0 0.0
    %430 = vmatprep.subr.mxu0 0.0
    %431 = vmatpush2.msra.mxu0 0.0
    %432 = vmatprep.subr.mxu0 0.0
    %433 = vmatpush2.msra.mxu0 0.0
    %434 = vmatprep.subr.mxu0 0.0
    %435 = vmatpush2.msra.mxu0 0.0
    %436 = vmatprep.subr.mxu0 0.0
    %437 = vmatpush2.msra.mxu0 0.0
    %438 = vmatprep.subr.mxu0 0.0
    %439 = vmatpush2.msra.mxu0 0.0
    %440 = vmatprep.subr.mxu0 0.0
    %441 = vmatpush2.msra.mxu0 0.0
    %442 = vmatprep.mubr.f32.mxu0 0.0
    %v443 = vand.u32 %v141, 4294901760
    %v444 = vsub.f32 %v141, %v443
    %445 = vmatmul.mubr.f32.gmra.mxu0 %v444
    %v446 = vpop.f32.mrf.mxu0
    %v447 = vadd.f32 %v349, %v446
    %v448 = vpop.f32.mrf.mxu0
    %449 = vmatprep.mubr.f32.mxu0 0.0
    %v450 = vand.u32 %v144, 4294901760
    %v451 = vsub.f32 %v144, %v450
    %452 = vmatmul.mubr.f32.gmra.mxu0 %v451
    %v453 = vpop.f32.mrf.mxu0
    %v454 = vadd.f32 %v355, %v453
    %v455 = vpop.f32.mrf.mxu0
    %456 = vmatprep.mubr.f32.mxu0 0.0
    %v457 = vand.u32 %v147, 4294901760
    %v458 = vsub.f32 %v147, %v457
    %459 = vmatmul.mubr.f32.gmra.mxu0 %v458
    %v460 = vpop.f32.mrf.mxu0
    %v461 = vadd.f32 %v361, %v460
    %v462 = vpop.f32.mrf.mxu0
    %463 = vmatprep.mubr.f32.mxu0 0.0
    %v464 = vand.u32 %v150, 4294901760
    %v465 = vsub.f32 %v150, %v464
    %466 = vmatmul.mubr.f32.gmra.mxu0 %v465
    %v467 = vpop.f32.mrf.mxu0
    %v468 = vadd.f32 %v367, %v467
    %v469 = vpop.f32.mrf.mxu0
    %470 = vdwg.mxu0
    %471 = vmatprep.subr.mxu0 0.0
    %472 = vmatpush1.msra.mxu0 0.0
    %473 = vmatprep.subr.mxu0 0.0
    %474 = vmatpush1.msra.mxu0 0.0
    %475 = vmatprep.subr.mxu0 0.0
    %476 = vmatpush1.msra.mxu0 0.0
    %477 = vmatprep.subr.mxu0 0.0
    %478 = vmatpush1.msra.mxu0 0.0
    %479 = vmatprep.subr.mxu0 0.0
    %480 = vmatpush1.msra.mxu0 0.0
    %481 = vmatprep.subr.mxu0 0.0
    %482 = vmatpush1.msra.mxu0 0.0
    %483 = vmatprep.subr.mxu0 0.0
    %484 = vmatpush1.msra.mxu0 0.0
    %485 = vmatprep.subr.mxu0 0.0
    %486 = vmatpush1.msra.mxu0 0.0
    %487 = vmatprep.subr.mxu0 0.0
    %488 = vmatpush1.msra.mxu0 0.0
    %489 = vmatprep.subr.mxu0 0.0
    %490 = vmatpush1.msra.mxu0 0.0
    %491 = vmatprep.subr.mxu0 0.0
    %492 = vmatpush1.msra.mxu0 0.0
    %493 = vmatprep.subr.mxu0 0.0
    %494 = vmatpush1.msra.mxu0 0.0
    %495 = vmatprep.subr.mxu0 0.0
    %v496 = vand.u32 %v138, 4294901760
    %497 = vmatpush1.msra.mxu0 %v496
    %498 = vmatprep.subr.mxu0 0.0
    %v499 = vand.u32 %v137, 4294901760
    %500 = vmatpush1.msra.mxu0 %v499
    %501 = vmatprep.subr.mxu0 0.0
    %v502 = vand.u32 %v136, 4294901760
    %503 = vmatpush1.msra.mxu0 %v502
    %504 = vmatprep.subr.mxu0 0.0
    %v505 = vand.u32 %v135, 4294901760
    %506 = vmatpush1.msra.mxu0 %v505
    %507 = vmatprep.subr.mxu0 0.0
    %508 = vmatpush2.msra.mxu0 0.0
    %509 = vmatprep.subr.mxu0 0.0
    %510 = vmatpush2.msra.mxu0 0.0
    %511 = vmatprep.subr.mxu0 0.0
    %512 = vmatpush2.msra.mxu0 0.0
    %513 = vmatprep.subr.mxu0 0.0
    %514 = vmatpush2.msra.mxu0 0.0
    %515 = vmatprep.subr.mxu0 0.0
    %516 = vmatpush2.msra.mxu0 0.0
    %517 = vmatprep.subr.mxu0 0.0
    %518 = vmatpush2.msra.mxu0 0.0
    %519 = vmatprep.subr.mxu0 0.0
    %520 = vmatpush2.msra.mxu0 0.0
    %521 = vmatprep.subr.mxu0 0.0
    %522 = vmatpush2.msra.mxu0 0.0
    %523 = vmatprep.subr.mxu0 0.0
    %524 = vmatpush2.msra.mxu0 0.0
    %525 = vmatprep.subr.mxu0 0.0
    %526 = vmatpush2.msra.mxu0 0.0
    %527 = vmatprep.subr.mxu0 0.0
    %528 = vmatpush2.msra.mxu0 0.0
    %529 = vmatprep.subr.mxu0 0.0
    %530 = vmatpush2.msra.mxu0 0.0
    %531 = vmatprep.subr.mxu0 0.0
    %532 = vmatpush2.msra.mxu0 0.0
    %533 = vmatprep.subr.mxu0 0.0
    %534 = vmatpush2.msra.mxu0 0.0
    %535 = vmatprep.subr.mxu0 0.0
    %536 = vmatpush2.msra.mxu0 0.0
    %537 = vmatprep.subr.mxu0 0.0
    %538 = vmatpush2.msra.mxu0 0.0
    %539 = vmatprep.mubr.f32.mxu0 0.0
    %v540 = vand.u32 %v141, 4294901760
    %v541 = vsub.f32 %v141, %v540
    %v542 = vand.u32 %v541, 4294901760
    %543 = vmatmul.mubr.f32.gmra.mxu0 %v542
    %v544 = vpop.f32.mrf.mxu0
    %v545 = vadd.f32 %v447, %v544
    %v546 = vpop.f32.mrf.mxu0
    %547 = vmatprep.mubr.f32.mxu0 0.0
    %v548 = vand.u32 %v144, 4294901760
    %v549 = vsub.f32 %v144, %v548
    %v550 = vand.u32 %v549, 4294901760
    %551 = vmatmul.mubr.f32.gmra.mxu0 %v550
    %v552 = vpop.f32.mrf.mxu0
    %v553 = vadd.f32 %v454, %v552
    %v554 = vpop.f32.mrf.mxu0
    %555 = vmatprep.mubr.f32.mxu0 0.0
    %v556 = vand.u32 %v147, 4294901760
    %v557 = vsub.f32 %v147, %v556
    %v558 = vand.u32 %v557, 4294901760
    %559 = vmatmul.mubr.f32.gmra.mxu0 %v558
    %v560 = vpop.f32.mrf.mxu0
    %v561 = vadd.f32 %v461, %v560
    %v562 = vpop.f32.mrf.mxu0
    %563 = vmatprep.mubr.f32.mxu0 0.0
    %v564 = vand.u32 %v150, 4294901760
    %v565 = vsub.f32 %v150, %v564
    %v566 = vand.u32 %v565, 4294901760
    %567 = vmatmul.mubr.f32.gmra.mxu0 %v566
    %v568 = vpop.f32.mrf.mxu0
    %v569 = vadd.f32 %v468, %v568
    %v570 = vpop.f32.mrf.mxu0
    %571 = vdwg.mxu0
    %572 = vmatprep.subr.mxu0 0.0
    %573 = vmatpush1.msra.mxu0 0.0
    %574 = vmatprep.subr.mxu0 0.0
    %575 = vmatpush1.msra.mxu0 0.0
    %576 = vmatprep.subr.mxu0 0.0
    %577 = vmatpush1.msra.mxu0 0.0
    %578 = vmatprep.subr.mxu0 0.0
    %579 = vmatpush1.msra.mxu0 0.0
    %580 = vmatprep.subr.mxu0 0.0
    %581 = vmatpush1.msra.mxu0 0.0
    %582 = vmatprep.subr.mxu0 0.0
    %583 = vmatpush1.msra.mxu0 0.0
    %584 = vmatprep.subr.mxu0 0.0
    %585 = vmatpush1.msra.mxu0 0.0
    %586 = vmatprep.subr.mxu0 0.0
    %587 = vmatpush1.msra.mxu0 0.0
    %588 = vmatprep.subr.mxu0 0.0
    %589 = vmatpush1.msra.mxu0 0.0
    %590 = vmatprep.subr.mxu0 0.0
    %591 = vmatpush1.msra.mxu0 0.0
    %592 = vmatprep.subr.mxu0 0.0
    %593 = vmatpush1.msra.mxu0 0.0
    %594 = vmatprep.subr.mxu0 0.0
    %595 = vmatpush1.msra.mxu0 0.0
    %596 = vmatprep.subr.mxu0 0.0
    %v597 = vand.u32 %v138, 4294901760
    %v598 = vsub.f32 %v138, %v597
    %v599 = vand.u32 %v598, 4294901760
    %600 = vmatpush1.msra.mxu0 %v599
    %601 = vmatprep.subr.mxu0 0.0
    %v602 = vand.u32 %v137, 4294901760
    %v603 = vsub.f32 %v137, %v602
    %v604 = vand.u32 %v603, 4294901760
    %605 = vmatpush1.msra.mxu0 %v604
    %606 = vmatprep.subr.mxu0 0.0
    %v607 = vand.u32 %v136, 4294901760
    %v608 = vsub.f32 %v136, %v607
    %v609 = vand.u32 %v608, 4294901760
    %610 = vmatpush1.msra.mxu0 %v609
    %611 = vmatprep.subr.mxu0 0.0
    %v612 = vand.u32 %v135, 4294901760
    %v613 = vsub.f32 %v135, %v612
    %v614 = vand.u32 %v613, 4294901760
    %615 = vmatpush1.msra.mxu0 %v614
    %616 = vmatprep.subr.mxu0 0.0
    %617 = vmatpush2.msra.mxu0 0.0
    %618 = vmatprep.subr.mxu0 0.0
    %619 = vmatpush2.msra.mxu0 0.0
    %620 = vmatprep.subr.mxu0 0.0
    %621 = vmatpush2.msra.mxu0 0.0
    %622 = vmatprep.subr.mxu0 0.0
    %623 = vmatpush2.msra.mxu0 0.0
    %624 = vmatprep.subr.mxu0 0.0
    %625 = vmatpush2.msra.mxu0 0.0
    %626 = vmatprep.subr.mxu0 0.0
    %627 = vmatpush2.msra.mxu0 0.0
    %628 = vmatprep.subr.mxu0 0.0
    %629 = vmatpush2.msra.mxu0 0.0
    %630 = vmatprep.subr.mxu0 0.0
    %631 = vmatpush2.msra.mxu0 0.0
    %632 = vmatprep.subr.mxu0 0.0
    %633 = vmatpush2.msra.mxu0 0.0
    %634 = vmatprep.subr.mxu0 0.0
    %635 = vmatpush2.msra.mxu0 0.0
    %636 = vmatprep.subr.mxu0 0.0
    %637 = vmatpush2.msra.mxu0 0.0
    %638 = vmatprep.subr.mxu0 0.0
    %639 = vmatpush2.msra.mxu0 0.0
    %640 = vmatprep.subr.mxu0 0.0
    %641 = vmatpush2.msra.mxu0 0.0
    %642 = vmatprep.subr.mxu0 0.0
    %643 = vmatpush2.msra.mxu0 0.0
    %644 = vmatprep.subr.mxu0 0.0
    %645 = vmatpush2.msra.mxu0 0.0
    %646 = vmatprep.subr.mxu0 0.0
    %647 = vmatpush2.msra.mxu0 0.0
    %648 = vmatprep.mubr.f32.mxu0 0.0
    %v649 = vand.u32 %v141, 4294901760
    %650 = vmatmul.mubr.f32.gmra.mxu0 %v649
    %v651 = vpop.f32.mrf.mxu0
    %v652 = vadd.f32 %v545, %v651
    %v653 = vpop.f32.mrf.mxu0
    %654 = vmatprep.mubr.f32.mxu0 0.0
    %v655 = vand.u32 %v144, 4294901760
    %656 = vmatmul.mubr.f32.gmra.mxu0 %v655
    %v657 = vpop.f32.mrf.mxu0
    %v658 = vadd.f32 %v553, %v657
    %v659 = vpop.f32.mrf.mxu0
    %660 = vmatprep.mubr.f32.mxu0 0.0
    %v661 = vand.u32 %v147, 4294901760
    %662 = vmatmul.mubr.f32.gmra.mxu0 %v661
    %v663 = vpop.f32.mrf.mxu0
    %v664 = vadd.f32 %v561, %v663
    %v665 = vpop.f32.mrf.mxu0
    %666 = vmatprep.mubr.f32.mxu0 0.0
    %v667 = vand.u32 %v150, 4294901760
    %668 = vmatmul.mubr.f32.gmra.mxu0 %v667
    %v669 = vpop.f32.mrf.mxu0
    %v670 = vadd.f32 %v569, %v669
    %v671 = vpop.f32.mrf.mxu0
    %672 = vdwg.mxu0
    %673 = vmatprep.subr.mxu0 0.0
    %674 = vmatpush1.msra.mxu0 0.0
    %675 = vmatprep.subr.mxu0 0.0
    %676 = vmatpush1.msra.mxu0 0.0
    %677 = vmatprep.subr.mxu0 0.0
    %678 = vmatpush1.msra.mxu0 0.0
    %679 = vmatprep.subr.mxu0 0.0
    %680 = vmatpush1.msra.mxu0 0.0
    %681 = vmatprep.subr.mxu0 0.0
    %682 = vmatpush1.msra.mxu0 0.0
    %683 = vmatprep.subr.mxu0 0.0
    %684 = vmatpush1.msra.mxu0 0.0
    %685 = vmatprep.subr.mxu0 0.0
    %686 = vmatpush1.msra.mxu0 0.0
    %687 = vmatprep.subr.mxu0 0.0
    %688 = vmatpush1.msra.mxu0 0.0
    %689 = vmatprep.subr.mxu0 0.0
    %690 = vmatpush1.msra.mxu0 0.0
    %691 = vmatprep.subr.mxu0 0.0
    %692 = vmatpush1.msra.mxu0 0.0
    %693 = vmatprep.subr.mxu0 0.0
    %694 = vmatpush1.msra.mxu0 0.0
    %695 = vmatprep.subr.mxu0 0.0
    %696 = vmatpush1.msra.mxu0 0.0
    %697 = vmatprep.subr.mxu0 0.0
    %v698 = vand.u32 %v138, 4294901760
    %699 = vmatpush1.msra.mxu0 %v698
    %700 = vmatprep.subr.mxu0 0.0
    %v701 = vand.u32 %v137, 4294901760
    %702 = vmatpush1.msra.mxu0 %v701
    %703 = vmatprep.subr.mxu0 0.0
    %v704 = vand.u32 %v136, 4294901760
    %705 = vmatpush1.msra.mxu0 %v704
    %706 = vmatprep.subr.mxu0 0.0
    %v707 = vand.u32 %v135, 4294901760
    %708 = vmatpush1.msra.mxu0 %v707
    %709 = vmatprep.subr.mxu0 0.0
    %710 = vmatpush2.msra.mxu0 0.0
    %711 = vmatprep.subr.mxu0 0.0
    %712 = vmatpush2.msra.mxu0 0.0
    %713 = vmatprep.subr.mxu0 0.0
    %714 = vmatpush2.msra.mxu0 0.0
    %715 = vmatprep.subr.mxu0 0.0
    %716 = vmatpush2.msra.mxu0 0.0
    %717 = vmatprep.subr.mxu0 0.0
    %718 = vmatpush2.msra.mxu0 0.0
    %719 = vmatprep.subr.mxu0 0.0
    %720 = vmatpush2.msra.mxu0 0.0
    %721 = vmatprep.subr.mxu0 0.0
    %722 = vmatpush2.msra.mxu0 0.0
    %723 = vmatprep.subr.mxu0 0.0
    %724 = vmatpush2.msra.mxu0 0.0
    %725 = vmatprep.subr.mxu0 0.0
    %726 = vmatpush2.msra.mxu0 0.0
    %727 = vmatprep.subr.mxu0 0.0
    %728 = vmatpush2.msra.mxu0 0.0
    %729 = vmatprep.subr.mxu0 0.0
    %730 = vmatpush2.msra.mxu0 0.0
    %731 = vmatprep.subr.mxu0 0.0
    %732 = vmatpush2.msra.mxu0 0.0
    %733 = vmatprep.subr.mxu0 0.0
    %734 = vmatpush2.msra.mxu0 0.0
    %735 = vmatprep.subr.mxu0 0.0
    %736 = vmatpush2.msra.mxu0 0.0
    %737 = vmatprep.subr.mxu0 0.0
    %738 = vmatpush2.msra.mxu0 0.0
    %739 = vmatprep.subr.mxu0 0.0
    %740 = vmatpush2.msra.mxu0 0.0
    %741 = vmatprep.mubr.f32.mxu0 0.0
    %v742 = vand.u32 %v141, 4294901760
    %743 = vmatmul.mubr.f32.gmra.mxu0 %v742
    %v744 = vpop.f32.mrf.mxu0
    %v745 = vadd.f32 %v652, %v744
    %v746 = vpop.f32.mrf.mxu0
    %747 = vmatprep.mubr.f32.mxu0 0.0
    %v748 = vand.u32 %v144, 4294901760
    %749 = vmatmul.mubr.f32.gmra.mxu0 %v748
    %v750 = vpop.f32.mrf.mxu0
    %v751 = vadd.f32 %v658, %v750
    %v752 = vpop.f32.mrf.mxu0
    %753 = vmatprep.mubr.f32.mxu0 0.0
    %v754 = vand.u32 %v147, 4294901760
    %755 = vmatmul.mubr.f32.gmra.mxu0 %v754
    %v756 = vpop.f32.mrf.mxu0
    %v757 = vadd.f32 %v664, %v756
    %v758 = vpop.f32.mrf.mxu0
    %759 = vmatprep.mubr.f32.mxu0 0.0
    %v760 = vand.u32 %v150, 4294901760
    %761 = vmatmul.mubr.f32.gmra.mxu0 %v760
    %v762 = vpop.f32.mrf.mxu0
    %v763 = vadd.f32 %v670, %v762
    %v764 = vpop.f32.mrf.mxu0
    %765 = vdwg.mxu0
    %v767 = vsel %vm139, %v15, 0
    %v770 = vsel %vm139, %v16, 0
    %v773 = vsel %vm139, %v17, 0
    %v776 = vsel %vm139, %v18, 0
    %778 = vmatprep.subr.mxu0 0.0
    %779 = vmatpush1.msra.mxu0 0.0
    %780 = vmatprep.subr.mxu0 0.0
    %781 = vmatpush1.msra.mxu0 0.0
    %782 = vmatprep.subr.mxu0 0.0
    %783 = vmatpush1.msra.mxu0 0.0
    %784 = vmatprep.subr.mxu0 0.0
    %785 = vmatpush1.msra.mxu0 0.0
    %786 = vmatprep.subr.mxu0 0.0
    %787 = vmatpush1.msra.mxu0 0.0
    %788 = vmatprep.subr.mxu0 0.0
    %789 = vmatpush1.msra.mxu0 0.0
    %790 = vmatprep.subr.mxu0 0.0
    %791 = vmatpush1.msra.mxu0 0.0
    %792 = vmatprep.subr.mxu0 0.0
    %793 = vmatpush1.msra.mxu0 0.0
    %794 = vmatprep.subr.mxu0 0.0
    %795 = vmatpush1.msra.mxu0 0.0
    %796 = vmatprep.subr.mxu0 0.0
    %797 = vmatpush1.msra.mxu0 0.0
    %798 = vmatprep.subr.mxu0 0.0
    %799 = vmatpush1.msra.mxu0 0.0
    %800 = vmatprep.subr.mxu0 0.0
    %801 = vmatpush1.msra.mxu0 0.0
    %802 = vmatprep.subr.mxu0 0.0
    %v803 = vand.u32 %v134, 4294901760
    %804 = vmatpush1.msra.mxu0 %v803
    %805 = vmatprep.subr.mxu0 0.0
    %v806 = vand.u32 %v133, 4294901760
    %807 = vmatpush1.msra.mxu0 %v806
    %808 = vmatprep.subr.mxu0 0.0
    %v809 = vand.u32 %v132, 4294901760
    %810 = vmatpush1.msra.mxu0 %v809
    %811 = vmatprep.subr.mxu0 0.0
    %v812 = vand.u32 %v131, 4294901760
    %813 = vmatpush1.msra.mxu0 %v812
    %814 = vmatprep.subr.mxu0 0.0
    %815 = vmatpush2.msra.mxu0 0.0
    %816 = vmatprep.subr.mxu0 0.0
    %817 = vmatpush2.msra.mxu0 0.0
    %818 = vmatprep.subr.mxu0 0.0
    %819 = vmatpush2.msra.mxu0 0.0
    %820 = vmatprep.subr.mxu0 0.0
    %821 = vmatpush2.msra.mxu0 0.0
    %822 = vmatprep.subr.mxu0 0.0
    %823 = vmatpush2.msra.mxu0 0.0
    %824 = vmatprep.subr.mxu0 0.0
    %825 = vmatpush2.msra.mxu0 0.0
    %826 = vmatprep.subr.mxu0 0.0
    %827 = vmatpush2.msra.mxu0 0.0
    %828 = vmatprep.subr.mxu0 0.0
    %829 = vmatpush2.msra.mxu0 0.0
    %830 = vmatprep.subr.mxu0 0.0
    %831 = vmatpush2.msra.mxu0 0.0
    %832 = vmatprep.subr.mxu0 0.0
    %833 = vmatpush2.msra.mxu0 0.0
    %834 = vmatprep.subr.mxu0 0.0
    %835 = vmatpush2.msra.mxu0 0.0
    %836 = vmatprep.subr.mxu0 0.0
    %837 = vmatpush2.msra.mxu0 0.0
    %838 = vmatprep.subr.mxu0 0.0
    %839 = vmatpush2.msra.mxu0 0.0
    %840 = vmatprep.subr.mxu0 0.0
    %841 = vmatpush2.msra.mxu0 0.0
    %842 = vmatprep.subr.mxu0 0.0
    %843 = vmatpush2.msra.mxu0 0.0
    %844 = vmatprep.subr.mxu0 0.0
    %845 = vmatpush2.msra.mxu0 0.0
    %846 = vmatprep.mubr.f32.mxu0 0.0
    %v847 = vand.u32 %v767, 4294901760
    %v848 = vsub.f32 %v767, %v847
    %v849 = vand.u32 %v848, 4294901760
    %v850 = vsub.f32 %v848, %v849
    %v851 = vand.u32 %v850, 4294901760
    %852 = vmatmul.mubr.f32.gmra.mxu0 %v851
    %v853 = vpop.f32.mrf.mxu0
    %v854 = vadd.f32 %v745, %v853
    %v855 = vpop.f32.mrf.mxu0
    %856 = vmatprep.mubr.f32.mxu0 0.0
    %v857 = vand.u32 %v770, 4294901760
    %v858 = vsub.f32 %v770, %v857
    %v859 = vand.u32 %v858, 4294901760
    %v860 = vsub.f32 %v858, %v859
    %v861 = vand.u32 %v860, 4294901760
    %862 = vmatmul.mubr.f32.gmra.mxu0 %v861
    %v863 = vpop.f32.mrf.mxu0
    %v864 = vadd.f32 %v751, %v863
    %v865 = vpop.f32.mrf.mxu0
    %866 = vmatprep.mubr.f32.mxu0 0.0
    %v867 = vand.u32 %v773, 4294901760
    %v868 = vsub.f32 %v773, %v867
    %v869 = vand.u32 %v868, 4294901760
    %v870 = vsub.f32 %v868, %v869
    %v871 = vand.u32 %v870, 4294901760
    %872 = vmatmul.mubr.f32.gmra.mxu0 %v871
    %v873 = vpop.f32.mrf.mxu0
    %v874 = vadd.f32 %v757, %v873
    %v875 = vpop.f32.mrf.mxu0
    %876 = vmatprep.mubr.f32.mxu0 0.0
    %v877 = vand.u32 %v776, 4294901760
    %v878 = vsub.f32 %v776, %v877
    %v879 = vand.u32 %v878, 4294901760
    %v880 = vsub.f32 %v878, %v879
    %v881 = vand.u32 %v880, 4294901760
    %882 = vmatmul.mubr.f32.gmra.mxu0 %v881
    %v883 = vpop.f32.mrf.mxu0
    %v884 = vadd.f32 %v763, %v883
    %v885 = vpop.f32.mrf.mxu0
    %886 = vdwg.mxu0
    %887 = vmatprep.subr.mxu0 0.0
    %888 = vmatpush1.msra.mxu0 0.0
    %889 = vmatprep.subr.mxu0 0.0
    %890 = vmatpush1.msra.mxu0 0.0
    %891 = vmatprep.subr.mxu0 0.0
    %892 = vmatpush1.msra.mxu0 0.0
    %893 = vmatprep.subr.mxu0 0.0
    %894 = vmatpush1.msra.mxu0 0.0
    %895 = vmatprep.subr.mxu0 0.0
    %896 = vmatpush1.msra.mxu0 0.0
    %897 = vmatprep.subr.mxu0 0.0
    %898 = vmatpush1.msra.mxu0 0.0
    %899 = vmatprep.subr.mxu0 0.0
    %900 = vmatpush1.msra.mxu0 0.0
    %901 = vmatprep.subr.mxu0 0.0
    %902 = vmatpush1.msra.mxu0 0.0
    %903 = vmatprep.subr.mxu0 0.0
    %904 = vmatpush1.msra.mxu0 0.0
    %905 = vmatprep.subr.mxu0 0.0
    %906 = vmatpush1.msra.mxu0 0.0
    %907 = vmatprep.subr.mxu0 0.0
    %908 = vmatpush1.msra.mxu0 0.0
    %909 = vmatprep.subr.mxu0 0.0
    %910 = vmatpush1.msra.mxu0 0.0
    %911 = vmatprep.subr.mxu0 0.0
    %v912 = vand.u32 %v134, 4294901760
    %v913 = vsub.f32 %v134, %v912
    %v914 = vand.u32 %v913, 4294901760
    %v915 = vsub.f32 %v913, %v914
    %v916 = vand.u32 %v915, 4294901760
    %917 = vmatpush1.msra.mxu0 %v916
    %918 = vmatprep.subr.mxu0 0.0
    %v919 = vand.u32 %v133, 4294901760
    %v920 = vsub.f32 %v133, %v919
    %v921 = vand.u32 %v920, 4294901760
    %v922 = vsub.f32 %v920, %v921
    %v923 = vand.u32 %v922, 4294901760
    %924 = vmatpush1.msra.mxu0 %v923
    %925 = vmatprep.subr.mxu0 0.0
    %v926 = vand.u32 %v132, 4294901760
    %v927 = vsub.f32 %v132, %v926
    %v928 = vand.u32 %v927, 4294901760
    %v929 = vsub.f32 %v927, %v928
    %v930 = vand.u32 %v929, 4294901760
    %931 = vmatpush1.msra.mxu0 %v930
    %932 = vmatprep.subr.mxu0 0.0
    %v933 = vand.u32 %v131, 4294901760
    %v934 = vsub.f32 %v131, %v933
    %v935 = vand.u32 %v934, 4294901760
    %v936 = vsub.f32 %v934, %v935
    %v937 = vand.u32 %v936, 4294901760
    %938 = vmatpush1.msra.mxu0 %v937
    %939 = vmatprep.subr.mxu0 0.0
    %940 = vmatpush2.msra.mxu0 0.0
    %941 = vmatprep.subr.mxu0 0.0
    %942 = vmatpush2.msra.mxu0 0.0
    %943 = vmatprep.subr.mxu0 0.0
    %944 = vmatpush2.msra.mxu0 0.0
    %945 = vmatprep.subr.mxu0 0.0
    %946 = vmatpush2.msra.mxu0 0.0
    %947 = vmatprep.subr.mxu0 0.0
    %948 = vmatpush2.msra.mxu0 0.0
    %949 = vmatprep.subr.mxu0 0.0
    %950 = vmatpush2.msra.mxu0 0.0
    %951 = vmatprep.subr.mxu0 0.0
    %952 = vmatpush2.msra.mxu0 0.0
    %953 = vmatprep.subr.mxu0 0.0
    %954 = vmatpush2.msra.mxu0 0.0
    %955 = vmatprep.subr.mxu0 0.0
    %956 = vmatpush2.msra.mxu0 0.0
    %957 = vmatprep.subr.mxu0 0.0
    %958 = vmatpush2.msra.mxu0 0.0
    %959 = vmatprep.subr.mxu0 0.0
    %960 = vmatpush2.msra.mxu0 0.0
    %961 = vmatprep.subr.mxu0 0.0
    %962 = vmatpush2.msra.mxu0 0.0
    %963 = vmatprep.subr.mxu0 0.0
    %964 = vmatpush2.msra.mxu0 0.0
    %965 = vmatprep.subr.mxu0 0.0
    %966 = vmatpush2.msra.mxu0 0.0
    %967 = vmatprep.subr.mxu0 0.0
    %968 = vmatpush2.msra.mxu0 0.0
    %969 = vmatprep.subr.mxu0 0.0
    %970 = vmatpush2.msra.mxu0 0.0
    %971 = vmatprep.mubr.f32.mxu0 0.0
    %v972 = vand.u32 %v767, 4294901760
    %973 = vmatmul.mubr.f32.gmra.mxu0 %v972
    %v974 = vpop.f32.mrf.mxu0
    %v975 = vadd.f32 %v854, %v974
    %v976 = vpop.f32.mrf.mxu0
    %977 = vmatprep.mubr.f32.mxu0 0.0
    %v978 = vand.u32 %v770, 4294901760
    %979 = vmatmul.mubr.f32.gmra.mxu0 %v978
    %v980 = vpop.f32.mrf.mxu0
    %v981 = vadd.f32 %v864, %v980
    %v982 = vpop.f32.mrf.mxu0
    %983 = vmatprep.mubr.f32.mxu0 0.0
    %v984 = vand.u32 %v773, 4294901760
    %985 = vmatmul.mubr.f32.gmra.mxu0 %v984
    %v986 = vpop.f32.mrf.mxu0
    %v987 = vadd.f32 %v874, %v986
    %v988 = vpop.f32.mrf.mxu0
    %989 = vmatprep.mubr.f32.mxu0 0.0
    %v990 = vand.u32 %v776, 4294901760
    %991 = vmatmul.mubr.f32.gmra.mxu0 %v990
    %v992 = vpop.f32.mrf.mxu0
    %v993 = vadd.f32 %v884, %v992
    %v994 = vpop.f32.mrf.mxu0
    %995 = vdwg.mxu0
    %996 = vmatprep.subr.mxu0 0.0
    %997 = vmatpush1.msra.mxu0 0.0
    %998 = vmatprep.subr.mxu0 0.0
    %999 = vmatpush1.msra.mxu0 0.0
    %1000 = vmatprep.subr.mxu0 0.0
    %1001 = vmatpush1.msra.mxu0 0.0
    %1002 = vmatprep.subr.mxu0 0.0
    %1003 = vmatpush1.msra.mxu0 0.0
    %1004 = vmatprep.subr.mxu0 0.0
    %1005 = vmatpush1.msra.mxu0 0.0
    %1006 = vmatprep.subr.mxu0 0.0
    %1007 = vmatpush1.msra.mxu0 0.0
    %1008 = vmatprep.subr.mxu0 0.0
    %1009 = vmatpush1.msra.mxu0 0.0
    %1010 = vmatprep.subr.mxu0 0.0
    %1011 = vmatpush1.msra.mxu0 0.0
    %1012 = vmatprep.subr.mxu0 0.0
    %1013 = vmatpush1.msra.mxu0 0.0
    %1014 = vmatprep.subr.mxu0 0.0
    %1015 = vmatpush1.msra.mxu0 0.0
    %1016 = vmatprep.subr.mxu0 0.0
    %1017 = vmatpush1.msra.mxu0 0.0
    %1018 = vmatprep.subr.mxu0 0.0
    %1019 = vmatpush1.msra.mxu0 0.0
    %1020 = vmatprep.subr.mxu0 0.0
    %v1021 = vand.u32 %v134, 4294901760
    %v1022 = vsub.f32 %v134, %v1021
    %1023 = vmatpush1.msra.mxu0 %v1022
    %1024 = vmatprep.subr.mxu0 0.0
    %v1025 = vand.u32 %v133, 4294901760
    %v1026 = vsub.f32 %v133, %v1025
    %1027 = vmatpush1.msra.mxu0 %v1026
    %1028 = vmatprep.subr.mxu0 0.0
    %v1029 = vand.u32 %v132, 4294901760
    %v1030 = vsub.f32 %v132, %v1029
    %1031 = vmatpush1.msra.mxu0 %v1030
    %1032 = vmatprep.subr.mxu0 0.0
    %v1033 = vand.u32 %v131, 4294901760
    %v1034 = vsub.f32 %v131, %v1033
    %1035 = vmatpush1.msra.mxu0 %v1034
    %1036 = vmatprep.subr.mxu0 0.0
    %1037 = vmatpush2.msra.mxu0 0.0
    %1038 = vmatprep.subr.mxu0 0.0
    %1039 = vmatpush2.msra.mxu0 0.0
    %1040 = vmatprep.subr.mxu0 0.0
    %1041 = vmatpush2.msra.mxu0 0.0
    %1042 = vmatprep.subr.mxu0 0.0
    %1043 = vmatpush2.msra.mxu0 0.0
    %1044 = vmatprep.subr.mxu0 0.0
    %1045 = vmatpush2.msra.mxu0 0.0
    %1046 = vmatprep.subr.mxu0 0.0
    %1047 = vmatpush2.msra.mxu0 0.0
    %1048 = vmatprep.subr.mxu0 0.0
    %1049 = vmatpush2.msra.mxu0 0.0
    %1050 = vmatprep.subr.mxu0 0.0
    %1051 = vmatpush2.msra.mxu0 0.0
    %1052 = vmatprep.subr.mxu0 0.0
    %1053 = vmatpush2.msra.mxu0 0.0
    %1054 = vmatprep.subr.mxu0 0.0
    %1055 = vmatpush2.msra.mxu0 0.0
    %1056 = vmatprep.subr.mxu0 0.0
    %1057 = vmatpush2.msra.mxu0 0.0
    %1058 = vmatprep.subr.mxu0 0.0
    %1059 = vmatpush2.msra.mxu0 0.0
    %1060 = vmatprep.subr.mxu0 0.0
    %1061 = vmatpush2.msra.mxu0 0.0
    %1062 = vmatprep.subr.mxu0 0.0
    %1063 = vmatpush2.msra.mxu0 0.0
    %1064 = vmatprep.subr.mxu0 0.0
    %1065 = vmatpush2.msra.mxu0 0.0
    %1066 = vmatprep.subr.mxu0 0.0
    %1067 = vmatpush2.msra.mxu0 0.0
    %1068 = vmatprep.mubr.f32.mxu0 0.0
    %v1069 = vand.u32 %v767, 4294901760
    %v1070 = vsub.f32 %v767, %v1069
    %1071 = vmatmul.mubr.f32.gmra.mxu0 %v1070
    %v1072 = vpop.f32.mrf.mxu0
    %v1073 = vadd.f32 %v975, %v1072
    %v1074 = vpop.f32.mrf.mxu0
    %1075 = vmatprep.mubr.f32.mxu0 0.0
    %v1076 = vand.u32 %v770, 4294901760
    %v1077 = vsub.f32 %v770, %v1076
    %1078 = vmatmul.mubr.f32.gmra.mxu0 %v1077
    %v1079 = vpop.f32.mrf.mxu0
    %v1080 = vadd.f32 %v981, %v1079
    %v1081 = vpop.f32.mrf.mxu0
    %1082 = vmatprep.mubr.f32.mxu0 0.0
    %v1083 = vand.u32 %v773, 4294901760
    %v1084 = vsub.f32 %v773, %v1083
    %1085 = vmatmul.mubr.f32.gmra.mxu0 %v1084
    %v1086 = vpop.f32.mrf.mxu0
    %v1087 = vadd.f32 %v987, %v1086
    %v1088 = vpop.f32.mrf.mxu0
    %1089 = vmatprep.mubr.f32.mxu0 0.0
    %v1090 = vand.u32 %v776, 4294901760
    %v1091 = vsub.f32 %v776, %v1090
    %1092 = vmatmul.mubr.f32.gmra.mxu0 %v1091
    %v1093 = vpop.f32.mrf.mxu0
    %v1094 = vadd.f32 %v993, %v1093
    %v1095 = vpop.f32.mrf.mxu0
    %1096 = vdwg.mxu0
    %1097 = vmatprep.subr.mxu0 0.0
    %1098 = vmatpush1.msra.mxu0 0.0
    %1099 = vmatprep.subr.mxu0 0.0
    %1100 = vmatpush1.msra.mxu0 0.0
    %1101 = vmatprep.subr.mxu0 0.0
    %1102 = vmatpush1.msra.mxu0 0.0
    %1103 = vmatprep.subr.mxu0 0.0
    %1104 = vmatpush1.msra.mxu0 0.0
    %1105 = vmatprep.subr.mxu0 0.0
    %1106 = vmatpush1.msra.mxu0 0.0
    %1107 = vmatprep.subr.mxu0 0.0
    %1108 = vmatpush1.msra.mxu0 0.0
    %1109 = vmatprep.subr.mxu0 0.0
    %1110 = vmatpush1.msra.mxu0 0.0
    %1111 = vmatprep.subr.mxu0 0.0
    %1112 = vmatpush1.msra.mxu0 0.0
    %1113 = vmatprep.subr.mxu0 0.0
    %1114 = vmatpush1.msra.mxu0 0.0
    %1115 = vmatprep.subr.mxu0 0.0
    %1116 = vmatpush1.msra.mxu0 0.0
    %1117 = vmatprep.subr.mxu0 0.0
    %1118 = vmatpush1.msra.mxu0 0.0
    %1119 = vmatprep.subr.mxu0 0.0
    %1120 = vmatpush1.msra.mxu0 0.0
    %1121 = vmatprep.subr.mxu0 0.0
    %v1122 = vand.u32 %v134, 4294901760
    %1123 = vmatpush1.msra.mxu0 %v1122
    %1124 = vmatprep.subr.mxu0 0.0
    %v1125 = vand.u32 %v133, 4294901760
    %1126 = vmatpush1.msra.mxu0 %v1125
    %1127 = vmatprep.subr.mxu0 0.0
    %v1128 = vand.u32 %v132, 4294901760
    %1129 = vmatpush1.msra.mxu0 %v1128
    %1130 = vmatprep.subr.mxu0 0.0
    %v1131 = vand.u32 %v131, 4294901760
    %1132 = vmatpush1.msra.mxu0 %v1131
    %1133 = vmatprep.subr.mxu0 0.0
    %1134 = vmatpush2.msra.mxu0 0.0
    %1135 = vmatprep.subr.mxu0 0.0
    %1136 = vmatpush2.msra.mxu0 0.0
    %1137 = vmatprep.subr.mxu0 0.0
    %1138 = vmatpush2.msra.mxu0 0.0
    %1139 = vmatprep.subr.mxu0 0.0
    %1140 = vmatpush2.msra.mxu0 0.0
    %1141 = vmatprep.subr.mxu0 0.0
    %1142 = vmatpush2.msra.mxu0 0.0
    %1143 = vmatprep.subr.mxu0 0.0
    %1144 = vmatpush2.msra.mxu0 0.0
    %1145 = vmatprep.subr.mxu0 0.0
    %1146 = vmatpush2.msra.mxu0 0.0
    %1147 = vmatprep.subr.mxu0 0.0
    %1148 = vmatpush2.msra.mxu0 0.0
    %1149 = vmatprep.subr.mxu0 0.0
    %1150 = vmatpush2.msra.mxu0 0.0
    %1151 = vmatprep.subr.mxu0 0.0
    %1152 = vmatpush2.msra.mxu0 0.0
    %1153 = vmatprep.subr.mxu0 0.0
    %1154 = vmatpush2.msra.mxu0 0.0
    %1155 = vmatprep.subr.mxu0 0.0
    %1156 = vmatpush2.msra.mxu0 0.0
    %1157 = vmatprep.subr.mxu0 0.0
    %1158 = vmatpush2.msra.mxu0 0.0
    %1159 = vmatprep.subr.mxu0 0.0
    %1160 = vmatpush2.msra.mxu0 0.0
    %1161 = vmatprep.subr.mxu0 0.0
    %1162 = vmatpush2.msra.mxu0 0.0
    %1163 = vmatprep.subr.mxu0 0.0
    %1164 = vmatpush2.msra.mxu0 0.0
    %1165 = vmatprep.mubr.f32.mxu0 0.0
    %v1166 = vand.u32 %v767, 4294901760
    %v1167 = vsub.f32 %v767, %v1166
    %v1168 = vand.u32 %v1167, 4294901760
    %1169 = vmatmul.mubr.f32.gmra.mxu0 %v1168
    %v1170 = vpop.f32.mrf.mxu0
    %v1171 = vadd.f32 %v1073, %v1170
    %v1172 = vpop.f32.mrf.mxu0
    %1173 = vmatprep.mubr.f32.mxu0 0.0
    %v1174 = vand.u32 %v770, 4294901760
    %v1175 = vsub.f32 %v770, %v1174
    %v1176 = vand.u32 %v1175, 4294901760
    %1177 = vmatmul.mubr.f32.gmra.mxu0 %v1176
    %v1178 = vpop.f32.mrf.mxu0
    %v1179 = vadd.f32 %v1080, %v1178
    %v1180 = vpop.f32.mrf.mxu0
    %1181 = vmatprep.mubr.f32.mxu0 0.0
    %v1182 = vand.u32 %v773, 4294901760
    %v1183 = vsub.f32 %v773, %v1182
    %v1184 = vand.u32 %v1183, 4294901760
    %1185 = vmatmul.mubr.f32.gmra.mxu0 %v1184
    %v1186 = vpop.f32.mrf.mxu0
    %v1187 = vadd.f32 %v1087, %v1186
    %v1188 = vpop.f32.mrf.mxu0
    %1189 = vmatprep.mubr.f32.mxu0 0.0
    %v1190 = vand.u32 %v776, 4294901760
    %v1191 = vsub.f32 %v776, %v1190
    %v1192 = vand.u32 %v1191, 4294901760
    %1193 = vmatmul.mubr.f32.gmra.mxu0 %v1192
    %v1194 = vpop.f32.mrf.mxu0
    %v1195 = vadd.f32 %v1094, %v1194
    %v1196 = vpop.f32.mrf.mxu0
    %1197 = vdwg.mxu0
    %1198 = vmatprep.subr.mxu0 0.0
    %1199 = vmatpush1.msra.mxu0 0.0
    %1200 = vmatprep.subr.mxu0 0.0
    %1201 = vmatpush1.msra.mxu0 0.0
    %1202 = vmatprep.subr.mxu0 0.0
    %1203 = vmatpush1.msra.mxu0 0.0
    %1204 = vmatprep.subr.mxu0 0.0
    %1205 = vmatpush1.msra.mxu0 0.0
    %1206 = vmatprep.subr.mxu0 0.0
    %1207 = vmatpush1.msra.mxu0 0.0
    %1208 = vmatprep.subr.mxu0 0.0
    %1209 = vmatpush1.msra.mxu0 0.0
    %1210 = vmatprep.subr.mxu0 0.0
    %1211 = vmatpush1.msra.mxu0 0.0
    %1212 = vmatprep.subr.mxu0 0.0
    %1213 = vmatpush1.msra.mxu0 0.0
    %1214 = vmatprep.subr.mxu0 0.0
    %1215 = vmatpush1.msra.mxu0 0.0
    %1216 = vmatprep.subr.mxu0 0.0
    %1217 = vmatpush1.msra.mxu0 0.0
    %1218 = vmatprep.subr.mxu0 0.0
    %1219 = vmatpush1.msra.mxu0 0.0
    %1220 = vmatprep.subr.mxu0 0.0
    %1221 = vmatpush1.msra.mxu0 0.0
    %1222 = vmatprep.subr.mxu0 0.0
    %v1223 = vand.u32 %v134, 4294901760
    %v1224 = vsub.f32 %v134, %v1223
    %v1225 = vand.u32 %v1224, 4294901760
    %1226 = vmatpush1.msra.mxu0 %v1225
    %1227 = vmatprep.subr.mxu0 0.0
    %v1228 = vand.u32 %v133, 4294901760
    %v1229 = vsub.f32 %v133, %v1228
    %v1230 = vand.u32 %v1229, 4294901760
    %1231 = vmatpush1.msra.mxu0 %v1230
    %1232 = vmatprep.subr.mxu0 0.0
    %v1233 = vand.u32 %v132, 4294901760
    %v1234 = vsub.f32 %v132, %v1233
    %v1235 = vand.u32 %v1234, 4294901760
    %1236 = vmatpush1.msra.mxu0 %v1235
    %1237 = vmatprep.subr.mxu0 0.0
    %v1238 = vand.u32 %v131, 4294901760
    %v1239 = vsub.f32 %v131, %v1238
    %v1240 = vand.u32 %v1239, 4294901760
    %1241 = vmatpush1.msra.mxu0 %v1240
    %1242 = vmatprep.subr.mxu0 0.0
    %1243 = vmatpush2.msra.mxu0 0.0
    %1244 = vmatprep.subr.mxu0 0.0
    %1245 = vmatpush2.msra.mxu0 0.0
    %1246 = vmatprep.subr.mxu0 0.0
    %1247 = vmatpush2.msra.mxu0 0.0
    %1248 = vmatprep.subr.mxu0 0.0
    %1249 = vmatpush2.msra.mxu0 0.0
    %1250 = vmatprep.subr.mxu0 0.0
    %1251 = vmatpush2.msra.mxu0 0.0
    %1252 = vmatprep.subr.mxu0 0.0
    %1253 = vmatpush2.msra.mxu0 0.0
    %1254 = vmatprep.subr.mxu0 0.0
    %1255 = vmatpush2.msra.mxu0 0.0
    %1256 = vmatprep.subr.mxu0 0.0
    %1257 = vmatpush2.msra.mxu0 0.0
    %1258 = vmatprep.subr.mxu0 0.0
    %1259 = vmatpush2.msra.mxu0 0.0
    %1260 = vmatprep.subr.mxu0 0.0
    %1261 = vmatpush2.msra.mxu0 0.0
    %1262 = vmatprep.subr.mxu0 0.0
    %1263 = vmatpush2.msra.mxu0 0.0
    %1264 = vmatprep.subr.mxu0 0.0
    %1265 = vmatpush2.msra.mxu0 0.0
    %1266 = vmatprep.subr.mxu0 0.0
    %1267 = vmatpush2.msra.mxu0 0.0
    %1268 = vmatprep.subr.mxu0 0.0
    %1269 = vmatpush2.msra.mxu0 0.0
    %1270 = vmatprep.subr.mxu0 0.0
    %1271 = vmatpush2.msra.mxu0 0.0
    %1272 = vmatprep.subr.mxu0 0.0
    %1273 = vmatpush2.msra.mxu0 0.0
    %1274 = vmatprep.mubr.f32.mxu0 0.0
    %v1275 = vand.u32 %v767, 4294901760
    %1276 = vmatmul.mubr.f32.gmra.mxu0 %v1275
    %v1277 = vpop.f32.mrf.mxu0
    %v1278 = vadd.f32 %v1171, %v1277
    %v1279 = vpop.f32.mrf.mxu0
    %1280 = vmatprep.mubr.f32.mxu0 0.0
    %v1281 = vand.u32 %v770, 4294901760
    %1282 = vmatmul.mubr.f32.gmra.mxu0 %v1281
    %v1283 = vpop.f32.mrf.mxu0
    %v1284 = vadd.f32 %v1179, %v1283
    %v1285 = vpop.f32.mrf.mxu0
    %1286 = vmatprep.mubr.f32.mxu0 0.0
    %v1287 = vand.u32 %v773, 4294901760
    %1288 = vmatmul.mubr.f32.gmra.mxu0 %v1287
    %v1289 = vpop.f32.mrf.mxu0
    %v1290 = vadd.f32 %v1187, %v1289
    %v1291 = vpop.f32.mrf.mxu0
    %1292 = vmatprep.mubr.f32.mxu0 0.0
    %v1293 = vand.u32 %v776, 4294901760
    %1294 = vmatmul.mubr.f32.gmra.mxu0 %v1293
    %v1295 = vpop.f32.mrf.mxu0
    %v1296 = vadd.f32 %v1195, %v1295
    %v1297 = vpop.f32.mrf.mxu0
    %1298 = vdwg.mxu0
    %1299 = vmatprep.subr.mxu0 0.0
    %1300 = vmatpush1.msra.mxu0 0.0
    %1301 = vmatprep.subr.mxu0 0.0
    %1302 = vmatpush1.msra.mxu0 0.0
    %1303 = vmatprep.subr.mxu0 0.0
    %1304 = vmatpush1.msra.mxu0 0.0
    %1305 = vmatprep.subr.mxu0 0.0
    %1306 = vmatpush1.msra.mxu0 0.0
    %1307 = vmatprep.subr.mxu0 0.0
    %1308 = vmatpush1.msra.mxu0 0.0
    %1309 = vmatprep.subr.mxu0 0.0
    %1310 = vmatpush1.msra.mxu0 0.0
    %1311 = vmatprep.subr.mxu0 0.0
    %1312 = vmatpush1.msra.mxu0 0.0
    %1313 = vmatprep.subr.mxu0 0.0
    %1314 = vmatpush1.msra.mxu0 0.0
    %1315 = vmatprep.subr.mxu0 0.0
    %1316 = vmatpush1.msra.mxu0 0.0
    %1317 = vmatprep.subr.mxu0 0.0
    %1318 = vmatpush1.msra.mxu0 0.0
    %1319 = vmatprep.subr.mxu0 0.0
    %1320 = vmatpush1.msra.mxu0 0.0
    %1321 = vmatprep.subr.mxu0 0.0
    %1322 = vmatpush1.msra.mxu0 0.0
    %1323 = vmatprep.subr.mxu0 0.0
    %v1324 = vand.u32 %v134, 4294901760
    %1325 = vmatpush1.msra.mxu0 %v1324
    %1326 = vmatprep.subr.mxu0 0.0
    %v1327 = vand.u32 %v133, 4294901760
    %1328 = vmatpush1.msra.mxu0 %v1327
    %1329 = vmatprep.subr.mxu0 0.0
    %v1330 = vand.u32 %v132, 4294901760
    %1331 = vmatpush1.msra.mxu0 %v1330
    %1332 = vmatprep.subr.mxu0 0.0
    %v1333 = vand.u32 %v131, 4294901760
    %1334 = vmatpush1.msra.mxu0 %v1333
    %1335 = vmatprep.subr.mxu0 0.0
    %1336 = vmatpush2.msra.mxu0 0.0
    %1337 = vmatprep.subr.mxu0 0.0
    %1338 = vmatpush2.msra.mxu0 0.0
    %1339 = vmatprep.subr.mxu0 0.0
    %1340 = vmatpush2.msra.mxu0 0.0
    %1341 = vmatprep.subr.mxu0 0.0
    %1342 = vmatpush2.msra.mxu0 0.0
    %1343 = vmatprep.subr.mxu0 0.0
    %1344 = vmatpush2.msra.mxu0 0.0
    %1345 = vmatprep.subr.mxu0 0.0
    %1346 = vmatpush2.msra.mxu0 0.0
    %1347 = vmatprep.subr.mxu0 0.0
    %1348 = vmatpush2.msra.mxu0 0.0
    %1349 = vmatprep.subr.mxu0 0.0
    %1350 = vmatpush2.msra.mxu0 0.0
    %1351 = vmatprep.subr.mxu0 0.0
    %1352 = vmatpush2.msra.mxu0 0.0
    %1353 = vmatprep.subr.mxu0 0.0
    %1354 = vmatpush2.msra.mxu0 0.0
    %1355 = vmatprep.subr.mxu0 0.0
    %1356 = vmatpush2.msra.mxu0 0.0
    %1357 = vmatprep.subr.mxu0 0.0
    %1358 = vmatpush2.msra.mxu0 0.0
    %1359 = vmatprep.subr.mxu0 0.0
    %1360 = vmatpush2.msra.mxu0 0.0
    %1361 = vmatprep.subr.mxu0 0.0
    %1362 = vmatpush2.msra.mxu0 0.0
    %1363 = vmatprep.subr.mxu0 0.0
    %1364 = vmatpush2.msra.mxu0 0.0
    %1365 = vmatprep.subr.mxu0 0.0
    %1366 = vmatpush2.msra.mxu0 0.0
    %1367 = vmatprep.mubr.f32.mxu0 0.0
    %v1368 = vand.u32 %v767, 4294901760
    %1369 = vmatmul.mubr.f32.gmra.mxu0 %v1368
    %v1370 = vpop.f32.mrf.mxu0
    %v1371 = vadd.f32 %v1278, %v1370
    %v1372 = vpop.f32.mrf.mxu0
    %1373 = vmatprep.mubr.f32.mxu0 0.0
    %v1374 = vand.u32 %v770, 4294901760
    %1375 = vmatmul.mubr.f32.gmra.mxu0 %v1374
    %v1376 = vpop.f32.mrf.mxu0
    %v1377 = vadd.f32 %v1284, %v1376
    %v1378 = vpop.f32.mrf.mxu0
    %1379 = vmatprep.mubr.f32.mxu0 0.0
    %v1380 = vand.u32 %v773, 4294901760
    %1381 = vmatmul.mubr.f32.gmra.mxu0 %v1380
    %v1382 = vpop.f32.mrf.mxu0
    %v1383 = vadd.f32 %v1290, %v1382
    %v1384 = vpop.f32.mrf.mxu0
    %1385 = vmatprep.mubr.f32.mxu0 0.0
    %v1386 = vand.u32 %v776, 4294901760
    %1387 = vmatmul.mubr.f32.gmra.mxu0 %v1386
    %v1388 = vpop.f32.mrf.mxu0
    %v1389 = vadd.f32 %v1296, %v1388
    %v1390 = vpop.f32.mrf.mxu0
    %1391 = vdwg.mxu0
    %v1392 = vld [vmem:[%s1 + $0x40] sm:$0xff]
    %v1393 = vld [vmem:[%s1 + $0x48] sm:$0xff]
    %v1394 = vld [vmem:[%s1 + $0x50] sm:$0xff]
    %v1395 = vld [vmem:[%s1 + $0x58] sm:$0xff]
    %v1397 = vsel %vm139, %v127, 0
    %v1400 = vsel %vm139, %v128, 0
    %v1403 = vsel %vm139, %v129, 0
    %v1406 = vsel %vm139, %v130, 0
    %1408 = vmatprep.subr.mxu0 0.0
    %1409 = vmatpush1.msra.mxu0 0.0
    %1410 = vmatprep.subr.mxu0 0.0
    %1411 = vmatpush1.msra.mxu0 0.0
    %1412 = vmatprep.subr.mxu0 0.0
    %1413 = vmatpush1.msra.mxu0 0.0
    %1414 = vmatprep.subr.mxu0 0.0
    %1415 = vmatpush1.msra.mxu0 0.0
    %1416 = vmatprep.subr.mxu0 0.0
    %1417 = vmatpush1.msra.mxu0 0.0
    %1418 = vmatprep.subr.mxu0 0.0
    %1419 = vmatpush1.msra.mxu0 0.0
    %1420 = vmatprep.subr.mxu0 0.0
    %1421 = vmatpush1.msra.mxu0 0.0
    %1422 = vmatprep.subr.mxu0 0.0
    %1423 = vmatpush1.msra.mxu0 0.0
    %1424 = vmatprep.subr.mxu0 0.0
    %1425 = vmatpush1.msra.mxu0 0.0
    %1426 = vmatprep.subr.mxu0 0.0
    %1427 = vmatpush1.msra.mxu0 0.0
    %1428 = vmatprep.subr.mxu0 0.0
    %1429 = vmatpush1.msra.mxu0 0.0
    %1430 = vmatprep.subr.mxu0 0.0
    %1431 = vmatpush1.msra.mxu0 0.0
    %1432 = vmatprep.subr.mxu0 0.0
    %v1433 = vand.u32 %v1395, 4294901760
    %1434 = vmatpush1.msra.mxu0 %v1433
    %1435 = vmatprep.subr.mxu0 0.0
    %v1436 = vand.u32 %v1394, 4294901760
    %1437 = vmatpush1.msra.mxu0 %v1436
    %1438 = vmatprep.subr.mxu0 0.0
    %v1439 = vand.u32 %v1393, 4294901760
    %1440 = vmatpush1.msra.mxu0 %v1439
    %1441 = vmatprep.subr.mxu0 0.0
    %v1442 = vand.u32 %v1392, 4294901760
    %1443 = vmatpush1.msra.mxu0 %v1442
    %1444 = vmatprep.subr.mxu0 0.0
    %1445 = vmatpush2.msra.mxu0 0.0
    %1446 = vmatprep.subr.mxu0 0.0
    %1447 = vmatpush2.msra.mxu0 0.0
    %1448 = vmatprep.subr.mxu0 0.0
    %1449 = vmatpush2.msra.mxu0 0.0
    %1450 = vmatprep.subr.mxu0 0.0
    %1451 = vmatpush2.msra.mxu0 0.0
    %1452 = vmatprep.subr.mxu0 0.0
    %1453 = vmatpush2.msra.mxu0 0.0
    %1454 = vmatprep.subr.mxu0 0.0
    %1455 = vmatpush2.msra.mxu0 0.0
    %1456 = vmatprep.subr.mxu0 0.0
    %1457 = vmatpush2.msra.mxu0 0.0
    %1458 = vmatprep.subr.mxu0 0.0
    %1459 = vmatpush2.msra.mxu0 0.0
    %1460 = vmatprep.subr.mxu0 0.0
    %1461 = vmatpush2.msra.mxu0 0.0
    %1462 = vmatprep.subr.mxu0 0.0
    %1463 = vmatpush2.msra.mxu0 0.0
    %1464 = vmatprep.subr.mxu0 0.0
    %1465 = vmatpush2.msra.mxu0 0.0
    %1466 = vmatprep.subr.mxu0 0.0
    %1467 = vmatpush2.msra.mxu0 0.0
    %1468 = vmatprep.subr.mxu0 0.0
    %1469 = vmatpush2.msra.mxu0 0.0
    %1470 = vmatprep.subr.mxu0 0.0
    %1471 = vmatpush2.msra.mxu0 0.0
    %1472 = vmatprep.subr.mxu0 0.0
    %1473 = vmatpush2.msra.mxu0 0.0
    %1474 = vmatprep.subr.mxu0 0.0
    %1475 = vmatpush2.msra.mxu0 0.0
    %1476 = vmatprep.mubr.f32.mxu0 0.0
    %v1477 = vand.u32 %v1397, 4294901760
    %v1478 = vsub.f32 %v1397, %v1477
    %v1479 = vand.u32 %v1478, 4294901760
    %v1480 = vsub.f32 %v1478, %v1479
    %v1481 = vand.u32 %v1480, 4294901760
    %1482 = vmatmul.mubr.f32.gmra.mxu0 %v1481
    %v1483 = vpop.f32.mrf.mxu0
    %v1484 = vadd.f32 0.0, %v1483
    %v1485 = vpop.f32.mrf.mxu0
    %1486 = vmatprep.mubr.f32.mxu0 0.0
    %v1487 = vand.u32 %v1400, 4294901760
    %v1488 = vsub.f32 %v1400, %v1487
    %v1489 = vand.u32 %v1488, 4294901760
    %v1490 = vsub.f32 %v1488, %v1489
    %v1491 = vand.u32 %v1490, 4294901760
    %1492 = vmatmul.mubr.f32.gmra.mxu0 %v1491
    %v1493 = vpop.f32.mrf.mxu0
    %v1494 = vadd.f32 0.0, %v1493
    %v1495 = vpop.f32.mrf.mxu0
    %1496 = vmatprep.mubr.f32.mxu0 0.0
    %v1497 = vand.u32 %v1403, 4294901760
    %v1498 = vsub.f32 %v1403, %v1497
    %v1499 = vand.u32 %v1498, 4294901760
    %v1500 = vsub.f32 %v1498, %v1499
    %v1501 = vand.u32 %v1500, 4294901760
    %1502 = vmatmul.mubr.f32.gmra.mxu0 %v1501
    %v1503 = vpop.f32.mrf.mxu0
    %v1504 = vadd.f32 0.0, %v1503
    %v1505 = vpop.f32.mrf.mxu0
    %1506 = vmatprep.mubr.f32.mxu0 0.0
    %v1507 = vand.u32 %v1406, 4294901760
    %v1508 = vsub.f32 %v1406, %v1507
    %v1509 = vand.u32 %v1508, 4294901760
    %v1510 = vsub.f32 %v1508, %v1509
    %v1511 = vand.u32 %v1510, 4294901760
    %1512 = vmatmul.mubr.f32.gmra.mxu0 %v1511
    %v1513 = vpop.f32.mrf.mxu0
    %v1514 = vadd.f32 0.0, %v1513
    %v1515 = vpop.f32.mrf.mxu0
    %1516 = vdwg.mxu0
    %1517 = vmatprep.subr.mxu0 0.0
    %1518 = vmatpush1.msra.mxu0 0.0
    %1519 = vmatprep.subr.mxu0 0.0
    %1520 = vmatpush1.msra.mxu0 0.0
    %1521 = vmatprep.subr.mxu0 0.0
    %1522 = vmatpush1.msra.mxu0 0.0
    %1523 = vmatprep.subr.mxu0 0.0
    %1524 = vmatpush1.msra.mxu0 0.0
    %1525 = vmatprep.subr.mxu0 0.0
    %1526 = vmatpush1.msra.mxu0 0.0
    %1527 = vmatprep.subr.mxu0 0.0
    %1528 = vmatpush1.msra.mxu0 0.0
    %1529 = vmatprep.subr.mxu0 0.0
    %1530 = vmatpush1.msra.mxu0 0.0
    %1531 = vmatprep.subr.mxu0 0.0
    %1532 = vmatpush1.msra.mxu0 0.0
    %1533 = vmatprep.subr.mxu0 0.0
    %1534 = vmatpush1.msra.mxu0 0.0
    %1535 = vmatprep.subr.mxu0 0.0
    %1536 = vmatpush1.msra.mxu0 0.0
    %1537 = vmatprep.subr.mxu0 0.0
    %1538 = vmatpush1.msra.mxu0 0.0
    %1539 = vmatprep.subr.mxu0 0.0
    %1540 = vmatpush1.msra.mxu0 0.0
    %1541 = vmatprep.subr.mxu0 0.0
    %v1542 = vand.u32 %v1395, 4294901760
    %v1543 = vsub.f32 %v1395, %v1542
    %v1544 = vand.u32 %v1543, 4294901760
    %v1545 = vsub.f32 %v1543, %v1544
    %v1546 = vand.u32 %v1545, 4294901760
    %1547 = vmatpush1.msra.mxu0 %v1546
    %1548 = vmatprep.subr.mxu0 0.0
    %v1549 = vand.u32 %v1394, 4294901760
    %v1550 = vsub.f32 %v1394, %v1549
    %v1551 = vand.u32 %v1550, 4294901760
    %v1552 = vsub.f32 %v1550, %v1551
    %v1553 = vand.u32 %v1552, 4294901760
    %1554 = vmatpush1.msra.mxu0 %v1553
    %1555 = vmatprep.subr.mxu0 0.0
    %v1556 = vand.u32 %v1393, 4294901760
    %v1557 = vsub.f32 %v1393, %v1556
    %v1558 = vand.u32 %v1557, 4294901760
    %v1559 = vsub.f32 %v1557, %v1558
    %v1560 = vand.u32 %v1559, 4294901760
    %1561 = vmatpush1.msra.mxu0 %v1560
    %1562 = vmatprep.subr.mxu0 0.0
    %v1563 = vand.u32 %v1392, 4294901760
    %v1564 = vsub.f32 %v1392, %v1563
    %v1565 = vand.u32 %v1564, 4294901760
    %v1566 = vsub.f32 %v1564, %v1565
    %v1567 = vand.u32 %v1566, 4294901760
    %1568 = vmatpush1.msra.mxu0 %v1567
    %1569 = vmatprep.subr.mxu0 0.0
    %1570 = vmatpush2.msra.mxu0 0.0
    %1571 = vmatprep.subr.mxu0 0.0
    %1572 = vmatpush2.msra.mxu0 0.0
    %1573 = vmatprep.subr.mxu0 0.0
    %1574 = vmatpush2.msra.mxu0 0.0
    %1575 = vmatprep.subr.mxu0 0.0
    %1576 = vmatpush2.msra.mxu0 0.0
    %1577 = vmatprep.subr.mxu0 0.0
    %1578 = vmatpush2.msra.mxu0 0.0
    %1579 = vmatprep.subr.mxu0 0.0
    %1580 = vmatpush2.msra.mxu0 0.0
    %1581 = vmatprep.subr.mxu0 0.0
    %1582 = vmatpush2.msra.mxu0 0.0
    %1583 = vmatprep.subr.mxu0 0.0
    %1584 = vmatpush2.msra.mxu0 0.0
    %1585 = vmatprep.subr.mxu0 0.0
    %1586 = vmatpush2.msra.mxu0 0.0
    %1587 = vmatprep.subr.mxu0 0.0
    %1588 = vmatpush2.msra.mxu0 0.0
    %1589 = vmatprep.subr.mxu0 0.0
    %1590 = vmatpush2.msra.mxu0 0.0
    %1591 = vmatprep.subr.mxu0 0.0
    %1592 = vmatpush2.msra.mxu0 0.0
    %1593 = vmatprep.subr.mxu0 0.0
    %1594 = vmatpush2.msra.mxu0 0.0
    %1595 = vmatprep.subr.mxu0 0.0
    %1596 = vmatpush2.msra.mxu0 0.0
    %1597 = vmatprep.subr.mxu0 0.0
    %1598 = vmatpush2.msra.mxu0 0.0
    %1599 = vmatprep.subr.mxu0 0.0
    %1600 = vmatpush2.msra.mxu0 0.0
    %1601 = vmatprep.mubr.f32.mxu0 0.0
    %v1602 = vand.u32 %v1397, 4294901760
    %1603 = vmatmul.mubr.f32.gmra.mxu0 %v1602
    %v1604 = vpop.f32.mrf.mxu0
    %v1605 = vadd.f32 %v1484, %v1604
    %v1606 = vpop.f32.mrf.mxu0
    %1607 = vmatprep.mubr.f32.mxu0 0.0
    %v1608 = vand.u32 %v1400, 4294901760
    %1609 = vmatmul.mubr.f32.gmra.mxu0 %v1608
    %v1610 = vpop.f32.mrf.mxu0
    %v1611 = vadd.f32 %v1494, %v1610
    %v1612 = vpop.f32.mrf.mxu0
    %1613 = vmatprep.mubr.f32.mxu0 0.0
    %v1614 = vand.u32 %v1403, 4294901760
    %1615 = vmatmul.mubr.f32.gmra.mxu0 %v1614
    %v1616 = vpop.f32.mrf.mxu0
    %v1617 = vadd.f32 %v1504, %v1616
    %v1618 = vpop.f32.mrf.mxu0
    %1619 = vmatprep.mubr.f32.mxu0 0.0
    %v1620 = vand.u32 %v1406, 4294901760
    %1621 = vmatmul.mubr.f32.gmra.mxu0 %v1620
    %v1622 = vpop.f32.mrf.mxu0
    %v1623 = vadd.f32 %v1514, %v1622
    %v1624 = vpop.f32.mrf.mxu0
    %1625 = vdwg.mxu0
    %1626 = vmatprep.subr.mxu0 0.0
    %1627 = vmatpush1.msra.mxu0 0.0
    %1628 = vmatprep.subr.mxu0 0.0
    %1629 = vmatpush1.msra.mxu0 0.0
    %1630 = vmatprep.subr.mxu0 0.0
    %1631 = vmatpush1.msra.mxu0 0.0
    %1632 = vmatprep.subr.mxu0 0.0
    %1633 = vmatpush1.msra.mxu0 0.0
    %1634 = vmatprep.subr.mxu0 0.0
    %1635 = vmatpush1.msra.mxu0 0.0
    %1636 = vmatprep.subr.mxu0 0.0
    %1637 = vmatpush1.msra.mxu0 0.0
    %1638 = vmatprep.subr.mxu0 0.0
    %1639 = vmatpush1.msra.mxu0 0.0
    %1640 = vmatprep.subr.mxu0 0.0
    %1641 = vmatpush1.msra.mxu0 0.0
    %1642 = vmatprep.subr.mxu0 0.0
    %1643 = vmatpush1.msra.mxu0 0.0
    %1644 = vmatprep.subr.mxu0 0.0
    %1645 = vmatpush1.msra.mxu0 0.0
    %1646 = vmatprep.subr.mxu0 0.0
    %1647 = vmatpush1.msra.mxu0 0.0
    %1648 = vmatprep.subr.mxu0 0.0
    %1649 = vmatpush1.msra.mxu0 0.0
    %1650 = vmatprep.subr.mxu0 0.0
    %v1651 = vand.u32 %v1395, 4294901760
    %v1652 = vsub.f32 %v1395, %v1651
    %1653 = vmatpush1.msra.mxu0 %v1652
    %1654 = vmatprep.subr.mxu0 0.0
    %v1655 = vand.u32 %v1394, 4294901760
    %v1656 = vsub.f32 %v1394, %v1655
    %1657 = vmatpush1.msra.mxu0 %v1656
    %1658 = vmatprep.subr.mxu0 0.0
    %v1659 = vand.u32 %v1393, 4294901760
    %v1660 = vsub.f32 %v1393, %v1659
    %1661 = vmatpush1.msra.mxu0 %v1660
    %1662 = vmatprep.subr.mxu0 0.0
    %v1663 = vand.u32 %v1392, 4294901760
    %v1664 = vsub.f32 %v1392, %v1663
    %1665 = vmatpush1.msra.mxu0 %v1664
    %1666 = vmatprep.subr.mxu0 0.0
    %1667 = vmatpush2.msra.mxu0 0.0
    %1668 = vmatprep.subr.mxu0 0.0
    %1669 = vmatpush2.msra.mxu0 0.0
    %1670 = vmatprep.subr.mxu0 0.0
    %1671 = vmatpush2.msra.mxu0 0.0
    %1672 = vmatprep.subr.mxu0 0.0
    %1673 = vmatpush2.msra.mxu0 0.0
    %1674 = vmatprep.subr.mxu0 0.0
    %1675 = vmatpush2.msra.mxu0 0.0
    %1676 = vmatprep.subr.mxu0 0.0
    %1677 = vmatpush2.msra.mxu0 0.0
    %1678 = vmatprep.subr.mxu0 0.0
    %1679 = vmatpush2.msra.mxu0 0.0
    %1680 = vmatprep.subr.mxu0 0.0
    %1681 = vmatpush2.msra.mxu0 0.0
    %1682 = vmatprep.subr.mxu0 0.0
    %1683 = vmatpush2.msra.mxu0 0.0
    %1684 = vmatprep.subr.mxu0 0.0
    %1685 = vmatpush2.msra.mxu0 0.0
    %1686 = vmatprep.subr.mxu0 0.0
    %1687 = vmatpush2.msra.mxu0 0.0
    %1688 = vmatprep.subr.mxu0 0.0
    %1689 = vmatpush2.msra.mxu0 0.0
    %1690 = vmatprep.subr.mxu0 0.0
    %1691 = vmatpush2.msra.mxu0 0.0
    %1692 = vmatprep.subr.mxu0 0.0
    %1693 = vmatpush2.msra.mxu0 0.0
    %1694 = vmatprep.subr.mxu0 0.0
    %1695 = vmatpush2.msra.mxu0 0.0
    %1696 = vmatprep.subr.mxu0 0.0
    %1697 = vmatpush2.msra.mxu0 0.0
    %1698 = vmatprep.mubr.f32.mxu0 0.0
    %v1699 = vand.u32 %v1397, 4294901760
    %v1700 = vsub.f32 %v1397, %v1699
    %1701 = vmatmul.mubr.f32.gmra.mxu0 %v1700
    %v1702 = vpop.f32.mrf.mxu0
    %v1703 = vadd.f32 %v1605, %v1702
    %v1704 = vpop.f32.mrf.mxu0
    %1705 = vmatprep.mubr.f32.mxu0 0.0
    %v1706 = vand.u32 %v1400, 4294901760
    %v1707 = vsub.f32 %v1400, %v1706
    %1708 = vmatmul.mubr.f32.gmra.mxu0 %v1707
    %v1709 = vpop.f32.mrf.mxu0
    %v1710 = vadd.f32 %v1611, %v1709
    %v1711 = vpop.f32.mrf.mxu0
    %1712 = vmatprep.mubr.f32.mxu0 0.0
    %v1713 = vand.u32 %v1403, 4294901760
    %v1714 = vsub.f32 %v1403, %v1713
    %1715 = vmatmul.mubr.f32.gmra.mxu0 %v1714
    %v1716 = vpop.f32.mrf.mxu0
    %v1717 = vadd.f32 %v1617, %v1716
    %v1718 = vpop.f32.mrf.mxu0
    %1719 = vmatprep.mubr.f32.mxu0 0.0
    %v1720 = vand.u32 %v1406, 4294901760
    %v1721 = vsub.f32 %v1406, %v1720
    %1722 = vmatmul.mubr.f32.gmra.mxu0 %v1721
    %v1723 = vpop.f32.mrf.mxu0
    %v1724 = vadd.f32 %v1623, %v1723
    %v1725 = vpop.f32.mrf.mxu0
    %1726 = vdwg.mxu0
    %1727 = vmatprep.subr.mxu0 0.0
    %1728 = vmatpush1.msra.mxu0 0.0
    %1729 = vmatprep.subr.mxu0 0.0
    %1730 = vmatpush1.msra.mxu0 0.0
    %1731 = vmatprep.subr.mxu0 0.0
    %1732 = vmatpush1.msra.mxu0 0.0
    %1733 = vmatprep.subr.mxu0 0.0
    %1734 = vmatpush1.msra.mxu0 0.0
    %1735 = vmatprep.subr.mxu0 0.0
    %1736 = vmatpush1.msra.mxu0 0.0
    %1737 = vmatprep.subr.mxu0 0.0
    %1738 = vmatpush1.msra.mxu0 0.0
    %1739 = vmatprep.subr.mxu0 0.0
    %1740 = vmatpush1.msra.mxu0 0.0
    %1741 = vmatprep.subr.mxu0 0.0
    %1742 = vmatpush1.msra.mxu0 0.0
    %1743 = vmatprep.subr.mxu0 0.0
    %1744 = vmatpush1.msra.mxu0 0.0
    %1745 = vmatprep.subr.mxu0 0.0
    %1746 = vmatpush1.msra.mxu0 0.0
    %1747 = vmatprep.subr.mxu0 0.0
    %1748 = vmatpush1.msra.mxu0 0.0
    %1749 = vmatprep.subr.mxu0 0.0
    %1750 = vmatpush1.msra.mxu0 0.0
    %1751 = vmatprep.subr.mxu0 0.0
    %v1752 = vand.u32 %v1395, 4294901760
    %1753 = vmatpush1.msra.mxu0 %v1752
    %1754 = vmatprep.subr.mxu0 0.0
    %v1755 = vand.u32 %v1394, 4294901760
    %1756 = vmatpush1.msra.mxu0 %v1755
    %1757 = vmatprep.subr.mxu0 0.0
    %v1758 = vand.u32 %v1393, 4294901760
    %1759 = vmatpush1.msra.mxu0 %v1758
    %1760 = vmatprep.subr.mxu0 0.0
    %v1761 = vand.u32 %v1392, 4294901760
    %1762 = vmatpush1.msra.mxu0 %v1761
    %1763 = vmatprep.subr.mxu0 0.0
    %1764 = vmatpush2.msra.mxu0 0.0
    %1765 = vmatprep.subr.mxu0 0.0
    %1766 = vmatpush2.msra.mxu0 0.0
    %1767 = vmatprep.subr.mxu0 0.0
    %1768 = vmatpush2.msra.mxu0 0.0
    %1769 = vmatprep.subr.mxu0 0.0
    %1770 = vmatpush2.msra.mxu0 0.0
    %1771 = vmatprep.subr.mxu0 0.0
    %1772 = vmatpush2.msra.mxu0 0.0
    %1773 = vmatprep.subr.mxu0 0.0
    %1774 = vmatpush2.msra.mxu0 0.0
    %1775 = vmatprep.subr.mxu0 0.0
    %1776 = vmatpush2.msra.mxu0 0.0
    %1777 = vmatprep.subr.mxu0 0.0
    %1778 = vmatpush2.msra.mxu0 0.0
    %1779 = vmatprep.subr.mxu0 0.0
    %1780 = vmatpush2.msra.mxu0 0.0
    %1781 = vmatprep.subr.mxu0 0.0
    %1782 = vmatpush2.msra.mxu0 0.0
    %1783 = vmatprep.subr.mxu0 0.0
    %1784 = vmatpush2.msra.mxu0 0.0
    %1785 = vmatprep.subr.mxu0 0.0
    %1786 = vmatpush2.msra.mxu0 0.0
    %1787 = vmatprep.subr.mxu0 0.0
    %1788 = vmatpush2.msra.mxu0 0.0
    %1789 = vmatprep.subr.mxu0 0.0
    %1790 = vmatpush2.msra.mxu0 0.0
    %1791 = vmatprep.subr.mxu0 0.0
    %1792 = vmatpush2.msra.mxu0 0.0
    %1793 = vmatprep.subr.mxu0 0.0
    %1794 = vmatpush2.msra.mxu0 0.0
    %1795 = vmatprep.mubr.f32.mxu0 0.0
    %v1796 = vand.u32 %v1397, 4294901760
    %v1797 = vsub.f32 %v1397, %v1796
    %v1798 = vand.u32 %v1797, 4294901760
    %1799 = vmatmul.mubr.f32.gmra.mxu0 %v1798
    %v1800 = vpop.f32.mrf.mxu0
    %v1801 = vadd.f32 %v1703, %v1800
    %v1802 = vpop.f32.mrf.mxu0
    %1803 = vmatprep.mubr.f32.mxu0 0.0
    %v1804 = vand.u32 %v1400, 4294901760
    %v1805 = vsub.f32 %v1400, %v1804
    %v1806 = vand.u32 %v1805, 4294901760
    %1807 = vmatmul.mubr.f32.gmra.mxu0 %v1806
    %v1808 = vpop.f32.mrf.mxu0
    %v1809 = vadd.f32 %v1710, %v1808
    %v1810 = vpop.f32.mrf.mxu0
    %1811 = vmatprep.mubr.f32.mxu0 0.0
    %v1812 = vand.u32 %v1403, 4294901760
    %v1813 = vsub.f32 %v1403, %v1812
    %v1814 = vand.u32 %v1813, 4294901760
    %1815 = vmatmul.mubr.f32.gmra.mxu0 %v1814
    %v1816 = vpop.f32.mrf.mxu0
    %v1817 = vadd.f32 %v1717, %v1816
    %v1818 = vpop.f32.mrf.mxu0
    %1819 = vmatprep.mubr.f32.mxu0 0.0
    %v1820 = vand.u32 %v1406, 4294901760
    %v1821 = vsub.f32 %v1406, %v1820
    %v1822 = vand.u32 %v1821, 4294901760
    %1823 = vmatmul.mubr.f32.gmra.mxu0 %v1822
    %v1824 = vpop.f32.mrf.mxu0
    %v1825 = vadd.f32 %v1724, %v1824
    %v1826 = vpop.f32.mrf.mxu0
    %1827 = vdwg.mxu0
    %1828 = vmatprep.subr.mxu0 0.0
    %1829 = vmatpush1.msra.mxu0 0.0
    %1830 = vmatprep.subr.mxu0 0.0
    %1831 = vmatpush1.msra.mxu0 0.0
    %1832 = vmatprep.subr.mxu0 0.0
    %1833 = vmatpush1.msra.mxu0 0.0
    %1834 = vmatprep.subr.mxu0 0.0
    %1835 = vmatpush1.msra.mxu0 0.0
    %1836 = vmatprep.subr.mxu0 0.0
    %1837 = vmatpush1.msra.mxu0 0.0
    %1838 = vmatprep.subr.mxu0 0.0
    %1839 = vmatpush1.msra.mxu0 0.0
    %1840 = vmatprep.subr.mxu0 0.0
    %1841 = vmatpush1.msra.mxu0 0.0
    %1842 = vmatprep.subr.mxu0 0.0
    %1843 = vmatpush1.msra.mxu0 0.0
    %1844 = vmatprep.subr.mxu0 0.0
    %1845 = vmatpush1.msra.mxu0 0.0
    %1846 = vmatprep.subr.mxu0 0.0
    %1847 = vmatpush1.msra.mxu0 0.0
    %1848 = vmatprep.subr.mxu0 0.0
    %1849 = vmatpush1.msra.mxu0 0.0
    %1850 = vmatprep.subr.mxu0 0.0
    %1851 = vmatpush1.msra.mxu0 0.0
    %1852 = vmatprep.subr.mxu0 0.0
    %v1853 = vand.u32 %v1395, 4294901760
    %v1854 = vsub.f32 %v1395, %v1853
    %v1855 = vand.u32 %v1854, 4294901760
    %1856 = vmatpush1.msra.mxu0 %v1855
    %1857 = vmatprep.subr.mxu0 0.0
    %v1858 = vand.u32 %v1394, 4294901760
    %v1859 = vsub.f32 %v1394, %v1858
    %v1860 = vand.u32 %v1859, 4294901760
    %1861 = vmatpush1.msra.mxu0 %v1860
    %1862 = vmatprep.subr.mxu0 0.0
    %v1863 = vand.u32 %v1393, 4294901760
    %v1864 = vsub.f32 %v1393, %v1863
    %v1865 = vand.u32 %v1864, 4294901760
    %1866 = vmatpush1.msra.mxu0 %v1865
    %1867 = vmatprep.subr.mxu0 0.0
    %v1868 = vand.u32 %v1392, 4294901760
    %v1869 = vsub.f32 %v1392, %v1868
    %v1870 = vand.u32 %v1869, 4294901760
    %1871 = vmatpush1.msra.mxu0 %v1870
    %1872 = vmatprep.subr.mxu0 0.0
    %1873 = vmatpush2.msra.mxu0 0.0
    %1874 = vmatprep.subr.mxu0 0.0
    %1875 = vmatpush2.msra.mxu0 0.0
    %1876 = vmatprep.subr.mxu0 0.0
    %1877 = vmatpush2.msra.mxu0 0.0
    %1878 = vmatprep.subr.mxu0 0.0
    %1879 = vmatpush2.msra.mxu0 0.0
    %1880 = vmatprep.subr.mxu0 0.0
    %1881 = vmatpush2.msra.mxu0 0.0
    %1882 = vmatprep.subr.mxu0 0.0
    %1883 = vmatpush2.msra.mxu0 0.0
    %1884 = vmatprep.subr.mxu0 0.0
    %1885 = vmatpush2.msra.mxu0 0.0
    %1886 = vmatprep.subr.mxu0 0.0
    %1887 = vmatpush2.msra.mxu0 0.0
    %1888 = vmatprep.subr.mxu0 0.0
    %1889 = vmatpush2.msra.mxu0 0.0
    %1890 = vmatprep.subr.mxu0 0.0
    %1891 = vmatpush2.msra.mxu0 0.0
    %1892 = vmatprep.subr.mxu0 0.0
    %1893 = vmatpush2.msra.mxu0 0.0
    %1894 = vmatprep.subr.mxu0 0.0
    %1895 = vmatpush2.msra.mxu0 0.0
    %1896 = vmatprep.subr.mxu0 0.0
    %1897 = vmatpush2.msra.mxu0 0.0
    %1898 = vmatprep.subr.mxu0 0.0
    %1899 = vmatpush2.msra.mxu0 0.0
    %1900 = vmatprep.subr.mxu0 0.0
    %1901 = vmatpush2.msra.mxu0 0.0
    %1902 = vmatprep.subr.mxu0 0.0
    %1903 = vmatpush2.msra.mxu0 0.0
    %1904 = vmatprep.mubr.f32.mxu0 0.0
    %v1905 = vand.u32 %v1397, 4294901760
    %1906 = vmatmul.mubr.f32.gmra.mxu0 %v1905
    %v1907 = vpop.f32.mrf.mxu0
    %v1908 = vadd.f32 %v1801, %v1907
    %v1909 = vpop.f32.mrf.mxu0
    %1910 = vmatprep.mubr.f32.mxu0 0.0
    %v1911 = vand.u32 %v1400, 4294901760
    %1912 = vmatmul.mubr.f32.gmra.mxu0 %v1911
    %v1913 = vpop.f32.mrf.mxu0
    %v1914 = vadd.f32 %v1809, %v1913
    %v1915 = vpop.f32.mrf.mxu0
    %1916 = vmatprep.mubr.f32.mxu0 0.0
    %v1917 = vand.u32 %v1403, 4294901760
    %1918 = vmatmul.mubr.f32.gmra.mxu0 %v1917
    %v1919 = vpop.f32.mrf.mxu0
    %v1920 = vadd.f32 %v1817, %v1919
    %v1921 = vpop.f32.mrf.mxu0
    %1922 = vmatprep.mubr.f32.mxu0 0.0
    %v1923 = vand.u32 %v1406, 4294901760
    %1924 = vmatmul.mubr.f32.gmra.mxu0 %v1923
    %v1925 = vpop.f32.mrf.mxu0
    %v1926 = vadd.f32 %v1825, %v1925
    %v1927 = vpop.f32.mrf.mxu0
    %1928 = vdwg.mxu0
    %1929 = vmatprep.subr.mxu0 0.0
    %1930 = vmatpush1.msra.mxu0 0.0
    %1931 = vmatprep.subr.mxu0 0.0
    %1932 = vmatpush1.msra.mxu0 0.0
    %1933 = vmatprep.subr.mxu0 0.0
    %1934 = vmatpush1.msra.mxu0 0.0
    %1935 = vmatprep.subr.mxu0 0.0
    %1936 = vmatpush1.msra.mxu0 0.0
    %1937 = vmatprep.subr.mxu0 0.0
    %1938 = vmatpush1.msra.mxu0 0.0
    %1939 = vmatprep.subr.mxu0 0.0
    %1940 = vmatpush1.msra.mxu0 0.0
    %1941 = vmatprep.subr.mxu0 0.0
    %1942 = vmatpush1.msra.mxu0 0.0
    %1943 = vmatprep.subr.mxu0 0.0
    %1944 = vmatpush1.msra.mxu0 0.0
    %1945 = vmatprep.subr.mxu0 0.0
    %1946 = vmatpush1.msra.mxu0 0.0
    %1947 = vmatprep.subr.mxu0 0.0
    %1948 = vmatpush1.msra.mxu0 0.0
    %1949 = vmatprep.subr.mxu0 0.0
    %1950 = vmatpush1.msra.mxu0 0.0
    %1951 = vmatprep.subr.mxu0 0.0
    %1952 = vmatpush1.msra.mxu0 0.0
    %1953 = vmatprep.subr.mxu0 0.0
    %v1954 = vand.u32 %v1395, 4294901760
    %1955 = vmatpush1.msra.mxu0 %v1954
    %1956 = vmatprep.subr.mxu0 0.0
    %v1957 = vand.u32 %v1394, 4294901760
    %1958 = vmatpush1.msra.mxu0 %v1957
    %1959 = vmatprep.subr.mxu0 0.0
    %v1960 = vand.u32 %v1393, 4294901760
    %1961 = vmatpush1.msra.mxu0 %v1960
    %1962 = vmatprep.subr.mxu0 0.0
    %v1963 = vand.u32 %v1392, 4294901760
    %1964 = vmatpush1.msra.mxu0 %v1963
    %1965 = vmatprep.subr.mxu0 0.0
    %1966 = vmatpush2.msra.mxu0 0.0
    %1967 = vmatprep.subr.mxu0 0.0
    %1968 = vmatpush2.msra.mxu0 0.0
    %1969 = vmatprep.subr.mxu0 0.0
    %1970 = vmatpush2.msra.mxu0 0.0
    %1971 = vmatprep.subr.mxu0 0.0
    %1972 = vmatpush2.msra.mxu0 0.0
    %1973 = vmatprep.subr.mxu0 0.0
    %1974 = vmatpush2.msra.mxu0 0.0
    %1975 = vmatprep.subr.mxu0 0.0
    %1976 = vmatpush2.msra.mxu0 0.0
    %1977 = vmatprep.subr.mxu0 0.0
    %1978 = vmatpush2.msra.mxu0 0.0
    %1979 = vmatprep.subr.mxu0 0.0
    %1980 = vmatpush2.msra.mxu0 0.0
    %1981 = vmatprep.subr.mxu0 0.0
    %1982 = vmatpush2.msra.mxu0 0.0
    %1983 = vmatprep.subr.mxu0 0.0
    %1984 = vmatpush2.msra.mxu0 0.0
    %1985 = vmatprep.subr.mxu0 0.0
    %1986 = vmatpush2.msra.mxu0 0.0
    %1987 = vmatprep.subr.mxu0 0.0
    %1988 = vmatpush2.msra.mxu0 0.0
    %1989 = vmatprep.subr.mxu0 0.0
    %1990 = vmatpush2.msra.mxu0 0.0
    %1991 = vmatprep.subr.mxu0 0.0
    %1992 = vmatpush2.msra.mxu0 0.0
    %1993 = vmatprep.subr.mxu0 0.0
    %1994 = vmatpush2.msra.mxu0 0.0
    %1995 = vmatprep.subr.mxu0 0.0
    %1996 = vmatpush2.msra.mxu0 0.0
    %1997 = vmatprep.mubr.f32.mxu0 0.0
    %v1998 = vand.u32 %v1397, 4294901760
    %1999 = vmatmul.mubr.f32.gmra.mxu0 %v1998
    %v2000 = vpop.f32.mrf.mxu0
    %v2001 = vadd.f32 %v1908, %v2000
    %v2002 = vpop.f32.mrf.mxu0
    %2003 = vmatprep.mubr.f32.mxu0 0.0
    %v2004 = vand.u32 %v1400, 4294901760
    %2005 = vmatmul.mubr.f32.gmra.mxu0 %v2004
    %v2006 = vpop.f32.mrf.mxu0
    %v2007 = vadd.f32 %v1914, %v2006
    %v2008 = vpop.f32.mrf.mxu0
    %2009 = vmatprep.mubr.f32.mxu0 0.0
    %v2010 = vand.u32 %v1403, 4294901760
    %2011 = vmatmul.mubr.f32.gmra.mxu0 %v2010
    %v2012 = vpop.f32.mrf.mxu0
    %v2013 = vadd.f32 %v1920, %v2012
    %v2014 = vpop.f32.mrf.mxu0
    %2015 = vmatprep.mubr.f32.mxu0 0.0
    %v2016 = vand.u32 %v1406, 4294901760
    %2017 = vmatmul.mubr.f32.gmra.mxu0 %v2016
    %v2018 = vpop.f32.mrf.mxu0
    %v2019 = vadd.f32 %v1926, %v2018
    %v2020 = vpop.f32.mrf.mxu0
    %2021 = vdwg.mxu0
    %v2022 = vadd.f32 %v1371, %v2001
    %v2023 = vadd.f32 %v1377, %v2007
    %v2024 = vadd.f32 %v1383, %v2013
    %v2025 = vadd.f32 %v1389, %v2019
    %v2026 = vlaneseq
    %v2027 = vshrl.u32 %v2026, 7
    %v2028 = vsub.s32 0, %v2027
    %v2029 = vrot.slane %v84, %v2028
    %v2030 = vadd.f32 %v2022, %v2029
    %v2031 = vadd.f32 %v2023, %v2029
    %v2032 = vadd.f32 %v2024, %v2029
    %v2033 = vadd.f32 %v2025, %v2029
    %v2034 = vmul.f32 %v2030, %v2030
    %v2035 = vmul.f32 %v2031, %v2031
    %v2036 = vmul.f32 %v2032, %v2032
    %v2037 = vmul.f32 %v2033, %v2033
    %v2039 = vsel %vm139, %v2030, 0
    %v2042 = vsel %vm139, %v2031, 0
    %v2045 = vsel %vm139, %v2032, 0
    %v2048 = vsel %vm139, %v2033, 0
    %v2051 = vsel %vm139, %v2034, 0
    %v2054 = vsel %vm139, %v2035, 0
    %v2057 = vsel %vm139, %v2036, 0
    %v2060 = vsel %vm139, %v2037, 0
    %2062 = vmatprep.subr.mxu0 0.0
    %2063 = vmatpush1.msra.mxu0 0.0
    %2064 = vmatprep.subr.mxu0 0.0
    %2065 = vmatpush1.msra.mxu0 0.0
    %2066 = vmatprep.subr.mxu0 0.0
    %2067 = vmatpush1.msra.mxu0 0.0
    %2068 = vmatprep.subr.mxu0 0.0
    %2069 = vmatpush1.msra.mxu0 0.0
    %2070 = vmatprep.subr.mxu0 0.0
    %2071 = vmatpush1.msra.mxu0 0.0
    %2072 = vmatprep.subr.mxu0 0.0
    %2073 = vmatpush1.msra.mxu0 0.0
    %2074 = vmatprep.subr.mxu0 0.0
    %2075 = vmatpush1.msra.mxu0 0.0
    %2076 = vmatprep.subr.mxu0 0.0
    %2077 = vmatpush1.msra.mxu0 0.0
    %2078 = vmatprep.subr.mxu0 0.0
    %2079 = vmatpush1.msra.mxu0 0.0
    %2080 = vmatprep.subr.mxu0 0.0
    %2081 = vmatpush1.msra.mxu0 0.0
    %2082 = vmatprep.subr.mxu0 0.0
    %2083 = vmatpush1.msra.mxu0 0.0
    %2084 = vmatprep.subr.mxu0 0.0
    %2085 = vmatpush1.msra.mxu0 0.0
    %2086 = vmatprep.subr.mxu0 0.0
    %v2087 = vand.u32 %v83, 4294901760
    %2088 = vmatpush1.msra.mxu0 %v2087
    %2089 = vmatprep.subr.mxu0 0.0
    %v2090 = vand.u32 %v82, 4294901760
    %2091 = vmatpush1.msra.mxu0 %v2090
    %2092 = vmatprep.subr.mxu0 0.0
    %v2093 = vand.u32 %v81, 4294901760
    %2094 = vmatpush1.msra.mxu0 %v2093
    %2095 = vmatprep.subr.mxu0 0.0
    %v2096 = vand.u32 %v80, 4294901760
    %2097 = vmatpush1.msra.mxu0 %v2096
    %2098 = vmatprep.subr.mxu0 0.0
    %2099 = vmatpush2.msra.mxu0 0.0
    %2100 = vmatprep.subr.mxu0 0.0
    %2101 = vmatpush2.msra.mxu0 0.0
    %2102 = vmatprep.subr.mxu0 0.0
    %2103 = vmatpush2.msra.mxu0 0.0
    %2104 = vmatprep.subr.mxu0 0.0
    %2105 = vmatpush2.msra.mxu0 0.0
    %2106 = vmatprep.subr.mxu0 0.0
    %2107 = vmatpush2.msra.mxu0 0.0
    %2108 = vmatprep.subr.mxu0 0.0
    %2109 = vmatpush2.msra.mxu0 0.0
    %2110 = vmatprep.subr.mxu0 0.0
    %2111 = vmatpush2.msra.mxu0 0.0
    %2112 = vmatprep.subr.mxu0 0.0
    %2113 = vmatpush2.msra.mxu0 0.0
    %2114 = vmatprep.subr.mxu0 0.0
    %2115 = vmatpush2.msra.mxu0 0.0
    %2116 = vmatprep.subr.mxu0 0.0
    %2117 = vmatpush2.msra.mxu0 0.0
    %2118 = vmatprep.subr.mxu0 0.0
    %2119 = vmatpush2.msra.mxu0 0.0
    %2120 = vmatprep.subr.mxu0 0.0
    %2121 = vmatpush2.msra.mxu0 0.0
    %2122 = vmatprep.subr.mxu0 0.0
    %2123 = vmatpush2.msra.mxu0 0.0
    %2124 = vmatprep.subr.mxu0 0.0
    %2125 = vmatpush2.msra.mxu0 0.0
    %2126 = vmatprep.subr.mxu0 0.0
    %2127 = vmatpush2.msra.mxu0 0.0
    %2128 = vmatprep.subr.mxu0 0.0
    %2129 = vmatpush2.msra.mxu0 0.0
    %2130 = vmatprep.mubr.f32.mxu0 0.0
    %v2131 = vand.u32 %v2039, 4294901760
    %v2132 = vsub.f32 %v2039, %v2131
    %v2133 = vand.u32 %v2132, 4294901760
    %v2134 = vsub.f32 %v2132, %v2133
    %v2135 = vand.u32 %v2134, 4294901760
    %2136 = vmatmul.mubr.f32.gmra.mxu0 %v2135
    %v2137 = vpop.f32.mrf.mxu0
    %v2138 = vadd.f32 0.0, %v2137
    %v2139 = vpop.f32.mrf.mxu0
    %2140 = vmatprep.mubr.f32.mxu0 0.0
    %v2141 = vand.u32 %v2042, 4294901760
    %v2142 = vsub.f32 %v2042, %v2141
    %v2143 = vand.u32 %v2142, 4294901760
    %v2144 = vsub.f32 %v2142, %v2143
    %v2145 = vand.u32 %v2144, 4294901760
    %2146 = vmatmul.mubr.f32.gmra.mxu0 %v2145
    %v2147 = vpop.f32.mrf.mxu0
    %v2148 = vadd.f32 0.0, %v2147
    %v2149 = vpop.f32.mrf.mxu0
    %2150 = vmatprep.mubr.f32.mxu0 0.0
    %v2151 = vand.u32 %v2045, 4294901760
    %v2152 = vsub.f32 %v2045, %v2151
    %v2153 = vand.u32 %v2152, 4294901760
    %v2154 = vsub.f32 %v2152, %v2153
    %v2155 = vand.u32 %v2154, 4294901760
    %2156 = vmatmul.mubr.f32.gmra.mxu0 %v2155
    %v2157 = vpop.f32.mrf.mxu0
    %v2158 = vadd.f32 0.0, %v2157
    %v2159 = vpop.f32.mrf.mxu0
    %2160 = vmatprep.mubr.f32.mxu0 0.0
    %v2161 = vand.u32 %v2048, 4294901760
    %v2162 = vsub.f32 %v2048, %v2161
    %v2163 = vand.u32 %v2162, 4294901760
    %v2164 = vsub.f32 %v2162, %v2163
    %v2165 = vand.u32 %v2164, 4294901760
    %2166 = vmatmul.mubr.f32.gmra.mxu0 %v2165
    %v2167 = vpop.f32.mrf.mxu0
    %v2168 = vadd.f32 0.0, %v2167
    %v2169 = vpop.f32.mrf.mxu0
    %2170 = vmatprep.mubr.f32.mxu0 0.0
    %v2171 = vand.u32 %v2051, 4294901760
    %v2172 = vsub.f32 %v2051, %v2171
    %v2173 = vand.u32 %v2172, 4294901760
    %v2174 = vsub.f32 %v2172, %v2173
    %v2175 = vand.u32 %v2174, 4294901760
    %2176 = vmatmul.mubr.f32.gmra.mxu0 %v2175
    %v2177 = vpop.f32.mrf.mxu0
    %v2178 = vadd.f32 0.0, %v2177
    %v2179 = vpop.f32.mrf.mxu0
    %2180 = vmatprep.mubr.f32.mxu0 0.0
    %v2181 = vand.u32 %v2054, 4294901760
    %v2182 = vsub.f32 %v2054, %v2181
    %v2183 = vand.u32 %v2182, 4294901760
    %v2184 = vsub.f32 %v2182, %v2183
    %v2185 = vand.u32 %v2184, 4294901760
    %2186 = vmatmul.mubr.f32.gmra.mxu0 %v2185
    %v2187 = vpop.f32.mrf.mxu0
    %v2188 = vadd.f32 0.0, %v2187
    %v2189 = vpop.f32.mrf.mxu0
    %2190 = vmatprep.mubr.f32.mxu0 0.0
    %v2191 = vand.u32 %v2057, 4294901760
    %v2192 = vsub.f32 %v2057, %v2191
    %v2193 = vand.u32 %v2192, 4294901760
    %v2194 = vsub.f32 %v2192, %v2193
    %v2195 = vand.u32 %v2194, 4294901760
    %2196 = vmatmul.mubr.f32.gmra.mxu0 %v2195
    %v2197 = vpop.f32.mrf.mxu0
    %v2198 = vadd.f32 0.0, %v2197
    %v2199 = vpop.f32.mrf.mxu0
    %2200 = vmatprep.mubr.f32.mxu0 0.0
    %v2201 = vand.u32 %v2060, 4294901760
    %v2202 = vsub.f32 %v2060, %v2201
    %v2203 = vand.u32 %v2202, 4294901760
    %v2204 = vsub.f32 %v2202, %v2203
    %v2205 = vand.u32 %v2204, 4294901760
    %2206 = vmatmul.mubr.f32.gmra.mxu0 %v2205
    %v2207 = vpop.f32.mrf.mxu0
    %v2208 = vadd.f32 0.0, %v2207
    %v2209 = vpop.f32.mrf.mxu0
    %2210 = vdwg.mxu0
    %2211 = vmatprep.subr.mxu0 0.0
    %2212 = vmatpush1.msra.mxu0 0.0
    %2213 = vmatprep.subr.mxu0 0.0
    %2214 = vmatpush1.msra.mxu0 0.0
    %2215 = vmatprep.subr.mxu0 0.0
    %2216 = vmatpush1.msra.mxu0 0.0
    %2217 = vmatprep.subr.mxu0 0.0
    %2218 = vmatpush1.msra.mxu0 0.0
    %2219 = vmatprep.subr.mxu0 0.0
    %2220 = vmatpush1.msra.mxu0 0.0
    %2221 = vmatprep.subr.mxu0 0.0
    %2222 = vmatpush1.msra.mxu0 0.0
    %2223 = vmatprep.subr.mxu0 0.0
    %2224 = vmatpush1.msra.mxu0 0.0
    %2225 = vmatprep.subr.mxu0 0.0
    %2226 = vmatpush1.msra.mxu0 0.0
    %2227 = vmatprep.subr.mxu0 0.0
    %2228 = vmatpush1.msra.mxu0 0.0
    %2229 = vmatprep.subr.mxu0 0.0
    %2230 = vmatpush1.msra.mxu0 0.0
    %2231 = vmatprep.subr.mxu0 0.0
    %2232 = vmatpush1.msra.mxu0 0.0
    %2233 = vmatprep.subr.mxu0 0.0
    %2234 = vmatpush1.msra.mxu0 0.0
    %2235 = vmatprep.subr.mxu0 0.0
    %v2236 = vand.u32 %v83, 4294901760
    %v2237 = vsub.f32 %v83, %v2236
    %v2238 = vand.u32 %v2237, 4294901760
    %v2239 = vsub.f32 %v2237, %v2238
    %v2240 = vand.u32 %v2239, 4294901760
    %2241 = vmatpush1.msra.mxu0 %v2240
    %2242 = vmatprep.subr.mxu0 0.0
    %v2243 = vand.u32 %v82, 4294901760
    %v2244 = vsub.f32 %v82, %v2243
    %v2245 = vand.u32 %v2244, 4294901760
    %v2246 = vsub.f32 %v2244, %v2245
    %v2247 = vand.u32 %v2246, 4294901760
    %2248 = vmatpush1.msra.mxu0 %v2247
    %2249 = vmatprep.subr.mxu0 0.0
    %v2250 = vand.u32 %v81, 4294901760
    %v2251 = vsub.f32 %v81, %v2250
    %v2252 = vand.u32 %v2251, 4294901760
    %v2253 = vsub.f32 %v2251, %v2252
    %v2254 = vand.u32 %v2253, 4294901760
    %2255 = vmatpush1.msra.mxu0 %v2254
    %2256 = vmatprep.subr.mxu0 0.0
    %v2257 = vand.u32 %v80, 4294901760
    %v2258 = vsub.f32 %v80, %v2257
    %v2259 = vand.u32 %v2258, 4294901760
    %v2260 = vsub.f32 %v2258, %v2259
    %v2261 = vand.u32 %v2260, 4294901760
    %2262 = vmatpush1.msra.mxu0 %v2261
    %2263 = vmatprep.subr.mxu0 0.0
    %2264 = vmatpush2.msra.mxu0 0.0
    %2265 = vmatprep.subr.mxu0 0.0
    %2266 = vmatpush2.msra.mxu0 0.0
    %2267 = vmatprep.subr.mxu0 0.0
    %2268 = vmatpush2.msra.mxu0 0.0
    %2269 = vmatprep.subr.mxu0 0.0
    %2270 = vmatpush2.msra.mxu0 0.0
    %2271 = vmatprep.subr.mxu0 0.0
    %2272 = vmatpush2.msra.mxu0 0.0
    %2273 = vmatprep.subr.mxu0 0.0
    %2274 = vmatpush2.msra.mxu0 0.0
    %2275 = vmatprep.subr.mxu0 0.0
    %2276 = vmatpush2.msra.mxu0 0.0
    %2277 = vmatprep.subr.mxu0 0.0
    %2278 = vmatpush2.msra.mxu0 0.0
    %2279 = vmatprep.subr.mxu0 0.0
    %2280 = vmatpush2.msra.mxu0 0.0
    %2281 = vmatprep.subr.mxu0 0.0
    %2282 = vmatpush2.msra.mxu0 0.0
    %2283 = vmatprep.subr.mxu0 0.0
    %2284 = vmatpush2.msra.mxu0 0.0
    %2285 = vmatprep.subr.mxu0 0.0
    %2286 = vmatpush2.msra.mxu0 0.0
    %2287 = vmatprep.subr.mxu0 0.0
    %2288 = vmatpush2.msra.mxu0 0.0
    %2289 = vmatprep.subr.mxu0 0.0
    %2290 = vmatpush2.msra.mxu0 0.0
    %2291 = vmatprep.subr.mxu0 0.0
    %2292 = vmatpush2.msra.mxu0 0.0
    %2293 = vmatprep.subr.mxu0 0.0
    %2294 = vmatpush2.msra.mxu0 0.0
    %2295 = vmatprep.mubr.f32.mxu0 0.0
    %v2296 = vand.u32 %v2039, 4294901760
    %2297 = vmatmul.mubr.f32.gmra.mxu0 %v2296
    %v2298 = vpop.f32.mrf.mxu0
    %v2299 = vadd.f32 %v2138, %v2298
    %v2300 = vpop.f32.mrf.mxu0
    %2301 = vmatprep.mubr.f32.mxu0 0.0
    %v2302 = vand.u32 %v2042, 4294901760
    %2303 = vmatmul.mubr.f32.gmra.mxu0 %v2302
    %v2304 = vpop.f32.mrf.mxu0
    %v2305 = vadd.f32 %v2148, %v2304
    %v2306 = vpop.f32.mrf.mxu0
    %2307 = vmatprep.mubr.f32.mxu0 0.0
    %v2308 = vand.u32 %v2045, 4294901760
    %2309 = vmatmul.mubr.f32.gmra.mxu0 %v2308
    %v2310 = vpop.f32.mrf.mxu0
    %v2311 = vadd.f32 %v2158, %v2310
    %v2312 = vpop.f32.mrf.mxu0
    %2313 = vmatprep.mubr.f32.mxu0 0.0
    %v2314 = vand.u32 %v2048, 4294901760
    %2315 = vmatmul.mubr.f32.gmra.mxu0 %v2314
    %v2316 = vpop.f32.mrf.mxu0
    %v2317 = vadd.f32 %v2168, %v2316
    %v2318 = vpop.f32.mrf.mxu0
    %2319 = vmatprep.mubr.f32.mxu0 0.0
    %v2320 = vand.u32 %v2051, 4294901760
    %2321 = vmatmul.mubr.f32.gmra.mxu0 %v2320
    %v2322 = vpop.f32.mrf.mxu0
    %v2323 = vadd.f32 %v2178, %v2322
    %v2324 = vpop.f32.mrf.mxu0
    %2325 = vmatprep.mubr.f32.mxu0 0.0
    %v2326 = vand.u32 %v2054, 4294901760
    %2327 = vmatmul.mubr.f32.gmra.mxu0 %v2326
    %v2328 = vpop.f32.mrf.mxu0
    %v2329 = vadd.f32 %v2188, %v2328
    %v2330 = vpop.f32.mrf.mxu0
    %2331 = vmatprep.mubr.f32.mxu0 0.0
    %v2332 = vand.u32 %v2057, 4294901760
    %2333 = vmatmul.mubr.f32.gmra.mxu0 %v2332
    %v2334 = vpop.f32.mrf.mxu0
    %v2335 = vadd.f32 %v2198, %v2334
    %v2336 = vpop.f32.mrf.mxu0
    %2337 = vmatprep.mubr.f32.mxu0 0.0
    %v2338 = vand.u32 %v2060, 4294901760
    %2339 = vmatmul.mubr.f32.gmra.mxu0 %v2338
    %v2340 = vpop.f32.mrf.mxu0
    %v2341 = vadd.f32 %v2208, %v2340
    %v2342 = vpop.f32.mrf.mxu0
    %2343 = vdwg.mxu0
    %2344 = vmatprep.subr.mxu0 0.0
    %2345 = vmatpush1.msra.mxu0 0.0
    %2346 = vmatprep.subr.mxu0 0.0
    %2347 = vmatpush1.msra.mxu0 0.0
    %2348 = vmatprep.subr.mxu0 0.0
    %2349 = vmatpush1.msra.mxu0 0.0
    %2350 = vmatprep.subr.mxu0 0.0
    %2351 = vmatpush1.msra.mxu0 0.0
    %2352 = vmatprep.subr.mxu0 0.0
    %2353 = vmatpush1.msra.mxu0 0.0
    %2354 = vmatprep.subr.mxu0 0.0
    %2355 = vmatpush1.msra.mxu0 0.0
    %2356 = vmatprep.subr.mxu0 0.0
    %2357 = vmatpush1.msra.mxu0 0.0
    %2358 = vmatprep.subr.mxu0 0.0
    %2359 = vmatpush1.msra.mxu0 0.0
    %2360 = vmatprep.subr.mxu0 0.0
    %2361 = vmatpush1.msra.mxu0 0.0
    %2362 = vmatprep.subr.mxu0 0.0
    %2363 = vmatpush1.msra.mxu0 0.0
    %2364 = vmatprep.subr.mxu0 0.0
    %2365 = vmatpush1.msra.mxu0 0.0
    %2366 = vmatprep.subr.mxu0 0.0
    %2367 = vmatpush1.msra.mxu0 0.0
    %2368 = vmatprep.subr.mxu0 0.0
    %v2369 = vand.u32 %v83, 4294901760
    %v2370 = vsub.f32 %v83, %v2369
    %2371 = vmatpush1.msra.mxu0 %v2370
    %2372 = vmatprep.subr.mxu0 0.0
    %v2373 = vand.u32 %v82, 4294901760
    %v2374 = vsub.f32 %v82, %v2373
    %2375 = vmatpush1.msra.mxu0 %v2374
    %2376 = vmatprep.subr.mxu0 0.0
    %v2377 = vand.u32 %v81, 4294901760
    %v2378 = vsub.f32 %v81, %v2377
    %2379 = vmatpush1.msra.mxu0 %v2378
    %2380 = vmatprep.subr.mxu0 0.0
    %v2381 = vand.u32 %v80, 4294901760
    %v2382 = vsub.f32 %v80, %v2381
    %2383 = vmatpush1.msra.mxu0 %v2382
    %2384 = vmatprep.subr.mxu0 0.0
    %2385 = vmatpush2.msra.mxu0 0.0
    %2386 = vmatprep.subr.mxu0 0.0
    %2387 = vmatpush2.msra.mxu0 0.0
    %2388 = vmatprep.subr.mxu0 0.0
    %2389 = vmatpush2.msra.mxu0 0.0
    %2390 = vmatprep.subr.mxu0 0.0
    %2391 = vmatpush2.msra.mxu0 0.0
    %2392 = vmatprep.subr.mxu0 0.0
    %2393 = vmatpush2.msra.mxu0 0.0
    %2394 = vmatprep.subr.mxu0 0.0
    %2395 = vmatpush2.msra.mxu0 0.0
    %2396 = vmatprep.subr.mxu0 0.0
    %2397 = vmatpush2.msra.mxu0 0.0
    %2398 = vmatprep.subr.mxu0 0.0
    %2399 = vmatpush2.msra.mxu0 0.0
    %2400 = vmatprep.subr.mxu0 0.0
    %2401 = vmatpush2.msra.mxu0 0.0
    %2402 = vmatprep.subr.mxu0 0.0
    %2403 = vmatpush2.msra.mxu0 0.0
    %2404 = vmatprep.subr.mxu0 0.0
    %2405 = vmatpush2.msra.mxu0 0.0
    %2406 = vmatprep.subr.mxu0 0.0
    %2407 = vmatpush2.msra.mxu0 0.0
    %2408 = vmatprep.subr.mxu0 0.0
    %2409 = vmatpush2.msra.mxu0 0.0
    %2410 = vmatprep.subr.mxu0 0.0
    %2411 = vmatpush2.msra.mxu0 0.0
    %2412 = vmatprep.subr.mxu0 0.0
    %2413 = vmatpush2.msra.mxu0 0.0
    %2414 = vmatprep.subr.mxu0 0.0
    %2415 = vmatpush2.msra.mxu0 0.0
    %2416 = vmatprep.mubr.f32.mxu0 0.0
    %v2417 = vand.u32 %v2039, 4294901760
    %v2418 = vsub.f32 %v2039, %v2417
    %2419 = vmatmul.mubr.f32.gmra.mxu0 %v2418
    %v2420 = vpop.f32.mrf.mxu0
    %v2421 = vadd.f32 %v2299, %v2420
    %v2422 = vpop.f32.mrf.mxu0
    %2423 = vmatprep.mubr.f32.mxu0 0.0
    %v2424 = vand.u32 %v2042, 4294901760
    %v2425 = vsub.f32 %v2042, %v2424
    %2426 = vmatmul.mubr.f32.gmra.mxu0 %v2425
    %v2427 = vpop.f32.mrf.mxu0
    %v2428 = vadd.f32 %v2305, %v2427
    %v2429 = vpop.f32.mrf.mxu0
    %2430 = vmatprep.mubr.f32.mxu0 0.0
    %v2431 = vand.u32 %v2045, 4294901760
    %v2432 = vsub.f32 %v2045, %v2431
    %2433 = vmatmul.mubr.f32.gmra.mxu0 %v2432
    %v2434 = vpop.f32.mrf.mxu0
    %v2435 = vadd.f32 %v2311, %v2434
    %v2436 = vpop.f32.mrf.mxu0
    %2437 = vmatprep.mubr.f32.mxu0 0.0
    %v2438 = vand.u32 %v2048, 4294901760
    %v2439 = vsub.f32 %v2048, %v2438
    %2440 = vmatmul.mubr.f32.gmra.mxu0 %v2439
    %v2441 = vpop.f32.mrf.mxu0
    %v2442 = vadd.f32 %v2317, %v2441
    %v2443 = vpop.f32.mrf.mxu0
    %2444 = vmatprep.mubr.f32.mxu0 0.0
    %v2445 = vand.u32 %v2051, 4294901760
    %v2446 = vsub.f32 %v2051, %v2445
    %2447 = vmatmul.mubr.f32.gmra.mxu0 %v2446
    %v2448 = vpop.f32.mrf.mxu0
    %v2449 = vadd.f32 %v2323, %v2448
    %v2450 = vpop.f32.mrf.mxu0
    %2451 = vmatprep.mubr.f32.mxu0 0.0
    %v2452 = vand.u32 %v2054, 4294901760
    %v2453 = vsub.f32 %v2054, %v2452
    %2454 = vmatmul.mubr.f32.gmra.mxu0 %v2453
    %v2455 = vpop.f32.mrf.mxu0
    %v2456 = vadd.f32 %v2329, %v2455
    %v2457 = vpop.f32.mrf.mxu0
    %2458 = vmatprep.mubr.f32.mxu0 0.0
    %v2459 = vand.u32 %v2057, 4294901760
    %v2460 = vsub.f32 %v2057, %v2459
    %2461 = vmatmul.mubr.f32.gmra.mxu0 %v2460
    %v2462 = vpop.f32.mrf.mxu0
    %v2463 = vadd.f32 %v2335, %v2462
    %v2464 = vpop.f32.mrf.mxu0
    %2465 = vmatprep.mubr.f32.mxu0 0.0
    %v2466 = vand.u32 %v2060, 4294901760
    %v2467 = vsub.f32 %v2060, %v2466
    %2468 = vmatmul.mubr.f32.gmra.mxu0 %v2467
    %v2469 = vpop.f32.mrf.mxu0
    %v2470 = vadd.f32 %v2341, %v2469
    %v2471 = vpop.f32.mrf.mxu0
    %2472 = vdwg.mxu0
    %2473 = vmatprep.subr.mxu0 0.0
    %2474 = vmatpush1.msra.mxu0 0.0
    %2475 = vmatprep.subr.mxu0 0.0
    %2476 = vmatpush1.msra.mxu0 0.0
    %2477 = vmatprep.subr.mxu0 0.0
    %2478 = vmatpush1.msra.mxu0 0.0
    %2479 = vmatprep.subr.mxu0 0.0
    %2480 = vmatpush1.msra.mxu0 0.0
    %2481 = vmatprep.subr.mxu0 0.0
    %2482 = vmatpush1.msra.mxu0 0.0
    %2483 = vmatprep.subr.mxu0 0.0
    %2484 = vmatpush1.msra.mxu0 0.0
    %2485 = vmatprep.subr.mxu0 0.0
    %2486 = vmatpush1.msra.mxu0 0.0
    %2487 = vmatprep.subr.mxu0 0.0
    %2488 = vmatpush1.msra.mxu0 0.0
    %2489 = vmatprep.subr.mxu0 0.0
    %2490 = vmatpush1.msra.mxu0 0.0
    %2491 = vmatprep.subr.mxu0 0.0
    %2492 = vmatpush1.msra.mxu0 0.0
    %2493 = vmatprep.subr.mxu0 0.0
    %2494 = vmatpush1.msra.mxu0 0.0
    %2495 = vmatprep.subr.mxu0 0.0
    %2496 = vmatpush1.msra.mxu0 0.0
    %2497 = vmatprep.subr.mxu0 0.0
    %v2498 = vand.u32 %v83, 4294901760
    %2499 = vmatpush1.msra.mxu0 %v2498
    %2500 = vmatprep.subr.mxu0 0.0
    %v2501 = vand.u32 %v82, 4294901760
    %2502 = vmatpush1.msra.mxu0 %v2501
    %2503 = vmatprep.subr.mxu0 0.0
    %v2504 = vand.u32 %v81, 4294901760
    %2505 = vmatpush1.msra.mxu0 %v2504
    %2506 = vmatprep.subr.mxu0 0.0
    %v2507 = vand.u32 %v80, 4294901760
    %2508 = vmatpush1.msra.mxu0 %v2507
    %2509 = vmatprep.subr.mxu0 0.0
    %2510 = vmatpush2.msra.mxu0 0.0
    %2511 = vmatprep.subr.mxu0 0.0
    %2512 = vmatpush2.msra.mxu0 0.0
    %2513 = vmatprep.subr.mxu0 0.0
    %2514 = vmatpush2.msra.mxu0 0.0
    %2515 = vmatprep.subr.mxu0 0.0
    %2516 = vmatpush2.msra.mxu0 0.0
    %2517 = vmatprep.subr.mxu0 0.0
    %2518 = vmatpush2.msra.mxu0 0.0
    %2519 = vmatprep.subr.mxu0 0.0
    %2520 = vmatpush2.msra.mxu0 0.0
    %2521 = vmatprep.subr.mxu0 0.0
    %2522 = vmatpush2.msra.mxu0 0.0
    %2523 = vmatprep.subr.mxu0 0.0
    %2524 = vmatpush2.msra.mxu0 0.0
    %2525 = vmatprep.subr.mxu0 0.0
    %2526 = vmatpush2.msra.mxu0 0.0
    %2527 = vmatprep.subr.mxu0 0.0
    %2528 = vmatpush2.msra.mxu0 0.0
    %2529 = vmatprep.subr.mxu0 0.0
    %2530 = vmatpush2.msra.mxu0 0.0
    %2531 = vmatprep.subr.mxu0 0.0
    %2532 = vmatpush2.msra.mxu0 0.0
    %2533 = vmatprep.subr.mxu0 0.0
    %2534 = vmatpush2.msra.mxu0 0.0
    %2535 = vmatprep.subr.mxu0 0.0
    %2536 = vmatpush2.msra.mxu0 0.0
    %2537 = vmatprep.subr.mxu0 0.0
    %2538 = vmatpush2.msra.mxu0 0.0
    %2539 = vmatprep.subr.mxu0 0.0
    %2540 = vmatpush2.msra.mxu0 0.0
    %2541 = vmatprep.mubr.f32.mxu0 0.0
    %v2542 = vand.u32 %v2039, 4294901760
    %v2543 = vsub.f32 %v2039, %v2542
    %v2544 = vand.u32 %v2543, 4294901760
    %2545 = vmatmul.mubr.f32.gmra.mxu0 %v2544
    %v2546 = vpop.f32.mrf.mxu0
    %v2547 = vadd.f32 %v2421, %v2546
    %v2548 = vpop.f32.mrf.mxu0
    %2549 = vmatprep.mubr.f32.mxu0 0.0
    %v2550 = vand.u32 %v2042, 4294901760
    %v2551 = vsub.f32 %v2042, %v2550
    %v2552 = vand.u32 %v2551, 4294901760
    %2553 = vmatmul.mubr.f32.gmra.mxu0 %v2552
    %v2554 = vpop.f32.mrf.mxu0
    %v2555 = vadd.f32 %v2428, %v2554
    %v2556 = vpop.f32.mrf.mxu0
    %2557 = vmatprep.mubr.f32.mxu0 0.0
    %v2558 = vand.u32 %v2045, 4294901760
    %v2559 = vsub.f32 %v2045, %v2558
    %v2560 = vand.u32 %v2559, 4294901760
    %2561 = vmatmul.mubr.f32.gmra.mxu0 %v2560
    %v2562 = vpop.f32.mrf.mxu0
    %v2563 = vadd.f32 %v2435, %v2562
    %v2564 = vpop.f32.mrf.mxu0
    %2565 = vmatprep.mubr.f32.mxu0 0.0
    %v2566 = vand.u32 %v2048, 4294901760
    %v2567 = vsub.f32 %v2048, %v2566
    %v2568 = vand.u32 %v2567, 4294901760
    %2569 = vmatmul.mubr.f32.gmra.mxu0 %v2568
    %v2570 = vpop.f32.mrf.mxu0
    %v2571 = vadd.f32 %v2442, %v2570
    %v2572 = vpop.f32.mrf.mxu0
    %2573 = vmatprep.mubr.f32.mxu0 0.0
    %v2574 = vand.u32 %v2051, 4294901760
    %v2575 = vsub.f32 %v2051, %v2574
    %v2576 = vand.u32 %v2575, 4294901760
    %2577 = vmatmul.mubr.f32.gmra.mxu0 %v2576
    %v2578 = vpop.f32.mrf.mxu0
    %v2579 = vadd.f32 %v2449, %v2578
    %v2580 = vpop.f32.mrf.mxu0
    %2581 = vmatprep.mubr.f32.mxu0 0.0
    %v2582 = vand.u32 %v2054, 4294901760
    %v2583 = vsub.f32 %v2054, %v2582
    %v2584 = vand.u32 %v2583, 4294901760
    %2585 = vmatmul.mubr.f32.gmra.mxu0 %v2584
    %v2586 = vpop.f32.mrf.mxu0
    %v2587 = vadd.f32 %v2456, %v2586
    %v2588 = vpop.f32.mrf.mxu0
    %2589 = vmatprep.mubr.f32.mxu0 0.0
    %v2590 = vand.u32 %v2057, 4294901760
    %v2591 = vsub.f32 %v2057, %v2590
    %v2592 = vand.u32 %v2591, 4294901760
    %2593 = vmatmul.mubr.f32.gmra.mxu0 %v2592
    %v2594 = vpop.f32.mrf.mxu0
    %v2595 = vadd.f32 %v2463, %v2594
    %v2596 = vpop.f32.mrf.mxu0
    %2597 = vmatprep.mubr.f32.mxu0 0.0
    %v2598 = vand.u32 %v2060, 4294901760
    %v2599 = vsub.f32 %v2060, %v2598
    %v2600 = vand.u32 %v2599, 4294901760
    %2601 = vmatmul.mubr.f32.gmra.mxu0 %v2600
    %v2602 = vpop.f32.mrf.mxu0
    %v2603 = vadd.f32 %v2470, %v2602
    %v2604 = vpop.f32.mrf.mxu0
    %2605 = vdwg.mxu0
    %2606 = vmatprep.subr.mxu0 0.0
    %2607 = vmatpush1.msra.mxu0 0.0
    %2608 = vmatprep.subr.mxu0 0.0
    %2609 = vmatpush1.msra.mxu0 0.0
    %2610 = vmatprep.subr.mxu0 0.0
    %2611 = vmatpush1.msra.mxu0 0.0
    %2612 = vmatprep.subr.mxu0 0.0
    %2613 = vmatpush1.msra.mxu0 0.0
    %2614 = vmatprep.subr.mxu0 0.0
    %2615 = vmatpush1.msra.mxu0 0.0
    %2616 = vmatprep.subr.mxu0 0.0
    %2617 = vmatpush1.msra.mxu0 0.0
    %2618 = vmatprep.subr.mxu0 0.0
    %2619 = vmatpush1.msra.mxu0 0.0
    %2620 = vmatprep.subr.mxu0 0.0
    %2621 = vmatpush1.msra.mxu0 0.0
    %2622 = vmatprep.subr.mxu0 0.0
    %2623 = vmatpush1.msra.mxu0 0.0
    %2624 = vmatprep.subr.mxu0 0.0
    %2625 = vmatpush1.msra.mxu0 0.0
    %2626 = vmatprep.subr.mxu0 0.0
    %2627 = vmatpush1.msra.mxu0 0.0
    %2628 = vmatprep.subr.mxu0 0.0
    %2629 = vmatpush1.msra.mxu0 0.0
    %2630 = vmatprep.subr.mxu0 0.0
    %v2631 = vand.u32 %v83, 4294901760
    %v2632 = vsub.f32 %v83, %v2631
    %v2633 = vand.u32 %v2632, 4294901760
    %2634 = vmatpush1.msra.mxu0 %v2633
    %2635 = vmatprep.subr.mxu0 0.0
    %v2636 = vand.u32 %v82, 4294901760
    %v2637 = vsub.f32 %v82, %v2636
    %v2638 = vand.u32 %v2637, 4294901760
    %2639 = vmatpush1.msra.mxu0 %v2638
    %2640 = vmatprep.subr.mxu0 0.0
    %v2641 = vand.u32 %v81, 4294901760
    %v2642 = vsub.f32 %v81, %v2641
    %v2643 = vand.u32 %v2642, 4294901760
    %2644 = vmatpush1.msra.mxu0 %v2643
    %2645 = vmatprep.subr.mxu0 0.0
    %v2646 = vand.u32 %v80, 4294901760
    %v2647 = vsub.f32 %v80, %v2646
    %v2648 = vand.u32 %v2647, 4294901760
    %2649 = vmatpush1.msra.mxu0 %v2648
    %2650 = vmatprep.subr.mxu0 0.0
    %2651 = vmatpush2.msra.mxu0 0.0
    %2652 = vmatprep.subr.mxu0 0.0
    %2653 = vmatpush2.msra.mxu0 0.0
    %2654 = vmatprep.subr.mxu0 0.0
    %2655 = vmatpush2.msra.mxu0 0.0
    %2656 = vmatprep.subr.mxu0 0.0
    %2657 = vmatpush2.msra.mxu0 0.0
    %2658 = vmatprep.subr.mxu0 0.0
    %2659 = vmatpush2.msra.mxu0 0.0
    %2660 = vmatprep.subr.mxu0 0.0
    %2661 = vmatpush2.msra.mxu0 0.0
    %2662 = vmatprep.subr.mxu0 0.0
    %2663 = vmatpush2.msra.mxu0 0.0
    %2664 = vmatprep.subr.mxu0 0.0
    %2665 = vmatpush2.msra.mxu0 0.0
    %2666 = vmatprep.subr.mxu0 0.0
    %2667 = vmatpush2.msra.mxu0 0.0
    %2668 = vmatprep.subr.mxu0 0.0
    %2669 = vmatpush2.msra.mxu0 0.0
    %2670 = vmatprep.subr.mxu0 0.0
    %2671 = vmatpush2.msra.mxu0 0.0
    %2672 = vmatprep.subr.mxu0 0.0
    %2673 = vmatpush2.msra.mxu0 0.0
    %2674 = vmatprep.subr.mxu0 0.0
    %2675 = vmatpush2.msra.mxu0 0.0
    %2676 = vmatprep.subr.mxu0 0.0
    %2677 = vmatpush2.msra.mxu0 0.0
    %2678 = vmatprep.subr.mxu0 0.0
    %2679 = vmatpush2.msra.mxu0 0.0
    %2680 = vmatprep.subr.mxu0 0.0
    %2681 = vmatpush2.msra.mxu0 0.0
    %2682 = vmatprep.mubr.f32.mxu0 0.0
    %v2683 = vand.u32 %v2039, 4294901760
    %2684 = vmatmul.mubr.f32.gmra.mxu0 %v2683
    %v2685 = vpop.f32.mrf.mxu0
    %v2686 = vadd.f32 %v2547, %v2685
    %v2687 = vpop.f32.mrf.mxu0
    %2688 = vmatprep.mubr.f32.mxu0 0.0
    %v2689 = vand.u32 %v2042, 4294901760
    %2690 = vmatmul.mubr.f32.gmra.mxu0 %v2689
    %v2691 = vpop.f32.mrf.mxu0
    %v2692 = vadd.f32 %v2555, %v2691
    %v2693 = vpop.f32.mrf.mxu0
    %2694 = vmatprep.mubr.f32.mxu0 0.0
    %v2695 = vand.u32 %v2045, 4294901760
    %2696 = vmatmul.mubr.f32.gmra.mxu0 %v2695
    %v2697 = vpop.f32.mrf.mxu0
    %v2698 = vadd.f32 %v2563, %v2697
    %v2699 = vpop.f32.mrf.mxu0
    %2700 = vmatprep.mubr.f32.mxu0 0.0
    %v2701 = vand.u32 %v2048, 4294901760
    %2702 = vmatmul.mubr.f32.gmra.mxu0 %v2701
    %v2703 = vpop.f32.mrf.mxu0
    %v2704 = vadd.f32 %v2571, %v2703
    %v2705 = vpop.f32.mrf.mxu0
    %2706 = vmatprep.mubr.f32.mxu0 0.0
    %v2707 = vand.u32 %v2051, 4294901760
    %2708 = vmatmul.mubr.f32.gmra.mxu0 %v2707
    %v2709 = vpop.f32.mrf.mxu0
    %v2710 = vadd.f32 %v2579, %v2709
    %v2711 = vpop.f32.mrf.mxu0
    %2712 = vmatprep.mubr.f32.mxu0 0.0
    %v2713 = vand.u32 %v2054, 4294901760
    %2714 = vmatmul.mubr.f32.gmra.mxu0 %v2713
    %v2715 = vpop.f32.mrf.mxu0
    %v2716 = vadd.f32 %v2587, %v2715
    %v2717 = vpop.f32.mrf.mxu0
    %2718 = vmatprep.mubr.f32.mxu0 0.0
    %v2719 = vand.u32 %v2057, 4294901760
    %2720 = vmatmul.mubr.f32.gmra.mxu0 %v2719
    %v2721 = vpop.f32.mrf.mxu0
    %v2722 = vadd.f32 %v2595, %v2721
    %v2723 = vpop.f32.mrf.mxu0
    %2724 = vmatprep.mubr.f32.mxu0 0.0
    %v2725 = vand.u32 %v2060, 4294901760
    %2726 = vmatmul.mubr.f32.gmra.mxu0 %v2725
    %v2727 = vpop.f32.mrf.mxu0
    %v2728 = vadd.f32 %v2603, %v2727
    %v2729 = vpop.f32.mrf.mxu0
    %2730 = vdwg.mxu0
    %2731 = vmatprep.subr.mxu0 0.0
    %2732 = vmatpush1.msra.mxu0 0.0
    %2733 = vmatprep.subr.mxu0 0.0
    %2734 = vmatpush1.msra.mxu0 0.0
    %2735 = vmatprep.subr.mxu0 0.0
    %2736 = vmatpush1.msra.mxu0 0.0
    %2737 = vmatprep.subr.mxu0 0.0
    %2738 = vmatpush1.msra.mxu0 0.0
    %2739 = vmatprep.subr.mxu0 0.0
    %2740 = vmatpush1.msra.mxu0 0.0
    %2741 = vmatprep.subr.mxu0 0.0
    %2742 = vmatpush1.msra.mxu0 0.0
    %2743 = vmatprep.subr.mxu0 0.0
    %2744 = vmatpush1.msra.mxu0 0.0
    %2745 = vmatprep.subr.mxu0 0.0
    %2746 = vmatpush1.msra.mxu0 0.0
    %2747 = vmatprep.subr.mxu0 0.0
    %2748 = vmatpush1.msra.mxu0 0.0
    %2749 = vmatprep.subr.mxu0 0.0
    %2750 = vmatpush1.msra.mxu0 0.0
    %2751 = vmatprep.subr.mxu0 0.0
    %2752 = vmatpush1.msra.mxu0 0.0
    %2753 = vmatprep.subr.mxu0 0.0
    %2754 = vmatpush1.msra.mxu0 0.0
    %2755 = vmatprep.subr.mxu0 0.0
    %v2756 = vand.u32 %v83, 4294901760
    %2757 = vmatpush1.msra.mxu0 %v2756
    %2758 = vmatprep.subr.mxu0 0.0
    %v2759 = vand.u32 %v82, 4294901760
    %2760 = vmatpush1.msra.mxu0 %v2759
    %2761 = vmatprep.subr.mxu0 0.0
    %v2762 = vand.u32 %v81, 4294901760
    %2763 = vmatpush1.msra.mxu0 %v2762
    %2764 = vmatprep.subr.mxu0 0.0
    %v2765 = vand.u32 %v80, 4294901760
    %2766 = vmatpush1.msra.mxu0 %v2765
    %2767 = vmatprep.subr.mxu0 0.0
    %2768 = vmatpush2.msra.mxu0 0.0
    %2769 = vmatprep.subr.mxu0 0.0
    %2770 = vmatpush2.msra.mxu0 0.0
    %2771 = vmatprep.subr.mxu0 0.0
    %2772 = vmatpush2.msra.mxu0 0.0
    %2773 = vmatprep.subr.mxu0 0.0
    %2774 = vmatpush2.msra.mxu0 0.0
    %2775 = vmatprep.subr.mxu0 0.0
    %2776 = vmatpush2.msra.mxu0 0.0
    %2777 = vmatprep.subr.mxu0 0.0
    %2778 = vmatpush2.msra.mxu0 0.0
    %2779 = vmatprep.subr.mxu0 0.0
    %2780 = vmatpush2.msra.mxu0 0.0
    %2781 = vmatprep.subr.mxu0 0.0
    %2782 = vmatpush2.msra.mxu0 0.0
    %2783 = vmatprep.subr.mxu0 0.0
    %2784 = vmatpush2.msra.mxu0 0.0
    %2785 = vmatprep.subr.mxu0 0.0
    %2786 = vmatpush2.msra.mxu0 0.0
    %2787 = vmatprep.subr.mxu0 0.0
    %2788 = vmatpush2.msra.mxu0 0.0
    %2789 = vmatprep.subr.mxu0 0.0
    %2790 = vmatpush2.msra.mxu0 0.0
    %2791 = vmatprep.subr.mxu0 0.0
    %2792 = vmatpush2.msra.mxu0 0.0
    %2793 = vmatprep.subr.mxu0 0.0
    %2794 = vmatpush2.msra.mxu0 0.0
    %2795 = vmatprep.subr.mxu0 0.0
    %2796 = vmatpush2.msra.mxu0 0.0
    %2797 = vmatprep.subr.mxu0 0.0
    %2798 = vmatpush2.msra.mxu0 0.0
    %2799 = vmatprep.mubr.f32.mxu0 0.0
    %v2800 = vand.u32 %v2039, 4294901760
    %2801 = vmatmul.mubr.f32.gmra.mxu0 %v2800
    %v2802 = vpop.f32.mrf.mxu0
    %v2803 = vadd.f32 %v2686, %v2802
    %v2804 = vpop.f32.mrf.mxu0
    %2805 = vmatprep.mubr.f32.mxu0 0.0
    %v2806 = vand.u32 %v2042, 4294901760
    %2807 = vmatmul.mubr.f32.gmra.mxu0 %v2806
    %v2808 = vpop.f32.mrf.mxu0
    %v2809 = vadd.f32 %v2692, %v2808
    %v2810 = vpop.f32.mrf.mxu0
    %2811 = vmatprep.mubr.f32.mxu0 0.0
    %v2812 = vand.u32 %v2045, 4294901760
    %2813 = vmatmul.mubr.f32.gmra.mxu0 %v2812
    %v2814 = vpop.f32.mrf.mxu0
    %v2815 = vadd.f32 %v2698, %v2814
    %v2816 = vpop.f32.mrf.mxu0
    %2817 = vmatprep.mubr.f32.mxu0 0.0
    %v2818 = vand.u32 %v2048, 4294901760
    %2819 = vmatmul.mubr.f32.gmra.mxu0 %v2818
    %v2820 = vpop.f32.mrf.mxu0
    %v2821 = vadd.f32 %v2704, %v2820
    %v2822 = vpop.f32.mrf.mxu0
    %2823 = vmatprep.mubr.f32.mxu0 0.0
    %v2824 = vand.u32 %v2051, 4294901760
    %2825 = vmatmul.mubr.f32.gmra.mxu0 %v2824
    %v2826 = vpop.f32.mrf.mxu0
    %v2827 = vadd.f32 %v2710, %v2826
    %v2828 = vpop.f32.mrf.mxu0
    %2829 = vmatprep.mubr.f32.mxu0 0.0
    %v2830 = vand.u32 %v2054, 4294901760
    %2831 = vmatmul.mubr.f32.gmra.mxu0 %v2830
    %v2832 = vpop.f32.mrf.mxu0
    %v2833 = vadd.f32 %v2716, %v2832
    %v2834 = vpop.f32.mrf.mxu0
    %2835 = vmatprep.mubr.f32.mxu0 0.0
    %v2836 = vand.u32 %v2057, 4294901760
    %2837 = vmatmul.mubr.f32.gmra.mxu0 %v2836
    %v2838 = vpop.f32.mrf.mxu0
    %v2839 = vadd.f32 %v2722, %v2838
    %v2840 = vpop.f32.mrf.mxu0
    %2841 = vmatprep.mubr.f32.mxu0 0.0
    %v2842 = vand.u32 %v2060, 4294901760
    %2843 = vmatmul.mubr.f32.gmra.mxu0 %v2842
    %v2844 = vpop.f32.mrf.mxu0
    %v2845 = vadd.f32 %v2728, %v2844
    %v2846 = vpop.f32.mrf.mxu0
    %2847 = vdwg.mxu0
    %v2848 = vsel %vm139, %v2803, 0.0
    %v2849 = vsel %vm139, %v2809, 0.0
    %v2850 = vadd.f32 %v2848, %v2849
    %v2851 = vrot.slane %v2850, 4
    %v2852 = vadd.f32 %v2850, %v2851
    %v2853 = vrot.slane %v2852, 2
    %v2854 = vadd.f32 %v2852, %v2853
    %v2855 = vrot.slane %v2854, 1
    %v2856 = vadd.f32 %v2854, %v2855
    %v2857 = vsel %vm139, %v2815, 0.0
    %v2858 = vsel %vm139, %v2821, 0.0
    %v2859 = vadd.f32 %v2857, %v2858
    %v2860 = vrot.slane %v2859, 4
    %v2861 = vadd.f32 %v2859, %v2860
    %v2862 = vrot.slane %v2861, 2
    %v2863 = vadd.f32 %v2861, %v2862
    %v2864 = vrot.slane %v2863, 1
    %v2865 = vadd.f32 %v2863, %v2864
    %v2866 = vsel %vm139, %v2827, 0.0
    %v2867 = vsel %vm139, %v2833, 0.0
    %v2868 = vadd.f32 %v2866, %v2867
    %v2869 = vrot.slane %v2868, 4
    %v2870 = vadd.f32 %v2868, %v2869
    %v2871 = vrot.slane %v2870, 2
    %v2872 = vadd.f32 %v2870, %v2871
    %v2873 = vrot.slane %v2872, 1
    %v2874 = vadd.f32 %v2872, %v2873
    %v2875 = vsel %vm139, %v2839, 0.0
    %v2876 = vsel %vm139, %v2845, 0.0
    %v2877 = vadd.f32 %v2875, %v2876
    %v2878 = vrot.slane %v2877, 4
    %v2879 = vadd.f32 %v2877, %v2878
    %v2880 = vrot.slane %v2879, 2
    %v2881 = vadd.f32 %v2879, %v2880
    %v2882 = vrot.slane %v2881, 1
    %v2883 = vadd.f32 %v2881, %v2882
    %v2884 = vmul.f32 %v2856, %v2856
    %v2885 = vmul.f32 %v2865, %v2865
    %v2886 = vsub.f32 %v2874, %v2884
    %v2887 = vsub.f32 %v2883, %v2885
    %v2888 = vmax.f32 %v2886, 0.0
    %v2889 = vmax.f32 %v2887, 0.0
    %v2890 = vadd.f32 %v2888, 1e-05
    %v2891 = vadd.f32 %v2889, 1e-05
    %v2892 = vrsqrt.pop %v2890
    %v2893 = vrsqrt.pop %v2891
    %v2894 = vsub.f32 %v2030, %v2856
    %v2895 = vsub.f32 %v2031, %v2856
    %v2896 = vsub.f32 %v2032, %v2865
    %v2897 = vsub.f32 %v2033, %v2865
    %v2898 = vmul.f32 %v2894, %v2892
    %v2899 = vmul.f32 %v2895, %v2892
    %v2900 = vmul.f32 %v2896, %v2893
    %v2901 = vmul.f32 %v2897, %v2893
    %v2902 = vlaneseq
    %v2903 = vshrl.u32 %v2902, 7
    %v2904 = vsub.s32 0, %v2903
    %v2905 = vrot.slane %v85, %v2904
    %v2906 = vmul.f32 %v2898, %v2905
    %v2907 = vmul.f32 %v2899, %v2905
    %v2908 = vmul.f32 %v2900, %v2905
    %v2909 = vmul.f32 %v2901, %v2905
    %v2910 = vlaneseq
    %v2911 = vshrl.u32 %v2910, 7
    %v2912 = vsub.s32 0, %v2911
    %v2913 = vrot.slane %v86, %v2912
    %v2914 = vadd.f32 %v2906, %v2913
    %v2915 = vadd.f32 %v2907, %v2913
    %v2916 = vadd.f32 %v2908, %v2913
    %v2917 = vadd.f32 %v2909, %v2913
    %v2918 = vmax.f32 %v2914, 0.0
    %v2919 = vmax.f32 %v2915, 0.0
    %v2920 = vmax.f32 %v2916, 0.0
    %v2921 = vmax.f32 %v2917, 0.0
    %v2922 = vrot.slane %v2918, 7
    %v2923 = vrot.slane %v2919, 7
    %v2924 = vrot.slane %v2920, 7
    %v2925 = vrot.slane %v2921, 7
    %v2926 = vsel %vm109, %v2924, %v2925
    %v2927 = vsel %vm109, %v2923, %v2924
    %v2928 = vsel %vm109, %v2922, %v2923
    %v2929 = vsel %vm109, %v2925, %v2922
    %v2930 = vsel %vm72, 0.0, %v2929
    %v2931 = vsel %vm73, 0.0, %v2928
    %v2932 = vsel %vm74, 0.0, %v2927
    %v2933 = vsel %vm75, 0.0, %v2926
    %v2934 = vrot.slane %v2918, 1
    %v2935 = vrot.slane %v2919, 1
    %v2936 = vrot.slane %v2920, 1
    %v2937 = vrot.slane %v2921, 1
    %v2938 = vsel %vm122, %v2936, %v2937
    %v2939 = vsel %vm122, %v2935, %v2936
    %v2940 = vsel %vm122, %v2934, %v2935
    %v2941 = vsel %vm122, %v2937, %v2934
    %v2942 = vsel %vm76, 0.0, %v2940
    %v2943 = vsel %vm77, 0.0, %v2939
    %v2944 = vsel %vm78, 0.0, %v2938
    %v2945 = vsel %vm79, 0.0, %v2941
    %v2946 = vld [vmem:[%s1 + $0x80] sm:$0xff]
    %v2947 = vld [vmem:[%s1 + $0x88] sm:$0xff]
    %v2948 = vld [vmem:[%s1 + $0x90] sm:$0xff]
    %v2949 = vld [vmem:[%s1 + $0x98] sm:$0xff]
    %v2950 = vld [vmem:[%s1 + $0x60] sm:$0xff]
    %v2951 = vld [vmem:[%s1 + $0x68] sm:$0xff]
    %v2952 = vld [vmem:[%s1 + $0x70] sm:$0xff]
    %v2953 = vld [vmem:[%s1 + $0x78] sm:$0xff]
    %v2955 = vsel %vm139, %v2930, 0
    %v2958 = vsel %vm139, %v2931, 0
    %v2961 = vsel %vm139, %v2932, 0
    %v2964 = vsel %vm139, %v2933, 0
    %2966 = vmatprep.subr.mxu0 0.0
    %2967 = vmatpush1.msra.mxu0 0.0
    %2968 = vmatprep.subr.mxu0 0.0
    %2969 = vmatpush1.msra.mxu0 0.0
    %2970 = vmatprep.subr.mxu0 0.0
    %2971 = vmatpush1.msra.mxu0 0.0
    %2972 = vmatprep.subr.mxu0 0.0
    %2973 = vmatpush1.msra.mxu0 0.0
    %2974 = vmatprep.subr.mxu0 0.0
    %2975 = vmatpush1.msra.mxu0 0.0
    %2976 = vmatprep.subr.mxu0 0.0
    %2977 = vmatpush1.msra.mxu0 0.0
    %2978 = vmatprep.subr.mxu0 0.0
    %2979 = vmatpush1.msra.mxu0 0.0
    %2980 = vmatprep.subr.mxu0 0.0
    %2981 = vmatpush1.msra.mxu0 0.0
    %2982 = vmatprep.subr.mxu0 0.0
    %2983 = vmatpush1.msra.mxu0 0.0
    %2984 = vmatprep.subr.mxu0 0.0
    %2985 = vmatpush1.msra.mxu0 0.0
    %2986 = vmatprep.subr.mxu0 0.0
    %2987 = vmatpush1.msra.mxu0 0.0
    %2988 = vmatprep.subr.mxu0 0.0
    %2989 = vmatpush1.msra.mxu0 0.0
    %2990 = vmatprep.subr.mxu0 0.0
    %v2991 = vand.u32 %v2953, 4294901760
    %2992 = vmatpush1.msra.mxu0 %v2991
    %2993 = vmatprep.subr.mxu0 0.0
    %v2994 = vand.u32 %v2952, 4294901760
    %2995 = vmatpush1.msra.mxu0 %v2994
    %2996 = vmatprep.subr.mxu0 0.0
    %v2997 = vand.u32 %v2951, 4294901760
    %2998 = vmatpush1.msra.mxu0 %v2997
    %2999 = vmatprep.subr.mxu0 0.0
    %v3000 = vand.u32 %v2950, 4294901760
    %3001 = vmatpush1.msra.mxu0 %v3000
    %3002 = vmatprep.subr.mxu0 0.0
    %3003 = vmatpush2.msra.mxu0 0.0
    %3004 = vmatprep.subr.mxu0 0.0
    %3005 = vmatpush2.msra.mxu0 0.0
    %3006 = vmatprep.subr.mxu0 0.0
    %3007 = vmatpush2.msra.mxu0 0.0
    %3008 = vmatprep.subr.mxu0 0.0
    %3009 = vmatpush2.msra.mxu0 0.0
    %3010 = vmatprep.subr.mxu0 0.0
    %3011 = vmatpush2.msra.mxu0 0.0
    %3012 = vmatprep.subr.mxu0 0.0
    %3013 = vmatpush2.msra.mxu0 0.0
    %3014 = vmatprep.subr.mxu0 0.0
    %3015 = vmatpush2.msra.mxu0 0.0
    %3016 = vmatprep.subr.mxu0 0.0
    %3017 = vmatpush2.msra.mxu0 0.0
    %3018 = vmatprep.subr.mxu0 0.0
    %3019 = vmatpush2.msra.mxu0 0.0
    %3020 = vmatprep.subr.mxu0 0.0
    %3021 = vmatpush2.msra.mxu0 0.0
    %3022 = vmatprep.subr.mxu0 0.0
    %3023 = vmatpush2.msra.mxu0 0.0
    %3024 = vmatprep.subr.mxu0 0.0
    %3025 = vmatpush2.msra.mxu0 0.0
    %3026 = vmatprep.subr.mxu0 0.0
    %3027 = vmatpush2.msra.mxu0 0.0
    %3028 = vmatprep.subr.mxu0 0.0
    %3029 = vmatpush2.msra.mxu0 0.0
    %3030 = vmatprep.subr.mxu0 0.0
    %3031 = vmatpush2.msra.mxu0 0.0
    %3032 = vmatprep.subr.mxu0 0.0
    %3033 = vmatpush2.msra.mxu0 0.0
    %3034 = vmatprep.mubr.f32.mxu0 0.0
    %v3035 = vand.u32 %v2955, 4294901760
    %v3036 = vsub.f32 %v2955, %v3035
    %v3037 = vand.u32 %v3036, 4294901760
    %v3038 = vsub.f32 %v3036, %v3037
    %v3039 = vand.u32 %v3038, 4294901760
    %3040 = vmatmul.mubr.f32.gmra.mxu0 %v3039
    %v3041 = vpop.f32.mrf.mxu0
    %v3042 = vadd.f32 0.0, %v3041
    %v3043 = vpop.f32.mrf.mxu0
    %3044 = vmatprep.mubr.f32.mxu0 0.0
    %v3045 = vand.u32 %v2958, 4294901760
    %v3046 = vsub.f32 %v2958, %v3045
    %v3047 = vand.u32 %v3046, 4294901760
    %v3048 = vsub.f32 %v3046, %v3047
    %v3049 = vand.u32 %v3048, 4294901760
    %3050 = vmatmul.mubr.f32.gmra.mxu0 %v3049
    %v3051 = vpop.f32.mrf.mxu0
    %v3052 = vadd.f32 0.0, %v3051
    %v3053 = vpop.f32.mrf.mxu0
    %3054 = vmatprep.mubr.f32.mxu0 0.0
    %v3055 = vand.u32 %v2961, 4294901760
    %v3056 = vsub.f32 %v2961, %v3055
    %v3057 = vand.u32 %v3056, 4294901760
    %v3058 = vsub.f32 %v3056, %v3057
    %v3059 = vand.u32 %v3058, 4294901760
    %3060 = vmatmul.mubr.f32.gmra.mxu0 %v3059
    %v3061 = vpop.f32.mrf.mxu0
    %v3062 = vadd.f32 0.0, %v3061
    %v3063 = vpop.f32.mrf.mxu0
    %3064 = vmatprep.mubr.f32.mxu0 0.0
    %v3065 = vand.u32 %v2964, 4294901760
    %v3066 = vsub.f32 %v2964, %v3065
    %v3067 = vand.u32 %v3066, 4294901760
    %v3068 = vsub.f32 %v3066, %v3067
    %v3069 = vand.u32 %v3068, 4294901760
    %3070 = vmatmul.mubr.f32.gmra.mxu0 %v3069
    %v3071 = vpop.f32.mrf.mxu0
    %v3072 = vadd.f32 0.0, %v3071
    %v3073 = vpop.f32.mrf.mxu0
    %3074 = vdwg.mxu0
    %3075 = vmatprep.subr.mxu0 0.0
    %3076 = vmatpush1.msra.mxu0 0.0
    %3077 = vmatprep.subr.mxu0 0.0
    %3078 = vmatpush1.msra.mxu0 0.0
    %3079 = vmatprep.subr.mxu0 0.0
    %3080 = vmatpush1.msra.mxu0 0.0
    %3081 = vmatprep.subr.mxu0 0.0
    %3082 = vmatpush1.msra.mxu0 0.0
    %3083 = vmatprep.subr.mxu0 0.0
    %3084 = vmatpush1.msra.mxu0 0.0
    %3085 = vmatprep.subr.mxu0 0.0
    %3086 = vmatpush1.msra.mxu0 0.0
    %3087 = vmatprep.subr.mxu0 0.0
    %3088 = vmatpush1.msra.mxu0 0.0
    %3089 = vmatprep.subr.mxu0 0.0
    %3090 = vmatpush1.msra.mxu0 0.0
    %3091 = vmatprep.subr.mxu0 0.0
    %3092 = vmatpush1.msra.mxu0 0.0
    %3093 = vmatprep.subr.mxu0 0.0
    %3094 = vmatpush1.msra.mxu0 0.0
    %3095 = vmatprep.subr.mxu0 0.0
    %3096 = vmatpush1.msra.mxu0 0.0
    %3097 = vmatprep.subr.mxu0 0.0
    %3098 = vmatpush1.msra.mxu0 0.0
    %3099 = vmatprep.subr.mxu0 0.0
    %v3100 = vand.u32 %v2953, 4294901760
    %v3101 = vsub.f32 %v2953, %v3100
    %v3102 = vand.u32 %v3101, 4294901760
    %v3103 = vsub.f32 %v3101, %v3102
    %v3104 = vand.u32 %v3103, 4294901760
    %3105 = vmatpush1.msra.mxu0 %v3104
    %3106 = vmatprep.subr.mxu0 0.0
    %v3107 = vand.u32 %v2952, 4294901760
    %v3108 = vsub.f32 %v2952, %v3107
    %v3109 = vand.u32 %v3108, 4294901760
    %v3110 = vsub.f32 %v3108, %v3109
    %v3111 = vand.u32 %v3110, 4294901760
    %3112 = vmatpush1.msra.mxu0 %v3111
    %3113 = vmatprep.subr.mxu0 0.0
    %v3114 = vand.u32 %v2951, 4294901760
    %v3115 = vsub.f32 %v2951, %v3114
    %v3116 = vand.u32 %v3115, 4294901760
    %v3117 = vsub.f32 %v3115, %v3116
    %v3118 = vand.u32 %v3117, 4294901760
    %3119 = vmatpush1.msra.mxu0 %v3118
    %3120 = vmatprep.subr.mxu0 0.0
    %v3121 = vand.u32 %v2950, 4294901760
    %v3122 = vsub.f32 %v2950, %v3121
    %v3123 = vand.u32 %v3122, 4294901760
    %v3124 = vsub.f32 %v3122, %v3123
    %v3125 = vand.u32 %v3124, 4294901760
    %3126 = vmatpush1.msra.mxu0 %v3125
    %3127 = vmatprep.subr.mxu0 0.0
    %3128 = vmatpush2.msra.mxu0 0.0
    %3129 = vmatprep.subr.mxu0 0.0
    %3130 = vmatpush2.msra.mxu0 0.0
    %3131 = vmatprep.subr.mxu0 0.0
    %3132 = vmatpush2.msra.mxu0 0.0
    %3133 = vmatprep.subr.mxu0 0.0
    %3134 = vmatpush2.msra.mxu0 0.0
    %3135 = vmatprep.subr.mxu0 0.0
    %3136 = vmatpush2.msra.mxu0 0.0
    %3137 = vmatprep.subr.mxu0 0.0
    %3138 = vmatpush2.msra.mxu0 0.0
    %3139 = vmatprep.subr.mxu0 0.0
    %3140 = vmatpush2.msra.mxu0 0.0
    %3141 = vmatprep.subr.mxu0 0.0
    %3142 = vmatpush2.msra.mxu0 0.0
    %3143 = vmatprep.subr.mxu0 0.0
    %3144 = vmatpush2.msra.mxu0 0.0
    %3145 = vmatprep.subr.mxu0 0.0
    %3146 = vmatpush2.msra.mxu0 0.0
    %3147 = vmatprep.subr.mxu0 0.0
    %3148 = vmatpush2.msra.mxu0 0.0
    %3149 = vmatprep.subr.mxu0 0.0
    %3150 = vmatpush2.msra.mxu0 0.0
    %3151 = vmatprep.subr.mxu0 0.0
    %3152 = vmatpush2.msra.mxu0 0.0
    %3153 = vmatprep.subr.mxu0 0.0
    %3154 = vmatpush2.msra.mxu0 0.0
    %3155 = vmatprep.subr.mxu0 0.0
    %3156 = vmatpush2.msra.mxu0 0.0
    %3157 = vmatprep.subr.mxu0 0.0
    %3158 = vmatpush2.msra.mxu0 0.0
    %3159 = vmatprep.mubr.f32.mxu0 0.0
    %v3160 = vand.u32 %v2955, 4294901760
    %3161 = vmatmul.mubr.f32.gmra.mxu0 %v3160
    %v3162 = vpop.f32.mrf.mxu0
    %v3163 = vadd.f32 %v3042, %v3162
    %v3164 = vpop.f32.mrf.mxu0
    %3165 = vmatprep.mubr.f32.mxu0 0.0
    %v3166 = vand.u32 %v2958, 4294901760
    %3167 = vmatmul.mubr.f32.gmra.mxu0 %v3166
    %v3168 = vpop.f32.mrf.mxu0
    %v3169 = vadd.f32 %v3052, %v3168
    %v3170 = vpop.f32.mrf.mxu0
    %3171 = vmatprep.mubr.f32.mxu0 0.0
    %v3172 = vand.u32 %v2961, 4294901760
    %3173 = vmatmul.mubr.f32.gmra.mxu0 %v3172
    %v3174 = vpop.f32.mrf.mxu0
    %v3175 = vadd.f32 %v3062, %v3174
    %v3176 = vpop.f32.mrf.mxu0
    %3177 = vmatprep.mubr.f32.mxu0 0.0
    %v3178 = vand.u32 %v2964, 4294901760
    %3179 = vmatmul.mubr.f32.gmra.mxu0 %v3178
    %v3180 = vpop.f32.mrf.mxu0
    %v3181 = vadd.f32 %v3072, %v3180
    %v3182 = vpop.f32.mrf.mxu0
    %3183 = vdwg.mxu0
    %3184 = vmatprep.subr.mxu0 0.0
    %3185 = vmatpush1.msra.mxu0 0.0
    %3186 = vmatprep.subr.mxu0 0.0
    %3187 = vmatpush1.msra.mxu0 0.0
    %3188 = vmatprep.subr.mxu0 0.0
    %3189 = vmatpush1.msra.mxu0 0.0
    %3190 = vmatprep.subr.mxu0 0.0
    %3191 = vmatpush1.msra.mxu0 0.0
    %3192 = vmatprep.subr.mxu0 0.0
    %3193 = vmatpush1.msra.mxu0 0.0
    %3194 = vmatprep.subr.mxu0 0.0
    %3195 = vmatpush1.msra.mxu0 0.0
    %3196 = vmatprep.subr.mxu0 0.0
    %3197 = vmatpush1.msra.mxu0 0.0
    %3198 = vmatprep.subr.mxu0 0.0
    %3199 = vmatpush1.msra.mxu0 0.0
    %3200 = vmatprep.subr.mxu0 0.0
    %3201 = vmatpush1.msra.mxu0 0.0
    %3202 = vmatprep.subr.mxu0 0.0
    %3203 = vmatpush1.msra.mxu0 0.0
    %3204 = vmatprep.subr.mxu0 0.0
    %3205 = vmatpush1.msra.mxu0 0.0
    %3206 = vmatprep.subr.mxu0 0.0
    %3207 = vmatpush1.msra.mxu0 0.0
    %3208 = vmatprep.subr.mxu0 0.0
    %v3209 = vand.u32 %v2953, 4294901760
    %v3210 = vsub.f32 %v2953, %v3209
    %3211 = vmatpush1.msra.mxu0 %v3210
    %3212 = vmatprep.subr.mxu0 0.0
    %v3213 = vand.u32 %v2952, 4294901760
    %v3214 = vsub.f32 %v2952, %v3213
    %3215 = vmatpush1.msra.mxu0 %v3214
    %3216 = vmatprep.subr.mxu0 0.0
    %v3217 = vand.u32 %v2951, 4294901760
    %v3218 = vsub.f32 %v2951, %v3217
    %3219 = vmatpush1.msra.mxu0 %v3218
    %3220 = vmatprep.subr.mxu0 0.0
    %v3221 = vand.u32 %v2950, 4294901760
    %v3222 = vsub.f32 %v2950, %v3221
    %3223 = vmatpush1.msra.mxu0 %v3222
    %3224 = vmatprep.subr.mxu0 0.0
    %3225 = vmatpush2.msra.mxu0 0.0
    %3226 = vmatprep.subr.mxu0 0.0
    %3227 = vmatpush2.msra.mxu0 0.0
    %3228 = vmatprep.subr.mxu0 0.0
    %3229 = vmatpush2.msra.mxu0 0.0
    %3230 = vmatprep.subr.mxu0 0.0
    %3231 = vmatpush2.msra.mxu0 0.0
    %3232 = vmatprep.subr.mxu0 0.0
    %3233 = vmatpush2.msra.mxu0 0.0
    %3234 = vmatprep.subr.mxu0 0.0
    %3235 = vmatpush2.msra.mxu0 0.0
    %3236 = vmatprep.subr.mxu0 0.0
    %3237 = vmatpush2.msra.mxu0 0.0
    %3238 = vmatprep.subr.mxu0 0.0
    %3239 = vmatpush2.msra.mxu0 0.0
    %3240 = vmatprep.subr.mxu0 0.0
    %3241 = vmatpush2.msra.mxu0 0.0
    %3242 = vmatprep.subr.mxu0 0.0
    %3243 = vmatpush2.msra.mxu0 0.0
    %3244 = vmatprep.subr.mxu0 0.0
    %3245 = vmatpush2.msra.mxu0 0.0
    %3246 = vmatprep.subr.mxu0 0.0
    %3247 = vmatpush2.msra.mxu0 0.0
    %3248 = vmatprep.subr.mxu0 0.0
    %3249 = vmatpush2.msra.mxu0 0.0
    %3250 = vmatprep.subr.mxu0 0.0
    %3251 = vmatpush2.msra.mxu0 0.0
    %3252 = vmatprep.subr.mxu0 0.0
    %3253 = vmatpush2.msra.mxu0 0.0
    %3254 = vmatprep.subr.mxu0 0.0
    %3255 = vmatpush2.msra.mxu0 0.0
    %3256 = vmatprep.mubr.f32.mxu0 0.0
    %v3257 = vand.u32 %v2955, 4294901760
    %v3258 = vsub.f32 %v2955, %v3257
    %3259 = vmatmul.mubr.f32.gmra.mxu0 %v3258
    %v3260 = vpop.f32.mrf.mxu0
    %v3261 = vadd.f32 %v3163, %v3260
    %v3262 = vpop.f32.mrf.mxu0
    %3263 = vmatprep.mubr.f32.mxu0 0.0
    %v3264 = vand.u32 %v2958, 4294901760
    %v3265 = vsub.f32 %v2958, %v3264
    %3266 = vmatmul.mubr.f32.gmra.mxu0 %v3265
    %v3267 = vpop.f32.mrf.mxu0
    %v3268 = vadd.f32 %v3169, %v3267
    %v3269 = vpop.f32.mrf.mxu0
    %3270 = vmatprep.mubr.f32.mxu0 0.0
    %v3271 = vand.u32 %v2961, 4294901760
    %v3272 = vsub.f32 %v2961, %v3271
    %3273 = vmatmul.mubr.f32.gmra.mxu0 %v3272
    %v3274 = vpop.f32.mrf.mxu0
    %v3275 = vadd.f32 %v3175, %v3274
    %v3276 = vpop.f32.mrf.mxu0
    %3277 = vmatprep.mubr.f32.mxu0 0.0
    %v3278 = vand.u32 %v2964, 4294901760
    %v3279 = vsub.f32 %v2964, %v3278
    %3280 = vmatmul.mubr.f32.gmra.mxu0 %v3279
    %v3281 = vpop.f32.mrf.mxu0
    %v3282 = vadd.f32 %v3181, %v3281
    %v3283 = vpop.f32.mrf.mxu0
    %3284 = vdwg.mxu0
    %3285 = vmatprep.subr.mxu0 0.0
    %3286 = vmatpush1.msra.mxu0 0.0
    %3287 = vmatprep.subr.mxu0 0.0
    %3288 = vmatpush1.msra.mxu0 0.0
    %3289 = vmatprep.subr.mxu0 0.0
    %3290 = vmatpush1.msra.mxu0 0.0
    %3291 = vmatprep.subr.mxu0 0.0
    %3292 = vmatpush1.msra.mxu0 0.0
    %3293 = vmatprep.subr.mxu0 0.0
    %3294 = vmatpush1.msra.mxu0 0.0
    %3295 = vmatprep.subr.mxu0 0.0
    %3296 = vmatpush1.msra.mxu0 0.0
    %3297 = vmatprep.subr.mxu0 0.0
    %3298 = vmatpush1.msra.mxu0 0.0
    %3299 = vmatprep.subr.mxu0 0.0
    %3300 = vmatpush1.msra.mxu0 0.0
    %3301 = vmatprep.subr.mxu0 0.0
    %3302 = vmatpush1.msra.mxu0 0.0
    %3303 = vmatprep.subr.mxu0 0.0
    %3304 = vmatpush1.msra.mxu0 0.0
    %3305 = vmatprep.subr.mxu0 0.0
    %3306 = vmatpush1.msra.mxu0 0.0
    %3307 = vmatprep.subr.mxu0 0.0
    %3308 = vmatpush1.msra.mxu0 0.0
    %3309 = vmatprep.subr.mxu0 0.0
    %v3310 = vand.u32 %v2953, 4294901760
    %3311 = vmatpush1.msra.mxu0 %v3310
    %3312 = vmatprep.subr.mxu0 0.0
    %v3313 = vand.u32 %v2952, 4294901760
    %3314 = vmatpush1.msra.mxu0 %v3313
    %3315 = vmatprep.subr.mxu0 0.0
    %v3316 = vand.u32 %v2951, 4294901760
    %3317 = vmatpush1.msra.mxu0 %v3316
    %3318 = vmatprep.subr.mxu0 0.0
    %v3319 = vand.u32 %v2950, 4294901760
    %3320 = vmatpush1.msra.mxu0 %v3319
    %3321 = vmatprep.subr.mxu0 0.0
    %3322 = vmatpush2.msra.mxu0 0.0
    %3323 = vmatprep.subr.mxu0 0.0
    %3324 = vmatpush2.msra.mxu0 0.0
    %3325 = vmatprep.subr.mxu0 0.0
    %3326 = vmatpush2.msra.mxu0 0.0
    %3327 = vmatprep.subr.mxu0 0.0
    %3328 = vmatpush2.msra.mxu0 0.0
    %3329 = vmatprep.subr.mxu0 0.0
    %3330 = vmatpush2.msra.mxu0 0.0
    %3331 = vmatprep.subr.mxu0 0.0
    %3332 = vmatpush2.msra.mxu0 0.0
    %3333 = vmatprep.subr.mxu0 0.0
    %3334 = vmatpush2.msra.mxu0 0.0
    %3335 = vmatprep.subr.mxu0 0.0
    %3336 = vmatpush2.msra.mxu0 0.0
    %3337 = vmatprep.subr.mxu0 0.0
    %3338 = vmatpush2.msra.mxu0 0.0
    %3339 = vmatprep.subr.mxu0 0.0
    %3340 = vmatpush2.msra.mxu0 0.0
    %3341 = vmatprep.subr.mxu0 0.0
    %3342 = vmatpush2.msra.mxu0 0.0
    %3343 = vmatprep.subr.mxu0 0.0
    %3344 = vmatpush2.msra.mxu0 0.0
    %3345 = vmatprep.subr.mxu0 0.0
    %3346 = vmatpush2.msra.mxu0 0.0
    %3347 = vmatprep.subr.mxu0 0.0
    %3348 = vmatpush2.msra.mxu0 0.0
    %3349 = vmatprep.subr.mxu0 0.0
    %3350 = vmatpush2.msra.mxu0 0.0
    %3351 = vmatprep.subr.mxu0 0.0
    %3352 = vmatpush2.msra.mxu0 0.0
    %3353 = vmatprep.mubr.f32.mxu0 0.0
    %v3354 = vand.u32 %v2955, 4294901760
    %v3355 = vsub.f32 %v2955, %v3354
    %v3356 = vand.u32 %v3355, 4294901760
    %3357 = vmatmul.mubr.f32.gmra.mxu0 %v3356
    %v3358 = vpop.f32.mrf.mxu0
    %v3359 = vadd.f32 %v3261, %v3358
    %v3360 = vpop.f32.mrf.mxu0
    %3361 = vmatprep.mubr.f32.mxu0 0.0
    %v3362 = vand.u32 %v2958, 4294901760
    %v3363 = vsub.f32 %v2958, %v3362
    %v3364 = vand.u32 %v3363, 4294901760
    %3365 = vmatmul.mubr.f32.gmra.mxu0 %v3364
    %v3366 = vpop.f32.mrf.mxu0
    %v3367 = vadd.f32 %v3268, %v3366
    %v3368 = vpop.f32.mrf.mxu0
    %3369 = vmatprep.mubr.f32.mxu0 0.0
    %v3370 = vand.u32 %v2961, 4294901760
    %v3371 = vsub.f32 %v2961, %v3370
    %v3372 = vand.u32 %v3371, 4294901760
    %3373 = vmatmul.mubr.f32.gmra.mxu0 %v3372
    %v3374 = vpop.f32.mrf.mxu0
    %v3375 = vadd.f32 %v3275, %v3374
    %v3376 = vpop.f32.mrf.mxu0
    %3377 = vmatprep.mubr.f32.mxu0 0.0
    %v3378 = vand.u32 %v2964, 4294901760
    %v3379 = vsub.f32 %v2964, %v3378
    %v3380 = vand.u32 %v3379, 4294901760
    %3381 = vmatmul.mubr.f32.gmra.mxu0 %v3380
    %v3382 = vpop.f32.mrf.mxu0
    %v3383 = vadd.f32 %v3282, %v3382
    %v3384 = vpop.f32.mrf.mxu0
    %3385 = vdwg.mxu0
    %3386 = vmatprep.subr.mxu0 0.0
    %3387 = vmatpush1.msra.mxu0 0.0
    %3388 = vmatprep.subr.mxu0 0.0
    %3389 = vmatpush1.msra.mxu0 0.0
    %3390 = vmatprep.subr.mxu0 0.0
    %3391 = vmatpush1.msra.mxu0 0.0
    %3392 = vmatprep.subr.mxu0 0.0
    %3393 = vmatpush1.msra.mxu0 0.0
    %3394 = vmatprep.subr.mxu0 0.0
    %3395 = vmatpush1.msra.mxu0 0.0
    %3396 = vmatprep.subr.mxu0 0.0
    %3397 = vmatpush1.msra.mxu0 0.0
    %3398 = vmatprep.subr.mxu0 0.0
    %3399 = vmatpush1.msra.mxu0 0.0
    %3400 = vmatprep.subr.mxu0 0.0
    %3401 = vmatpush1.msra.mxu0 0.0
    %3402 = vmatprep.subr.mxu0 0.0
    %3403 = vmatpush1.msra.mxu0 0.0
    %3404 = vmatprep.subr.mxu0 0.0
    %3405 = vmatpush1.msra.mxu0 0.0
    %3406 = vmatprep.subr.mxu0 0.0
    %3407 = vmatpush1.msra.mxu0 0.0
    %3408 = vmatprep.subr.mxu0 0.0
    %3409 = vmatpush1.msra.mxu0 0.0
    %3410 = vmatprep.subr.mxu0 0.0
    %v3411 = vand.u32 %v2953, 4294901760
    %v3412 = vsub.f32 %v2953, %v3411
    %v3413 = vand.u32 %v3412, 4294901760
    %3414 = vmatpush1.msra.mxu0 %v3413
    %3415 = vmatprep.subr.mxu0 0.0
    %v3416 = vand.u32 %v2952, 4294901760
    %v3417 = vsub.f32 %v2952, %v3416
    %v3418 = vand.u32 %v3417, 4294901760
    %3419 = vmatpush1.msra.mxu0 %v3418
    %3420 = vmatprep.subr.mxu0 0.0
    %v3421 = vand.u32 %v2951, 4294901760
    %v3422 = vsub.f32 %v2951, %v3421
    %v3423 = vand.u32 %v3422, 4294901760
    %3424 = vmatpush1.msra.mxu0 %v3423
    %3425 = vmatprep.subr.mxu0 0.0
    %v3426 = vand.u32 %v2950, 4294901760
    %v3427 = vsub.f32 %v2950, %v3426
    %v3428 = vand.u32 %v3427, 4294901760
    %3429 = vmatpush1.msra.mxu0 %v3428
    %3430 = vmatprep.subr.mxu0 0.0
    %3431 = vmatpush2.msra.mxu0 0.0
    %3432 = vmatprep.subr.mxu0 0.0
    %3433 = vmatpush2.msra.mxu0 0.0
    %3434 = vmatprep.subr.mxu0 0.0
    %3435 = vmatpush2.msra.mxu0 0.0
    %3436 = vmatprep.subr.mxu0 0.0
    %3437 = vmatpush2.msra.mxu0 0.0
    %3438 = vmatprep.subr.mxu0 0.0
    %3439 = vmatpush2.msra.mxu0 0.0
    %3440 = vmatprep.subr.mxu0 0.0
    %3441 = vmatpush2.msra.mxu0 0.0
    %3442 = vmatprep.subr.mxu0 0.0
    %3443 = vmatpush2.msra.mxu0 0.0
    %3444 = vmatprep.subr.mxu0 0.0
    %3445 = vmatpush2.msra.mxu0 0.0
    %3446 = vmatprep.subr.mxu0 0.0
    %3447 = vmatpush2.msra.mxu0 0.0
    %3448 = vmatprep.subr.mxu0 0.0
    %3449 = vmatpush2.msra.mxu0 0.0
    %3450 = vmatprep.subr.mxu0 0.0
    %3451 = vmatpush2.msra.mxu0 0.0
    %3452 = vmatprep.subr.mxu0 0.0
    %3453 = vmatpush2.msra.mxu0 0.0
    %3454 = vmatprep.subr.mxu0 0.0
    %3455 = vmatpush2.msra.mxu0 0.0
    %3456 = vmatprep.subr.mxu0 0.0
    %3457 = vmatpush2.msra.mxu0 0.0
    %3458 = vmatprep.subr.mxu0 0.0
    %3459 = vmatpush2.msra.mxu0 0.0
    %3460 = vmatprep.subr.mxu0 0.0
    %3461 = vmatpush2.msra.mxu0 0.0
    %3462 = vmatprep.mubr.f32.mxu0 0.0
    %v3463 = vand.u32 %v2955, 4294901760
    %3464 = vmatmul.mubr.f32.gmra.mxu0 %v3463
    %v3465 = vpop.f32.mrf.mxu0
    %v3466 = vadd.f32 %v3359, %v3465
    %v3467 = vpop.f32.mrf.mxu0
    %3468 = vmatprep.mubr.f32.mxu0 0.0
    %v3469 = vand.u32 %v2958, 4294901760
    %3470 = vmatmul.mubr.f32.gmra.mxu0 %v3469
    %v3471 = vpop.f32.mrf.mxu0
    %v3472 = vadd.f32 %v3367, %v3471
    %v3473 = vpop.f32.mrf.mxu0
    %3474 = vmatprep.mubr.f32.mxu0 0.0
    %v3475 = vand.u32 %v2961, 4294901760
    %3476 = vmatmul.mubr.f32.gmra.mxu0 %v3475
    %v3477 = vpop.f32.mrf.mxu0
    %v3478 = vadd.f32 %v3375, %v3477
    %v3479 = vpop.f32.mrf.mxu0
    %3480 = vmatprep.mubr.f32.mxu0 0.0
    %v3481 = vand.u32 %v2964, 4294901760
    %3482 = vmatmul.mubr.f32.gmra.mxu0 %v3481
    %v3483 = vpop.f32.mrf.mxu0
    %v3484 = vadd.f32 %v3383, %v3483
    %v3485 = vpop.f32.mrf.mxu0
    %3486 = vdwg.mxu0
    %3487 = vmatprep.subr.mxu0 0.0
    %3488 = vmatpush1.msra.mxu0 0.0
    %3489 = vmatprep.subr.mxu0 0.0
    %3490 = vmatpush1.msra.mxu0 0.0
    %3491 = vmatprep.subr.mxu0 0.0
    %3492 = vmatpush1.msra.mxu0 0.0
    %3493 = vmatprep.subr.mxu0 0.0
    %3494 = vmatpush1.msra.mxu0 0.0
    %3495 = vmatprep.subr.mxu0 0.0
    %3496 = vmatpush1.msra.mxu0 0.0
    %3497 = vmatprep.subr.mxu0 0.0
    %3498 = vmatpush1.msra.mxu0 0.0
    %3499 = vmatprep.subr.mxu0 0.0
    %3500 = vmatpush1.msra.mxu0 0.0
    %3501 = vmatprep.subr.mxu0 0.0
    %3502 = vmatpush1.msra.mxu0 0.0
    %3503 = vmatprep.subr.mxu0 0.0
    %3504 = vmatpush1.msra.mxu0 0.0
    %3505 = vmatprep.subr.mxu0 0.0
    %3506 = vmatpush1.msra.mxu0 0.0
    %3507 = vmatprep.subr.mxu0 0.0
    %3508 = vmatpush1.msra.mxu0 0.0
    %3509 = vmatprep.subr.mxu0 0.0
    %3510 = vmatpush1.msra.mxu0 0.0
    %3511 = vmatprep.subr.mxu0 0.0
    %v3512 = vand.u32 %v2953, 4294901760
    %3513 = vmatpush1.msra.mxu0 %v3512
    %3514 = vmatprep.subr.mxu0 0.0
    %v3515 = vand.u32 %v2952, 4294901760
    %3516 = vmatpush1.msra.mxu0 %v3515
    %3517 = vmatprep.subr.mxu0 0.0
    %v3518 = vand.u32 %v2951, 4294901760
    %3519 = vmatpush1.msra.mxu0 %v3518
    %3520 = vmatprep.subr.mxu0 0.0
    %v3521 = vand.u32 %v2950, 4294901760
    %3522 = vmatpush1.msra.mxu0 %v3521
    %3523 = vmatprep.subr.mxu0 0.0
    %3524 = vmatpush2.msra.mxu0 0.0
    %3525 = vmatprep.subr.mxu0 0.0
    %3526 = vmatpush2.msra.mxu0 0.0
    %3527 = vmatprep.subr.mxu0 0.0
    %3528 = vmatpush2.msra.mxu0 0.0
    %3529 = vmatprep.subr.mxu0 0.0
    %3530 = vmatpush2.msra.mxu0 0.0
    %3531 = vmatprep.subr.mxu0 0.0
    %3532 = vmatpush2.msra.mxu0 0.0
    %3533 = vmatprep.subr.mxu0 0.0
    %3534 = vmatpush2.msra.mxu0 0.0
    %3535 = vmatprep.subr.mxu0 0.0
    %3536 = vmatpush2.msra.mxu0 0.0
    %3537 = vmatprep.subr.mxu0 0.0
    %3538 = vmatpush2.msra.mxu0 0.0
    %3539 = vmatprep.subr.mxu0 0.0
    %3540 = vmatpush2.msra.mxu0 0.0
    %3541 = vmatprep.subr.mxu0 0.0
    %3542 = vmatpush2.msra.mxu0 0.0
    %3543 = vmatprep.subr.mxu0 0.0
    %3544 = vmatpush2.msra.mxu0 0.0
    %3545 = vmatprep.subr.mxu0 0.0
    %3546 = vmatpush2.msra.mxu0 0.0
    %3547 = vmatprep.subr.mxu0 0.0
    %3548 = vmatpush2.msra.mxu0 0.0
    %3549 = vmatprep.subr.mxu0 0.0
    %3550 = vmatpush2.msra.mxu0 0.0
    %3551 = vmatprep.subr.mxu0 0.0
    %3552 = vmatpush2.msra.mxu0 0.0
    %3553 = vmatprep.subr.mxu0 0.0
    %3554 = vmatpush2.msra.mxu0 0.0
    %3555 = vmatprep.mubr.f32.mxu0 0.0
    %v3556 = vand.u32 %v2955, 4294901760
    %3557 = vmatmul.mubr.f32.gmra.mxu0 %v3556
    %v3558 = vpop.f32.mrf.mxu0
    %v3559 = vadd.f32 %v3466, %v3558
    %v3560 = vpop.f32.mrf.mxu0
    %3561 = vmatprep.mubr.f32.mxu0 0.0
    %v3562 = vand.u32 %v2958, 4294901760
    %3563 = vmatmul.mubr.f32.gmra.mxu0 %v3562
    %v3564 = vpop.f32.mrf.mxu0
    %v3565 = vadd.f32 %v3472, %v3564
    %v3566 = vpop.f32.mrf.mxu0
    %3567 = vmatprep.mubr.f32.mxu0 0.0
    %v3568 = vand.u32 %v2961, 4294901760
    %3569 = vmatmul.mubr.f32.gmra.mxu0 %v3568
    %v3570 = vpop.f32.mrf.mxu0
    %v3571 = vadd.f32 %v3478, %v3570
    %v3572 = vpop.f32.mrf.mxu0
    %3573 = vmatprep.mubr.f32.mxu0 0.0
    %v3574 = vand.u32 %v2964, 4294901760
    %3575 = vmatmul.mubr.f32.gmra.mxu0 %v3574
    %v3576 = vpop.f32.mrf.mxu0
    %v3577 = vadd.f32 %v3484, %v3576
    %v3578 = vpop.f32.mrf.mxu0
    %3579 = vdwg.mxu0
    %v3581 = vsel %vm139, %v2918, 0
    %v3584 = vsel %vm139, %v2919, 0
    %v3587 = vsel %vm139, %v2920, 0
    %v3590 = vsel %vm139, %v2921, 0
    %3592 = vmatprep.subr.mxu0 0.0
    %3593 = vmatpush1.msra.mxu0 0.0
    %3594 = vmatprep.subr.mxu0 0.0
    %3595 = vmatpush1.msra.mxu0 0.0
    %3596 = vmatprep.subr.mxu0 0.0
    %3597 = vmatpush1.msra.mxu0 0.0
    %3598 = vmatprep.subr.mxu0 0.0
    %3599 = vmatpush1.msra.mxu0 0.0
    %3600 = vmatprep.subr.mxu0 0.0
    %3601 = vmatpush1.msra.mxu0 0.0
    %3602 = vmatprep.subr.mxu0 0.0
    %3603 = vmatpush1.msra.mxu0 0.0
    %3604 = vmatprep.subr.mxu0 0.0
    %3605 = vmatpush1.msra.mxu0 0.0
    %3606 = vmatprep.subr.mxu0 0.0
    %3607 = vmatpush1.msra.mxu0 0.0
    %3608 = vmatprep.subr.mxu0 0.0
    %3609 = vmatpush1.msra.mxu0 0.0
    %3610 = vmatprep.subr.mxu0 0.0
    %3611 = vmatpush1.msra.mxu0 0.0
    %3612 = vmatprep.subr.mxu0 0.0
    %3613 = vmatpush1.msra.mxu0 0.0
    %3614 = vmatprep.subr.mxu0 0.0
    %3615 = vmatpush1.msra.mxu0 0.0
    %3616 = vmatprep.subr.mxu0 0.0
    %v3617 = vand.u32 %v2949, 4294901760
    %3618 = vmatpush1.msra.mxu0 %v3617
    %3619 = vmatprep.subr.mxu0 0.0
    %v3620 = vand.u32 %v2948, 4294901760
    %3621 = vmatpush1.msra.mxu0 %v3620
    %3622 = vmatprep.subr.mxu0 0.0
    %v3623 = vand.u32 %v2947, 4294901760
    %3624 = vmatpush1.msra.mxu0 %v3623
    %3625 = vmatprep.subr.mxu0 0.0
    %v3626 = vand.u32 %v2946, 4294901760
    %3627 = vmatpush1.msra.mxu0 %v3626
    %3628 = vmatprep.subr.mxu0 0.0
    %3629 = vmatpush2.msra.mxu0 0.0
    %3630 = vmatprep.subr.mxu0 0.0
    %3631 = vmatpush2.msra.mxu0 0.0
    %3632 = vmatprep.subr.mxu0 0.0
    %3633 = vmatpush2.msra.mxu0 0.0
    %3634 = vmatprep.subr.mxu0 0.0
    %3635 = vmatpush2.msra.mxu0 0.0
    %3636 = vmatprep.subr.mxu0 0.0
    %3637 = vmatpush2.msra.mxu0 0.0
    %3638 = vmatprep.subr.mxu0 0.0
    %3639 = vmatpush2.msra.mxu0 0.0
    %3640 = vmatprep.subr.mxu0 0.0
    %3641 = vmatpush2.msra.mxu0 0.0
    %3642 = vmatprep.subr.mxu0 0.0
    %3643 = vmatpush2.msra.mxu0 0.0
    %3644 = vmatprep.subr.mxu0 0.0
    %3645 = vmatpush2.msra.mxu0 0.0
    %3646 = vmatprep.subr.mxu0 0.0
    %3647 = vmatpush2.msra.mxu0 0.0
    %3648 = vmatprep.subr.mxu0 0.0
    %3649 = vmatpush2.msra.mxu0 0.0
    %3650 = vmatprep.subr.mxu0 0.0
    %3651 = vmatpush2.msra.mxu0 0.0
    %3652 = vmatprep.subr.mxu0 0.0
    %3653 = vmatpush2.msra.mxu0 0.0
    %3654 = vmatprep.subr.mxu0 0.0
    %3655 = vmatpush2.msra.mxu0 0.0
    %3656 = vmatprep.subr.mxu0 0.0
    %3657 = vmatpush2.msra.mxu0 0.0
    %3658 = vmatprep.subr.mxu0 0.0
    %3659 = vmatpush2.msra.mxu0 0.0
    %3660 = vmatprep.mubr.f32.mxu0 0.0
    %v3661 = vand.u32 %v3581, 4294901760
    %v3662 = vsub.f32 %v3581, %v3661
    %v3663 = vand.u32 %v3662, 4294901760
    %v3664 = vsub.f32 %v3662, %v3663
    %v3665 = vand.u32 %v3664, 4294901760
    %3666 = vmatmul.mubr.f32.gmra.mxu0 %v3665
    %v3667 = vpop.f32.mrf.mxu0
    %v3668 = vadd.f32 %v3559, %v3667
    %v3669 = vpop.f32.mrf.mxu0
    %3670 = vmatprep.mubr.f32.mxu0 0.0
    %v3671 = vand.u32 %v3584, 4294901760
    %v3672 = vsub.f32 %v3584, %v3671
    %v3673 = vand.u32 %v3672, 4294901760
    %v3674 = vsub.f32 %v3672, %v3673
    %v3675 = vand.u32 %v3674, 4294901760
    %3676 = vmatmul.mubr.f32.gmra.mxu0 %v3675
    %v3677 = vpop.f32.mrf.mxu0
    %v3678 = vadd.f32 %v3565, %v3677
    %v3679 = vpop.f32.mrf.mxu0
    %3680 = vmatprep.mubr.f32.mxu0 0.0
    %v3681 = vand.u32 %v3587, 4294901760
    %v3682 = vsub.f32 %v3587, %v3681
    %v3683 = vand.u32 %v3682, 4294901760
    %v3684 = vsub.f32 %v3682, %v3683
    %v3685 = vand.u32 %v3684, 4294901760
    %3686 = vmatmul.mubr.f32.gmra.mxu0 %v3685
    %v3687 = vpop.f32.mrf.mxu0
    %v3688 = vadd.f32 %v3571, %v3687
    %v3689 = vpop.f32.mrf.mxu0
    %3690 = vmatprep.mubr.f32.mxu0 0.0
    %v3691 = vand.u32 %v3590, 4294901760
    %v3692 = vsub.f32 %v3590, %v3691
    %v3693 = vand.u32 %v3692, 4294901760
    %v3694 = vsub.f32 %v3692, %v3693
    %v3695 = vand.u32 %v3694, 4294901760
    %3696 = vmatmul.mubr.f32.gmra.mxu0 %v3695
    %v3697 = vpop.f32.mrf.mxu0
    %v3698 = vadd.f32 %v3577, %v3697
    %v3699 = vpop.f32.mrf.mxu0
    %3700 = vdwg.mxu0
    %3701 = vmatprep.subr.mxu0 0.0
    %3702 = vmatpush1.msra.mxu0 0.0
    %3703 = vmatprep.subr.mxu0 0.0
    %3704 = vmatpush1.msra.mxu0 0.0
    %3705 = vmatprep.subr.mxu0 0.0
    %3706 = vmatpush1.msra.mxu0 0.0
    %3707 = vmatprep.subr.mxu0 0.0
    %3708 = vmatpush1.msra.mxu0 0.0
    %3709 = vmatprep.subr.mxu0 0.0
    %3710 = vmatpush1.msra.mxu0 0.0
    %3711 = vmatprep.subr.mxu0 0.0
    %3712 = vmatpush1.msra.mxu0 0.0
    %3713 = vmatprep.subr.mxu0 0.0
    %3714 = vmatpush1.msra.mxu0 0.0
    %3715 = vmatprep.subr.mxu0 0.0
    %3716 = vmatpush1.msra.mxu0 0.0
    %3717 = vmatprep.subr.mxu0 0.0
    %3718 = vmatpush1.msra.mxu0 0.0
    %3719 = vmatprep.subr.mxu0 0.0
    %3720 = vmatpush1.msra.mxu0 0.0
    %3721 = vmatprep.subr.mxu0 0.0
    %3722 = vmatpush1.msra.mxu0 0.0
    %3723 = vmatprep.subr.mxu0 0.0
    %3724 = vmatpush1.msra.mxu0 0.0
    %3725 = vmatprep.subr.mxu0 0.0
    %v3726 = vand.u32 %v2949, 4294901760
    %v3727 = vsub.f32 %v2949, %v3726
    %v3728 = vand.u32 %v3727, 4294901760
    %v3729 = vsub.f32 %v3727, %v3728
    %v3730 = vand.u32 %v3729, 4294901760
    %3731 = vmatpush1.msra.mxu0 %v3730
    %3732 = vmatprep.subr.mxu0 0.0
    %v3733 = vand.u32 %v2948, 4294901760
    %v3734 = vsub.f32 %v2948, %v3733
    %v3735 = vand.u32 %v3734, 4294901760
    %v3736 = vsub.f32 %v3734, %v3735
    %v3737 = vand.u32 %v3736, 4294901760
    %3738 = vmatpush1.msra.mxu0 %v3737
    %3739 = vmatprep.subr.mxu0 0.0
    %v3740 = vand.u32 %v2947, 4294901760
    %v3741 = vsub.f32 %v2947, %v3740
    %v3742 = vand.u32 %v3741, 4294901760
    %v3743 = vsub.f32 %v3741, %v3742
    %v3744 = vand.u32 %v3743, 4294901760
    %3745 = vmatpush1.msra.mxu0 %v3744
    %3746 = vmatprep.subr.mxu0 0.0
    %v3747 = vand.u32 %v2946, 4294901760
    %v3748 = vsub.f32 %v2946, %v3747
    %v3749 = vand.u32 %v3748, 4294901760
    %v3750 = vsub.f32 %v3748, %v3749
    %v3751 = vand.u32 %v3750, 4294901760
    %3752 = vmatpush1.msra.mxu0 %v3751
    %3753 = vmatprep.subr.mxu0 0.0
    %3754 = vmatpush2.msra.mxu0 0.0
    %3755 = vmatprep.subr.mxu0 0.0
    %3756 = vmatpush2.msra.mxu0 0.0
    %3757 = vmatprep.subr.mxu0 0.0
    %3758 = vmatpush2.msra.mxu0 0.0
    %3759 = vmatprep.subr.mxu0 0.0
    %3760 = vmatpush2.msra.mxu0 0.0
    %3761 = vmatprep.subr.mxu0 0.0
    %3762 = vmatpush2.msra.mxu0 0.0
    %3763 = vmatprep.subr.mxu0 0.0
    %3764 = vmatpush2.msra.mxu0 0.0
    %3765 = vmatprep.subr.mxu0 0.0
    %3766 = vmatpush2.msra.mxu0 0.0
    %3767 = vmatprep.subr.mxu0 0.0
    %3768 = vmatpush2.msra.mxu0 0.0
    %3769 = vmatprep.subr.mxu0 0.0
    %3770 = vmatpush2.msra.mxu0 0.0
    %3771 = vmatprep.subr.mxu0 0.0
    %3772 = vmatpush2.msra.mxu0 0.0
    %3773 = vmatprep.subr.mxu0 0.0
    %3774 = vmatpush2.msra.mxu0 0.0
    %3775 = vmatprep.subr.mxu0 0.0
    %3776 = vmatpush2.msra.mxu0 0.0
    %3777 = vmatprep.subr.mxu0 0.0
    %3778 = vmatpush2.msra.mxu0 0.0
    %3779 = vmatprep.subr.mxu0 0.0
    %3780 = vmatpush2.msra.mxu0 0.0
    %3781 = vmatprep.subr.mxu0 0.0
    %3782 = vmatpush2.msra.mxu0 0.0
    %3783 = vmatprep.subr.mxu0 0.0
    %3784 = vmatpush2.msra.mxu0 0.0
    %3785 = vmatprep.mubr.f32.mxu0 0.0
    %v3786 = vand.u32 %v3581, 4294901760
    %3787 = vmatmul.mubr.f32.gmra.mxu0 %v3786
    %v3788 = vpop.f32.mrf.mxu0
    %v3789 = vadd.f32 %v3668, %v3788
    %v3790 = vpop.f32.mrf.mxu0
    %3791 = vmatprep.mubr.f32.mxu0 0.0
    %v3792 = vand.u32 %v3584, 4294901760
    %3793 = vmatmul.mubr.f32.gmra.mxu0 %v3792
    %v3794 = vpop.f32.mrf.mxu0
    %v3795 = vadd.f32 %v3678, %v3794
    %v3796 = vpop.f32.mrf.mxu0
    %3797 = vmatprep.mubr.f32.mxu0 0.0
    %v3798 = vand.u32 %v3587, 4294901760
    %3799 = vmatmul.mubr.f32.gmra.mxu0 %v3798
    %v3800 = vpop.f32.mrf.mxu0
    %v3801 = vadd.f32 %v3688, %v3800
    %v3802 = vpop.f32.mrf.mxu0
    %3803 = vmatprep.mubr.f32.mxu0 0.0
    %v3804 = vand.u32 %v3590, 4294901760
    %3805 = vmatmul.mubr.f32.gmra.mxu0 %v3804
    %v3806 = vpop.f32.mrf.mxu0
    %v3807 = vadd.f32 %v3698, %v3806
    %v3808 = vpop.f32.mrf.mxu0
    %3809 = vdwg.mxu0
    %3810 = vmatprep.subr.mxu0 0.0
    %3811 = vmatpush1.msra.mxu0 0.0
    %3812 = vmatprep.subr.mxu0 0.0
    %3813 = vmatpush1.msra.mxu0 0.0
    %3814 = vmatprep.subr.mxu0 0.0
    %3815 = vmatpush1.msra.mxu0 0.0
    %3816 = vmatprep.subr.mxu0 0.0
    %3817 = vmatpush1.msra.mxu0 0.0
    %3818 = vmatprep.subr.mxu0 0.0
    %3819 = vmatpush1.msra.mxu0 0.0
    %3820 = vmatprep.subr.mxu0 0.0
    %3821 = vmatpush1.msra.mxu0 0.0
    %3822 = vmatprep.subr.mxu0 0.0
    %3823 = vmatpush1.msra.mxu0 0.0
    %3824 = vmatprep.subr.mxu0 0.0
    %3825 = vmatpush1.msra.mxu0 0.0
    %3826 = vmatprep.subr.mxu0 0.0
    %3827 = vmatpush1.msra.mxu0 0.0
    %3828 = vmatprep.subr.mxu0 0.0
    %3829 = vmatpush1.msra.mxu0 0.0
    %3830 = vmatprep.subr.mxu0 0.0
    %3831 = vmatpush1.msra.mxu0 0.0
    %3832 = vmatprep.subr.mxu0 0.0
    %3833 = vmatpush1.msra.mxu0 0.0
    %3834 = vmatprep.subr.mxu0 0.0
    %v3835 = vand.u32 %v2949, 4294901760
    %v3836 = vsub.f32 %v2949, %v3835
    %3837 = vmatpush1.msra.mxu0 %v3836
    %3838 = vmatprep.subr.mxu0 0.0
    %v3839 = vand.u32 %v2948, 4294901760
    %v3840 = vsub.f32 %v2948, %v3839
    %3841 = vmatpush1.msra.mxu0 %v3840
    %3842 = vmatprep.subr.mxu0 0.0
    %v3843 = vand.u32 %v2947, 4294901760
    %v3844 = vsub.f32 %v2947, %v3843
    %3845 = vmatpush1.msra.mxu0 %v3844
    %3846 = vmatprep.subr.mxu0 0.0
    %v3847 = vand.u32 %v2946, 4294901760
    %v3848 = vsub.f32 %v2946, %v3847
    %3849 = vmatpush1.msra.mxu0 %v3848
    %3850 = vmatprep.subr.mxu0 0.0
    %3851 = vmatpush2.msra.mxu0 0.0
    %3852 = vmatprep.subr.mxu0 0.0
    %3853 = vmatpush2.msra.mxu0 0.0
    %3854 = vmatprep.subr.mxu0 0.0
    %3855 = vmatpush2.msra.mxu0 0.0
    %3856 = vmatprep.subr.mxu0 0.0
    %3857 = vmatpush2.msra.mxu0 0.0
    %3858 = vmatprep.subr.mxu0 0.0
    %3859 = vmatpush2.msra.mxu0 0.0
    %3860 = vmatprep.subr.mxu0 0.0
    %3861 = vmatpush2.msra.mxu0 0.0
    %3862 = vmatprep.subr.mxu0 0.0
    %3863 = vmatpush2.msra.mxu0 0.0
    %3864 = vmatprep.subr.mxu0 0.0
    %3865 = vmatpush2.msra.mxu0 0.0
    %3866 = vmatprep.subr.mxu0 0.0
    %3867 = vmatpush2.msra.mxu0 0.0
    %3868 = vmatprep.subr.mxu0 0.0
    %3869 = vmatpush2.msra.mxu0 0.0
    %3870 = vmatprep.subr.mxu0 0.0
    %3871 = vmatpush2.msra.mxu0 0.0
    %3872 = vmatprep.subr.mxu0 0.0
    %3873 = vmatpush2.msra.mxu0 0.0
    %3874 = vmatprep.subr.mxu0 0.0
    %3875 = vmatpush2.msra.mxu0 0.0
    %3876 = vmatprep.subr.mxu0 0.0
    %3877 = vmatpush2.msra.mxu0 0.0
    %3878 = vmatprep.subr.mxu0 0.0
    %3879 = vmatpush2.msra.mxu0 0.0
    %3880 = vmatprep.subr.mxu0 0.0
    %3881 = vmatpush2.msra.mxu0 0.0
    %3882 = vmatprep.mubr.f32.mxu0 0.0
    %v3883 = vand.u32 %v3581, 4294901760
    %v3884 = vsub.f32 %v3581, %v3883
    %3885 = vmatmul.mubr.f32.gmra.mxu0 %v3884
    %v3886 = vpop.f32.mrf.mxu0
    %v3887 = vadd.f32 %v3789, %v3886
    %v3888 = vpop.f32.mrf.mxu0
    %3889 = vmatprep.mubr.f32.mxu0 0.0
    %v3890 = vand.u32 %v3584, 4294901760
    %v3891 = vsub.f32 %v3584, %v3890
    %3892 = vmatmul.mubr.f32.gmra.mxu0 %v3891
    %v3893 = vpop.f32.mrf.mxu0
    %v3894 = vadd.f32 %v3795, %v3893
    %v3895 = vpop.f32.mrf.mxu0
    %3896 = vmatprep.mubr.f32.mxu0 0.0
    %v3897 = vand.u32 %v3587, 4294901760
    %v3898 = vsub.f32 %v3587, %v3897
    %3899 = vmatmul.mubr.f32.gmra.mxu0 %v3898
    %v3900 = vpop.f32.mrf.mxu0
    %v3901 = vadd.f32 %v3801, %v3900
    %v3902 = vpop.f32.mrf.mxu0
    %3903 = vmatprep.mubr.f32.mxu0 0.0
    %v3904 = vand.u32 %v3590, 4294901760
    %v3905 = vsub.f32 %v3590, %v3904
    %3906 = vmatmul.mubr.f32.gmra.mxu0 %v3905
    %v3907 = vpop.f32.mrf.mxu0
    %v3908 = vadd.f32 %v3807, %v3907
    %v3909 = vpop.f32.mrf.mxu0
    %3910 = vdwg.mxu0
    %3911 = vmatprep.subr.mxu0 0.0
    %3912 = vmatpush1.msra.mxu0 0.0
    %3913 = vmatprep.subr.mxu0 0.0
    %3914 = vmatpush1.msra.mxu0 0.0
    %3915 = vmatprep.subr.mxu0 0.0
    %3916 = vmatpush1.msra.mxu0 0.0
    %3917 = vmatprep.subr.mxu0 0.0
    %3918 = vmatpush1.msra.mxu0 0.0
    %3919 = vmatprep.subr.mxu0 0.0
    %3920 = vmatpush1.msra.mxu0 0.0
    %3921 = vmatprep.subr.mxu0 0.0
    %3922 = vmatpush1.msra.mxu0 0.0
    %3923 = vmatprep.subr.mxu0 0.0
    %3924 = vmatpush1.msra.mxu0 0.0
    %3925 = vmatprep.subr.mxu0 0.0
    %3926 = vmatpush1.msra.mxu0 0.0
    %3927 = vmatprep.subr.mxu0 0.0
    %3928 = vmatpush1.msra.mxu0 0.0
    %3929 = vmatprep.subr.mxu0 0.0
    %3930 = vmatpush1.msra.mxu0 0.0
    %3931 = vmatprep.subr.mxu0 0.0
    %3932 = vmatpush1.msra.mxu0 0.0
    %3933 = vmatprep.subr.mxu0 0.0
    %3934 = vmatpush1.msra.mxu0 0.0
    %3935 = vmatprep.subr.mxu0 0.0
    %v3936 = vand.u32 %v2949, 4294901760
    %3937 = vmatpush1.msra.mxu0 %v3936
    %3938 = vmatprep.subr.mxu0 0.0
    %v3939 = vand.u32 %v2948, 4294901760
    %3940 = vmatpush1.msra.mxu0 %v3939
    %3941 = vmatprep.subr.mxu0 0.0
    %v3942 = vand.u32 %v2947, 4294901760
    %3943 = vmatpush1.msra.mxu0 %v3942
    %3944 = vmatprep.subr.mxu0 0.0
    %v3945 = vand.u32 %v2946, 4294901760
    %3946 = vmatpush1.msra.mxu0 %v3945
    %3947 = vmatprep.subr.mxu0 0.0
    %3948 = vmatpush2.msra.mxu0 0.0
    %3949 = vmatprep.subr.mxu0 0.0
    %3950 = vmatpush2.msra.mxu0 0.0
    %3951 = vmatprep.subr.mxu0 0.0
    %3952 = vmatpush2.msra.mxu0 0.0
    %3953 = vmatprep.subr.mxu0 0.0
    %3954 = vmatpush2.msra.mxu0 0.0
    %3955 = vmatprep.subr.mxu0 0.0
    %3956 = vmatpush2.msra.mxu0 0.0
    %3957 = vmatprep.subr.mxu0 0.0
    %3958 = vmatpush2.msra.mxu0 0.0
    %3959 = vmatprep.subr.mxu0 0.0
    %3960 = vmatpush2.msra.mxu0 0.0
    %3961 = vmatprep.subr.mxu0 0.0
    %3962 = vmatpush2.msra.mxu0 0.0
    %3963 = vmatprep.subr.mxu0 0.0
    %3964 = vmatpush2.msra.mxu0 0.0
    %3965 = vmatprep.subr.mxu0 0.0
    %3966 = vmatpush2.msra.mxu0 0.0
    %3967 = vmatprep.subr.mxu0 0.0
    %3968 = vmatpush2.msra.mxu0 0.0
    %3969 = vmatprep.subr.mxu0 0.0
    %3970 = vmatpush2.msra.mxu0 0.0
    %3971 = vmatprep.subr.mxu0 0.0
    %3972 = vmatpush2.msra.mxu0 0.0
    %3973 = vmatprep.subr.mxu0 0.0
    %3974 = vmatpush2.msra.mxu0 0.0
    %3975 = vmatprep.subr.mxu0 0.0
    %3976 = vmatpush2.msra.mxu0 0.0
    %3977 = vmatprep.subr.mxu0 0.0
    %3978 = vmatpush2.msra.mxu0 0.0
    %3979 = vmatprep.mubr.f32.mxu0 0.0
    %v3980 = vand.u32 %v3581, 4294901760
    %v3981 = vsub.f32 %v3581, %v3980
    %v3982 = vand.u32 %v3981, 4294901760
    %3983 = vmatmul.mubr.f32.gmra.mxu0 %v3982
    %v3984 = vpop.f32.mrf.mxu0
    %v3985 = vadd.f32 %v3887, %v3984
    %v3986 = vpop.f32.mrf.mxu0
    %3987 = vmatprep.mubr.f32.mxu0 0.0
    %v3988 = vand.u32 %v3584, 4294901760
    %v3989 = vsub.f32 %v3584, %v3988
    %v3990 = vand.u32 %v3989, 4294901760
    %3991 = vmatmul.mubr.f32.gmra.mxu0 %v3990
    %v3992 = vpop.f32.mrf.mxu0
    %v3993 = vadd.f32 %v3894, %v3992
    %v3994 = vpop.f32.mrf.mxu0
    %3995 = vmatprep.mubr.f32.mxu0 0.0
    %v3996 = vand.u32 %v3587, 4294901760
    %v3997 = vsub.f32 %v3587, %v3996
    %v3998 = vand.u32 %v3997, 4294901760
    %3999 = vmatmul.mubr.f32.gmra.mxu0 %v3998
    %v4000 = vpop.f32.mrf.mxu0
    %v4001 = vadd.f32 %v3901, %v4000
    %v4002 = vpop.f32.mrf.mxu0
    %4003 = vmatprep.mubr.f32.mxu0 0.0
    %v4004 = vand.u32 %v3590, 4294901760
    %v4005 = vsub.f32 %v3590, %v4004
    %v4006 = vand.u32 %v4005, 4294901760
    %4007 = vmatmul.mubr.f32.gmra.mxu0 %v4006
    %v4008 = vpop.f32.mrf.mxu0
    %v4009 = vadd.f32 %v3908, %v4008
    %v4010 = vpop.f32.mrf.mxu0
    %4011 = vdwg.mxu0
    %4012 = vmatprep.subr.mxu0 0.0
    %4013 = vmatpush1.msra.mxu0 0.0
    %4014 = vmatprep.subr.mxu0 0.0
    %4015 = vmatpush1.msra.mxu0 0.0
    %4016 = vmatprep.subr.mxu0 0.0
    %4017 = vmatpush1.msra.mxu0 0.0
    %4018 = vmatprep.subr.mxu0 0.0
    %4019 = vmatpush1.msra.mxu0 0.0
    %4020 = vmatprep.subr.mxu0 0.0
    %4021 = vmatpush1.msra.mxu0 0.0
    %4022 = vmatprep.subr.mxu0 0.0
    %4023 = vmatpush1.msra.mxu0 0.0
    %4024 = vmatprep.subr.mxu0 0.0
    %4025 = vmatpush1.msra.mxu0 0.0
    %4026 = vmatprep.subr.mxu0 0.0
    %4027 = vmatpush1.msra.mxu0 0.0
    %4028 = vmatprep.subr.mxu0 0.0
    %4029 = vmatpush1.msra.mxu0 0.0
    %4030 = vmatprep.subr.mxu0 0.0
    %4031 = vmatpush1.msra.mxu0 0.0
    %4032 = vmatprep.subr.mxu0 0.0
    %4033 = vmatpush1.msra.mxu0 0.0
    %4034 = vmatprep.subr.mxu0 0.0
    %4035 = vmatpush1.msra.mxu0 0.0
    %4036 = vmatprep.subr.mxu0 0.0
    %v4037 = vand.u32 %v2949, 4294901760
    %v4038 = vsub.f32 %v2949, %v4037
    %v4039 = vand.u32 %v4038, 4294901760
    %4040 = vmatpush1.msra.mxu0 %v4039
    %4041 = vmatprep.subr.mxu0 0.0
    %v4042 = vand.u32 %v2948, 4294901760
    %v4043 = vsub.f32 %v2948, %v4042
    %v4044 = vand.u32 %v4043, 4294901760
    %4045 = vmatpush1.msra.mxu0 %v4044
    %4046 = vmatprep.subr.mxu0 0.0
    %v4047 = vand.u32 %v2947, 4294901760
    %v4048 = vsub.f32 %v2947, %v4047
    %v4049 = vand.u32 %v4048, 4294901760
    %4050 = vmatpush1.msra.mxu0 %v4049
    %4051 = vmatprep.subr.mxu0 0.0
    %v4052 = vand.u32 %v2946, 4294901760
    %v4053 = vsub.f32 %v2946, %v4052
    %v4054 = vand.u32 %v4053, 4294901760
    %4055 = vmatpush1.msra.mxu0 %v4054
    %4056 = vmatprep.subr.mxu0 0.0
    %4057 = vmatpush2.msra.mxu0 0.0
    %4058 = vmatprep.subr.mxu0 0.0
    %4059 = vmatpush2.msra.mxu0 0.0
    %4060 = vmatprep.subr.mxu0 0.0
    %4061 = vmatpush2.msra.mxu0 0.0
    %4062 = vmatprep.subr.mxu0 0.0
    %4063 = vmatpush2.msra.mxu0 0.0
    %4064 = vmatprep.subr.mxu0 0.0
    %4065 = vmatpush2.msra.mxu0 0.0
    %4066 = vmatprep.subr.mxu0 0.0
    %4067 = vmatpush2.msra.mxu0 0.0
    %4068 = vmatprep.subr.mxu0 0.0
    %4069 = vmatpush2.msra.mxu0 0.0
    %4070 = vmatprep.subr.mxu0 0.0
    %4071 = vmatpush2.msra.mxu0 0.0
    %4072 = vmatprep.subr.mxu0 0.0
    %4073 = vmatpush2.msra.mxu0 0.0
    %4074 = vmatprep.subr.mxu0 0.0
    %4075 = vmatpush2.msra.mxu0 0.0
    %4076 = vmatprep.subr.mxu0 0.0
    %4077 = vmatpush2.msra.mxu0 0.0
    %4078 = vmatprep.subr.mxu0 0.0
    %4079 = vmatpush2.msra.mxu0 0.0
    %4080 = vmatprep.subr.mxu0 0.0
    %4081 = vmatpush2.msra.mxu0 0.0
    %4082 = vmatprep.subr.mxu0 0.0
    %4083 = vmatpush2.msra.mxu0 0.0
    %4084 = vmatprep.subr.mxu0 0.0
    %4085 = vmatpush2.msra.mxu0 0.0
    %4086 = vmatprep.subr.mxu0 0.0
    %4087 = vmatpush2.msra.mxu0 0.0
    %4088 = vmatprep.mubr.f32.mxu0 0.0
    %v4089 = vand.u32 %v3581, 4294901760
    %4090 = vmatmul.mubr.f32.gmra.mxu0 %v4089
    %v4091 = vpop.f32.mrf.mxu0
    %v4092 = vadd.f32 %v3985, %v4091
    %v4093 = vpop.f32.mrf.mxu0
    %4094 = vmatprep.mubr.f32.mxu0 0.0
    %v4095 = vand.u32 %v3584, 4294901760
    %4096 = vmatmul.mubr.f32.gmra.mxu0 %v4095
    %v4097 = vpop.f32.mrf.mxu0
    %v4098 = vadd.f32 %v3993, %v4097
    %v4099 = vpop.f32.mrf.mxu0
    %4100 = vmatprep.mubr.f32.mxu0 0.0
    %v4101 = vand.u32 %v3587, 4294901760
    %4102 = vmatmul.mubr.f32.gmra.mxu0 %v4101
    %v4103 = vpop.f32.mrf.mxu0
    %v4104 = vadd.f32 %v4001, %v4103
    %v4105 = vpop.f32.mrf.mxu0
    %4106 = vmatprep.mubr.f32.mxu0 0.0
    %v4107 = vand.u32 %v3590, 4294901760
    %4108 = vmatmul.mubr.f32.gmra.mxu0 %v4107
    %v4109 = vpop.f32.mrf.mxu0
    %v4110 = vadd.f32 %v4009, %v4109
    %v4111 = vpop.f32.mrf.mxu0
    %4112 = vdwg.mxu0
    %4113 = vmatprep.subr.mxu0 0.0
    %4114 = vmatpush1.msra.mxu0 0.0
    %4115 = vmatprep.subr.mxu0 0.0
    %4116 = vmatpush1.msra.mxu0 0.0
    %4117 = vmatprep.subr.mxu0 0.0
    %4118 = vmatpush1.msra.mxu0 0.0
    %4119 = vmatprep.subr.mxu0 0.0
    %4120 = vmatpush1.msra.mxu0 0.0
    %4121 = vmatprep.subr.mxu0 0.0
    %4122 = vmatpush1.msra.mxu0 0.0
    %4123 = vmatprep.subr.mxu0 0.0
    %4124 = vmatpush1.msra.mxu0 0.0
    %4125 = vmatprep.subr.mxu0 0.0
    %4126 = vmatpush1.msra.mxu0 0.0
    %4127 = vmatprep.subr.mxu0 0.0
    %4128 = vmatpush1.msra.mxu0 0.0
    %4129 = vmatprep.subr.mxu0 0.0
    %4130 = vmatpush1.msra.mxu0 0.0
    %4131 = vmatprep.subr.mxu0 0.0
    %4132 = vmatpush1.msra.mxu0 0.0
    %4133 = vmatprep.subr.mxu0 0.0
    %4134 = vmatpush1.msra.mxu0 0.0
    %4135 = vmatprep.subr.mxu0 0.0
    %4136 = vmatpush1.msra.mxu0 0.0
    %4137 = vmatprep.subr.mxu0 0.0
    %v4138 = vand.u32 %v2949, 4294901760
    %4139 = vmatpush1.msra.mxu0 %v4138
    %4140 = vmatprep.subr.mxu0 0.0
    %v4141 = vand.u32 %v2948, 4294901760
    %4142 = vmatpush1.msra.mxu0 %v4141
    %4143 = vmatprep.subr.mxu0 0.0
    %v4144 = vand.u32 %v2947, 4294901760
    %4145 = vmatpush1.msra.mxu0 %v4144
    %4146 = vmatprep.subr.mxu0 0.0
    %v4147 = vand.u32 %v2946, 4294901760
    %4148 = vmatpush1.msra.mxu0 %v4147
    %4149 = vmatprep.subr.mxu0 0.0
    %4150 = vmatpush2.msra.mxu0 0.0
    %4151 = vmatprep.subr.mxu0 0.0
    %4152 = vmatpush2.msra.mxu0 0.0
    %4153 = vmatprep.subr.mxu0 0.0
    %4154 = vmatpush2.msra.mxu0 0.0
    %4155 = vmatprep.subr.mxu0 0.0
    %4156 = vmatpush2.msra.mxu0 0.0
    %4157 = vmatprep.subr.mxu0 0.0
    %4158 = vmatpush2.msra.mxu0 0.0
    %4159 = vmatprep.subr.mxu0 0.0
    %4160 = vmatpush2.msra.mxu0 0.0
    %4161 = vmatprep.subr.mxu0 0.0
    %4162 = vmatpush2.msra.mxu0 0.0
    %4163 = vmatprep.subr.mxu0 0.0
    %4164 = vmatpush2.msra.mxu0 0.0
    %4165 = vmatprep.subr.mxu0 0.0
    %4166 = vmatpush2.msra.mxu0 0.0
    %4167 = vmatprep.subr.mxu0 0.0
    %4168 = vmatpush2.msra.mxu0 0.0
    %4169 = vmatprep.subr.mxu0 0.0
    %4170 = vmatpush2.msra.mxu0 0.0
    %4171 = vmatprep.subr.mxu0 0.0
    %4172 = vmatpush2.msra.mxu0 0.0
    %4173 = vmatprep.subr.mxu0 0.0
    %4174 = vmatpush2.msra.mxu0 0.0
    %4175 = vmatprep.subr.mxu0 0.0
    %4176 = vmatpush2.msra.mxu0 0.0
    %4177 = vmatprep.subr.mxu0 0.0
    %4178 = vmatpush2.msra.mxu0 0.0
    %4179 = vmatprep.subr.mxu0 0.0
    %4180 = vmatpush2.msra.mxu0 0.0
    %4181 = vmatprep.mubr.f32.mxu0 0.0
    %v4182 = vand.u32 %v3581, 4294901760
    %4183 = vmatmul.mubr.f32.gmra.mxu0 %v4182
    %v4184 = vpop.f32.mrf.mxu0
    %v4185 = vadd.f32 %v4092, %v4184
    %v4186 = vpop.f32.mrf.mxu0
    %4187 = vmatprep.mubr.f32.mxu0 0.0
    %v4188 = vand.u32 %v3584, 4294901760
    %4189 = vmatmul.mubr.f32.gmra.mxu0 %v4188
    %v4190 = vpop.f32.mrf.mxu0
    %v4191 = vadd.f32 %v4098, %v4190
    %v4192 = vpop.f32.mrf.mxu0
    %4193 = vmatprep.mubr.f32.mxu0 0.0
    %v4194 = vand.u32 %v3587, 4294901760
    %4195 = vmatmul.mubr.f32.gmra.mxu0 %v4194
    %v4196 = vpop.f32.mrf.mxu0
    %v4197 = vadd.f32 %v4104, %v4196
    %v4198 = vpop.f32.mrf.mxu0
    %4199 = vmatprep.mubr.f32.mxu0 0.0
    %v4200 = vand.u32 %v3590, 4294901760
    %4201 = vmatmul.mubr.f32.gmra.mxu0 %v4200
    %v4202 = vpop.f32.mrf.mxu0
    %v4203 = vadd.f32 %v4110, %v4202
    %v4204 = vpop.f32.mrf.mxu0
    %4205 = vdwg.mxu0
    %v4206 = vld [vmem:[%s1 + $0xa0] sm:$0xff]
    %v4207 = vld [vmem:[%s1 + $0xa8] sm:$0xff]
    %v4208 = vld [vmem:[%s1 + $0xb0] sm:$0xff]
    %v4209 = vld [vmem:[%s1 + $0xb8] sm:$0xff]
    %v4211 = vsel %vm139, %v2942, 0
    %v4214 = vsel %vm139, %v2943, 0
    %v4217 = vsel %vm139, %v2944, 0
    %v4220 = vsel %vm139, %v2945, 0
    %4222 = vmatprep.subr.mxu0 0.0
    %4223 = vmatpush1.msra.mxu0 0.0
    %4224 = vmatprep.subr.mxu0 0.0
    %4225 = vmatpush1.msra.mxu0 0.0
    %4226 = vmatprep.subr.mxu0 0.0
    %4227 = vmatpush1.msra.mxu0 0.0
    %4228 = vmatprep.subr.mxu0 0.0
    %4229 = vmatpush1.msra.mxu0 0.0
    %4230 = vmatprep.subr.mxu0 0.0
    %4231 = vmatpush1.msra.mxu0 0.0
    %4232 = vmatprep.subr.mxu0 0.0
    %4233 = vmatpush1.msra.mxu0 0.0
    %4234 = vmatprep.subr.mxu0 0.0
    %4235 = vmatpush1.msra.mxu0 0.0
    %4236 = vmatprep.subr.mxu0 0.0
    %4237 = vmatpush1.msra.mxu0 0.0
    %4238 = vmatprep.subr.mxu0 0.0
    %4239 = vmatpush1.msra.mxu0 0.0
    %4240 = vmatprep.subr.mxu0 0.0
    %4241 = vmatpush1.msra.mxu0 0.0
    %4242 = vmatprep.subr.mxu0 0.0
    %4243 = vmatpush1.msra.mxu0 0.0
    %4244 = vmatprep.subr.mxu0 0.0
    %4245 = vmatpush1.msra.mxu0 0.0
    %4246 = vmatprep.subr.mxu0 0.0
    %v4247 = vand.u32 %v4209, 4294901760
    %4248 = vmatpush1.msra.mxu0 %v4247
    %4249 = vmatprep.subr.mxu0 0.0
    %v4250 = vand.u32 %v4208, 4294901760
    %4251 = vmatpush1.msra.mxu0 %v4250
    %4252 = vmatprep.subr.mxu0 0.0
    %v4253 = vand.u32 %v4207, 4294901760
    %4254 = vmatpush1.msra.mxu0 %v4253
    %4255 = vmatprep.subr.mxu0 0.0
    %v4256 = vand.u32 %v4206, 4294901760
    %4257 = vmatpush1.msra.mxu0 %v4256
    %4258 = vmatprep.subr.mxu0 0.0
    %4259 = vmatpush2.msra.mxu0 0.0
    %4260 = vmatprep.subr.mxu0 0.0
    %4261 = vmatpush2.msra.mxu0 0.0
    %4262 = vmatprep.subr.mxu0 0.0
    %4263 = vmatpush2.msra.mxu0 0.0
    %4264 = vmatprep.subr.mxu0 0.0
    %4265 = vmatpush2.msra.mxu0 0.0
    %4266 = vmatprep.subr.mxu0 0.0
    %4267 = vmatpush2.msra.mxu0 0.0
    %4268 = vmatprep.subr.mxu0 0.0
    %4269 = vmatpush2.msra.mxu0 0.0
    %4270 = vmatprep.subr.mxu0 0.0
    %4271 = vmatpush2.msra.mxu0 0.0
    %4272 = vmatprep.subr.mxu0 0.0
    %4273 = vmatpush2.msra.mxu0 0.0
    %4274 = vmatprep.subr.mxu0 0.0
    %4275 = vmatpush2.msra.mxu0 0.0
    %4276 = vmatprep.subr.mxu0 0.0
    %4277 = vmatpush2.msra.mxu0 0.0
    %4278 = vmatprep.subr.mxu0 0.0
    %4279 = vmatpush2.msra.mxu0 0.0
    %4280 = vmatprep.subr.mxu0 0.0
    %4281 = vmatpush2.msra.mxu0 0.0
    %4282 = vmatprep.subr.mxu0 0.0
    %4283 = vmatpush2.msra.mxu0 0.0
    %4284 = vmatprep.subr.mxu0 0.0
    %4285 = vmatpush2.msra.mxu0 0.0
    %4286 = vmatprep.subr.mxu0 0.0
    %4287 = vmatpush2.msra.mxu0 0.0
    %4288 = vmatprep.subr.mxu0 0.0
    %4289 = vmatpush2.msra.mxu0 0.0
    %4290 = vmatprep.mubr.f32.mxu0 0.0
    %v4291 = vand.u32 %v4211, 4294901760
    %v4292 = vsub.f32 %v4211, %v4291
    %v4293 = vand.u32 %v4292, 4294901760
    %v4294 = vsub.f32 %v4292, %v4293
    %v4295 = vand.u32 %v4294, 4294901760
    %4296 = vmatmul.mubr.f32.gmra.mxu0 %v4295
    %v4297 = vpop.f32.mrf.mxu0
    %v4298 = vadd.f32 0.0, %v4297
    %v4299 = vpop.f32.mrf.mxu0
    %4300 = vmatprep.mubr.f32.mxu0 0.0
    %v4301 = vand.u32 %v4214, 4294901760
    %v4302 = vsub.f32 %v4214, %v4301
    %v4303 = vand.u32 %v4302, 4294901760
    %v4304 = vsub.f32 %v4302, %v4303
    %v4305 = vand.u32 %v4304, 4294901760
    %4306 = vmatmul.mubr.f32.gmra.mxu0 %v4305
    %v4307 = vpop.f32.mrf.mxu0
    %v4308 = vadd.f32 0.0, %v4307
    %v4309 = vpop.f32.mrf.mxu0
    %4310 = vmatprep.mubr.f32.mxu0 0.0
    %v4311 = vand.u32 %v4217, 4294901760
    %v4312 = vsub.f32 %v4217, %v4311
    %v4313 = vand.u32 %v4312, 4294901760
    %v4314 = vsub.f32 %v4312, %v4313
    %v4315 = vand.u32 %v4314, 4294901760
    %4316 = vmatmul.mubr.f32.gmra.mxu0 %v4315
    %v4317 = vpop.f32.mrf.mxu0
    %v4318 = vadd.f32 0.0, %v4317
    %v4319 = vpop.f32.mrf.mxu0
    %4320 = vmatprep.mubr.f32.mxu0 0.0
    %v4321 = vand.u32 %v4220, 4294901760
    %v4322 = vsub.f32 %v4220, %v4321
    %v4323 = vand.u32 %v4322, 4294901760
    %v4324 = vsub.f32 %v4322, %v4323
    %v4325 = vand.u32 %v4324, 4294901760
    %4326 = vmatmul.mubr.f32.gmra.mxu0 %v4325
    %v4327 = vpop.f32.mrf.mxu0
    %v4328 = vadd.f32 0.0, %v4327
    %v4329 = vpop.f32.mrf.mxu0
    %4330 = vdwg.mxu0
    %4331 = vmatprep.subr.mxu0 0.0
    %4332 = vmatpush1.msra.mxu0 0.0
    %4333 = vmatprep.subr.mxu0 0.0
    %4334 = vmatpush1.msra.mxu0 0.0
    %4335 = vmatprep.subr.mxu0 0.0
    %4336 = vmatpush1.msra.mxu0 0.0
    %4337 = vmatprep.subr.mxu0 0.0
    %4338 = vmatpush1.msra.mxu0 0.0
    %4339 = vmatprep.subr.mxu0 0.0
    %4340 = vmatpush1.msra.mxu0 0.0
    %4341 = vmatprep.subr.mxu0 0.0
    %4342 = vmatpush1.msra.mxu0 0.0
    %4343 = vmatprep.subr.mxu0 0.0
    %4344 = vmatpush1.msra.mxu0 0.0
    %4345 = vmatprep.subr.mxu0 0.0
    %4346 = vmatpush1.msra.mxu0 0.0
    %4347 = vmatprep.subr.mxu0 0.0
    %4348 = vmatpush1.msra.mxu0 0.0
    %4349 = vmatprep.subr.mxu0 0.0
    %4350 = vmatpush1.msra.mxu0 0.0
    %4351 = vmatprep.subr.mxu0 0.0
    %4352 = vmatpush1.msra.mxu0 0.0
    %4353 = vmatprep.subr.mxu0 0.0
    %4354 = vmatpush1.msra.mxu0 0.0
    %4355 = vmatprep.subr.mxu0 0.0
    %v4356 = vand.u32 %v4209, 4294901760
    %v4357 = vsub.f32 %v4209, %v4356
    %v4358 = vand.u32 %v4357, 4294901760
    %v4359 = vsub.f32 %v4357, %v4358
    %v4360 = vand.u32 %v4359, 4294901760
    %4361 = vmatpush1.msra.mxu0 %v4360
    %4362 = vmatprep.subr.mxu0 0.0
    %v4363 = vand.u32 %v4208, 4294901760
    %v4364 = vsub.f32 %v4208, %v4363
    %v4365 = vand.u32 %v4364, 4294901760
    %v4366 = vsub.f32 %v4364, %v4365
    %v4367 = vand.u32 %v4366, 4294901760
    %4368 = vmatpush1.msra.mxu0 %v4367
    %4369 = vmatprep.subr.mxu0 0.0
    %v4370 = vand.u32 %v4207, 4294901760
    %v4371 = vsub.f32 %v4207, %v4370
    %v4372 = vand.u32 %v4371, 4294901760
    %v4373 = vsub.f32 %v4371, %v4372
    %v4374 = vand.u32 %v4373, 4294901760
    %4375 = vmatpush1.msra.mxu0 %v4374
    %4376 = vmatprep.subr.mxu0 0.0
    %v4377 = vand.u32 %v4206, 4294901760
    %v4378 = vsub.f32 %v4206, %v4377
    %v4379 = vand.u32 %v4378, 4294901760
    %v4380 = vsub.f32 %v4378, %v4379
    %v4381 = vand.u32 %v4380, 4294901760
    %4382 = vmatpush1.msra.mxu0 %v4381
    %4383 = vmatprep.subr.mxu0 0.0
    %4384 = vmatpush2.msra.mxu0 0.0
    %4385 = vmatprep.subr.mxu0 0.0
    %4386 = vmatpush2.msra.mxu0 0.0
    %4387 = vmatprep.subr.mxu0 0.0
    %4388 = vmatpush2.msra.mxu0 0.0
    %4389 = vmatprep.subr.mxu0 0.0
    %4390 = vmatpush2.msra.mxu0 0.0
    %4391 = vmatprep.subr.mxu0 0.0
    %4392 = vmatpush2.msra.mxu0 0.0
    %4393 = vmatprep.subr.mxu0 0.0
    %4394 = vmatpush2.msra.mxu0 0.0
    %4395 = vmatprep.subr.mxu0 0.0
    %4396 = vmatpush2.msra.mxu0 0.0
    %4397 = vmatprep.subr.mxu0 0.0
    %4398 = vmatpush2.msra.mxu0 0.0
    %4399 = vmatprep.subr.mxu0 0.0
    %4400 = vmatpush2.msra.mxu0 0.0
    %4401 = vmatprep.subr.mxu0 0.0
    %4402 = vmatpush2.msra.mxu0 0.0
    %4403 = vmatprep.subr.mxu0 0.0
    %4404 = vmatpush2.msra.mxu0 0.0
    %4405 = vmatprep.subr.mxu0 0.0
    %4406 = vmatpush2.msra.mxu0 0.0
    %4407 = vmatprep.subr.mxu0 0.0
    %4408 = vmatpush2.msra.mxu0 0.0
    %4409 = vmatprep.subr.mxu0 0.0
    %4410 = vmatpush2.msra.mxu0 0.0
    %4411 = vmatprep.subr.mxu0 0.0
    %4412 = vmatpush2.msra.mxu0 0.0
    %4413 = vmatprep.subr.mxu0 0.0
    %4414 = vmatpush2.msra.mxu0 0.0
    %4415 = vmatprep.mubr.f32.mxu0 0.0
    %v4416 = vand.u32 %v4211, 4294901760
    %4417 = vmatmul.mubr.f32.gmra.mxu0 %v4416
    %v4418 = vpop.f32.mrf.mxu0
    %v4419 = vadd.f32 %v4298, %v4418
    %v4420 = vpop.f32.mrf.mxu0
    %4421 = vmatprep.mubr.f32.mxu0 0.0
    %v4422 = vand.u32 %v4214, 4294901760
    %4423 = vmatmul.mubr.f32.gmra.mxu0 %v4422
    %v4424 = vpop.f32.mrf.mxu0
    %v4425 = vadd.f32 %v4308, %v4424
    %v4426 = vpop.f32.mrf.mxu0
    %4427 = vmatprep.mubr.f32.mxu0 0.0
    %v4428 = vand.u32 %v4217, 4294901760
    %4429 = vmatmul.mubr.f32.gmra.mxu0 %v4428
    %v4430 = vpop.f32.mrf.mxu0
    %v4431 = vadd.f32 %v4318, %v4430
    %v4432 = vpop.f32.mrf.mxu0
    %4433 = vmatprep.mubr.f32.mxu0 0.0
    %v4434 = vand.u32 %v4220, 4294901760
    %4435 = vmatmul.mubr.f32.gmra.mxu0 %v4434
    %v4436 = vpop.f32.mrf.mxu0
    %v4437 = vadd.f32 %v4328, %v4436
    %v4438 = vpop.f32.mrf.mxu0
    %4439 = vdwg.mxu0
    %4440 = vmatprep.subr.mxu0 0.0
    %4441 = vmatpush1.msra.mxu0 0.0
    %4442 = vmatprep.subr.mxu0 0.0
    %4443 = vmatpush1.msra.mxu0 0.0
    %4444 = vmatprep.subr.mxu0 0.0
    %4445 = vmatpush1.msra.mxu0 0.0
    %4446 = vmatprep.subr.mxu0 0.0
    %4447 = vmatpush1.msra.mxu0 0.0
    %4448 = vmatprep.subr.mxu0 0.0
    %4449 = vmatpush1.msra.mxu0 0.0
    %4450 = vmatprep.subr.mxu0 0.0
    %4451 = vmatpush1.msra.mxu0 0.0
    %4452 = vmatprep.subr.mxu0 0.0
    %4453 = vmatpush1.msra.mxu0 0.0
    %4454 = vmatprep.subr.mxu0 0.0
    %4455 = vmatpush1.msra.mxu0 0.0
    %4456 = vmatprep.subr.mxu0 0.0
    %4457 = vmatpush1.msra.mxu0 0.0
    %4458 = vmatprep.subr.mxu0 0.0
    %4459 = vmatpush1.msra.mxu0 0.0
    %4460 = vmatprep.subr.mxu0 0.0
    %4461 = vmatpush1.msra.mxu0 0.0
    %4462 = vmatprep.subr.mxu0 0.0
    %4463 = vmatpush1.msra.mxu0 0.0
    %4464 = vmatprep.subr.mxu0 0.0
    %v4465 = vand.u32 %v4209, 4294901760
    %v4466 = vsub.f32 %v4209, %v4465
    %4467 = vmatpush1.msra.mxu0 %v4466
    %4468 = vmatprep.subr.mxu0 0.0
    %v4469 = vand.u32 %v4208, 4294901760
    %v4470 = vsub.f32 %v4208, %v4469
    %4471 = vmatpush1.msra.mxu0 %v4470
    %4472 = vmatprep.subr.mxu0 0.0
    %v4473 = vand.u32 %v4207, 4294901760
    %v4474 = vsub.f32 %v4207, %v4473
    %4475 = vmatpush1.msra.mxu0 %v4474
    %4476 = vmatprep.subr.mxu0 0.0
    %v4477 = vand.u32 %v4206, 4294901760
    %v4478 = vsub.f32 %v4206, %v4477
    %4479 = vmatpush1.msra.mxu0 %v4478
    %4480 = vmatprep.subr.mxu0 0.0
    %4481 = vmatpush2.msra.mxu0 0.0
    %4482 = vmatprep.subr.mxu0 0.0
    %4483 = vmatpush2.msra.mxu0 0.0
    %4484 = vmatprep.subr.mxu0 0.0
    %4485 = vmatpush2.msra.mxu0 0.0
    %4486 = vmatprep.subr.mxu0 0.0
    %4487 = vmatpush2.msra.mxu0 0.0
    %4488 = vmatprep.subr.mxu0 0.0
    %4489 = vmatpush2.msra.mxu0 0.0
    %4490 = vmatprep.subr.mxu0 0.0
    %4491 = vmatpush2.msra.mxu0 0.0
    %4492 = vmatprep.subr.mxu0 0.0
    %4493 = vmatpush2.msra.mxu0 0.0
    %4494 = vmatprep.subr.mxu0 0.0
    %4495 = vmatpush2.msra.mxu0 0.0
    %4496 = vmatprep.subr.mxu0 0.0
    %4497 = vmatpush2.msra.mxu0 0.0
    %4498 = vmatprep.subr.mxu0 0.0
    %4499 = vmatpush2.msra.mxu0 0.0
    %4500 = vmatprep.subr.mxu0 0.0
    %4501 = vmatpush2.msra.mxu0 0.0
    %4502 = vmatprep.subr.mxu0 0.0
    %4503 = vmatpush2.msra.mxu0 0.0
    %4504 = vmatprep.subr.mxu0 0.0
    %4505 = vmatpush2.msra.mxu0 0.0
    %4506 = vmatprep.subr.mxu0 0.0
    %4507 = vmatpush2.msra.mxu0 0.0
    %4508 = vmatprep.subr.mxu0 0.0
    %4509 = vmatpush2.msra.mxu0 0.0
    %4510 = vmatprep.subr.mxu0 0.0
    %4511 = vmatpush2.msra.mxu0 0.0
    %4512 = vmatprep.mubr.f32.mxu0 0.0
    %v4513 = vand.u32 %v4211, 4294901760
    %v4514 = vsub.f32 %v4211, %v4513
    %4515 = vmatmul.mubr.f32.gmra.mxu0 %v4514
    %v4516 = vpop.f32.mrf.mxu0
    %v4517 = vadd.f32 %v4419, %v4516
    %v4518 = vpop.f32.mrf.mxu0
    %4519 = vmatprep.mubr.f32.mxu0 0.0
    %v4520 = vand.u32 %v4214, 4294901760
    %v4521 = vsub.f32 %v4214, %v4520
    %4522 = vmatmul.mubr.f32.gmra.mxu0 %v4521
    %v4523 = vpop.f32.mrf.mxu0
    %v4524 = vadd.f32 %v4425, %v4523
    %v4525 = vpop.f32.mrf.mxu0
    %4526 = vmatprep.mubr.f32.mxu0 0.0
    %v4527 = vand.u32 %v4217, 4294901760
    %v4528 = vsub.f32 %v4217, %v4527
    %4529 = vmatmul.mubr.f32.gmra.mxu0 %v4528
    %v4530 = vpop.f32.mrf.mxu0
    %v4531 = vadd.f32 %v4431, %v4530
    %v4532 = vpop.f32.mrf.mxu0
    %4533 = vmatprep.mubr.f32.mxu0 0.0
    %v4534 = vand.u32 %v4220, 4294901760
    %v4535 = vsub.f32 %v4220, %v4534
    %4536 = vmatmul.mubr.f32.gmra.mxu0 %v4535
    %v4537 = vpop.f32.mrf.mxu0
    %v4538 = vadd.f32 %v4437, %v4537
    %v4539 = vpop.f32.mrf.mxu0
    %4540 = vdwg.mxu0
    %4541 = vmatprep.subr.mxu0 0.0
    %4542 = vmatpush1.msra.mxu0 0.0
    %4543 = vmatprep.subr.mxu0 0.0
    %4544 = vmatpush1.msra.mxu0 0.0
    %4545 = vmatprep.subr.mxu0 0.0
    %4546 = vmatpush1.msra.mxu0 0.0
    %4547 = vmatprep.subr.mxu0 0.0
    %4548 = vmatpush1.msra.mxu0 0.0
    %4549 = vmatprep.subr.mxu0 0.0
    %4550 = vmatpush1.msra.mxu0 0.0
    %4551 = vmatprep.subr.mxu0 0.0
    %4552 = vmatpush1.msra.mxu0 0.0
    %4553 = vmatprep.subr.mxu0 0.0
    %4554 = vmatpush1.msra.mxu0 0.0
    %4555 = vmatprep.subr.mxu0 0.0
    %4556 = vmatpush1.msra.mxu0 0.0
    %4557 = vmatprep.subr.mxu0 0.0
    %4558 = vmatpush1.msra.mxu0 0.0
    %4559 = vmatprep.subr.mxu0 0.0
    %4560 = vmatpush1.msra.mxu0 0.0
    %4561 = vmatprep.subr.mxu0 0.0
    %4562 = vmatpush1.msra.mxu0 0.0
    %4563 = vmatprep.subr.mxu0 0.0
    %4564 = vmatpush1.msra.mxu0 0.0
    %4565 = vmatprep.subr.mxu0 0.0
    %v4566 = vand.u32 %v4209, 4294901760
    %4567 = vmatpush1.msra.mxu0 %v4566
    %4568 = vmatprep.subr.mxu0 0.0
    %v4569 = vand.u32 %v4208, 4294901760
    %4570 = vmatpush1.msra.mxu0 %v4569
    %4571 = vmatprep.subr.mxu0 0.0
    %v4572 = vand.u32 %v4207, 4294901760
    %4573 = vmatpush1.msra.mxu0 %v4572
    %4574 = vmatprep.subr.mxu0 0.0
    %v4575 = vand.u32 %v4206, 4294901760
    %4576 = vmatpush1.msra.mxu0 %v4575
    %4577 = vmatprep.subr.mxu0 0.0
    %4578 = vmatpush2.msra.mxu0 0.0
    %4579 = vmatprep.subr.mxu0 0.0
    %4580 = vmatpush2.msra.mxu0 0.0
    %4581 = vmatprep.subr.mxu0 0.0
    %4582 = vmatpush2.msra.mxu0 0.0
    %4583 = vmatprep.subr.mxu0 0.0
    %4584 = vmatpush2.msra.mxu0 0.0
    %4585 = vmatprep.subr.mxu0 0.0
    %4586 = vmatpush2.msra.mxu0 0.0
    %4587 = vmatprep.subr.mxu0 0.0
    %4588 = vmatpush2.msra.mxu0 0.0
    %4589 = vmatprep.subr.mxu0 0.0
    %4590 = vmatpush2.msra.mxu0 0.0
    %4591 = vmatprep.subr.mxu0 0.0
    %4592 = vmatpush2.msra.mxu0 0.0
    %4593 = vmatprep.subr.mxu0 0.0
    %4594 = vmatpush2.msra.mxu0 0.0
    %4595 = vmatprep.subr.mxu0 0.0
    %4596 = vmatpush2.msra.mxu0 0.0
    %4597 = vmatprep.subr.mxu0 0.0
    %4598 = vmatpush2.msra.mxu0 0.0
    %4599 = vmatprep.subr.mxu0 0.0
    %4600 = vmatpush2.msra.mxu0 0.0
    %4601 = vmatprep.subr.mxu0 0.0
    %4602 = vmatpush2.msra.mxu0 0.0
    %4603 = vmatprep.subr.mxu0 0.0
    %4604 = vmatpush2.msra.mxu0 0.0
    %4605 = vmatprep.subr.mxu0 0.0
    %4606 = vmatpush2.msra.mxu0 0.0
    %4607 = vmatprep.subr.mxu0 0.0
    %4608 = vmatpush2.msra.mxu0 0.0
    %4609 = vmatprep.mubr.f32.mxu0 0.0
    %v4610 = vand.u32 %v4211, 4294901760
    %v4611 = vsub.f32 %v4211, %v4610
    %v4612 = vand.u32 %v4611, 4294901760
    %4613 = vmatmul.mubr.f32.gmra.mxu0 %v4612
    %v4614 = vpop.f32.mrf.mxu0
    %v4615 = vadd.f32 %v4517, %v4614
    %v4616 = vpop.f32.mrf.mxu0
    %4617 = vmatprep.mubr.f32.mxu0 0.0
    %v4618 = vand.u32 %v4214, 4294901760
    %v4619 = vsub.f32 %v4214, %v4618
    %v4620 = vand.u32 %v4619, 4294901760
    %4621 = vmatmul.mubr.f32.gmra.mxu0 %v4620
    %v4622 = vpop.f32.mrf.mxu0
    %v4623 = vadd.f32 %v4524, %v4622
    %v4624 = vpop.f32.mrf.mxu0
    %4625 = vmatprep.mubr.f32.mxu0 0.0
    %v4626 = vand.u32 %v4217, 4294901760
    %v4627 = vsub.f32 %v4217, %v4626
    %v4628 = vand.u32 %v4627, 4294901760
    %4629 = vmatmul.mubr.f32.gmra.mxu0 %v4628
    %v4630 = vpop.f32.mrf.mxu0
    %v4631 = vadd.f32 %v4531, %v4630
    %v4632 = vpop.f32.mrf.mxu0
    %4633 = vmatprep.mubr.f32.mxu0 0.0
    %v4634 = vand.u32 %v4220, 4294901760
    %v4635 = vsub.f32 %v4220, %v4634
    %v4636 = vand.u32 %v4635, 4294901760
    %4637 = vmatmul.mubr.f32.gmra.mxu0 %v4636
    %v4638 = vpop.f32.mrf.mxu0
    %v4639 = vadd.f32 %v4538, %v4638
    %v4640 = vpop.f32.mrf.mxu0
    %4641 = vdwg.mxu0
    %4642 = vmatprep.subr.mxu0 0.0
    %4643 = vmatpush1.msra.mxu0 0.0
    %4644 = vmatprep.subr.mxu0 0.0
    %4645 = vmatpush1.msra.mxu0 0.0
    %4646 = vmatprep.subr.mxu0 0.0
    %4647 = vmatpush1.msra.mxu0 0.0
    %4648 = vmatprep.subr.mxu0 0.0
    %4649 = vmatpush1.msra.mxu0 0.0
    %4650 = vmatprep.subr.mxu0 0.0
    %4651 = vmatpush1.msra.mxu0 0.0
    %4652 = vmatprep.subr.mxu0 0.0
    %4653 = vmatpush1.msra.mxu0 0.0
    %4654 = vmatprep.subr.mxu0 0.0
    %4655 = vmatpush1.msra.mxu0 0.0
    %4656 = vmatprep.subr.mxu0 0.0
    %4657 = vmatpush1.msra.mxu0 0.0
    %4658 = vmatprep.subr.mxu0 0.0
    %4659 = vmatpush1.msra.mxu0 0.0
    %4660 = vmatprep.subr.mxu0 0.0
    %4661 = vmatpush1.msra.mxu0 0.0
    %4662 = vmatprep.subr.mxu0 0.0
    %4663 = vmatpush1.msra.mxu0 0.0
    %4664 = vmatprep.subr.mxu0 0.0
    %4665 = vmatpush1.msra.mxu0 0.0
    %4666 = vmatprep.subr.mxu0 0.0
    %v4667 = vand.u32 %v4209, 4294901760
    %v4668 = vsub.f32 %v4209, %v4667
    %v4669 = vand.u32 %v4668, 4294901760
    %4670 = vmatpush1.msra.mxu0 %v4669
    %4671 = vmatprep.subr.mxu0 0.0
    %v4672 = vand.u32 %v4208, 4294901760
    %v4673 = vsub.f32 %v4208, %v4672
    %v4674 = vand.u32 %v4673, 4294901760
    %4675 = vmatpush1.msra.mxu0 %v4674
    %4676 = vmatprep.subr.mxu0 0.0
    %v4677 = vand.u32 %v4207, 4294901760
    %v4678 = vsub.f32 %v4207, %v4677
    %v4679 = vand.u32 %v4678, 4294901760
    %4680 = vmatpush1.msra.mxu0 %v4679
    %4681 = vmatprep.subr.mxu0 0.0
    %v4682 = vand.u32 %v4206, 4294901760
    %v4683 = vsub.f32 %v4206, %v4682
    %v4684 = vand.u32 %v4683, 4294901760
    %4685 = vmatpush1.msra.mxu0 %v4684
    %4686 = vmatprep.subr.mxu0 0.0
    %4687 = vmatpush2.msra.mxu0 0.0
    %4688 = vmatprep.subr.mxu0 0.0
    %4689 = vmatpush2.msra.mxu0 0.0
    %4690 = vmatprep.subr.mxu0 0.0
    %4691 = vmatpush2.msra.mxu0 0.0
    %4692 = vmatprep.subr.mxu0 0.0
    %4693 = vmatpush2.msra.mxu0 0.0
    %4694 = vmatprep.subr.mxu0 0.0
    %4695 = vmatpush2.msra.mxu0 0.0
    %4696 = vmatprep.subr.mxu0 0.0
    %4697 = vmatpush2.msra.mxu0 0.0
    %4698 = vmatprep.subr.mxu0 0.0
    %4699 = vmatpush2.msra.mxu0 0.0
    %4700 = vmatprep.subr.mxu0 0.0
    %4701 = vmatpush2.msra.mxu0 0.0
    %4702 = vmatprep.subr.mxu0 0.0
    %4703 = vmatpush2.msra.mxu0 0.0
    %4704 = vmatprep.subr.mxu0 0.0
    %4705 = vmatpush2.msra.mxu0 0.0
    %4706 = vmatprep.subr.mxu0 0.0
    %4707 = vmatpush2.msra.mxu0 0.0
    %4708 = vmatprep.subr.mxu0 0.0
    %4709 = vmatpush2.msra.mxu0 0.0
    %4710 = vmatprep.subr.mxu0 0.0
    %4711 = vmatpush2.msra.mxu0 0.0
    %4712 = vmatprep.subr.mxu0 0.0
    %4713 = vmatpush2.msra.mxu0 0.0
    %4714 = vmatprep.subr.mxu0 0.0
    %4715 = vmatpush2.msra.mxu0 0.0
    %4716 = vmatprep.subr.mxu0 0.0
    %4717 = vmatpush2.msra.mxu0 0.0
    %4718 = vmatprep.mubr.f32.mxu0 0.0
    %v4719 = vand.u32 %v4211, 4294901760
    %4720 = vmatmul.mubr.f32.gmra.mxu0 %v4719
    %v4721 = vpop.f32.mrf.mxu0
    %v4722 = vadd.f32 %v4615, %v4721
    %v4723 = vpop.f32.mrf.mxu0
    %4724 = vmatprep.mubr.f32.mxu0 0.0
    %v4725 = vand.u32 %v4214, 4294901760
    %4726 = vmatmul.mubr.f32.gmra.mxu0 %v4725
    %v4727 = vpop.f32.mrf.mxu0
    %v4728 = vadd.f32 %v4623, %v4727
    %v4729 = vpop.f32.mrf.mxu0
    %4730 = vmatprep.mubr.f32.mxu0 0.0
    %v4731 = vand.u32 %v4217, 4294901760
    %4732 = vmatmul.mubr.f32.gmra.mxu0 %v4731
    %v4733 = vpop.f32.mrf.mxu0
    %v4734 = vadd.f32 %v4631, %v4733
    %v4735 = vpop.f32.mrf.mxu0
    %4736 = vmatprep.mubr.f32.mxu0 0.0
    %v4737 = vand.u32 %v4220, 4294901760
    %4738 = vmatmul.mubr.f32.gmra.mxu0 %v4737
    %v4739 = vpop.f32.mrf.mxu0
    %v4740 = vadd.f32 %v4639, %v4739
    %v4741 = vpop.f32.mrf.mxu0
    %4742 = vdwg.mxu0
    %4743 = vmatprep.subr.mxu0 0.0
    %4744 = vmatpush1.msra.mxu0 0.0
    %4745 = vmatprep.subr.mxu0 0.0
    %4746 = vmatpush1.msra.mxu0 0.0
    %4747 = vmatprep.subr.mxu0 0.0
    %4748 = vmatpush1.msra.mxu0 0.0
    %4749 = vmatprep.subr.mxu0 0.0
    %4750 = vmatpush1.msra.mxu0 0.0
    %4751 = vmatprep.subr.mxu0 0.0
    %4752 = vmatpush1.msra.mxu0 0.0
    %4753 = vmatprep.subr.mxu0 0.0
    %4754 = vmatpush1.msra.mxu0 0.0
    %4755 = vmatprep.subr.mxu0 0.0
    %4756 = vmatpush1.msra.mxu0 0.0
    %4757 = vmatprep.subr.mxu0 0.0
    %4758 = vmatpush1.msra.mxu0 0.0
    %4759 = vmatprep.subr.mxu0 0.0
    %4760 = vmatpush1.msra.mxu0 0.0
    %4761 = vmatprep.subr.mxu0 0.0
    %4762 = vmatpush1.msra.mxu0 0.0
    %4763 = vmatprep.subr.mxu0 0.0
    %4764 = vmatpush1.msra.mxu0 0.0
    %4765 = vmatprep.subr.mxu0 0.0
    %4766 = vmatpush1.msra.mxu0 0.0
    %4767 = vmatprep.subr.mxu0 0.0
    %v4768 = vand.u32 %v4209, 4294901760
    %4769 = vmatpush1.msra.mxu0 %v4768
    %4770 = vmatprep.subr.mxu0 0.0
    %v4771 = vand.u32 %v4208, 4294901760
    %4772 = vmatpush1.msra.mxu0 %v4771
    %4773 = vmatprep.subr.mxu0 0.0
    %v4774 = vand.u32 %v4207, 4294901760
    %4775 = vmatpush1.msra.mxu0 %v4774
    %4776 = vmatprep.subr.mxu0 0.0
    %v4777 = vand.u32 %v4206, 4294901760
    %4778 = vmatpush1.msra.mxu0 %v4777
    %4779 = vmatprep.subr.mxu0 0.0
    %4780 = vmatpush2.msra.mxu0 0.0
    %4781 = vmatprep.subr.mxu0 0.0
    %4782 = vmatpush2.msra.mxu0 0.0
    %4783 = vmatprep.subr.mxu0 0.0
    %4784 = vmatpush2.msra.mxu0 0.0
    %4785 = vmatprep.subr.mxu0 0.0
    %4786 = vmatpush2.msra.mxu0 0.0
    %4787 = vmatprep.subr.mxu0 0.0
    %4788 = vmatpush2.msra.mxu0 0.0
    %4789 = vmatprep.subr.mxu0 0.0
    %4790 = vmatpush2.msra.mxu0 0.0
    %4791 = vmatprep.subr.mxu0 0.0
    %4792 = vmatpush2.msra.mxu0 0.0
    %4793 = vmatprep.subr.mxu0 0.0
    %4794 = vmatpush2.msra.mxu0 0.0
    %4795 = vmatprep.subr.mxu0 0.0
    %4796 = vmatpush2.msra.mxu0 0.0
    %4797 = vmatprep.subr.mxu0 0.0
    %4798 = vmatpush2.msra.mxu0 0.0
    %4799 = vmatprep.subr.mxu0 0.0
    %4800 = vmatpush2.msra.mxu0 0.0
    %4801 = vmatprep.subr.mxu0 0.0
    %4802 = vmatpush2.msra.mxu0 0.0
    %4803 = vmatprep.subr.mxu0 0.0
    %4804 = vmatpush2.msra.mxu0 0.0
    %4805 = vmatprep.subr.mxu0 0.0
    %4806 = vmatpush2.msra.mxu0 0.0
    %4807 = vmatprep.subr.mxu0 0.0
    %4808 = vmatpush2.msra.mxu0 0.0
    %4809 = vmatprep.subr.mxu0 0.0
    %4810 = vmatpush2.msra.mxu0 0.0
    %4811 = vmatprep.mubr.f32.mxu0 0.0
    %v4812 = vand.u32 %v4211, 4294901760
    %4813 = vmatmul.mubr.f32.gmra.mxu0 %v4812
    %v4814 = vpop.f32.mrf.mxu0
    %v4815 = vadd.f32 %v4722, %v4814
    %v4816 = vpop.f32.mrf.mxu0
    %4817 = vmatprep.mubr.f32.mxu0 0.0
    %v4818 = vand.u32 %v4214, 4294901760
    %4819 = vmatmul.mubr.f32.gmra.mxu0 %v4818
    %v4820 = vpop.f32.mrf.mxu0
    %v4821 = vadd.f32 %v4728, %v4820
    %v4822 = vpop.f32.mrf.mxu0
    %4823 = vmatprep.mubr.f32.mxu0 0.0
    %v4824 = vand.u32 %v4217, 4294901760
    %4825 = vmatmul.mubr.f32.gmra.mxu0 %v4824
    %v4826 = vpop.f32.mrf.mxu0
    %v4827 = vadd.f32 %v4734, %v4826
    %v4828 = vpop.f32.mrf.mxu0
    %4829 = vmatprep.mubr.f32.mxu0 0.0
    %v4830 = vand.u32 %v4220, 4294901760
    %4831 = vmatmul.mubr.f32.gmra.mxu0 %v4830
    %v4832 = vpop.f32.mrf.mxu0
    %v4833 = vadd.f32 %v4740, %v4832
    %v4834 = vpop.f32.mrf.mxu0
    %4835 = vdwg.mxu0
    %v4836 = vadd.f32 %v4185, %v4815
    %v4837 = vadd.f32 %v4191, %v4821
    %v4838 = vadd.f32 %v4197, %v4827
    %v4839 = vadd.f32 %v4203, %v4833
    %v4840 = vlaneseq
    %v4841 = vshrl.u32 %v4840, 7
    %v4842 = vsub.s32 0, %v4841
    %v4843 = vrot.slane %v87, %v4842
    %v4844 = vadd.f32 %v4836, %v4843
    %v4845 = vadd.f32 %v4837, %v4843
    %v4846 = vadd.f32 %v4838, %v4843
    %v4847 = vadd.f32 %v4839, %v4843
    %v4848 = vmul.f32 %v4844, %v4844
    %v4849 = vmul.f32 %v4845, %v4845
    %v4850 = vmul.f32 %v4846, %v4846
    %v4851 = vmul.f32 %v4847, %v4847
    %v4853 = vsel %vm139, %v4844, 0
    %v4856 = vsel %vm139, %v4845, 0
    %v4859 = vsel %vm139, %v4846, 0
    %v4862 = vsel %vm139, %v4847, 0
    %v4865 = vsel %vm139, %v4848, 0
    %v4868 = vsel %vm139, %v4849, 0
    %v4871 = vsel %vm139, %v4850, 0
    %v4874 = vsel %vm139, %v4851, 0
    %4876 = vmatprep.subr.mxu0 0.0
    %4877 = vmatpush1.msra.mxu0 0.0
    %4878 = vmatprep.subr.mxu0 0.0
    %4879 = vmatpush1.msra.mxu0 0.0
    %4880 = vmatprep.subr.mxu0 0.0
    %4881 = vmatpush1.msra.mxu0 0.0
    %4882 = vmatprep.subr.mxu0 0.0
    %4883 = vmatpush1.msra.mxu0 0.0
    %4884 = vmatprep.subr.mxu0 0.0
    %4885 = vmatpush1.msra.mxu0 0.0
    %4886 = vmatprep.subr.mxu0 0.0
    %4887 = vmatpush1.msra.mxu0 0.0
    %4888 = vmatprep.subr.mxu0 0.0
    %4889 = vmatpush1.msra.mxu0 0.0
    %4890 = vmatprep.subr.mxu0 0.0
    %4891 = vmatpush1.msra.mxu0 0.0
    %4892 = vmatprep.subr.mxu0 0.0
    %4893 = vmatpush1.msra.mxu0 0.0
    %4894 = vmatprep.subr.mxu0 0.0
    %4895 = vmatpush1.msra.mxu0 0.0
    %4896 = vmatprep.subr.mxu0 0.0
    %4897 = vmatpush1.msra.mxu0 0.0
    %4898 = vmatprep.subr.mxu0 0.0
    %4899 = vmatpush1.msra.mxu0 0.0
    %4900 = vmatprep.subr.mxu0 0.0
    %v4901 = vand.u32 %v83, 4294901760
    %4902 = vmatpush1.msra.mxu0 %v4901
    %4903 = vmatprep.subr.mxu0 0.0
    %v4904 = vand.u32 %v82, 4294901760
    %4905 = vmatpush1.msra.mxu0 %v4904
    %4906 = vmatprep.subr.mxu0 0.0
    %v4907 = vand.u32 %v81, 4294901760
    %4908 = vmatpush1.msra.mxu0 %v4907
    %4909 = vmatprep.subr.mxu0 0.0
    %v4910 = vand.u32 %v80, 4294901760
    %4911 = vmatpush1.msra.mxu0 %v4910
    %4912 = vmatprep.subr.mxu0 0.0
    %4913 = vmatpush2.msra.mxu0 0.0
    %4914 = vmatprep.subr.mxu0 0.0
    %4915 = vmatpush2.msra.mxu0 0.0
    %4916 = vmatprep.subr.mxu0 0.0
    %4917 = vmatpush2.msra.mxu0 0.0
    %4918 = vmatprep.subr.mxu0 0.0
    %4919 = vmatpush2.msra.mxu0 0.0
    %4920 = vmatprep.subr.mxu0 0.0
    %4921 = vmatpush2.msra.mxu0 0.0
    %4922 = vmatprep.subr.mxu0 0.0
    %4923 = vmatpush2.msra.mxu0 0.0
    %4924 = vmatprep.subr.mxu0 0.0
    %4925 = vmatpush2.msra.mxu0 0.0
    %4926 = vmatprep.subr.mxu0 0.0
    %4927 = vmatpush2.msra.mxu0 0.0
    %4928 = vmatprep.subr.mxu0 0.0
    %4929 = vmatpush2.msra.mxu0 0.0
    %4930 = vmatprep.subr.mxu0 0.0
    %4931 = vmatpush2.msra.mxu0 0.0
    %4932 = vmatprep.subr.mxu0 0.0
    %4933 = vmatpush2.msra.mxu0 0.0
    %4934 = vmatprep.subr.mxu0 0.0
    %4935 = vmatpush2.msra.mxu0 0.0
    %4936 = vmatprep.subr.mxu0 0.0
    %4937 = vmatpush2.msra.mxu0 0.0
    %4938 = vmatprep.subr.mxu0 0.0
    %4939 = vmatpush2.msra.mxu0 0.0
    %4940 = vmatprep.subr.mxu0 0.0
    %4941 = vmatpush2.msra.mxu0 0.0
    %4942 = vmatprep.subr.mxu0 0.0
    %4943 = vmatpush2.msra.mxu0 0.0
    %4944 = vmatprep.mubr.f32.mxu0 0.0
    %v4945 = vand.u32 %v4853, 4294901760
    %v4946 = vsub.f32 %v4853, %v4945
    %v4947 = vand.u32 %v4946, 4294901760
    %v4948 = vsub.f32 %v4946, %v4947
    %v4949 = vand.u32 %v4948, 4294901760
    %4950 = vmatmul.mubr.f32.gmra.mxu0 %v4949
    %v4951 = vpop.f32.mrf.mxu0
    %v4952 = vadd.f32 0.0, %v4951
    %v4953 = vpop.f32.mrf.mxu0
    %4954 = vmatprep.mubr.f32.mxu0 0.0
    %v4955 = vand.u32 %v4856, 4294901760
    %v4956 = vsub.f32 %v4856, %v4955
    %v4957 = vand.u32 %v4956, 4294901760
    %v4958 = vsub.f32 %v4956, %v4957
    %v4959 = vand.u32 %v4958, 4294901760
    %4960 = vmatmul.mubr.f32.gmra.mxu0 %v4959
    %v4961 = vpop.f32.mrf.mxu0
    %v4962 = vadd.f32 0.0, %v4961
    %v4963 = vpop.f32.mrf.mxu0
    %4964 = vmatprep.mubr.f32.mxu0 0.0
    %v4965 = vand.u32 %v4859, 4294901760
    %v4966 = vsub.f32 %v4859, %v4965
    %v4967 = vand.u32 %v4966, 4294901760
    %v4968 = vsub.f32 %v4966, %v4967
    %v4969 = vand.u32 %v4968, 4294901760
    %4970 = vmatmul.mubr.f32.gmra.mxu0 %v4969
    %v4971 = vpop.f32.mrf.mxu0
    %v4972 = vadd.f32 0.0, %v4971
    %v4973 = vpop.f32.mrf.mxu0
    %4974 = vmatprep.mubr.f32.mxu0 0.0
    %v4975 = vand.u32 %v4862, 4294901760
    %v4976 = vsub.f32 %v4862, %v4975
    %v4977 = vand.u32 %v4976, 4294901760
    %v4978 = vsub.f32 %v4976, %v4977
    %v4979 = vand.u32 %v4978, 4294901760
    %4980 = vmatmul.mubr.f32.gmra.mxu0 %v4979
    %v4981 = vpop.f32.mrf.mxu0
    %v4982 = vadd.f32 0.0, %v4981
    %v4983 = vpop.f32.mrf.mxu0
    %4984 = vmatprep.mubr.f32.mxu0 0.0
    %v4985 = vand.u32 %v4865, 4294901760
    %v4986 = vsub.f32 %v4865, %v4985
    %v4987 = vand.u32 %v4986, 4294901760
    %v4988 = vsub.f32 %v4986, %v4987
    %v4989 = vand.u32 %v4988, 4294901760
    %4990 = vmatmul.mubr.f32.gmra.mxu0 %v4989
    %v4991 = vpop.f32.mrf.mxu0
    %v4992 = vadd.f32 0.0, %v4991
    %v4993 = vpop.f32.mrf.mxu0
    %4994 = vmatprep.mubr.f32.mxu0 0.0
    %v4995 = vand.u32 %v4868, 4294901760
    %v4996 = vsub.f32 %v4868, %v4995
    %v4997 = vand.u32 %v4996, 4294901760
    %v4998 = vsub.f32 %v4996, %v4997
    %v4999 = vand.u32 %v4998, 4294901760
    %5000 = vmatmul.mubr.f32.gmra.mxu0 %v4999
    %v5001 = vpop.f32.mrf.mxu0
    %v5002 = vadd.f32 0.0, %v5001
    %v5003 = vpop.f32.mrf.mxu0
    %5004 = vmatprep.mubr.f32.mxu0 0.0
    %v5005 = vand.u32 %v4871, 4294901760
    %v5006 = vsub.f32 %v4871, %v5005
    %v5007 = vand.u32 %v5006, 4294901760
    %v5008 = vsub.f32 %v5006, %v5007
    %v5009 = vand.u32 %v5008, 4294901760
    %5010 = vmatmul.mubr.f32.gmra.mxu0 %v5009
    %v5011 = vpop.f32.mrf.mxu0
    %v5012 = vadd.f32 0.0, %v5011
    %v5013 = vpop.f32.mrf.mxu0
    %5014 = vmatprep.mubr.f32.mxu0 0.0
    %v5015 = vand.u32 %v4874, 4294901760
    %v5016 = vsub.f32 %v4874, %v5015
    %v5017 = vand.u32 %v5016, 4294901760
    %v5018 = vsub.f32 %v5016, %v5017
    %v5019 = vand.u32 %v5018, 4294901760
    %5020 = vmatmul.mubr.f32.gmra.mxu0 %v5019
    %v5021 = vpop.f32.mrf.mxu0
    %v5022 = vadd.f32 0.0, %v5021
    %v5023 = vpop.f32.mrf.mxu0
    %5024 = vdwg.mxu0
    %5025 = vmatprep.subr.mxu0 0.0
    %5026 = vmatpush1.msra.mxu0 0.0
    %5027 = vmatprep.subr.mxu0 0.0
    %5028 = vmatpush1.msra.mxu0 0.0
    %5029 = vmatprep.subr.mxu0 0.0
    %5030 = vmatpush1.msra.mxu0 0.0
    %5031 = vmatprep.subr.mxu0 0.0
    %5032 = vmatpush1.msra.mxu0 0.0
    %5033 = vmatprep.subr.mxu0 0.0
    %5034 = vmatpush1.msra.mxu0 0.0
    %5035 = vmatprep.subr.mxu0 0.0
    %5036 = vmatpush1.msra.mxu0 0.0
    %5037 = vmatprep.subr.mxu0 0.0
    %5038 = vmatpush1.msra.mxu0 0.0
    %5039 = vmatprep.subr.mxu0 0.0
    %5040 = vmatpush1.msra.mxu0 0.0
    %5041 = vmatprep.subr.mxu0 0.0
    %5042 = vmatpush1.msra.mxu0 0.0
    %5043 = vmatprep.subr.mxu0 0.0
    %5044 = vmatpush1.msra.mxu0 0.0
    %5045 = vmatprep.subr.mxu0 0.0
    %5046 = vmatpush1.msra.mxu0 0.0
    %5047 = vmatprep.subr.mxu0 0.0
    %5048 = vmatpush1.msra.mxu0 0.0
    %5049 = vmatprep.subr.mxu0 0.0
    %v5050 = vand.u32 %v83, 4294901760
    %v5051 = vsub.f32 %v83, %v5050
    %v5052 = vand.u32 %v5051, 4294901760
    %v5053 = vsub.f32 %v5051, %v5052
    %v5054 = vand.u32 %v5053, 4294901760
    %5055 = vmatpush1.msra.mxu0 %v5054
    %5056 = vmatprep.subr.mxu0 0.0
    %v5057 = vand.u32 %v82, 4294901760
    %v5058 = vsub.f32 %v82, %v5057
    %v5059 = vand.u32 %v5058, 4294901760
    %v5060 = vsub.f32 %v5058, %v5059
    %v5061 = vand.u32 %v5060, 4294901760
    %5062 = vmatpush1.msra.mxu0 %v5061
    %5063 = vmatprep.subr.mxu0 0.0
    %v5064 = vand.u32 %v81, 4294901760
    %v5065 = vsub.f32 %v81, %v5064
    %v5066 = vand.u32 %v5065, 4294901760
    %v5067 = vsub.f32 %v5065, %v5066
    %v5068 = vand.u32 %v5067, 4294901760
    %5069 = vmatpush1.msra.mxu0 %v5068
    %5070 = vmatprep.subr.mxu0 0.0
    %v5071 = vand.u32 %v80, 4294901760
    %v5072 = vsub.f32 %v80, %v5071
    %v5073 = vand.u32 %v5072, 4294901760
    %v5074 = vsub.f32 %v5072, %v5073
    %v5075 = vand.u32 %v5074, 4294901760
    %5076 = vmatpush1.msra.mxu0 %v5075
    %5077 = vmatprep.subr.mxu0 0.0
    %5078 = vmatpush2.msra.mxu0 0.0
    %5079 = vmatprep.subr.mxu0 0.0
    %5080 = vmatpush2.msra.mxu0 0.0
    %5081 = vmatprep.subr.mxu0 0.0
    %5082 = vmatpush2.msra.mxu0 0.0
    %5083 = vmatprep.subr.mxu0 0.0
    %5084 = vmatpush2.msra.mxu0 0.0
    %5085 = vmatprep.subr.mxu0 0.0
    %5086 = vmatpush2.msra.mxu0 0.0
    %5087 = vmatprep.subr.mxu0 0.0
    %5088 = vmatpush2.msra.mxu0 0.0
    %5089 = vmatprep.subr.mxu0 0.0
    %5090 = vmatpush2.msra.mxu0 0.0
    %5091 = vmatprep.subr.mxu0 0.0
    %5092 = vmatpush2.msra.mxu0 0.0
    %5093 = vmatprep.subr.mxu0 0.0
    %5094 = vmatpush2.msra.mxu0 0.0
    %5095 = vmatprep.subr.mxu0 0.0
    %5096 = vmatpush2.msra.mxu0 0.0
    %5097 = vmatprep.subr.mxu0 0.0
    %5098 = vmatpush2.msra.mxu0 0.0
    %5099 = vmatprep.subr.mxu0 0.0
    %5100 = vmatpush2.msra.mxu0 0.0
    %5101 = vmatprep.subr.mxu0 0.0
    %5102 = vmatpush2.msra.mxu0 0.0
    %5103 = vmatprep.subr.mxu0 0.0
    %5104 = vmatpush2.msra.mxu0 0.0
    %5105 = vmatprep.subr.mxu0 0.0
    %5106 = vmatpush2.msra.mxu0 0.0
    %5107 = vmatprep.subr.mxu0 0.0
    %5108 = vmatpush2.msra.mxu0 0.0
    %5109 = vmatprep.mubr.f32.mxu0 0.0
    %v5110 = vand.u32 %v4853, 4294901760
    %5111 = vmatmul.mubr.f32.gmra.mxu0 %v5110
    %v5112 = vpop.f32.mrf.mxu0
    %v5113 = vadd.f32 %v4952, %v5112
    %v5114 = vpop.f32.mrf.mxu0
    %5115 = vmatprep.mubr.f32.mxu0 0.0
    %v5116 = vand.u32 %v4856, 4294901760
    %5117 = vmatmul.mubr.f32.gmra.mxu0 %v5116
    %v5118 = vpop.f32.mrf.mxu0
    %v5119 = vadd.f32 %v4962, %v5118
    %v5120 = vpop.f32.mrf.mxu0
    %5121 = vmatprep.mubr.f32.mxu0 0.0
    %v5122 = vand.u32 %v4859, 4294901760
    %5123 = vmatmul.mubr.f32.gmra.mxu0 %v5122
    %v5124 = vpop.f32.mrf.mxu0
    %v5125 = vadd.f32 %v4972, %v5124
    %v5126 = vpop.f32.mrf.mxu0
    %5127 = vmatprep.mubr.f32.mxu0 0.0
    %v5128 = vand.u32 %v4862, 4294901760
    %5129 = vmatmul.mubr.f32.gmra.mxu0 %v5128
    %v5130 = vpop.f32.mrf.mxu0
    %v5131 = vadd.f32 %v4982, %v5130
    %v5132 = vpop.f32.mrf.mxu0
    %5133 = vmatprep.mubr.f32.mxu0 0.0
    %v5134 = vand.u32 %v4865, 4294901760
    %5135 = vmatmul.mubr.f32.gmra.mxu0 %v5134
    %v5136 = vpop.f32.mrf.mxu0
    %v5137 = vadd.f32 %v4992, %v5136
    %v5138 = vpop.f32.mrf.mxu0
    %5139 = vmatprep.mubr.f32.mxu0 0.0
    %v5140 = vand.u32 %v4868, 4294901760
    %5141 = vmatmul.mubr.f32.gmra.mxu0 %v5140
    %v5142 = vpop.f32.mrf.mxu0
    %v5143 = vadd.f32 %v5002, %v5142
    %v5144 = vpop.f32.mrf.mxu0
    %5145 = vmatprep.mubr.f32.mxu0 0.0
    %v5146 = vand.u32 %v4871, 4294901760
    %5147 = vmatmul.mubr.f32.gmra.mxu0 %v5146
    %v5148 = vpop.f32.mrf.mxu0
    %v5149 = vadd.f32 %v5012, %v5148
    %v5150 = vpop.f32.mrf.mxu0
    %5151 = vmatprep.mubr.f32.mxu0 0.0
    %v5152 = vand.u32 %v4874, 4294901760
    %5153 = vmatmul.mubr.f32.gmra.mxu0 %v5152
    %v5154 = vpop.f32.mrf.mxu0
    %v5155 = vadd.f32 %v5022, %v5154
    %v5156 = vpop.f32.mrf.mxu0
    %5157 = vdwg.mxu0
    %5158 = vmatprep.subr.mxu0 0.0
    %5159 = vmatpush1.msra.mxu0 0.0
    %5160 = vmatprep.subr.mxu0 0.0
    %5161 = vmatpush1.msra.mxu0 0.0
    %5162 = vmatprep.subr.mxu0 0.0
    %5163 = vmatpush1.msra.mxu0 0.0
    %5164 = vmatprep.subr.mxu0 0.0
    %5165 = vmatpush1.msra.mxu0 0.0
    %5166 = vmatprep.subr.mxu0 0.0
    %5167 = vmatpush1.msra.mxu0 0.0
    %5168 = vmatprep.subr.mxu0 0.0
    %5169 = vmatpush1.msra.mxu0 0.0
    %5170 = vmatprep.subr.mxu0 0.0
    %5171 = vmatpush1.msra.mxu0 0.0
    %5172 = vmatprep.subr.mxu0 0.0
    %5173 = vmatpush1.msra.mxu0 0.0
    %5174 = vmatprep.subr.mxu0 0.0
    %5175 = vmatpush1.msra.mxu0 0.0
    %5176 = vmatprep.subr.mxu0 0.0
    %5177 = vmatpush1.msra.mxu0 0.0
    %5178 = vmatprep.subr.mxu0 0.0
    %5179 = vmatpush1.msra.mxu0 0.0
    %5180 = vmatprep.subr.mxu0 0.0
    %5181 = vmatpush1.msra.mxu0 0.0
    %5182 = vmatprep.subr.mxu0 0.0
    %v5183 = vand.u32 %v83, 4294901760
    %v5184 = vsub.f32 %v83, %v5183
    %5185 = vmatpush1.msra.mxu0 %v5184
    %5186 = vmatprep.subr.mxu0 0.0
    %v5187 = vand.u32 %v82, 4294901760
    %v5188 = vsub.f32 %v82, %v5187
    %5189 = vmatpush1.msra.mxu0 %v5188
    %5190 = vmatprep.subr.mxu0 0.0
    %v5191 = vand.u32 %v81, 4294901760
    %v5192 = vsub.f32 %v81, %v5191
    %5193 = vmatpush1.msra.mxu0 %v5192
    %5194 = vmatprep.subr.mxu0 0.0
    %v5195 = vand.u32 %v80, 4294901760
    %v5196 = vsub.f32 %v80, %v5195
    %5197 = vmatpush1.msra.mxu0 %v5196
    %5198 = vmatprep.subr.mxu0 0.0
    %5199 = vmatpush2.msra.mxu0 0.0
    %5200 = vmatprep.subr.mxu0 0.0
    %5201 = vmatpush2.msra.mxu0 0.0
    %5202 = vmatprep.subr.mxu0 0.0
    %5203 = vmatpush2.msra.mxu0 0.0
    %5204 = vmatprep.subr.mxu0 0.0
    %5205 = vmatpush2.msra.mxu0 0.0
    %5206 = vmatprep.subr.mxu0 0.0
    %5207 = vmatpush2.msra.mxu0 0.0
    %5208 = vmatprep.subr.mxu0 0.0
    %5209 = vmatpush2.msra.mxu0 0.0
    %5210 = vmatprep.subr.mxu0 0.0
    %5211 = vmatpush2.msra.mxu0 0.0
    %5212 = vmatprep.subr.mxu0 0.0
    %5213 = vmatpush2.msra.mxu0 0.0
    %5214 = vmatprep.subr.mxu0 0.0
    %5215 = vmatpush2.msra.mxu0 0.0
    %5216 = vmatprep.subr.mxu0 0.0
    %5217 = vmatpush2.msra.mxu0 0.0
    %5218 = vmatprep.subr.mxu0 0.0
    %5219 = vmatpush2.msra.mxu0 0.0
    %5220 = vmatprep.subr.mxu0 0.0
    %5221 = vmatpush2.msra.mxu0 0.0
    %5222 = vmatprep.subr.mxu0 0.0
    %5223 = vmatpush2.msra.mxu0 0.0
    %5224 = vmatprep.subr.mxu0 0.0
    %5225 = vmatpush2.msra.mxu0 0.0
    %5226 = vmatprep.subr.mxu0 0.0
    %5227 = vmatpush2.msra.mxu0 0.0
    %5228 = vmatprep.subr.mxu0 0.0
    %5229 = vmatpush2.msra.mxu0 0.0
    %5230 = vmatprep.mubr.f32.mxu0 0.0
    %v5231 = vand.u32 %v4853, 4294901760
    %v5232 = vsub.f32 %v4853, %v5231
    %5233 = vmatmul.mubr.f32.gmra.mxu0 %v5232
    %v5234 = vpop.f32.mrf.mxu0
    %v5235 = vadd.f32 %v5113, %v5234
    %v5236 = vpop.f32.mrf.mxu0
    %5237 = vmatprep.mubr.f32.mxu0 0.0
    %v5238 = vand.u32 %v4856, 4294901760
    %v5239 = vsub.f32 %v4856, %v5238
    %5240 = vmatmul.mubr.f32.gmra.mxu0 %v5239
    %v5241 = vpop.f32.mrf.mxu0
    %v5242 = vadd.f32 %v5119, %v5241
    %v5243 = vpop.f32.mrf.mxu0
    %5244 = vmatprep.mubr.f32.mxu0 0.0
    %v5245 = vand.u32 %v4859, 4294901760
    %v5246 = vsub.f32 %v4859, %v5245
    %5247 = vmatmul.mubr.f32.gmra.mxu0 %v5246
    %v5248 = vpop.f32.mrf.mxu0
    %v5249 = vadd.f32 %v5125, %v5248
    %v5250 = vpop.f32.mrf.mxu0
    %5251 = vmatprep.mubr.f32.mxu0 0.0
    %v5252 = vand.u32 %v4862, 4294901760
    %v5253 = vsub.f32 %v4862, %v5252
    %5254 = vmatmul.mubr.f32.gmra.mxu0 %v5253
    %v5255 = vpop.f32.mrf.mxu0
    %v5256 = vadd.f32 %v5131, %v5255
    %v5257 = vpop.f32.mrf.mxu0
    %5258 = vmatprep.mubr.f32.mxu0 0.0
    %v5259 = vand.u32 %v4865, 4294901760
    %v5260 = vsub.f32 %v4865, %v5259
    %5261 = vmatmul.mubr.f32.gmra.mxu0 %v5260
    %v5262 = vpop.f32.mrf.mxu0
    %v5263 = vadd.f32 %v5137, %v5262
    %v5264 = vpop.f32.mrf.mxu0
    %5265 = vmatprep.mubr.f32.mxu0 0.0
    %v5266 = vand.u32 %v4868, 4294901760
    %v5267 = vsub.f32 %v4868, %v5266
    %5268 = vmatmul.mubr.f32.gmra.mxu0 %v5267
    %v5269 = vpop.f32.mrf.mxu0
    %v5270 = vadd.f32 %v5143, %v5269
    %v5271 = vpop.f32.mrf.mxu0
    %5272 = vmatprep.mubr.f32.mxu0 0.0
    %v5273 = vand.u32 %v4871, 4294901760
    %v5274 = vsub.f32 %v4871, %v5273
    %5275 = vmatmul.mubr.f32.gmra.mxu0 %v5274
    %v5276 = vpop.f32.mrf.mxu0
    %v5277 = vadd.f32 %v5149, %v5276
    %v5278 = vpop.f32.mrf.mxu0
    %5279 = vmatprep.mubr.f32.mxu0 0.0
    %v5280 = vand.u32 %v4874, 4294901760
    %v5281 = vsub.f32 %v4874, %v5280
    %5282 = vmatmul.mubr.f32.gmra.mxu0 %v5281
    %v5283 = vpop.f32.mrf.mxu0
    %v5284 = vadd.f32 %v5155, %v5283
    %v5285 = vpop.f32.mrf.mxu0
    %5286 = vdwg.mxu0
    %5287 = vmatprep.subr.mxu0 0.0
    %5288 = vmatpush1.msra.mxu0 0.0
    %5289 = vmatprep.subr.mxu0 0.0
    %5290 = vmatpush1.msra.mxu0 0.0
    %5291 = vmatprep.subr.mxu0 0.0
    %5292 = vmatpush1.msra.mxu0 0.0
    %5293 = vmatprep.subr.mxu0 0.0
    %5294 = vmatpush1.msra.mxu0 0.0
    %5295 = vmatprep.subr.mxu0 0.0
    %5296 = vmatpush1.msra.mxu0 0.0
    %5297 = vmatprep.subr.mxu0 0.0
    %5298 = vmatpush1.msra.mxu0 0.0
    %5299 = vmatprep.subr.mxu0 0.0
    %5300 = vmatpush1.msra.mxu0 0.0
    %5301 = vmatprep.subr.mxu0 0.0
    %5302 = vmatpush1.msra.mxu0 0.0
    %5303 = vmatprep.subr.mxu0 0.0
    %5304 = vmatpush1.msra.mxu0 0.0
    %5305 = vmatprep.subr.mxu0 0.0
    %5306 = vmatpush1.msra.mxu0 0.0
    %5307 = vmatprep.subr.mxu0 0.0
    %5308 = vmatpush1.msra.mxu0 0.0
    %5309 = vmatprep.subr.mxu0 0.0
    %5310 = vmatpush1.msra.mxu0 0.0
    %5311 = vmatprep.subr.mxu0 0.0
    %v5312 = vand.u32 %v83, 4294901760
    %5313 = vmatpush1.msra.mxu0 %v5312
    %5314 = vmatprep.subr.mxu0 0.0
    %v5315 = vand.u32 %v82, 4294901760
    %5316 = vmatpush1.msra.mxu0 %v5315
    %5317 = vmatprep.subr.mxu0 0.0
    %v5318 = vand.u32 %v81, 4294901760
    %5319 = vmatpush1.msra.mxu0 %v5318
    %5320 = vmatprep.subr.mxu0 0.0
    %v5321 = vand.u32 %v80, 4294901760
    %5322 = vmatpush1.msra.mxu0 %v5321
    %5323 = vmatprep.subr.mxu0 0.0
    %5324 = vmatpush2.msra.mxu0 0.0
    %5325 = vmatprep.subr.mxu0 0.0
    %5326 = vmatpush2.msra.mxu0 0.0
    %5327 = vmatprep.subr.mxu0 0.0
    %5328 = vmatpush2.msra.mxu0 0.0
    %5329 = vmatprep.subr.mxu0 0.0
    %5330 = vmatpush2.msra.mxu0 0.0
    %5331 = vmatprep.subr.mxu0 0.0
    %5332 = vmatpush2.msra.mxu0 0.0
    %5333 = vmatprep.subr.mxu0 0.0
    %5334 = vmatpush2.msra.mxu0 0.0
    %5335 = vmatprep.subr.mxu0 0.0
    %5336 = vmatpush2.msra.mxu0 0.0
    %5337 = vmatprep.subr.mxu0 0.0
    %5338 = vmatpush2.msra.mxu0 0.0
    %5339 = vmatprep.subr.mxu0 0.0
    %5340 = vmatpush2.msra.mxu0 0.0
    %5341 = vmatprep.subr.mxu0 0.0
    %5342 = vmatpush2.msra.mxu0 0.0
    %5343 = vmatprep.subr.mxu0 0.0
    %5344 = vmatpush2.msra.mxu0 0.0
    %5345 = vmatprep.subr.mxu0 0.0
    %5346 = vmatpush2.msra.mxu0 0.0
    %5347 = vmatprep.subr.mxu0 0.0
    %5348 = vmatpush2.msra.mxu0 0.0
    %5349 = vmatprep.subr.mxu0 0.0
    %5350 = vmatpush2.msra.mxu0 0.0
    %5351 = vmatprep.subr.mxu0 0.0
    %5352 = vmatpush2.msra.mxu0 0.0
    %5353 = vmatprep.subr.mxu0 0.0
    %5354 = vmatpush2.msra.mxu0 0.0
    %5355 = vmatprep.mubr.f32.mxu0 0.0
    %v5356 = vand.u32 %v4853, 4294901760
    %v5357 = vsub.f32 %v4853, %v5356
    %v5358 = vand.u32 %v5357, 4294901760
    %5359 = vmatmul.mubr.f32.gmra.mxu0 %v5358
    %v5360 = vpop.f32.mrf.mxu0
    %v5361 = vadd.f32 %v5235, %v5360
    %v5362 = vpop.f32.mrf.mxu0
    %5363 = vmatprep.mubr.f32.mxu0 0.0
    %v5364 = vand.u32 %v4856, 4294901760
    %v5365 = vsub.f32 %v4856, %v5364
    %v5366 = vand.u32 %v5365, 4294901760
    %5367 = vmatmul.mubr.f32.gmra.mxu0 %v5366
    %v5368 = vpop.f32.mrf.mxu0
    %v5369 = vadd.f32 %v5242, %v5368
    %v5370 = vpop.f32.mrf.mxu0
    %5371 = vmatprep.mubr.f32.mxu0 0.0
    %v5372 = vand.u32 %v4859, 4294901760
    %v5373 = vsub.f32 %v4859, %v5372
    %v5374 = vand.u32 %v5373, 4294901760
    %5375 = vmatmul.mubr.f32.gmra.mxu0 %v5374
    %v5376 = vpop.f32.mrf.mxu0
    %v5377 = vadd.f32 %v5249, %v5376
    %v5378 = vpop.f32.mrf.mxu0
    %5379 = vmatprep.mubr.f32.mxu0 0.0
    %v5380 = vand.u32 %v4862, 4294901760
    %v5381 = vsub.f32 %v4862, %v5380
    %v5382 = vand.u32 %v5381, 4294901760
    %5383 = vmatmul.mubr.f32.gmra.mxu0 %v5382
    %v5384 = vpop.f32.mrf.mxu0
    %v5385 = vadd.f32 %v5256, %v5384
    %v5386 = vpop.f32.mrf.mxu0
    %5387 = vmatprep.mubr.f32.mxu0 0.0
    %v5388 = vand.u32 %v4865, 4294901760
    %v5389 = vsub.f32 %v4865, %v5388
    %v5390 = vand.u32 %v5389, 4294901760
    %5391 = vmatmul.mubr.f32.gmra.mxu0 %v5390
    %v5392 = vpop.f32.mrf.mxu0
    %v5393 = vadd.f32 %v5263, %v5392
    %v5394 = vpop.f32.mrf.mxu0
    %5395 = vmatprep.mubr.f32.mxu0 0.0
    %v5396 = vand.u32 %v4868, 4294901760
    %v5397 = vsub.f32 %v4868, %v5396
    %v5398 = vand.u32 %v5397, 4294901760
    %5399 = vmatmul.mubr.f32.gmra.mxu0 %v5398
    %v5400 = vpop.f32.mrf.mxu0
    %v5401 = vadd.f32 %v5270, %v5400
    %v5402 = vpop.f32.mrf.mxu0
    %5403 = vmatprep.mubr.f32.mxu0 0.0
    %v5404 = vand.u32 %v4871, 4294901760
    %v5405 = vsub.f32 %v4871, %v5404
    %v5406 = vand.u32 %v5405, 4294901760
    %5407 = vmatmul.mubr.f32.gmra.mxu0 %v5406
    %v5408 = vpop.f32.mrf.mxu0
    %v5409 = vadd.f32 %v5277, %v5408
    %v5410 = vpop.f32.mrf.mxu0
    %5411 = vmatprep.mubr.f32.mxu0 0.0
    %v5412 = vand.u32 %v4874, 4294901760
    %v5413 = vsub.f32 %v4874, %v5412
    %v5414 = vand.u32 %v5413, 4294901760
    %5415 = vmatmul.mubr.f32.gmra.mxu0 %v5414
    %v5416 = vpop.f32.mrf.mxu0
    %v5417 = vadd.f32 %v5284, %v5416
    %v5418 = vpop.f32.mrf.mxu0
    %5419 = vdwg.mxu0
    %5420 = vmatprep.subr.mxu0 0.0
    %5421 = vmatpush1.msra.mxu0 0.0
    %5422 = vmatprep.subr.mxu0 0.0
    %5423 = vmatpush1.msra.mxu0 0.0
    %5424 = vmatprep.subr.mxu0 0.0
    %5425 = vmatpush1.msra.mxu0 0.0
    %5426 = vmatprep.subr.mxu0 0.0
    %5427 = vmatpush1.msra.mxu0 0.0
    %5428 = vmatprep.subr.mxu0 0.0
    %5429 = vmatpush1.msra.mxu0 0.0
    %5430 = vmatprep.subr.mxu0 0.0
    %5431 = vmatpush1.msra.mxu0 0.0
    %5432 = vmatprep.subr.mxu0 0.0
    %5433 = vmatpush1.msra.mxu0 0.0
    %5434 = vmatprep.subr.mxu0 0.0
    %5435 = vmatpush1.msra.mxu0 0.0
    %5436 = vmatprep.subr.mxu0 0.0
    %5437 = vmatpush1.msra.mxu0 0.0
    %5438 = vmatprep.subr.mxu0 0.0
    %5439 = vmatpush1.msra.mxu0 0.0
    %5440 = vmatprep.subr.mxu0 0.0
    %5441 = vmatpush1.msra.mxu0 0.0
    %5442 = vmatprep.subr.mxu0 0.0
    %5443 = vmatpush1.msra.mxu0 0.0
    %5444 = vmatprep.subr.mxu0 0.0
    %v5445 = vand.u32 %v83, 4294901760
    %v5446 = vsub.f32 %v83, %v5445
    %v5447 = vand.u32 %v5446, 4294901760
    %5448 = vmatpush1.msra.mxu0 %v5447
    %5449 = vmatprep.subr.mxu0 0.0
    %v5450 = vand.u32 %v82, 4294901760
    %v5451 = vsub.f32 %v82, %v5450
    %v5452 = vand.u32 %v5451, 4294901760
    %5453 = vmatpush1.msra.mxu0 %v5452
    %5454 = vmatprep.subr.mxu0 0.0
    %v5455 = vand.u32 %v81, 4294901760
    %v5456 = vsub.f32 %v81, %v5455
    %v5457 = vand.u32 %v5456, 4294901760
    %5458 = vmatpush1.msra.mxu0 %v5457
    %5459 = vmatprep.subr.mxu0 0.0
    %v5460 = vand.u32 %v80, 4294901760
    %v5461 = vsub.f32 %v80, %v5460
    %v5462 = vand.u32 %v5461, 4294901760
    %5463 = vmatpush1.msra.mxu0 %v5462
    %5464 = vmatprep.subr.mxu0 0.0
    %5465 = vmatpush2.msra.mxu0 0.0
    %5466 = vmatprep.subr.mxu0 0.0
    %5467 = vmatpush2.msra.mxu0 0.0
    %5468 = vmatprep.subr.mxu0 0.0
    %5469 = vmatpush2.msra.mxu0 0.0
    %5470 = vmatprep.subr.mxu0 0.0
    %5471 = vmatpush2.msra.mxu0 0.0
    %5472 = vmatprep.subr.mxu0 0.0
    %5473 = vmatpush2.msra.mxu0 0.0
    %5474 = vmatprep.subr.mxu0 0.0
    %5475 = vmatpush2.msra.mxu0 0.0
    %5476 = vmatprep.subr.mxu0 0.0
    %5477 = vmatpush2.msra.mxu0 0.0
    %5478 = vmatprep.subr.mxu0 0.0
    %5479 = vmatpush2.msra.mxu0 0.0
    %5480 = vmatprep.subr.mxu0 0.0
    %5481 = vmatpush2.msra.mxu0 0.0
    %5482 = vmatprep.subr.mxu0 0.0
    %5483 = vmatpush2.msra.mxu0 0.0
    %5484 = vmatprep.subr.mxu0 0.0
    %5485 = vmatpush2.msra.mxu0 0.0
    %5486 = vmatprep.subr.mxu0 0.0
    %5487 = vmatpush2.msra.mxu0 0.0
    %5488 = vmatprep.subr.mxu0 0.0
    %5489 = vmatpush2.msra.mxu0 0.0
    %5490 = vmatprep.subr.mxu0 0.0
    %5491 = vmatpush2.msra.mxu0 0.0
    %5492 = vmatprep.subr.mxu0 0.0
    %5493 = vmatpush2.msra.mxu0 0.0
    %5494 = vmatprep.subr.mxu0 0.0
    %5495 = vmatpush2.msra.mxu0 0.0
    %5496 = vmatprep.mubr.f32.mxu0 0.0
    %v5497 = vand.u32 %v4853, 4294901760
    %5498 = vmatmul.mubr.f32.gmra.mxu0 %v5497
    %v5499 = vpop.f32.mrf.mxu0
    %v5500 = vadd.f32 %v5361, %v5499
    %v5501 = vpop.f32.mrf.mxu0
    %5502 = vmatprep.mubr.f32.mxu0 0.0
    %v5503 = vand.u32 %v4856, 4294901760
    %5504 = vmatmul.mubr.f32.gmra.mxu0 %v5503
    %v5505 = vpop.f32.mrf.mxu0
    %v5506 = vadd.f32 %v5369, %v5505
    %v5507 = vpop.f32.mrf.mxu0
    %5508 = vmatprep.mubr.f32.mxu0 0.0
    %v5509 = vand.u32 %v4859, 4294901760
    %5510 = vmatmul.mubr.f32.gmra.mxu0 %v5509
    %v5511 = vpop.f32.mrf.mxu0
    %v5512 = vadd.f32 %v5377, %v5511
    %v5513 = vpop.f32.mrf.mxu0
    %5514 = vmatprep.mubr.f32.mxu0 0.0
    %v5515 = vand.u32 %v4862, 4294901760
    %5516 = vmatmul.mubr.f32.gmra.mxu0 %v5515
    %v5517 = vpop.f32.mrf.mxu0
    %v5518 = vadd.f32 %v5385, %v5517
    %v5519 = vpop.f32.mrf.mxu0
    %5520 = vmatprep.mubr.f32.mxu0 0.0
    %v5521 = vand.u32 %v4865, 4294901760
    %5522 = vmatmul.mubr.f32.gmra.mxu0 %v5521
    %v5523 = vpop.f32.mrf.mxu0
    %v5524 = vadd.f32 %v5393, %v5523
    %v5525 = vpop.f32.mrf.mxu0
    %5526 = vmatprep.mubr.f32.mxu0 0.0
    %v5527 = vand.u32 %v4868, 4294901760
    %5528 = vmatmul.mubr.f32.gmra.mxu0 %v5527
    %v5529 = vpop.f32.mrf.mxu0
    %v5530 = vadd.f32 %v5401, %v5529
    %v5531 = vpop.f32.mrf.mxu0
    %5532 = vmatprep.mubr.f32.mxu0 0.0
    %v5533 = vand.u32 %v4871, 4294901760
    %5534 = vmatmul.mubr.f32.gmra.mxu0 %v5533
    %v5535 = vpop.f32.mrf.mxu0
    %v5536 = vadd.f32 %v5409, %v5535
    %v5537 = vpop.f32.mrf.mxu0
    %5538 = vmatprep.mubr.f32.mxu0 0.0
    %v5539 = vand.u32 %v4874, 4294901760
    %5540 = vmatmul.mubr.f32.gmra.mxu0 %v5539
    %v5541 = vpop.f32.mrf.mxu0
    %v5542 = vadd.f32 %v5417, %v5541
    %v5543 = vpop.f32.mrf.mxu0
    %5544 = vdwg.mxu0
    %5545 = vmatprep.subr.mxu0 0.0
    %5546 = vmatpush1.msra.mxu0 0.0
    %5547 = vmatprep.subr.mxu0 0.0
    %5548 = vmatpush1.msra.mxu0 0.0
    %5549 = vmatprep.subr.mxu0 0.0
    %5550 = vmatpush1.msra.mxu0 0.0
    %5551 = vmatprep.subr.mxu0 0.0
    %5552 = vmatpush1.msra.mxu0 0.0
    %5553 = vmatprep.subr.mxu0 0.0
    %5554 = vmatpush1.msra.mxu0 0.0
    %5555 = vmatprep.subr.mxu0 0.0
    %5556 = vmatpush1.msra.mxu0 0.0
    %5557 = vmatprep.subr.mxu0 0.0
    %5558 = vmatpush1.msra.mxu0 0.0
    %5559 = vmatprep.subr.mxu0 0.0
    %5560 = vmatpush1.msra.mxu0 0.0
    %5561 = vmatprep.subr.mxu0 0.0
    %5562 = vmatpush1.msra.mxu0 0.0
    %5563 = vmatprep.subr.mxu0 0.0
    %5564 = vmatpush1.msra.mxu0 0.0
    %5565 = vmatprep.subr.mxu0 0.0
    %5566 = vmatpush1.msra.mxu0 0.0
    %5567 = vmatprep.subr.mxu0 0.0
    %5568 = vmatpush1.msra.mxu0 0.0
    %5569 = vmatprep.subr.mxu0 0.0
    %v5570 = vand.u32 %v83, 4294901760
    %5571 = vmatpush1.msra.mxu0 %v5570
    %5572 = vmatprep.subr.mxu0 0.0
    %v5573 = vand.u32 %v82, 4294901760
    %5574 = vmatpush1.msra.mxu0 %v5573
    %5575 = vmatprep.subr.mxu0 0.0
    %v5576 = vand.u32 %v81, 4294901760
    %5577 = vmatpush1.msra.mxu0 %v5576
    %5578 = vmatprep.subr.mxu0 0.0
    %v5579 = vand.u32 %v80, 4294901760
    %5580 = vmatpush1.msra.mxu0 %v5579
    %5581 = vmatprep.subr.mxu0 0.0
    %5582 = vmatpush2.msra.mxu0 0.0
    %5583 = vmatprep.subr.mxu0 0.0
    %5584 = vmatpush2.msra.mxu0 0.0
    %5585 = vmatprep.subr.mxu0 0.0
    %5586 = vmatpush2.msra.mxu0 0.0
    %5587 = vmatprep.subr.mxu0 0.0
    %5588 = vmatpush2.msra.mxu0 0.0
    %5589 = vmatprep.subr.mxu0 0.0
    %5590 = vmatpush2.msra.mxu0 0.0
    %5591 = vmatprep.subr.mxu0 0.0
    %5592 = vmatpush2.msra.mxu0 0.0
    %5593 = vmatprep.subr.mxu0 0.0
    %5594 = vmatpush2.msra.mxu0 0.0
    %5595 = vmatprep.subr.mxu0 0.0
    %5596 = vmatpush2.msra.mxu0 0.0
    %5597 = vmatprep.subr.mxu0 0.0
    %5598 = vmatpush2.msra.mxu0 0.0
    %5599 = vmatprep.subr.mxu0 0.0
    %5600 = vmatpush2.msra.mxu0 0.0
    %5601 = vmatprep.subr.mxu0 0.0
    %5602 = vmatpush2.msra.mxu0 0.0
    %5603 = vmatprep.subr.mxu0 0.0
    %5604 = vmatpush2.msra.mxu0 0.0
    %5605 = vmatprep.subr.mxu0 0.0
    %5606 = vmatpush2.msra.mxu0 0.0
    %5607 = vmatprep.subr.mxu0 0.0
    %5608 = vmatpush2.msra.mxu0 0.0
    %5609 = vmatprep.subr.mxu0 0.0
    %5610 = vmatpush2.msra.mxu0 0.0
    %5611 = vmatprep.subr.mxu0 0.0
    %5612 = vmatpush2.msra.mxu0 0.0
    %5613 = vmatprep.mubr.f32.mxu0 0.0
    %v5614 = vand.u32 %v4853, 4294901760
    %5615 = vmatmul.mubr.f32.gmra.mxu0 %v5614
    %v5616 = vpop.f32.mrf.mxu0
    %v5617 = vadd.f32 %v5500, %v5616
    %v5618 = vpop.f32.mrf.mxu0
    %5619 = vmatprep.mubr.f32.mxu0 0.0
    %v5620 = vand.u32 %v4856, 4294901760
    %5621 = vmatmul.mubr.f32.gmra.mxu0 %v5620
    %v5622 = vpop.f32.mrf.mxu0
    %v5623 = vadd.f32 %v5506, %v5622
    %v5624 = vpop.f32.mrf.mxu0
    %5625 = vmatprep.mubr.f32.mxu0 0.0
    %v5626 = vand.u32 %v4859, 4294901760
    %5627 = vmatmul.mubr.f32.gmra.mxu0 %v5626
    %v5628 = vpop.f32.mrf.mxu0
    %v5629 = vadd.f32 %v5512, %v5628
    %v5630 = vpop.f32.mrf.mxu0
    %5631 = vmatprep.mubr.f32.mxu0 0.0
    %v5632 = vand.u32 %v4862, 4294901760
    %5633 = vmatmul.mubr.f32.gmra.mxu0 %v5632
    %v5634 = vpop.f32.mrf.mxu0
    %v5635 = vadd.f32 %v5518, %v5634
    %v5636 = vpop.f32.mrf.mxu0
    %5637 = vmatprep.mubr.f32.mxu0 0.0
    %v5638 = vand.u32 %v4865, 4294901760
    %5639 = vmatmul.mubr.f32.gmra.mxu0 %v5638
    %v5640 = vpop.f32.mrf.mxu0
    %v5641 = vadd.f32 %v5524, %v5640
    %v5642 = vpop.f32.mrf.mxu0
    %5643 = vmatprep.mubr.f32.mxu0 0.0
    %v5644 = vand.u32 %v4868, 4294901760
    %5645 = vmatmul.mubr.f32.gmra.mxu0 %v5644
    %v5646 = vpop.f32.mrf.mxu0
    %v5647 = vadd.f32 %v5530, %v5646
    %v5648 = vpop.f32.mrf.mxu0
    %5649 = vmatprep.mubr.f32.mxu0 0.0
    %v5650 = vand.u32 %v4871, 4294901760
    %5651 = vmatmul.mubr.f32.gmra.mxu0 %v5650
    %v5652 = vpop.f32.mrf.mxu0
    %v5653 = vadd.f32 %v5536, %v5652
    %v5654 = vpop.f32.mrf.mxu0
    %5655 = vmatprep.mubr.f32.mxu0 0.0
    %v5656 = vand.u32 %v4874, 4294901760
    %5657 = vmatmul.mubr.f32.gmra.mxu0 %v5656
    %v5658 = vpop.f32.mrf.mxu0
    %v5659 = vadd.f32 %v5542, %v5658
    %v5660 = vpop.f32.mrf.mxu0
    %5661 = vdwg.mxu0
    %v5662 = vsel %vm139, %v5617, 0.0
    %v5663 = vsel %vm139, %v5623, 0.0
    %v5664 = vadd.f32 %v5662, %v5663
    %v5665 = vrot.slane %v5664, 4
    %v5666 = vadd.f32 %v5664, %v5665
    %v5667 = vrot.slane %v5666, 2
    %v5668 = vadd.f32 %v5666, %v5667
    %v5669 = vrot.slane %v5668, 1
    %v5670 = vadd.f32 %v5668, %v5669
    %v5671 = vsel %vm139, %v5629, 0.0
    %v5672 = vsel %vm139, %v5635, 0.0
    %v5673 = vadd.f32 %v5671, %v5672
    %v5674 = vrot.slane %v5673, 4
    %v5675 = vadd.f32 %v5673, %v5674
    %v5676 = vrot.slane %v5675, 2
    %v5677 = vadd.f32 %v5675, %v5676
    %v5678 = vrot.slane %v5677, 1
    %v5679 = vadd.f32 %v5677, %v5678
    %v5680 = vsel %vm139, %v5641, 0.0
    %v5681 = vsel %vm139, %v5647, 0.0
    %v5682 = vadd.f32 %v5680, %v5681
    %v5683 = vrot.slane %v5682, 4
    %v5684 = vadd.f32 %v5682, %v5683
    %v5685 = vrot.slane %v5684, 2
    %v5686 = vadd.f32 %v5684, %v5685
    %v5687 = vrot.slane %v5686, 1
    %v5688 = vadd.f32 %v5686, %v5687
    %v5689 = vsel %vm139, %v5653, 0.0
    %v5690 = vsel %vm139, %v5659, 0.0
    %v5691 = vadd.f32 %v5689, %v5690
    %v5692 = vrot.slane %v5691, 4
    %v5693 = vadd.f32 %v5691, %v5692
    %v5694 = vrot.slane %v5693, 2
    %v5695 = vadd.f32 %v5693, %v5694
    %v5696 = vrot.slane %v5695, 1
    %v5697 = vadd.f32 %v5695, %v5696
    %v5698 = vmul.f32 %v5670, %v5670
    %v5699 = vmul.f32 %v5679, %v5679
    %v5700 = vsub.f32 %v5688, %v5698
    %v5701 = vsub.f32 %v5697, %v5699
    %v5702 = vmax.f32 %v5700, 0.0
    %v5703 = vmax.f32 %v5701, 0.0
    %v5704 = vadd.f32 %v5702, 1e-05
    %v5705 = vadd.f32 %v5703, 1e-05
    %v5706 = vrsqrt.pop %v5704
    %v5707 = vrsqrt.pop %v5705
    %v5708 = vsub.f32 %v4844, %v5670
    %v5709 = vsub.f32 %v4845, %v5670
    %v5710 = vsub.f32 %v4846, %v5679
    %v5711 = vsub.f32 %v4847, %v5679
    %v5712 = vmul.f32 %v5708, %v5706
    %v5713 = vmul.f32 %v5709, %v5706
    %v5714 = vmul.f32 %v5710, %v5707
    %v5715 = vmul.f32 %v5711, %v5707
    %v5716 = vlaneseq
    %v5717 = vshrl.u32 %v5716, 7
    %v5718 = vsub.s32 0, %v5717
    %v5719 = vrot.slane %v88, %v5718
    %v5720 = vmul.f32 %v5712, %v5719
    %v5721 = vmul.f32 %v5713, %v5719
    %v5722 = vmul.f32 %v5714, %v5719
    %v5723 = vmul.f32 %v5715, %v5719
    %v5724 = vlaneseq
    %v5725 = vshrl.u32 %v5724, 7
    %v5726 = vsub.s32 0, %v5725
    %v5727 = vrot.slane %v89, %v5726
    %v5728 = vadd.f32 %v5720, %v5727
    %v5729 = vadd.f32 %v5721, %v5727
    %v5730 = vadd.f32 %v5722, %v5727
    %v5731 = vadd.f32 %v5723, %v5727
    %v5732 = vmax.f32 %v5728, 0.0
    %v5733 = vmax.f32 %v5729, 0.0
    %v5734 = vmax.f32 %v5730, 0.0
    %v5735 = vmax.f32 %v5731, 0.0
    %v5736 = vrot.slane %v5732, 7
    %v5737 = vrot.slane %v5733, 7
    %v5738 = vrot.slane %v5734, 7
    %v5739 = vrot.slane %v5735, 7
    %v5740 = vsel %vm109, %v5738, %v5739
    %v5741 = vsel %vm109, %v5737, %v5738
    %v5742 = vsel %vm109, %v5736, %v5737
    %v5743 = vsel %vm109, %v5739, %v5736
    %v5744 = vsel %vm72, 0.0, %v5743
    %v5745 = vsel %vm73, 0.0, %v5742
    %v5746 = vsel %vm74, 0.0, %v5741
    %v5747 = vsel %vm75, 0.0, %v5740
    %v5748 = vrot.slane %v5732, 1
    %v5749 = vrot.slane %v5733, 1
    %v5750 = vrot.slane %v5734, 1
    %v5751 = vrot.slane %v5735, 1
    %v5752 = vsel %vm122, %v5750, %v5751
    %v5753 = vsel %vm122, %v5749, %v5750
    %v5754 = vsel %vm122, %v5748, %v5749
    %v5755 = vsel %vm122, %v5751, %v5748
    %v5756 = vsel %vm76, 0.0, %v5754
    %v5757 = vsel %vm77, 0.0, %v5753
    %v5758 = vsel %vm78, 0.0, %v5752
    %v5759 = vsel %vm79, 0.0, %v5755
    %v5760 = vld [vmem:[%s2 + $0x20] sm:$0xff]
    %v5761 = vld [vmem:[%s2 + $0x28] sm:$0xff]
    %v5762 = vld [vmem:[%s2 + $0x30] sm:$0xff]
    %v5763 = vld [vmem:[%s2 + $0x38] sm:$0xff]
    %v5764 = vld [vmem:[%s2] sm:$0xff]
    %v5765 = vld [vmem:[%s2 + $0x8] sm:$0xff]
    %v5766 = vld [vmem:[%s2 + $0x10] sm:$0xff]
    %v5767 = vld [vmem:[%s2 + $0x18] sm:$0xff]
    %v5769 = vsel %vm139, %v5744, 0
    %v5772 = vsel %vm139, %v5745, 0
    %v5775 = vsel %vm139, %v5746, 0
    %v5778 = vsel %vm139, %v5747, 0
    %5780 = vmatprep.subr.mxu0 0.0
    %5781 = vmatpush1.msra.mxu0 0.0
    %5782 = vmatprep.subr.mxu0 0.0
    %5783 = vmatpush1.msra.mxu0 0.0
    %5784 = vmatprep.subr.mxu0 0.0
    %5785 = vmatpush1.msra.mxu0 0.0
    %5786 = vmatprep.subr.mxu0 0.0
    %5787 = vmatpush1.msra.mxu0 0.0
    %5788 = vmatprep.subr.mxu0 0.0
    %5789 = vmatpush1.msra.mxu0 0.0
    %5790 = vmatprep.subr.mxu0 0.0
    %5791 = vmatpush1.msra.mxu0 0.0
    %5792 = vmatprep.subr.mxu0 0.0
    %5793 = vmatpush1.msra.mxu0 0.0
    %5794 = vmatprep.subr.mxu0 0.0
    %5795 = vmatpush1.msra.mxu0 0.0
    %5796 = vmatprep.subr.mxu0 0.0
    %5797 = vmatpush1.msra.mxu0 0.0
    %5798 = vmatprep.subr.mxu0 0.0
    %5799 = vmatpush1.msra.mxu0 0.0
    %5800 = vmatprep.subr.mxu0 0.0
    %5801 = vmatpush1.msra.mxu0 0.0
    %5802 = vmatprep.subr.mxu0 0.0
    %5803 = vmatpush1.msra.mxu0 0.0
    %5804 = vmatprep.subr.mxu0 0.0
    %v5805 = vand.u32 %v5767, 4294901760
    %5806 = vmatpush1.msra.mxu0 %v5805
    %5807 = vmatprep.subr.mxu0 0.0
    %v5808 = vand.u32 %v5766, 4294901760
    %5809 = vmatpush1.msra.mxu0 %v5808
    %5810 = vmatprep.subr.mxu0 0.0
    %v5811 = vand.u32 %v5765, 4294901760
    %5812 = vmatpush1.msra.mxu0 %v5811
    %5813 = vmatprep.subr.mxu0 0.0
    %v5814 = vand.u32 %v5764, 4294901760
    %5815 = vmatpush1.msra.mxu0 %v5814
    %5816 = vmatprep.subr.mxu0 0.0
    %5817 = vmatpush2.msra.mxu0 0.0
    %5818 = vmatprep.subr.mxu0 0.0
    %5819 = vmatpush2.msra.mxu0 0.0
    %5820 = vmatprep.subr.mxu0 0.0
    %5821 = vmatpush2.msra.mxu0 0.0
    %5822 = vmatprep.subr.mxu0 0.0
    %5823 = vmatpush2.msra.mxu0 0.0
    %5824 = vmatprep.subr.mxu0 0.0
    %5825 = vmatpush2.msra.mxu0 0.0
    %5826 = vmatprep.subr.mxu0 0.0
    %5827 = vmatpush2.msra.mxu0 0.0
    %5828 = vmatprep.subr.mxu0 0.0
    %5829 = vmatpush2.msra.mxu0 0.0
    %5830 = vmatprep.subr.mxu0 0.0
    %5831 = vmatpush2.msra.mxu0 0.0
    %5832 = vmatprep.subr.mxu0 0.0
    %5833 = vmatpush2.msra.mxu0 0.0
    %5834 = vmatprep.subr.mxu0 0.0
    %5835 = vmatpush2.msra.mxu0 0.0
    %5836 = vmatprep.subr.mxu0 0.0
    %5837 = vmatpush2.msra.mxu0 0.0
    %5838 = vmatprep.subr.mxu0 0.0
    %5839 = vmatpush2.msra.mxu0 0.0
    %5840 = vmatprep.subr.mxu0 0.0
    %5841 = vmatpush2.msra.mxu0 0.0
    %5842 = vmatprep.subr.mxu0 0.0
    %5843 = vmatpush2.msra.mxu0 0.0
    %5844 = vmatprep.subr.mxu0 0.0
    %5845 = vmatpush2.msra.mxu0 0.0
    %5846 = vmatprep.subr.mxu0 0.0
    %5847 = vmatpush2.msra.mxu0 0.0
    %5848 = vmatprep.mubr.f32.mxu0 0.0
    %v5849 = vand.u32 %v5769, 4294901760
    %v5850 = vsub.f32 %v5769, %v5849
    %v5851 = vand.u32 %v5850, 4294901760
    %v5852 = vsub.f32 %v5850, %v5851
    %v5853 = vand.u32 %v5852, 4294901760
    %5854 = vmatmul.mubr.f32.gmra.mxu0 %v5853
    %v5855 = vpop.f32.mrf.mxu0
    %v5856 = vadd.f32 0.0, %v5855
    %v5857 = vpop.f32.mrf.mxu0
    %5858 = vmatprep.mubr.f32.mxu0 0.0
    %v5859 = vand.u32 %v5772, 4294901760
    %v5860 = vsub.f32 %v5772, %v5859
    %v5861 = vand.u32 %v5860, 4294901760
    %v5862 = vsub.f32 %v5860, %v5861
    %v5863 = vand.u32 %v5862, 4294901760
    %5864 = vmatmul.mubr.f32.gmra.mxu0 %v5863
    %v5865 = vpop.f32.mrf.mxu0
    %v5866 = vadd.f32 0.0, %v5865
    %v5867 = vpop.f32.mrf.mxu0
    %5868 = vmatprep.mubr.f32.mxu0 0.0
    %v5869 = vand.u32 %v5775, 4294901760
    %v5870 = vsub.f32 %v5775, %v5869
    %v5871 = vand.u32 %v5870, 4294901760
    %v5872 = vsub.f32 %v5870, %v5871
    %v5873 = vand.u32 %v5872, 4294901760
    %5874 = vmatmul.mubr.f32.gmra.mxu0 %v5873
    %v5875 = vpop.f32.mrf.mxu0
    %v5876 = vadd.f32 0.0, %v5875
    %v5877 = vpop.f32.mrf.mxu0
    %5878 = vmatprep.mubr.f32.mxu0 0.0
    %v5879 = vand.u32 %v5778, 4294901760
    %v5880 = vsub.f32 %v5778, %v5879
    %v5881 = vand.u32 %v5880, 4294901760
    %v5882 = vsub.f32 %v5880, %v5881
    %v5883 = vand.u32 %v5882, 4294901760
    %5884 = vmatmul.mubr.f32.gmra.mxu0 %v5883
    %v5885 = vpop.f32.mrf.mxu0
    %v5886 = vadd.f32 0.0, %v5885
    %v5887 = vpop.f32.mrf.mxu0
    %5888 = vdwg.mxu0
    %5889 = vmatprep.subr.mxu0 0.0
    %5890 = vmatpush1.msra.mxu0 0.0
    %5891 = vmatprep.subr.mxu0 0.0
    %5892 = vmatpush1.msra.mxu0 0.0
    %5893 = vmatprep.subr.mxu0 0.0
    %5894 = vmatpush1.msra.mxu0 0.0
    %5895 = vmatprep.subr.mxu0 0.0
    %5896 = vmatpush1.msra.mxu0 0.0
    %5897 = vmatprep.subr.mxu0 0.0
    %5898 = vmatpush1.msra.mxu0 0.0
    %5899 = vmatprep.subr.mxu0 0.0
    %5900 = vmatpush1.msra.mxu0 0.0
    %5901 = vmatprep.subr.mxu0 0.0
    %5902 = vmatpush1.msra.mxu0 0.0
    %5903 = vmatprep.subr.mxu0 0.0
    %5904 = vmatpush1.msra.mxu0 0.0
    %5905 = vmatprep.subr.mxu0 0.0
    %5906 = vmatpush1.msra.mxu0 0.0
    %5907 = vmatprep.subr.mxu0 0.0
    %5908 = vmatpush1.msra.mxu0 0.0
    %5909 = vmatprep.subr.mxu0 0.0
    %5910 = vmatpush1.msra.mxu0 0.0
    %5911 = vmatprep.subr.mxu0 0.0
    %5912 = vmatpush1.msra.mxu0 0.0
    %5913 = vmatprep.subr.mxu0 0.0
    %v5914 = vand.u32 %v5767, 4294901760
    %v5915 = vsub.f32 %v5767, %v5914
    %v5916 = vand.u32 %v5915, 4294901760
    %v5917 = vsub.f32 %v5915, %v5916
    %v5918 = vand.u32 %v5917, 4294901760
    %5919 = vmatpush1.msra.mxu0 %v5918
    %5920 = vmatprep.subr.mxu0 0.0
    %v5921 = vand.u32 %v5766, 4294901760
    %v5922 = vsub.f32 %v5766, %v5921
    %v5923 = vand.u32 %v5922, 4294901760
    %v5924 = vsub.f32 %v5922, %v5923
    %v5925 = vand.u32 %v5924, 4294901760
    %5926 = vmatpush1.msra.mxu0 %v5925
    %5927 = vmatprep.subr.mxu0 0.0
    %v5928 = vand.u32 %v5765, 4294901760
    %v5929 = vsub.f32 %v5765, %v5928
    %v5930 = vand.u32 %v5929, 4294901760
    %v5931 = vsub.f32 %v5929, %v5930
    %v5932 = vand.u32 %v5931, 4294901760
    %5933 = vmatpush1.msra.mxu0 %v5932
    %5934 = vmatprep.subr.mxu0 0.0
    %v5935 = vand.u32 %v5764, 4294901760
    %v5936 = vsub.f32 %v5764, %v5935
    %v5937 = vand.u32 %v5936, 4294901760
    %v5938 = vsub.f32 %v5936, %v5937
    %v5939 = vand.u32 %v5938, 4294901760
    %5940 = vmatpush1.msra.mxu0 %v5939
    %5941 = vmatprep.subr.mxu0 0.0
    %5942 = vmatpush2.msra.mxu0 0.0
    %5943 = vmatprep.subr.mxu0 0.0
    %5944 = vmatpush2.msra.mxu0 0.0
    %5945 = vmatprep.subr.mxu0 0.0
    %5946 = vmatpush2.msra.mxu0 0.0
    %5947 = vmatprep.subr.mxu0 0.0
    %5948 = vmatpush2.msra.mxu0 0.0
    %5949 = vmatprep.subr.mxu0 0.0
    %5950 = vmatpush2.msra.mxu0 0.0
    %5951 = vmatprep.subr.mxu0 0.0
    %5952 = vmatpush2.msra.mxu0 0.0
    %5953 = vmatprep.subr.mxu0 0.0
    %5954 = vmatpush2.msra.mxu0 0.0
    %5955 = vmatprep.subr.mxu0 0.0
    %5956 = vmatpush2.msra.mxu0 0.0
    %5957 = vmatprep.subr.mxu0 0.0
    %5958 = vmatpush2.msra.mxu0 0.0
    %5959 = vmatprep.subr.mxu0 0.0
    %5960 = vmatpush2.msra.mxu0 0.0
    %5961 = vmatprep.subr.mxu0 0.0
    %5962 = vmatpush2.msra.mxu0 0.0
    %5963 = vmatprep.subr.mxu0 0.0
    %5964 = vmatpush2.msra.mxu0 0.0
    %5965 = vmatprep.subr.mxu0 0.0
    %5966 = vmatpush2.msra.mxu0 0.0
    %5967 = vmatprep.subr.mxu0 0.0
    %5968 = vmatpush2.msra.mxu0 0.0
    %5969 = vmatprep.subr.mxu0 0.0
    %5970 = vmatpush2.msra.mxu0 0.0
    %5971 = vmatprep.subr.mxu0 0.0
    %5972 = vmatpush2.msra.mxu0 0.0
    %5973 = vmatprep.mubr.f32.mxu0 0.0
    %v5974 = vand.u32 %v5769, 4294901760
    %5975 = vmatmul.mubr.f32.gmra.mxu0 %v5974
    %v5976 = vpop.f32.mrf.mxu0
    %v5977 = vadd.f32 %v5856, %v5976
    %v5978 = vpop.f32.mrf.mxu0
    %5979 = vmatprep.mubr.f32.mxu0 0.0
    %v5980 = vand.u32 %v5772, 4294901760
    %5981 = vmatmul.mubr.f32.gmra.mxu0 %v5980
    %v5982 = vpop.f32.mrf.mxu0
    %v5983 = vadd.f32 %v5866, %v5982
    %v5984 = vpop.f32.mrf.mxu0
    %5985 = vmatprep.mubr.f32.mxu0 0.0
    %v5986 = vand.u32 %v5775, 4294901760
    %5987 = vmatmul.mubr.f32.gmra.mxu0 %v5986
    %v5988 = vpop.f32.mrf.mxu0
    %v5989 = vadd.f32 %v5876, %v5988
    %v5990 = vpop.f32.mrf.mxu0
    %5991 = vmatprep.mubr.f32.mxu0 0.0
    %v5992 = vand.u32 %v5778, 4294901760
    %5993 = vmatmul.mubr.f32.gmra.mxu0 %v5992
    %v5994 = vpop.f32.mrf.mxu0
    %v5995 = vadd.f32 %v5886, %v5994
    %v5996 = vpop.f32.mrf.mxu0
    %5997 = vdwg.mxu0
    %5998 = vmatprep.subr.mxu0 0.0
    %5999 = vmatpush1.msra.mxu0 0.0
    %6000 = vmatprep.subr.mxu0 0.0
    %6001 = vmatpush1.msra.mxu0 0.0
    %6002 = vmatprep.subr.mxu0 0.0
    %6003 = vmatpush1.msra.mxu0 0.0
    %6004 = vmatprep.subr.mxu0 0.0
    %6005 = vmatpush1.msra.mxu0 0.0
    %6006 = vmatprep.subr.mxu0 0.0
    %6007 = vmatpush1.msra.mxu0 0.0
    %6008 = vmatprep.subr.mxu0 0.0
    %6009 = vmatpush1.msra.mxu0 0.0
    %6010 = vmatprep.subr.mxu0 0.0
    %6011 = vmatpush1.msra.mxu0 0.0
    %6012 = vmatprep.subr.mxu0 0.0
    %6013 = vmatpush1.msra.mxu0 0.0
    %6014 = vmatprep.subr.mxu0 0.0
    %6015 = vmatpush1.msra.mxu0 0.0
    %6016 = vmatprep.subr.mxu0 0.0
    %6017 = vmatpush1.msra.mxu0 0.0
    %6018 = vmatprep.subr.mxu0 0.0
    %6019 = vmatpush1.msra.mxu0 0.0
    %6020 = vmatprep.subr.mxu0 0.0
    %6021 = vmatpush1.msra.mxu0 0.0
    %6022 = vmatprep.subr.mxu0 0.0
    %v6023 = vand.u32 %v5767, 4294901760
    %v6024 = vsub.f32 %v5767, %v6023
    %6025 = vmatpush1.msra.mxu0 %v6024
    %6026 = vmatprep.subr.mxu0 0.0
    %v6027 = vand.u32 %v5766, 4294901760
    %v6028 = vsub.f32 %v5766, %v6027
    %6029 = vmatpush1.msra.mxu0 %v6028
    %6030 = vmatprep.subr.mxu0 0.0
    %v6031 = vand.u32 %v5765, 4294901760
    %v6032 = vsub.f32 %v5765, %v6031
    %6033 = vmatpush1.msra.mxu0 %v6032
    %6034 = vmatprep.subr.mxu0 0.0
    %v6035 = vand.u32 %v5764, 4294901760
    %v6036 = vsub.f32 %v5764, %v6035
    %6037 = vmatpush1.msra.mxu0 %v6036
    %6038 = vmatprep.subr.mxu0 0.0
    %6039 = vmatpush2.msra.mxu0 0.0
    %6040 = vmatprep.subr.mxu0 0.0
    %6041 = vmatpush2.msra.mxu0 0.0
    %6042 = vmatprep.subr.mxu0 0.0
    %6043 = vmatpush2.msra.mxu0 0.0
    %6044 = vmatprep.subr.mxu0 0.0
    %6045 = vmatpush2.msra.mxu0 0.0
    %6046 = vmatprep.subr.mxu0 0.0
    %6047 = vmatpush2.msra.mxu0 0.0
    %6048 = vmatprep.subr.mxu0 0.0
    %6049 = vmatpush2.msra.mxu0 0.0
    %6050 = vmatprep.subr.mxu0 0.0
    %6051 = vmatpush2.msra.mxu0 0.0
    %6052 = vmatprep.subr.mxu0 0.0
    %6053 = vmatpush2.msra.mxu0 0.0
    %6054 = vmatprep.subr.mxu0 0.0
    %6055 = vmatpush2.msra.mxu0 0.0
    %6056 = vmatprep.subr.mxu0 0.0
    %6057 = vmatpush2.msra.mxu0 0.0
    %6058 = vmatprep.subr.mxu0 0.0
    %6059 = vmatpush2.msra.mxu0 0.0
    %6060 = vmatprep.subr.mxu0 0.0
    %6061 = vmatpush2.msra.mxu0 0.0
    %6062 = vmatprep.subr.mxu0 0.0
    %6063 = vmatpush2.msra.mxu0 0.0
    %6064 = vmatprep.subr.mxu0 0.0
    %6065 = vmatpush2.msra.mxu0 0.0
    %6066 = vmatprep.subr.mxu0 0.0
    %6067 = vmatpush2.msra.mxu0 0.0
    %6068 = vmatprep.subr.mxu0 0.0
    %6069 = vmatpush2.msra.mxu0 0.0
    %6070 = vmatprep.mubr.f32.mxu0 0.0
    %v6071 = vand.u32 %v5769, 4294901760
    %v6072 = vsub.f32 %v5769, %v6071
    %6073 = vmatmul.mubr.f32.gmra.mxu0 %v6072
    %v6074 = vpop.f32.mrf.mxu0
    %v6075 = vadd.f32 %v5977, %v6074
    %v6076 = vpop.f32.mrf.mxu0
    %6077 = vmatprep.mubr.f32.mxu0 0.0
    %v6078 = vand.u32 %v5772, 4294901760
    %v6079 = vsub.f32 %v5772, %v6078
    %6080 = vmatmul.mubr.f32.gmra.mxu0 %v6079
    %v6081 = vpop.f32.mrf.mxu0
    %v6082 = vadd.f32 %v5983, %v6081
    %v6083 = vpop.f32.mrf.mxu0
    %6084 = vmatprep.mubr.f32.mxu0 0.0
    %v6085 = vand.u32 %v5775, 4294901760
    %v6086 = vsub.f32 %v5775, %v6085
    %6087 = vmatmul.mubr.f32.gmra.mxu0 %v6086
    %v6088 = vpop.f32.mrf.mxu0
    %v6089 = vadd.f32 %v5989, %v6088
    %v6090 = vpop.f32.mrf.mxu0
    %6091 = vmatprep.mubr.f32.mxu0 0.0
    %v6092 = vand.u32 %v5778, 4294901760
    %v6093 = vsub.f32 %v5778, %v6092
    %6094 = vmatmul.mubr.f32.gmra.mxu0 %v6093
    %v6095 = vpop.f32.mrf.mxu0
    %v6096 = vadd.f32 %v5995, %v6095
    %v6097 = vpop.f32.mrf.mxu0
    %6098 = vdwg.mxu0
    %6099 = vmatprep.subr.mxu0 0.0
    %6100 = vmatpush1.msra.mxu0 0.0
    %6101 = vmatprep.subr.mxu0 0.0
    %6102 = vmatpush1.msra.mxu0 0.0
    %6103 = vmatprep.subr.mxu0 0.0
    %6104 = vmatpush1.msra.mxu0 0.0
    %6105 = vmatprep.subr.mxu0 0.0
    %6106 = vmatpush1.msra.mxu0 0.0
    %6107 = vmatprep.subr.mxu0 0.0
    %6108 = vmatpush1.msra.mxu0 0.0
    %6109 = vmatprep.subr.mxu0 0.0
    %6110 = vmatpush1.msra.mxu0 0.0
    %6111 = vmatprep.subr.mxu0 0.0
    %6112 = vmatpush1.msra.mxu0 0.0
    %6113 = vmatprep.subr.mxu0 0.0
    %6114 = vmatpush1.msra.mxu0 0.0
    %6115 = vmatprep.subr.mxu0 0.0
    %6116 = vmatpush1.msra.mxu0 0.0
    %6117 = vmatprep.subr.mxu0 0.0
    %6118 = vmatpush1.msra.mxu0 0.0
    %6119 = vmatprep.subr.mxu0 0.0
    %6120 = vmatpush1.msra.mxu0 0.0
    %6121 = vmatprep.subr.mxu0 0.0
    %6122 = vmatpush1.msra.mxu0 0.0
    %6123 = vmatprep.subr.mxu0 0.0
    %v6124 = vand.u32 %v5767, 4294901760
    %6125 = vmatpush1.msra.mxu0 %v6124
    %6126 = vmatprep.subr.mxu0 0.0
    %v6127 = vand.u32 %v5766, 4294901760
    %6128 = vmatpush1.msra.mxu0 %v6127
    %6129 = vmatprep.subr.mxu0 0.0
    %v6130 = vand.u32 %v5765, 4294901760
    %6131 = vmatpush1.msra.mxu0 %v6130
    %6132 = vmatprep.subr.mxu0 0.0
    %v6133 = vand.u32 %v5764, 4294901760
    %6134 = vmatpush1.msra.mxu0 %v6133
    %6135 = vmatprep.subr.mxu0 0.0
    %6136 = vmatpush2.msra.mxu0 0.0
    %6137 = vmatprep.subr.mxu0 0.0
    %6138 = vmatpush2.msra.mxu0 0.0
    %6139 = vmatprep.subr.mxu0 0.0
    %6140 = vmatpush2.msra.mxu0 0.0
    %6141 = vmatprep.subr.mxu0 0.0
    %6142 = vmatpush2.msra.mxu0 0.0
    %6143 = vmatprep.subr.mxu0 0.0
    %6144 = vmatpush2.msra.mxu0 0.0
    %6145 = vmatprep.subr.mxu0 0.0
    %6146 = vmatpush2.msra.mxu0 0.0
    %6147 = vmatprep.subr.mxu0 0.0
    %6148 = vmatpush2.msra.mxu0 0.0
    %6149 = vmatprep.subr.mxu0 0.0
    %6150 = vmatpush2.msra.mxu0 0.0
    %6151 = vmatprep.subr.mxu0 0.0
    %6152 = vmatpush2.msra.mxu0 0.0
    %6153 = vmatprep.subr.mxu0 0.0
    %6154 = vmatpush2.msra.mxu0 0.0
    %6155 = vmatprep.subr.mxu0 0.0
    %6156 = vmatpush2.msra.mxu0 0.0
    %6157 = vmatprep.subr.mxu0 0.0
    %6158 = vmatpush2.msra.mxu0 0.0
    %6159 = vmatprep.subr.mxu0 0.0
    %6160 = vmatpush2.msra.mxu0 0.0
    %6161 = vmatprep.subr.mxu0 0.0
    %6162 = vmatpush2.msra.mxu0 0.0
    %6163 = vmatprep.subr.mxu0 0.0
    %6164 = vmatpush2.msra.mxu0 0.0
    %6165 = vmatprep.subr.mxu0 0.0
    %6166 = vmatpush2.msra.mxu0 0.0
    %6167 = vmatprep.mubr.f32.mxu0 0.0
    %v6168 = vand.u32 %v5769, 4294901760
    %v6169 = vsub.f32 %v5769, %v6168
    %v6170 = vand.u32 %v6169, 4294901760
    %6171 = vmatmul.mubr.f32.gmra.mxu0 %v6170
    %v6172 = vpop.f32.mrf.mxu0
    %v6173 = vadd.f32 %v6075, %v6172
    %v6174 = vpop.f32.mrf.mxu0
    %6175 = vmatprep.mubr.f32.mxu0 0.0
    %v6176 = vand.u32 %v5772, 4294901760
    %v6177 = vsub.f32 %v5772, %v6176
    %v6178 = vand.u32 %v6177, 4294901760
    %6179 = vmatmul.mubr.f32.gmra.mxu0 %v6178
    %v6180 = vpop.f32.mrf.mxu0
    %v6181 = vadd.f32 %v6082, %v6180
    %v6182 = vpop.f32.mrf.mxu0
    %6183 = vmatprep.mubr.f32.mxu0 0.0
    %v6184 = vand.u32 %v5775, 4294901760
    %v6185 = vsub.f32 %v5775, %v6184
    %v6186 = vand.u32 %v6185, 4294901760
    %6187 = vmatmul.mubr.f32.gmra.mxu0 %v6186
    %v6188 = vpop.f32.mrf.mxu0
    %v6189 = vadd.f32 %v6089, %v6188
    %v6190 = vpop.f32.mrf.mxu0
    %6191 = vmatprep.mubr.f32.mxu0 0.0
    %v6192 = vand.u32 %v5778, 4294901760
    %v6193 = vsub.f32 %v5778, %v6192
    %v6194 = vand.u32 %v6193, 4294901760
    %6195 = vmatmul.mubr.f32.gmra.mxu0 %v6194
    %v6196 = vpop.f32.mrf.mxu0
    %v6197 = vadd.f32 %v6096, %v6196
    %v6198 = vpop.f32.mrf.mxu0
    %6199 = vdwg.mxu0
    %6200 = vmatprep.subr.mxu0 0.0
    %6201 = vmatpush1.msra.mxu0 0.0
    %6202 = vmatprep.subr.mxu0 0.0
    %6203 = vmatpush1.msra.mxu0 0.0
    %6204 = vmatprep.subr.mxu0 0.0
    %6205 = vmatpush1.msra.mxu0 0.0
    %6206 = vmatprep.subr.mxu0 0.0
    %6207 = vmatpush1.msra.mxu0 0.0
    %6208 = vmatprep.subr.mxu0 0.0
    %6209 = vmatpush1.msra.mxu0 0.0
    %6210 = vmatprep.subr.mxu0 0.0
    %6211 = vmatpush1.msra.mxu0 0.0
    %6212 = vmatprep.subr.mxu0 0.0
    %6213 = vmatpush1.msra.mxu0 0.0
    %6214 = vmatprep.subr.mxu0 0.0
    %6215 = vmatpush1.msra.mxu0 0.0
    %6216 = vmatprep.subr.mxu0 0.0
    %6217 = vmatpush1.msra.mxu0 0.0
    %6218 = vmatprep.subr.mxu0 0.0
    %6219 = vmatpush1.msra.mxu0 0.0
    %6220 = vmatprep.subr.mxu0 0.0
    %6221 = vmatpush1.msra.mxu0 0.0
    %6222 = vmatprep.subr.mxu0 0.0
    %6223 = vmatpush1.msra.mxu0 0.0
    %6224 = vmatprep.subr.mxu0 0.0
    %v6225 = vand.u32 %v5767, 4294901760
    %v6226 = vsub.f32 %v5767, %v6225
    %v6227 = vand.u32 %v6226, 4294901760
    %6228 = vmatpush1.msra.mxu0 %v6227
    %6229 = vmatprep.subr.mxu0 0.0
    %v6230 = vand.u32 %v5766, 4294901760
    %v6231 = vsub.f32 %v5766, %v6230
    %v6232 = vand.u32 %v6231, 4294901760
    %6233 = vmatpush1.msra.mxu0 %v6232
    %6234 = vmatprep.subr.mxu0 0.0
    %v6235 = vand.u32 %v5765, 4294901760
    %v6236 = vsub.f32 %v5765, %v6235
    %v6237 = vand.u32 %v6236, 4294901760
    %6238 = vmatpush1.msra.mxu0 %v6237
    %6239 = vmatprep.subr.mxu0 0.0
    %v6240 = vand.u32 %v5764, 4294901760
    %v6241 = vsub.f32 %v5764, %v6240
    %v6242 = vand.u32 %v6241, 4294901760
    %6243 = vmatpush1.msra.mxu0 %v6242
    %6244 = vmatprep.subr.mxu0 0.0
    %6245 = vmatpush2.msra.mxu0 0.0
    %6246 = vmatprep.subr.mxu0 0.0
    %6247 = vmatpush2.msra.mxu0 0.0
    %6248 = vmatprep.subr.mxu0 0.0
    %6249 = vmatpush2.msra.mxu0 0.0
    %6250 = vmatprep.subr.mxu0 0.0
    %6251 = vmatpush2.msra.mxu0 0.0
    %6252 = vmatprep.subr.mxu0 0.0
    %6253 = vmatpush2.msra.mxu0 0.0
    %6254 = vmatprep.subr.mxu0 0.0
    %6255 = vmatpush2.msra.mxu0 0.0
    %6256 = vmatprep.subr.mxu0 0.0
    %6257 = vmatpush2.msra.mxu0 0.0
    %6258 = vmatprep.subr.mxu0 0.0
    %6259 = vmatpush2.msra.mxu0 0.0
    %6260 = vmatprep.subr.mxu0 0.0
    %6261 = vmatpush2.msra.mxu0 0.0
    %6262 = vmatprep.subr.mxu0 0.0
    %6263 = vmatpush2.msra.mxu0 0.0
    %6264 = vmatprep.subr.mxu0 0.0
    %6265 = vmatpush2.msra.mxu0 0.0
    %6266 = vmatprep.subr.mxu0 0.0
    %6267 = vmatpush2.msra.mxu0 0.0
    %6268 = vmatprep.subr.mxu0 0.0
    %6269 = vmatpush2.msra.mxu0 0.0
    %6270 = vmatprep.subr.mxu0 0.0
    %6271 = vmatpush2.msra.mxu0 0.0
    %6272 = vmatprep.subr.mxu0 0.0
    %6273 = vmatpush2.msra.mxu0 0.0
    %6274 = vmatprep.subr.mxu0 0.0
    %6275 = vmatpush2.msra.mxu0 0.0
    %6276 = vmatprep.mubr.f32.mxu0 0.0
    %v6277 = vand.u32 %v5769, 4294901760
    %6278 = vmatmul.mubr.f32.gmra.mxu0 %v6277
    %v6279 = vpop.f32.mrf.mxu0
    %v6280 = vadd.f32 %v6173, %v6279
    %v6281 = vpop.f32.mrf.mxu0
    %6282 = vmatprep.mubr.f32.mxu0 0.0
    %v6283 = vand.u32 %v5772, 4294901760
    %6284 = vmatmul.mubr.f32.gmra.mxu0 %v6283
    %v6285 = vpop.f32.mrf.mxu0
    %v6286 = vadd.f32 %v6181, %v6285
    %v6287 = vpop.f32.mrf.mxu0
    %6288 = vmatprep.mubr.f32.mxu0 0.0
    %v6289 = vand.u32 %v5775, 4294901760
    %6290 = vmatmul.mubr.f32.gmra.mxu0 %v6289
    %v6291 = vpop.f32.mrf.mxu0
    %v6292 = vadd.f32 %v6189, %v6291
    %v6293 = vpop.f32.mrf.mxu0
    %6294 = vmatprep.mubr.f32.mxu0 0.0
    %v6295 = vand.u32 %v5778, 4294901760
    %6296 = vmatmul.mubr.f32.gmra.mxu0 %v6295
    %v6297 = vpop.f32.mrf.mxu0
    %v6298 = vadd.f32 %v6197, %v6297
    %v6299 = vpop.f32.mrf.mxu0
    %6300 = vdwg.mxu0
    %6301 = vmatprep.subr.mxu0 0.0
    %6302 = vmatpush1.msra.mxu0 0.0
    %6303 = vmatprep.subr.mxu0 0.0
    %6304 = vmatpush1.msra.mxu0 0.0
    %6305 = vmatprep.subr.mxu0 0.0
    %6306 = vmatpush1.msra.mxu0 0.0
    %6307 = vmatprep.subr.mxu0 0.0
    %6308 = vmatpush1.msra.mxu0 0.0
    %6309 = vmatprep.subr.mxu0 0.0
    %6310 = vmatpush1.msra.mxu0 0.0
    %6311 = vmatprep.subr.mxu0 0.0
    %6312 = vmatpush1.msra.mxu0 0.0
    %6313 = vmatprep.subr.mxu0 0.0
    %6314 = vmatpush1.msra.mxu0 0.0
    %6315 = vmatprep.subr.mxu0 0.0
    %6316 = vmatpush1.msra.mxu0 0.0
    %6317 = vmatprep.subr.mxu0 0.0
    %6318 = vmatpush1.msra.mxu0 0.0
    %6319 = vmatprep.subr.mxu0 0.0
    %6320 = vmatpush1.msra.mxu0 0.0
    %6321 = vmatprep.subr.mxu0 0.0
    %6322 = vmatpush1.msra.mxu0 0.0
    %6323 = vmatprep.subr.mxu0 0.0
    %6324 = vmatpush1.msra.mxu0 0.0
    %6325 = vmatprep.subr.mxu0 0.0
    %v6326 = vand.u32 %v5767, 4294901760
    %6327 = vmatpush1.msra.mxu0 %v6326
    %6328 = vmatprep.subr.mxu0 0.0
    %v6329 = vand.u32 %v5766, 4294901760
    %6330 = vmatpush1.msra.mxu0 %v6329
    %6331 = vmatprep.subr.mxu0 0.0
    %v6332 = vand.u32 %v5765, 4294901760
    %6333 = vmatpush1.msra.mxu0 %v6332
    %6334 = vmatprep.subr.mxu0 0.0
    %v6335 = vand.u32 %v5764, 4294901760
    %6336 = vmatpush1.msra.mxu0 %v6335
    %6337 = vmatprep.subr.mxu0 0.0
    %6338 = vmatpush2.msra.mxu0 0.0
    %6339 = vmatprep.subr.mxu0 0.0
    %6340 = vmatpush2.msra.mxu0 0.0
    %6341 = vmatprep.subr.mxu0 0.0
    %6342 = vmatpush2.msra.mxu0 0.0
    %6343 = vmatprep.subr.mxu0 0.0
    %6344 = vmatpush2.msra.mxu0 0.0
    %6345 = vmatprep.subr.mxu0 0.0
    %6346 = vmatpush2.msra.mxu0 0.0
    %6347 = vmatprep.subr.mxu0 0.0
    %6348 = vmatpush2.msra.mxu0 0.0
    %6349 = vmatprep.subr.mxu0 0.0
    %6350 = vmatpush2.msra.mxu0 0.0
    %6351 = vmatprep.subr.mxu0 0.0
    %6352 = vmatpush2.msra.mxu0 0.0
    %6353 = vmatprep.subr.mxu0 0.0
    %6354 = vmatpush2.msra.mxu0 0.0
    %6355 = vmatprep.subr.mxu0 0.0
    %6356 = vmatpush2.msra.mxu0 0.0
    %6357 = vmatprep.subr.mxu0 0.0
    %6358 = vmatpush2.msra.mxu0 0.0
    %6359 = vmatprep.subr.mxu0 0.0
    %6360 = vmatpush2.msra.mxu0 0.0
    %6361 = vmatprep.subr.mxu0 0.0
    %6362 = vmatpush2.msra.mxu0 0.0
    %6363 = vmatprep.subr.mxu0 0.0
    %6364 = vmatpush2.msra.mxu0 0.0
    %6365 = vmatprep.subr.mxu0 0.0
    %6366 = vmatpush2.msra.mxu0 0.0
    %6367 = vmatprep.subr.mxu0 0.0
    %6368 = vmatpush2.msra.mxu0 0.0
    %6369 = vmatprep.mubr.f32.mxu0 0.0
    %v6370 = vand.u32 %v5769, 4294901760
    %6371 = vmatmul.mubr.f32.gmra.mxu0 %v6370
    %v6372 = vpop.f32.mrf.mxu0
    %v6373 = vadd.f32 %v6280, %v6372
    %v6374 = vpop.f32.mrf.mxu0
    %6375 = vmatprep.mubr.f32.mxu0 0.0
    %v6376 = vand.u32 %v5772, 4294901760
    %6377 = vmatmul.mubr.f32.gmra.mxu0 %v6376
    %v6378 = vpop.f32.mrf.mxu0
    %v6379 = vadd.f32 %v6286, %v6378
    %v6380 = vpop.f32.mrf.mxu0
    %6381 = vmatprep.mubr.f32.mxu0 0.0
    %v6382 = vand.u32 %v5775, 4294901760
    %6383 = vmatmul.mubr.f32.gmra.mxu0 %v6382
    %v6384 = vpop.f32.mrf.mxu0
    %v6385 = vadd.f32 %v6292, %v6384
    %v6386 = vpop.f32.mrf.mxu0
    %6387 = vmatprep.mubr.f32.mxu0 0.0
    %v6388 = vand.u32 %v5778, 4294901760
    %6389 = vmatmul.mubr.f32.gmra.mxu0 %v6388
    %v6390 = vpop.f32.mrf.mxu0
    %v6391 = vadd.f32 %v6298, %v6390
    %v6392 = vpop.f32.mrf.mxu0
    %6393 = vdwg.mxu0
    %v6395 = vsel %vm139, %v5732, 0
    %v6398 = vsel %vm139, %v5733, 0
    %v6401 = vsel %vm139, %v5734, 0
    %v6404 = vsel %vm139, %v5735, 0
    %6406 = vmatprep.subr.mxu0 0.0
    %6407 = vmatpush1.msra.mxu0 0.0
    %6408 = vmatprep.subr.mxu0 0.0
    %6409 = vmatpush1.msra.mxu0 0.0
    %6410 = vmatprep.subr.mxu0 0.0
    %6411 = vmatpush1.msra.mxu0 0.0
    %6412 = vmatprep.subr.mxu0 0.0
    %6413 = vmatpush1.msra.mxu0 0.0
    %6414 = vmatprep.subr.mxu0 0.0
    %6415 = vmatpush1.msra.mxu0 0.0
    %6416 = vmatprep.subr.mxu0 0.0
    %6417 = vmatpush1.msra.mxu0 0.0
    %6418 = vmatprep.subr.mxu0 0.0
    %6419 = vmatpush1.msra.mxu0 0.0
    %6420 = vmatprep.subr.mxu0 0.0
    %6421 = vmatpush1.msra.mxu0 0.0
    %6422 = vmatprep.subr.mxu0 0.0
    %6423 = vmatpush1.msra.mxu0 0.0
    %6424 = vmatprep.subr.mxu0 0.0
    %6425 = vmatpush1.msra.mxu0 0.0
    %6426 = vmatprep.subr.mxu0 0.0
    %6427 = vmatpush1.msra.mxu0 0.0
    %6428 = vmatprep.subr.mxu0 0.0
    %6429 = vmatpush1.msra.mxu0 0.0
    %6430 = vmatprep.subr.mxu0 0.0
    %v6431 = vand.u32 %v5763, 4294901760
    %6432 = vmatpush1.msra.mxu0 %v6431
    %6433 = vmatprep.subr.mxu0 0.0
    %v6434 = vand.u32 %v5762, 4294901760
    %6435 = vmatpush1.msra.mxu0 %v6434
    %6436 = vmatprep.subr.mxu0 0.0
    %v6437 = vand.u32 %v5761, 4294901760
    %6438 = vmatpush1.msra.mxu0 %v6437
    %6439 = vmatprep.subr.mxu0 0.0
    %v6440 = vand.u32 %v5760, 4294901760
    %6441 = vmatpush1.msra.mxu0 %v6440
    %6442 = vmatprep.subr.mxu0 0.0
    %6443 = vmatpush2.msra.mxu0 0.0
    %6444 = vmatprep.subr.mxu0 0.0
    %6445 = vmatpush2.msra.mxu0 0.0
    %6446 = vmatprep.subr.mxu0 0.0
    %6447 = vmatpush2.msra.mxu0 0.0
    %6448 = vmatprep.subr.mxu0 0.0
    %6449 = vmatpush2.msra.mxu0 0.0
    %6450 = vmatprep.subr.mxu0 0.0
    %6451 = vmatpush2.msra.mxu0 0.0
    %6452 = vmatprep.subr.mxu0 0.0
    %6453 = vmatpush2.msra.mxu0 0.0
    %6454 = vmatprep.subr.mxu0 0.0
    %6455 = vmatpush2.msra.mxu0 0.0
    %6456 = vmatprep.subr.mxu0 0.0
    %6457 = vmatpush2.msra.mxu0 0.0
    %6458 = vmatprep.subr.mxu0 0.0
    %6459 = vmatpush2.msra.mxu0 0.0
    %6460 = vmatprep.subr.mxu0 0.0
    %6461 = vmatpush2.msra.mxu0 0.0
    %6462 = vmatprep.subr.mxu0 0.0
    %6463 = vmatpush2.msra.mxu0 0.0
    %6464 = vmatprep.subr.mxu0 0.0
    %6465 = vmatpush2.msra.mxu0 0.0
    %6466 = vmatprep.subr.mxu0 0.0
    %6467 = vmatpush2.msra.mxu0 0.0
    %6468 = vmatprep.subr.mxu0 0.0
    %6469 = vmatpush2.msra.mxu0 0.0
    %6470 = vmatprep.subr.mxu0 0.0
    %6471 = vmatpush2.msra.mxu0 0.0
    %6472 = vmatprep.subr.mxu0 0.0
    %6473 = vmatpush2.msra.mxu0 0.0
    %6474 = vmatprep.mubr.f32.mxu0 0.0
    %v6475 = vand.u32 %v6395, 4294901760
    %v6476 = vsub.f32 %v6395, %v6475
    %v6477 = vand.u32 %v6476, 4294901760
    %v6478 = vsub.f32 %v6476, %v6477
    %v6479 = vand.u32 %v6478, 4294901760
    %6480 = vmatmul.mubr.f32.gmra.mxu0 %v6479
    %v6481 = vpop.f32.mrf.mxu0
    %v6482 = vadd.f32 %v6373, %v6481
    %v6483 = vpop.f32.mrf.mxu0
    %6484 = vmatprep.mubr.f32.mxu0 0.0
    %v6485 = vand.u32 %v6398, 4294901760
    %v6486 = vsub.f32 %v6398, %v6485
    %v6487 = vand.u32 %v6486, 4294901760
    %v6488 = vsub.f32 %v6486, %v6487
    %v6489 = vand.u32 %v6488, 4294901760
    %6490 = vmatmul.mubr.f32.gmra.mxu0 %v6489
    %v6491 = vpop.f32.mrf.mxu0
    %v6492 = vadd.f32 %v6379, %v6491
    %v6493 = vpop.f32.mrf.mxu0
    %6494 = vmatprep.mubr.f32.mxu0 0.0
    %v6495 = vand.u32 %v6401, 4294901760
    %v6496 = vsub.f32 %v6401, %v6495
    %v6497 = vand.u32 %v6496, 4294901760
    %v6498 = vsub.f32 %v6496, %v6497
    %v6499 = vand.u32 %v6498, 4294901760
    %6500 = vmatmul.mubr.f32.gmra.mxu0 %v6499
    %v6501 = vpop.f32.mrf.mxu0
    %v6502 = vadd.f32 %v6385, %v6501
    %v6503 = vpop.f32.mrf.mxu0
    %6504 = vmatprep.mubr.f32.mxu0 0.0
    %v6505 = vand.u32 %v6404, 4294901760
    %v6506 = vsub.f32 %v6404, %v6505
    %v6507 = vand.u32 %v6506, 4294901760
    %v6508 = vsub.f32 %v6506, %v6507
    %v6509 = vand.u32 %v6508, 4294901760
    %6510 = vmatmul.mubr.f32.gmra.mxu0 %v6509
    %v6511 = vpop.f32.mrf.mxu0
    %v6512 = vadd.f32 %v6391, %v6511
    %v6513 = vpop.f32.mrf.mxu0
    %6514 = vdwg.mxu0
    %6515 = vmatprep.subr.mxu0 0.0
    %6516 = vmatpush1.msra.mxu0 0.0
    %6517 = vmatprep.subr.mxu0 0.0
    %6518 = vmatpush1.msra.mxu0 0.0
    %6519 = vmatprep.subr.mxu0 0.0
    %6520 = vmatpush1.msra.mxu0 0.0
    %6521 = vmatprep.subr.mxu0 0.0
    %6522 = vmatpush1.msra.mxu0 0.0
    %6523 = vmatprep.subr.mxu0 0.0
    %6524 = vmatpush1.msra.mxu0 0.0
    %6525 = vmatprep.subr.mxu0 0.0
    %6526 = vmatpush1.msra.mxu0 0.0
    %6527 = vmatprep.subr.mxu0 0.0
    %6528 = vmatpush1.msra.mxu0 0.0
    %6529 = vmatprep.subr.mxu0 0.0
    %6530 = vmatpush1.msra.mxu0 0.0
    %6531 = vmatprep.subr.mxu0 0.0
    %6532 = vmatpush1.msra.mxu0 0.0
    %6533 = vmatprep.subr.mxu0 0.0
    %6534 = vmatpush1.msra.mxu0 0.0
    %6535 = vmatprep.subr.mxu0 0.0
    %6536 = vmatpush1.msra.mxu0 0.0
    %6537 = vmatprep.subr.mxu0 0.0
    %6538 = vmatpush1.msra.mxu0 0.0
    %6539 = vmatprep.subr.mxu0 0.0
    %v6540 = vand.u32 %v5763, 4294901760
    %v6541 = vsub.f32 %v5763, %v6540
    %v6542 = vand.u32 %v6541, 4294901760
    %v6543 = vsub.f32 %v6541, %v6542
    %v6544 = vand.u32 %v6543, 4294901760
    %6545 = vmatpush1.msra.mxu0 %v6544
    %6546 = vmatprep.subr.mxu0 0.0
    %v6547 = vand.u32 %v5762, 4294901760
    %v6548 = vsub.f32 %v5762, %v6547
    %v6549 = vand.u32 %v6548, 4294901760
    %v6550 = vsub.f32 %v6548, %v6549
    %v6551 = vand.u32 %v6550, 4294901760
    %6552 = vmatpush1.msra.mxu0 %v6551
    %6553 = vmatprep.subr.mxu0 0.0
    %v6554 = vand.u32 %v5761, 4294901760
    %v6555 = vsub.f32 %v5761, %v6554
    %v6556 = vand.u32 %v6555, 4294901760
    %v6557 = vsub.f32 %v6555, %v6556
    %v6558 = vand.u32 %v6557, 4294901760
    %6559 = vmatpush1.msra.mxu0 %v6558
    %6560 = vmatprep.subr.mxu0 0.0
    %v6561 = vand.u32 %v5760, 4294901760
    %v6562 = vsub.f32 %v5760, %v6561
    %v6563 = vand.u32 %v6562, 4294901760
    %v6564 = vsub.f32 %v6562, %v6563
    %v6565 = vand.u32 %v6564, 4294901760
    %6566 = vmatpush1.msra.mxu0 %v6565
    %6567 = vmatprep.subr.mxu0 0.0
    %6568 = vmatpush2.msra.mxu0 0.0
    %6569 = vmatprep.subr.mxu0 0.0
    %6570 = vmatpush2.msra.mxu0 0.0
    %6571 = vmatprep.subr.mxu0 0.0
    %6572 = vmatpush2.msra.mxu0 0.0
    %6573 = vmatprep.subr.mxu0 0.0
    %6574 = vmatpush2.msra.mxu0 0.0
    %6575 = vmatprep.subr.mxu0 0.0
    %6576 = vmatpush2.msra.mxu0 0.0
    %6577 = vmatprep.subr.mxu0 0.0
    %6578 = vmatpush2.msra.mxu0 0.0
    %6579 = vmatprep.subr.mxu0 0.0
    %6580 = vmatpush2.msra.mxu0 0.0
    %6581 = vmatprep.subr.mxu0 0.0
    %6582 = vmatpush2.msra.mxu0 0.0
    %6583 = vmatprep.subr.mxu0 0.0
    %6584 = vmatpush2.msra.mxu0 0.0
    %6585 = vmatprep.subr.mxu0 0.0
    %6586 = vmatpush2.msra.mxu0 0.0
    %6587 = vmatprep.subr.mxu0 0.0
    %6588 = vmatpush2.msra.mxu0 0.0
    %6589 = vmatprep.subr.mxu0 0.0
    %6590 = vmatpush2.msra.mxu0 0.0
    %6591 = vmatprep.subr.mxu0 0.0
    %6592 = vmatpush2.msra.mxu0 0.0
    %6593 = vmatprep.subr.mxu0 0.0
    %6594 = vmatpush2.msra.mxu0 0.0
    %6595 = vmatprep.subr.mxu0 0.0
    %6596 = vmatpush2.msra.mxu0 0.0
    %6597 = vmatprep.subr.mxu0 0.0
    %6598 = vmatpush2.msra.mxu0 0.0
    %6599 = vmatprep.mubr.f32.mxu0 0.0
    %v6600 = vand.u32 %v6395, 4294901760
    %6601 = vmatmul.mubr.f32.gmra.mxu0 %v6600
    %v6602 = vpop.f32.mrf.mxu0
    %v6603 = vadd.f32 %v6482, %v6602
    %v6604 = vpop.f32.mrf.mxu0
    %6605 = vmatprep.mubr.f32.mxu0 0.0
    %v6606 = vand.u32 %v6398, 4294901760
    %6607 = vmatmul.mubr.f32.gmra.mxu0 %v6606
    %v6608 = vpop.f32.mrf.mxu0
    %v6609 = vadd.f32 %v6492, %v6608
    %v6610 = vpop.f32.mrf.mxu0
    %6611 = vmatprep.mubr.f32.mxu0 0.0
    %v6612 = vand.u32 %v6401, 4294901760
    %6613 = vmatmul.mubr.f32.gmra.mxu0 %v6612
    %v6614 = vpop.f32.mrf.mxu0
    %v6615 = vadd.f32 %v6502, %v6614
    %v6616 = vpop.f32.mrf.mxu0
    %6617 = vmatprep.mubr.f32.mxu0 0.0
    %v6618 = vand.u32 %v6404, 4294901760
    %6619 = vmatmul.mubr.f32.gmra.mxu0 %v6618
    %v6620 = vpop.f32.mrf.mxu0
    %v6621 = vadd.f32 %v6512, %v6620
    %v6622 = vpop.f32.mrf.mxu0
    %6623 = vdwg.mxu0
    %6624 = vmatprep.subr.mxu0 0.0
    %6625 = vmatpush1.msra.mxu0 0.0
    %6626 = vmatprep.subr.mxu0 0.0
    %6627 = vmatpush1.msra.mxu0 0.0
    %6628 = vmatprep.subr.mxu0 0.0
    %6629 = vmatpush1.msra.mxu0 0.0
    %6630 = vmatprep.subr.mxu0 0.0
    %6631 = vmatpush1.msra.mxu0 0.0
    %6632 = vmatprep.subr.mxu0 0.0
    %6633 = vmatpush1.msra.mxu0 0.0
    %6634 = vmatprep.subr.mxu0 0.0
    %6635 = vmatpush1.msra.mxu0 0.0
    %6636 = vmatprep.subr.mxu0 0.0
    %6637 = vmatpush1.msra.mxu0 0.0
    %6638 = vmatprep.subr.mxu0 0.0
    %6639 = vmatpush1.msra.mxu0 0.0
    %6640 = vmatprep.subr.mxu0 0.0
    %6641 = vmatpush1.msra.mxu0 0.0
    %6642 = vmatprep.subr.mxu0 0.0
    %6643 = vmatpush1.msra.mxu0 0.0
    %6644 = vmatprep.subr.mxu0 0.0
    %6645 = vmatpush1.msra.mxu0 0.0
    %6646 = vmatprep.subr.mxu0 0.0
    %6647 = vmatpush1.msra.mxu0 0.0
    %6648 = vmatprep.subr.mxu0 0.0
    %v6649 = vand.u32 %v5763, 4294901760
    %v6650 = vsub.f32 %v5763, %v6649
    %6651 = vmatpush1.msra.mxu0 %v6650
    %6652 = vmatprep.subr.mxu0 0.0
    %v6653 = vand.u32 %v5762, 4294901760
    %v6654 = vsub.f32 %v5762, %v6653
    %6655 = vmatpush1.msra.mxu0 %v6654
    %6656 = vmatprep.subr.mxu0 0.0
    %v6657 = vand.u32 %v5761, 4294901760
    %v6658 = vsub.f32 %v5761, %v6657
    %6659 = vmatpush1.msra.mxu0 %v6658
    %6660 = vmatprep.subr.mxu0 0.0
    %v6661 = vand.u32 %v5760, 4294901760
    %v6662 = vsub.f32 %v5760, %v6661
    %6663 = vmatpush1.msra.mxu0 %v6662
    %6664 = vmatprep.subr.mxu0 0.0
    %6665 = vmatpush2.msra.mxu0 0.0
    %6666 = vmatprep.subr.mxu0 0.0
    %6667 = vmatpush2.msra.mxu0 0.0
    %6668 = vmatprep.subr.mxu0 0.0
    %6669 = vmatpush2.msra.mxu0 0.0
    %6670 = vmatprep.subr.mxu0 0.0
    %6671 = vmatpush2.msra.mxu0 0.0
    %6672 = vmatprep.subr.mxu0 0.0
    %6673 = vmatpush2.msra.mxu0 0.0
    %6674 = vmatprep.subr.mxu0 0.0
    %6675 = vmatpush2.msra.mxu0 0.0
    %6676 = vmatprep.subr.mxu0 0.0
    %6677 = vmatpush2.msra.mxu0 0.0
    %6678 = vmatprep.subr.mxu0 0.0
    %6679 = vmatpush2.msra.mxu0 0.0
    %6680 = vmatprep.subr.mxu0 0.0
    %6681 = vmatpush2.msra.mxu0 0.0
    %6682 = vmatprep.subr.mxu0 0.0
    %6683 = vmatpush2.msra.mxu0 0.0
    %6684 = vmatprep.subr.mxu0 0.0
    %6685 = vmatpush2.msra.mxu0 0.0
    %6686 = vmatprep.subr.mxu0 0.0
    %6687 = vmatpush2.msra.mxu0 0.0
    %6688 = vmatprep.subr.mxu0 0.0
    %6689 = vmatpush2.msra.mxu0 0.0
    %6690 = vmatprep.subr.mxu0 0.0
    %6691 = vmatpush2.msra.mxu0 0.0
    %6692 = vmatprep.subr.mxu0 0.0
    %6693 = vmatpush2.msra.mxu0 0.0
    %6694 = vmatprep.subr.mxu0 0.0
    %6695 = vmatpush2.msra.mxu0 0.0
    %6696 = vmatprep.mubr.f32.mxu0 0.0
    %v6697 = vand.u32 %v6395, 4294901760
    %v6698 = vsub.f32 %v6395, %v6697
    %6699 = vmatmul.mubr.f32.gmra.mxu0 %v6698
    %v6700 = vpop.f32.mrf.mxu0
    %v6701 = vadd.f32 %v6603, %v6700
    %v6702 = vpop.f32.mrf.mxu0
    %6703 = vmatprep.mubr.f32.mxu0 0.0
    %v6704 = vand.u32 %v6398, 4294901760
    %v6705 = vsub.f32 %v6398, %v6704
    %6706 = vmatmul.mubr.f32.gmra.mxu0 %v6705
    %v6707 = vpop.f32.mrf.mxu0
    %v6708 = vadd.f32 %v6609, %v6707
    %v6709 = vpop.f32.mrf.mxu0
    %6710 = vmatprep.mubr.f32.mxu0 0.0
    %v6711 = vand.u32 %v6401, 4294901760
    %v6712 = vsub.f32 %v6401, %v6711
    %6713 = vmatmul.mubr.f32.gmra.mxu0 %v6712
    %v6714 = vpop.f32.mrf.mxu0
    %v6715 = vadd.f32 %v6615, %v6714
    %v6716 = vpop.f32.mrf.mxu0
    %6717 = vmatprep.mubr.f32.mxu0 0.0
    %v6718 = vand.u32 %v6404, 4294901760
    %v6719 = vsub.f32 %v6404, %v6718
    %6720 = vmatmul.mubr.f32.gmra.mxu0 %v6719
    %v6721 = vpop.f32.mrf.mxu0
    %v6722 = vadd.f32 %v6621, %v6721
    %v6723 = vpop.f32.mrf.mxu0
    %6724 = vdwg.mxu0
    %6725 = vmatprep.subr.mxu0 0.0
    %6726 = vmatpush1.msra.mxu0 0.0
    %6727 = vmatprep.subr.mxu0 0.0
    %6728 = vmatpush1.msra.mxu0 0.0
    %6729 = vmatprep.subr.mxu0 0.0
    %6730 = vmatpush1.msra.mxu0 0.0
    %6731 = vmatprep.subr.mxu0 0.0
    %6732 = vmatpush1.msra.mxu0 0.0
    %6733 = vmatprep.subr.mxu0 0.0
    %6734 = vmatpush1.msra.mxu0 0.0
    %6735 = vmatprep.subr.mxu0 0.0
    %6736 = vmatpush1.msra.mxu0 0.0
    %6737 = vmatprep.subr.mxu0 0.0
    %6738 = vmatpush1.msra.mxu0 0.0
    %6739 = vmatprep.subr.mxu0 0.0
    %6740 = vmatpush1.msra.mxu0 0.0
    %6741 = vmatprep.subr.mxu0 0.0
    %6742 = vmatpush1.msra.mxu0 0.0
    %6743 = vmatprep.subr.mxu0 0.0
    %6744 = vmatpush1.msra.mxu0 0.0
    %6745 = vmatprep.subr.mxu0 0.0
    %6746 = vmatpush1.msra.mxu0 0.0
    %6747 = vmatprep.subr.mxu0 0.0
    %6748 = vmatpush1.msra.mxu0 0.0
    %6749 = vmatprep.subr.mxu0 0.0
    %v6750 = vand.u32 %v5763, 4294901760
    %6751 = vmatpush1.msra.mxu0 %v6750
    %6752 = vmatprep.subr.mxu0 0.0
    %v6753 = vand.u32 %v5762, 4294901760
    %6754 = vmatpush1.msra.mxu0 %v6753
    %6755 = vmatprep.subr.mxu0 0.0
    %v6756 = vand.u32 %v5761, 4294901760
    %6757 = vmatpush1.msra.mxu0 %v6756
    %6758 = vmatprep.subr.mxu0 0.0
    %v6759 = vand.u32 %v5760, 4294901760
    %6760 = vmatpush1.msra.mxu0 %v6759
    %6761 = vmatprep.subr.mxu0 0.0
    %6762 = vmatpush2.msra.mxu0 0.0
    %6763 = vmatprep.subr.mxu0 0.0
    %6764 = vmatpush2.msra.mxu0 0.0
    %6765 = vmatprep.subr.mxu0 0.0
    %6766 = vmatpush2.msra.mxu0 0.0
    %6767 = vmatprep.subr.mxu0 0.0
    %6768 = vmatpush2.msra.mxu0 0.0
    %6769 = vmatprep.subr.mxu0 0.0
    %6770 = vmatpush2.msra.mxu0 0.0
    %6771 = vmatprep.subr.mxu0 0.0
    %6772 = vmatpush2.msra.mxu0 0.0
    %6773 = vmatprep.subr.mxu0 0.0
    %6774 = vmatpush2.msra.mxu0 0.0
    %6775 = vmatprep.subr.mxu0 0.0
    %6776 = vmatpush2.msra.mxu0 0.0
    %6777 = vmatprep.subr.mxu0 0.0
    %6778 = vmatpush2.msra.mxu0 0.0
    %6779 = vmatprep.subr.mxu0 0.0
    %6780 = vmatpush2.msra.mxu0 0.0
    %6781 = vmatprep.subr.mxu0 0.0
    %6782 = vmatpush2.msra.mxu0 0.0
    %6783 = vmatprep.subr.mxu0 0.0
    %6784 = vmatpush2.msra.mxu0 0.0
    %6785 = vmatprep.subr.mxu0 0.0
    %6786 = vmatpush2.msra.mxu0 0.0
    %6787 = vmatprep.subr.mxu0 0.0
    %6788 = vmatpush2.msra.mxu0 0.0
    %6789 = vmatprep.subr.mxu0 0.0
    %6790 = vmatpush2.msra.mxu0 0.0
    %6791 = vmatprep.subr.mxu0 0.0
    %6792 = vmatpush2.msra.mxu0 0.0
    %6793 = vmatprep.mubr.f32.mxu0 0.0
    %v6794 = vand.u32 %v6395, 4294901760
    %v6795 = vsub.f32 %v6395, %v6794
    %v6796 = vand.u32 %v6795, 4294901760
    %6797 = vmatmul.mubr.f32.gmra.mxu0 %v6796
    %v6798 = vpop.f32.mrf.mxu0
    %v6799 = vadd.f32 %v6701, %v6798
    %v6800 = vpop.f32.mrf.mxu0
    %6801 = vmatprep.mubr.f32.mxu0 0.0
    %v6802 = vand.u32 %v6398, 4294901760
    %v6803 = vsub.f32 %v6398, %v6802
    %v6804 = vand.u32 %v6803, 4294901760
    %6805 = vmatmul.mubr.f32.gmra.mxu0 %v6804
    %v6806 = vpop.f32.mrf.mxu0
    %v6807 = vadd.f32 %v6708, %v6806
    %v6808 = vpop.f32.mrf.mxu0
    %6809 = vmatprep.mubr.f32.mxu0 0.0
    %v6810 = vand.u32 %v6401, 4294901760
    %v6811 = vsub.f32 %v6401, %v6810
    %v6812 = vand.u32 %v6811, 4294901760
    %6813 = vmatmul.mubr.f32.gmra.mxu0 %v6812
    %v6814 = vpop.f32.mrf.mxu0
    %v6815 = vadd.f32 %v6715, %v6814
    %v6816 = vpop.f32.mrf.mxu0
    %6817 = vmatprep.mubr.f32.mxu0 0.0
    %v6818 = vand.u32 %v6404, 4294901760
    %v6819 = vsub.f32 %v6404, %v6818
    %v6820 = vand.u32 %v6819, 4294901760
    %6821 = vmatmul.mubr.f32.gmra.mxu0 %v6820
    %v6822 = vpop.f32.mrf.mxu0
    %v6823 = vadd.f32 %v6722, %v6822
    %v6824 = vpop.f32.mrf.mxu0
    %6825 = vdwg.mxu0
    %6826 = vmatprep.subr.mxu0 0.0
    %6827 = vmatpush1.msra.mxu0 0.0
    %6828 = vmatprep.subr.mxu0 0.0
    %6829 = vmatpush1.msra.mxu0 0.0
    %6830 = vmatprep.subr.mxu0 0.0
    %6831 = vmatpush1.msra.mxu0 0.0
    %6832 = vmatprep.subr.mxu0 0.0
    %6833 = vmatpush1.msra.mxu0 0.0
    %6834 = vmatprep.subr.mxu0 0.0
    %6835 = vmatpush1.msra.mxu0 0.0
    %6836 = vmatprep.subr.mxu0 0.0
    %6837 = vmatpush1.msra.mxu0 0.0
    %6838 = vmatprep.subr.mxu0 0.0
    %6839 = vmatpush1.msra.mxu0 0.0
    %6840 = vmatprep.subr.mxu0 0.0
    %6841 = vmatpush1.msra.mxu0 0.0
    %6842 = vmatprep.subr.mxu0 0.0
    %6843 = vmatpush1.msra.mxu0 0.0
    %6844 = vmatprep.subr.mxu0 0.0
    %6845 = vmatpush1.msra.mxu0 0.0
    %6846 = vmatprep.subr.mxu0 0.0
    %6847 = vmatpush1.msra.mxu0 0.0
    %6848 = vmatprep.subr.mxu0 0.0
    %6849 = vmatpush1.msra.mxu0 0.0
    %6850 = vmatprep.subr.mxu0 0.0
    %v6851 = vand.u32 %v5763, 4294901760
    %v6852 = vsub.f32 %v5763, %v6851
    %v6853 = vand.u32 %v6852, 4294901760
    %6854 = vmatpush1.msra.mxu0 %v6853
    %6855 = vmatprep.subr.mxu0 0.0
    %v6856 = vand.u32 %v5762, 4294901760
    %v6857 = vsub.f32 %v5762, %v6856
    %v6858 = vand.u32 %v6857, 4294901760
    %6859 = vmatpush1.msra.mxu0 %v6858
    %6860 = vmatprep.subr.mxu0 0.0
    %v6861 = vand.u32 %v5761, 4294901760
    %v6862 = vsub.f32 %v5761, %v6861
    %v6863 = vand.u32 %v6862, 4294901760
    %6864 = vmatpush1.msra.mxu0 %v6863
    %6865 = vmatprep.subr.mxu0 0.0
    %v6866 = vand.u32 %v5760, 4294901760
    %v6867 = vsub.f32 %v5760, %v6866
    %v6868 = vand.u32 %v6867, 4294901760
    %6869 = vmatpush1.msra.mxu0 %v6868
    %6870 = vmatprep.subr.mxu0 0.0
    %6871 = vmatpush2.msra.mxu0 0.0
    %6872 = vmatprep.subr.mxu0 0.0
    %6873 = vmatpush2.msra.mxu0 0.0
    %6874 = vmatprep.subr.mxu0 0.0
    %6875 = vmatpush2.msra.mxu0 0.0
    %6876 = vmatprep.subr.mxu0 0.0
    %6877 = vmatpush2.msra.mxu0 0.0
    %6878 = vmatprep.subr.mxu0 0.0
    %6879 = vmatpush2.msra.mxu0 0.0
    %6880 = vmatprep.subr.mxu0 0.0
    %6881 = vmatpush2.msra.mxu0 0.0
    %6882 = vmatprep.subr.mxu0 0.0
    %6883 = vmatpush2.msra.mxu0 0.0
    %6884 = vmatprep.subr.mxu0 0.0
    %6885 = vmatpush2.msra.mxu0 0.0
    %6886 = vmatprep.subr.mxu0 0.0
    %6887 = vmatpush2.msra.mxu0 0.0
    %6888 = vmatprep.subr.mxu0 0.0
    %6889 = vmatpush2.msra.mxu0 0.0
    %6890 = vmatprep.subr.mxu0 0.0
    %6891 = vmatpush2.msra.mxu0 0.0
    %6892 = vmatprep.subr.mxu0 0.0
    %6893 = vmatpush2.msra.mxu0 0.0
    %6894 = vmatprep.subr.mxu0 0.0
    %6895 = vmatpush2.msra.mxu0 0.0
    %6896 = vmatprep.subr.mxu0 0.0
    %6897 = vmatpush2.msra.mxu0 0.0
    %6898 = vmatprep.subr.mxu0 0.0
    %6899 = vmatpush2.msra.mxu0 0.0
    %6900 = vmatprep.subr.mxu0 0.0
    %6901 = vmatpush2.msra.mxu0 0.0
    %6902 = vmatprep.mubr.f32.mxu0 0.0
    %v6903 = vand.u32 %v6395, 4294901760
    %6904 = vmatmul.mubr.f32.gmra.mxu0 %v6903
    %v6905 = vpop.f32.mrf.mxu0
    %v6906 = vadd.f32 %v6799, %v6905
    %v6907 = vpop.f32.mrf.mxu0
    %6908 = vmatprep.mubr.f32.mxu0 0.0
    %v6909 = vand.u32 %v6398, 4294901760
    %6910 = vmatmul.mubr.f32.gmra.mxu0 %v6909
    %v6911 = vpop.f32.mrf.mxu0
    %v6912 = vadd.f32 %v6807, %v6911
    %v6913 = vpop.f32.mrf.mxu0
    %6914 = vmatprep.mubr.f32.mxu0 0.0
    %v6915 = vand.u32 %v6401, 4294901760
    %6916 = vmatmul.mubr.f32.gmra.mxu0 %v6915
    %v6917 = vpop.f32.mrf.mxu0
    %v6918 = vadd.f32 %v6815, %v6917
    %v6919 = vpop.f32.mrf.mxu0
    %6920 = vmatprep.mubr.f32.mxu0 0.0
    %v6921 = vand.u32 %v6404, 4294901760
    %6922 = vmatmul.mubr.f32.gmra.mxu0 %v6921
    %v6923 = vpop.f32.mrf.mxu0
    %v6924 = vadd.f32 %v6823, %v6923
    %v6925 = vpop.f32.mrf.mxu0
    %6926 = vdwg.mxu0
    %6927 = vmatprep.subr.mxu0 0.0
    %6928 = vmatpush1.msra.mxu0 0.0
    %6929 = vmatprep.subr.mxu0 0.0
    %6930 = vmatpush1.msra.mxu0 0.0
    %6931 = vmatprep.subr.mxu0 0.0
    %6932 = vmatpush1.msra.mxu0 0.0
    %6933 = vmatprep.subr.mxu0 0.0
    %6934 = vmatpush1.msra.mxu0 0.0
    %6935 = vmatprep.subr.mxu0 0.0
    %6936 = vmatpush1.msra.mxu0 0.0
    %6937 = vmatprep.subr.mxu0 0.0
    %6938 = vmatpush1.msra.mxu0 0.0
    %6939 = vmatprep.subr.mxu0 0.0
    %6940 = vmatpush1.msra.mxu0 0.0
    %6941 = vmatprep.subr.mxu0 0.0
    %6942 = vmatpush1.msra.mxu0 0.0
    %6943 = vmatprep.subr.mxu0 0.0
    %6944 = vmatpush1.msra.mxu0 0.0
    %6945 = vmatprep.subr.mxu0 0.0
    %6946 = vmatpush1.msra.mxu0 0.0
    %6947 = vmatprep.subr.mxu0 0.0
    %6948 = vmatpush1.msra.mxu0 0.0
    %6949 = vmatprep.subr.mxu0 0.0
    %6950 = vmatpush1.msra.mxu0 0.0
    %6951 = vmatprep.subr.mxu0 0.0
    %v6952 = vand.u32 %v5763, 4294901760
    %6953 = vmatpush1.msra.mxu0 %v6952
    %6954 = vmatprep.subr.mxu0 0.0
    %v6955 = vand.u32 %v5762, 4294901760
    %6956 = vmatpush1.msra.mxu0 %v6955
    %6957 = vmatprep.subr.mxu0 0.0
    %v6958 = vand.u32 %v5761, 4294901760
    %6959 = vmatpush1.msra.mxu0 %v6958
    %6960 = vmatprep.subr.mxu0 0.0
    %v6961 = vand.u32 %v5760, 4294901760
    %6962 = vmatpush1.msra.mxu0 %v6961
    %6963 = vmatprep.subr.mxu0 0.0
    %6964 = vmatpush2.msra.mxu0 0.0
    %6965 = vmatprep.subr.mxu0 0.0
    %6966 = vmatpush2.msra.mxu0 0.0
    %6967 = vmatprep.subr.mxu0 0.0
    %6968 = vmatpush2.msra.mxu0 0.0
    %6969 = vmatprep.subr.mxu0 0.0
    %6970 = vmatpush2.msra.mxu0 0.0
    %6971 = vmatprep.subr.mxu0 0.0
    %6972 = vmatpush2.msra.mxu0 0.0
    %6973 = vmatprep.subr.mxu0 0.0
    %6974 = vmatpush2.msra.mxu0 0.0
    %6975 = vmatprep.subr.mxu0 0.0
    %6976 = vmatpush2.msra.mxu0 0.0
    %6977 = vmatprep.subr.mxu0 0.0
    %6978 = vmatpush2.msra.mxu0 0.0
    %6979 = vmatprep.subr.mxu0 0.0
    %6980 = vmatpush2.msra.mxu0 0.0
    %6981 = vmatprep.subr.mxu0 0.0
    %6982 = vmatpush2.msra.mxu0 0.0
    %6983 = vmatprep.subr.mxu0 0.0
    %6984 = vmatpush2.msra.mxu0 0.0
    %6985 = vmatprep.subr.mxu0 0.0
    %6986 = vmatpush2.msra.mxu0 0.0
    %6987 = vmatprep.subr.mxu0 0.0
    %6988 = vmatpush2.msra.mxu0 0.0
    %6989 = vmatprep.subr.mxu0 0.0
    %6990 = vmatpush2.msra.mxu0 0.0
    %6991 = vmatprep.subr.mxu0 0.0
    %6992 = vmatpush2.msra.mxu0 0.0
    %6993 = vmatprep.subr.mxu0 0.0
    %6994 = vmatpush2.msra.mxu0 0.0
    %6995 = vmatprep.mubr.f32.mxu0 0.0
    %v6996 = vand.u32 %v6395, 4294901760
    %6997 = vmatmul.mubr.f32.gmra.mxu0 %v6996
    %v6998 = vpop.f32.mrf.mxu0
    %v6999 = vadd.f32 %v6906, %v6998
    %v7000 = vpop.f32.mrf.mxu0
    %7001 = vmatprep.mubr.f32.mxu0 0.0
    %v7002 = vand.u32 %v6398, 4294901760
    %7003 = vmatmul.mubr.f32.gmra.mxu0 %v7002
    %v7004 = vpop.f32.mrf.mxu0
    %v7005 = vadd.f32 %v6912, %v7004
    %v7006 = vpop.f32.mrf.mxu0
    %7007 = vmatprep.mubr.f32.mxu0 0.0
    %v7008 = vand.u32 %v6401, 4294901760
    %7009 = vmatmul.mubr.f32.gmra.mxu0 %v7008
    %v7010 = vpop.f32.mrf.mxu0
    %v7011 = vadd.f32 %v6918, %v7010
    %v7012 = vpop.f32.mrf.mxu0
    %7013 = vmatprep.mubr.f32.mxu0 0.0
    %v7014 = vand.u32 %v6404, 4294901760
    %7015 = vmatmul.mubr.f32.gmra.mxu0 %v7014
    %v7016 = vpop.f32.mrf.mxu0
    %v7017 = vadd.f32 %v6924, %v7016
    %v7018 = vpop.f32.mrf.mxu0
    %7019 = vdwg.mxu0
    %v7020 = vld [vmem:[%s2 + $0x40] sm:$0xff]
    %v7021 = vld [vmem:[%s2 + $0x48] sm:$0xff]
    %v7022 = vld [vmem:[%s2 + $0x50] sm:$0xff]
    %v7023 = vld [vmem:[%s2 + $0x58] sm:$0xff]
    %v7025 = vsel %vm139, %v5756, 0
    %v7028 = vsel %vm139, %v5757, 0
    %v7031 = vsel %vm139, %v5758, 0
    %v7034 = vsel %vm139, %v5759, 0
    %7036 = vmatprep.subr.mxu0 0.0
    %7037 = vmatpush1.msra.mxu0 0.0
    %7038 = vmatprep.subr.mxu0 0.0
    %7039 = vmatpush1.msra.mxu0 0.0
    %7040 = vmatprep.subr.mxu0 0.0
    %7041 = vmatpush1.msra.mxu0 0.0
    %7042 = vmatprep.subr.mxu0 0.0
    %7043 = vmatpush1.msra.mxu0 0.0
    %7044 = vmatprep.subr.mxu0 0.0
    %7045 = vmatpush1.msra.mxu0 0.0
    %7046 = vmatprep.subr.mxu0 0.0
    %7047 = vmatpush1.msra.mxu0 0.0
    %7048 = vmatprep.subr.mxu0 0.0
    %7049 = vmatpush1.msra.mxu0 0.0
    %7050 = vmatprep.subr.mxu0 0.0
    %7051 = vmatpush1.msra.mxu0 0.0
    %7052 = vmatprep.subr.mxu0 0.0
    %7053 = vmatpush1.msra.mxu0 0.0
    %7054 = vmatprep.subr.mxu0 0.0
    %7055 = vmatpush1.msra.mxu0 0.0
    %7056 = vmatprep.subr.mxu0 0.0
    %7057 = vmatpush1.msra.mxu0 0.0
    %7058 = vmatprep.subr.mxu0 0.0
    %7059 = vmatpush1.msra.mxu0 0.0
    %7060 = vmatprep.subr.mxu0 0.0
    %v7061 = vand.u32 %v7023, 4294901760
    %7062 = vmatpush1.msra.mxu0 %v7061
    %7063 = vmatprep.subr.mxu0 0.0
    %v7064 = vand.u32 %v7022, 4294901760
    %7065 = vmatpush1.msra.mxu0 %v7064
    %7066 = vmatprep.subr.mxu0 0.0
    %v7067 = vand.u32 %v7021, 4294901760
    %7068 = vmatpush1.msra.mxu0 %v7067
    %7069 = vmatprep.subr.mxu0 0.0
    %v7070 = vand.u32 %v7020, 4294901760
    %7071 = vmatpush1.msra.mxu0 %v7070
    %7072 = vmatprep.subr.mxu0 0.0
    %7073 = vmatpush2.msra.mxu0 0.0
    %7074 = vmatprep.subr.mxu0 0.0
    %7075 = vmatpush2.msra.mxu0 0.0
    %7076 = vmatprep.subr.mxu0 0.0
    %7077 = vmatpush2.msra.mxu0 0.0
    %7078 = vmatprep.subr.mxu0 0.0
    %7079 = vmatpush2.msra.mxu0 0.0
    %7080 = vmatprep.subr.mxu0 0.0
    %7081 = vmatpush2.msra.mxu0 0.0
    %7082 = vmatprep.subr.mxu0 0.0
    %7083 = vmatpush2.msra.mxu0 0.0
    %7084 = vmatprep.subr.mxu0 0.0
    %7085 = vmatpush2.msra.mxu0 0.0
    %7086 = vmatprep.subr.mxu0 0.0
    %7087 = vmatpush2.msra.mxu0 0.0
    %7088 = vmatprep.subr.mxu0 0.0
    %7089 = vmatpush2.msra.mxu0 0.0
    %7090 = vmatprep.subr.mxu0 0.0
    %7091 = vmatpush2.msra.mxu0 0.0
    %7092 = vmatprep.subr.mxu0 0.0
    %7093 = vmatpush2.msra.mxu0 0.0
    %7094 = vmatprep.subr.mxu0 0.0
    %7095 = vmatpush2.msra.mxu0 0.0
    %7096 = vmatprep.subr.mxu0 0.0
    %7097 = vmatpush2.msra.mxu0 0.0
    %7098 = vmatprep.subr.mxu0 0.0
    %7099 = vmatpush2.msra.mxu0 0.0
    %7100 = vmatprep.subr.mxu0 0.0
    %7101 = vmatpush2.msra.mxu0 0.0
    %7102 = vmatprep.subr.mxu0 0.0
    %7103 = vmatpush2.msra.mxu0 0.0
    %7104 = vmatprep.mubr.f32.mxu0 0.0
    %v7105 = vand.u32 %v7025, 4294901760
    %v7106 = vsub.f32 %v7025, %v7105
    %v7107 = vand.u32 %v7106, 4294901760
    %v7108 = vsub.f32 %v7106, %v7107
    %v7109 = vand.u32 %v7108, 4294901760
    %7110 = vmatmul.mubr.f32.gmra.mxu0 %v7109
    %v7111 = vpop.f32.mrf.mxu0
    %v7112 = vadd.f32 0.0, %v7111
    %v7113 = vpop.f32.mrf.mxu0
    %7114 = vmatprep.mubr.f32.mxu0 0.0
    %v7115 = vand.u32 %v7028, 4294901760
    %v7116 = vsub.f32 %v7028, %v7115
    %v7117 = vand.u32 %v7116, 4294901760
    %v7118 = vsub.f32 %v7116, %v7117
    %v7119 = vand.u32 %v7118, 4294901760
    %7120 = vmatmul.mubr.f32.gmra.mxu0 %v7119
    %v7121 = vpop.f32.mrf.mxu0
    %v7122 = vadd.f32 0.0, %v7121
    %v7123 = vpop.f32.mrf.mxu0
    %7124 = vmatprep.mubr.f32.mxu0 0.0
    %v7125 = vand.u32 %v7031, 4294901760
    %v7126 = vsub.f32 %v7031, %v7125
    %v7127 = vand.u32 %v7126, 4294901760
    %v7128 = vsub.f32 %v7126, %v7127
    %v7129 = vand.u32 %v7128, 4294901760
    %7130 = vmatmul.mubr.f32.gmra.mxu0 %v7129
    %v7131 = vpop.f32.mrf.mxu0
    %v7132 = vadd.f32 0.0, %v7131
    %v7133 = vpop.f32.mrf.mxu0
    %7134 = vmatprep.mubr.f32.mxu0 0.0
    %v7135 = vand.u32 %v7034, 4294901760
    %v7136 = vsub.f32 %v7034, %v7135
    %v7137 = vand.u32 %v7136, 4294901760
    %v7138 = vsub.f32 %v7136, %v7137
    %v7139 = vand.u32 %v7138, 4294901760
    %7140 = vmatmul.mubr.f32.gmra.mxu0 %v7139
    %v7141 = vpop.f32.mrf.mxu0
    %v7142 = vadd.f32 0.0, %v7141
    %v7143 = vpop.f32.mrf.mxu0
    %7144 = vdwg.mxu0
    %7145 = vmatprep.subr.mxu0 0.0
    %7146 = vmatpush1.msra.mxu0 0.0
    %7147 = vmatprep.subr.mxu0 0.0
    %7148 = vmatpush1.msra.mxu0 0.0
    %7149 = vmatprep.subr.mxu0 0.0
    %7150 = vmatpush1.msra.mxu0 0.0
    %7151 = vmatprep.subr.mxu0 0.0
    %7152 = vmatpush1.msra.mxu0 0.0
    %7153 = vmatprep.subr.mxu0 0.0
    %7154 = vmatpush1.msra.mxu0 0.0
    %7155 = vmatprep.subr.mxu0 0.0
    %7156 = vmatpush1.msra.mxu0 0.0
    %7157 = vmatprep.subr.mxu0 0.0
    %7158 = vmatpush1.msra.mxu0 0.0
    %7159 = vmatprep.subr.mxu0 0.0
    %7160 = vmatpush1.msra.mxu0 0.0
    %7161 = vmatprep.subr.mxu0 0.0
    %7162 = vmatpush1.msra.mxu0 0.0
    %7163 = vmatprep.subr.mxu0 0.0
    %7164 = vmatpush1.msra.mxu0 0.0
    %7165 = vmatprep.subr.mxu0 0.0
    %7166 = vmatpush1.msra.mxu0 0.0
    %7167 = vmatprep.subr.mxu0 0.0
    %7168 = vmatpush1.msra.mxu0 0.0
    %7169 = vmatprep.subr.mxu0 0.0
    %v7170 = vand.u32 %v7023, 4294901760
    %v7171 = vsub.f32 %v7023, %v7170
    %v7172 = vand.u32 %v7171, 4294901760
    %v7173 = vsub.f32 %v7171, %v7172
    %v7174 = vand.u32 %v7173, 4294901760
    %7175 = vmatpush1.msra.mxu0 %v7174
    %7176 = vmatprep.subr.mxu0 0.0
    %v7177 = vand.u32 %v7022, 4294901760
    %v7178 = vsub.f32 %v7022, %v7177
    %v7179 = vand.u32 %v7178, 4294901760
    %v7180 = vsub.f32 %v7178, %v7179
    %v7181 = vand.u32 %v7180, 4294901760
    %7182 = vmatpush1.msra.mxu0 %v7181
    %7183 = vmatprep.subr.mxu0 0.0
    %v7184 = vand.u32 %v7021, 4294901760
    %v7185 = vsub.f32 %v7021, %v7184
    %v7186 = vand.u32 %v7185, 4294901760
    %v7187 = vsub.f32 %v7185, %v7186
    %v7188 = vand.u32 %v7187, 4294901760
    %7189 = vmatpush1.msra.mxu0 %v7188
    %7190 = vmatprep.subr.mxu0 0.0
    %v7191 = vand.u32 %v7020, 4294901760
    %v7192 = vsub.f32 %v7020, %v7191
    %v7193 = vand.u32 %v7192, 4294901760
    %v7194 = vsub.f32 %v7192, %v7193
    %v7195 = vand.u32 %v7194, 4294901760
    %7196 = vmatpush1.msra.mxu0 %v7195
    %7197 = vmatprep.subr.mxu0 0.0
    %7198 = vmatpush2.msra.mxu0 0.0
    %7199 = vmatprep.subr.mxu0 0.0
    %7200 = vmatpush2.msra.mxu0 0.0
    %7201 = vmatprep.subr.mxu0 0.0
    %7202 = vmatpush2.msra.mxu0 0.0
    %7203 = vmatprep.subr.mxu0 0.0
    %7204 = vmatpush2.msra.mxu0 0.0
    %7205 = vmatprep.subr.mxu0 0.0
    %7206 = vmatpush2.msra.mxu0 0.0
    %7207 = vmatprep.subr.mxu0 0.0
    %7208 = vmatpush2.msra.mxu0 0.0
    %7209 = vmatprep.subr.mxu0 0.0
    %7210 = vmatpush2.msra.mxu0 0.0
    %7211 = vmatprep.subr.mxu0 0.0
    %7212 = vmatpush2.msra.mxu0 0.0
    %7213 = vmatprep.subr.mxu0 0.0
    %7214 = vmatpush2.msra.mxu0 0.0
    %7215 = vmatprep.subr.mxu0 0.0
    %7216 = vmatpush2.msra.mxu0 0.0
    %7217 = vmatprep.subr.mxu0 0.0
    %7218 = vmatpush2.msra.mxu0 0.0
    %7219 = vmatprep.subr.mxu0 0.0
    %7220 = vmatpush2.msra.mxu0 0.0
    %7221 = vmatprep.subr.mxu0 0.0
    %7222 = vmatpush2.msra.mxu0 0.0
    %7223 = vmatprep.subr.mxu0 0.0
    %7224 = vmatpush2.msra.mxu0 0.0
    %7225 = vmatprep.subr.mxu0 0.0
    %7226 = vmatpush2.msra.mxu0 0.0
    %7227 = vmatprep.subr.mxu0 0.0
    %7228 = vmatpush2.msra.mxu0 0.0
    %7229 = vmatprep.mubr.f32.mxu0 0.0
    %v7230 = vand.u32 %v7025, 4294901760
    %7231 = vmatmul.mubr.f32.gmra.mxu0 %v7230
    %v7232 = vpop.f32.mrf.mxu0
    %v7233 = vadd.f32 %v7112, %v7232
    %v7234 = vpop.f32.mrf.mxu0
    %7235 = vmatprep.mubr.f32.mxu0 0.0
    %v7236 = vand.u32 %v7028, 4294901760
    %7237 = vmatmul.mubr.f32.gmra.mxu0 %v7236
    %v7238 = vpop.f32.mrf.mxu0
    %v7239 = vadd.f32 %v7122, %v7238
    %v7240 = vpop.f32.mrf.mxu0
    %7241 = vmatprep.mubr.f32.mxu0 0.0
    %v7242 = vand.u32 %v7031, 4294901760
    %7243 = vmatmul.mubr.f32.gmra.mxu0 %v7242
    %v7244 = vpop.f32.mrf.mxu0
    %v7245 = vadd.f32 %v7132, %v7244
    %v7246 = vpop.f32.mrf.mxu0
    %7247 = vmatprep.mubr.f32.mxu0 0.0
    %v7248 = vand.u32 %v7034, 4294901760
    %7249 = vmatmul.mubr.f32.gmra.mxu0 %v7248
    %v7250 = vpop.f32.mrf.mxu0
    %v7251 = vadd.f32 %v7142, %v7250
    %v7252 = vpop.f32.mrf.mxu0
    %7253 = vdwg.mxu0
    %7254 = vmatprep.subr.mxu0 0.0
    %7255 = vmatpush1.msra.mxu0 0.0
    %7256 = vmatprep.subr.mxu0 0.0
    %7257 = vmatpush1.msra.mxu0 0.0
    %7258 = vmatprep.subr.mxu0 0.0
    %7259 = vmatpush1.msra.mxu0 0.0
    %7260 = vmatprep.subr.mxu0 0.0
    %7261 = vmatpush1.msra.mxu0 0.0
    %7262 = vmatprep.subr.mxu0 0.0
    %7263 = vmatpush1.msra.mxu0 0.0
    %7264 = vmatprep.subr.mxu0 0.0
    %7265 = vmatpush1.msra.mxu0 0.0
    %7266 = vmatprep.subr.mxu0 0.0
    %7267 = vmatpush1.msra.mxu0 0.0
    %7268 = vmatprep.subr.mxu0 0.0
    %7269 = vmatpush1.msra.mxu0 0.0
    %7270 = vmatprep.subr.mxu0 0.0
    %7271 = vmatpush1.msra.mxu0 0.0
    %7272 = vmatprep.subr.mxu0 0.0
    %7273 = vmatpush1.msra.mxu0 0.0
    %7274 = vmatprep.subr.mxu0 0.0
    %7275 = vmatpush1.msra.mxu0 0.0
    %7276 = vmatprep.subr.mxu0 0.0
    %7277 = vmatpush1.msra.mxu0 0.0
    %7278 = vmatprep.subr.mxu0 0.0
    %v7279 = vand.u32 %v7023, 4294901760
    %v7280 = vsub.f32 %v7023, %v7279
    %7281 = vmatpush1.msra.mxu0 %v7280
    %7282 = vmatprep.subr.mxu0 0.0
    %v7283 = vand.u32 %v7022, 4294901760
    %v7284 = vsub.f32 %v7022, %v7283
    %7285 = vmatpush1.msra.mxu0 %v7284
    %7286 = vmatprep.subr.mxu0 0.0
    %v7287 = vand.u32 %v7021, 4294901760
    %v7288 = vsub.f32 %v7021, %v7287
    %7289 = vmatpush1.msra.mxu0 %v7288
    %7290 = vmatprep.subr.mxu0 0.0
    %v7291 = vand.u32 %v7020, 4294901760
    %v7292 = vsub.f32 %v7020, %v7291
    %7293 = vmatpush1.msra.mxu0 %v7292
    %7294 = vmatprep.subr.mxu0 0.0
    %7295 = vmatpush2.msra.mxu0 0.0
    %7296 = vmatprep.subr.mxu0 0.0
    %7297 = vmatpush2.msra.mxu0 0.0
    %7298 = vmatprep.subr.mxu0 0.0
    %7299 = vmatpush2.msra.mxu0 0.0
    %7300 = vmatprep.subr.mxu0 0.0
    %7301 = vmatpush2.msra.mxu0 0.0
    %7302 = vmatprep.subr.mxu0 0.0
    %7303 = vmatpush2.msra.mxu0 0.0
    %7304 = vmatprep.subr.mxu0 0.0
    %7305 = vmatpush2.msra.mxu0 0.0
    %7306 = vmatprep.subr.mxu0 0.0
    %7307 = vmatpush2.msra.mxu0 0.0
    %7308 = vmatprep.subr.mxu0 0.0
    %7309 = vmatpush2.msra.mxu0 0.0
    %7310 = vmatprep.subr.mxu0 0.0
    %7311 = vmatpush2.msra.mxu0 0.0
    %7312 = vmatprep.subr.mxu0 0.0
    %7313 = vmatpush2.msra.mxu0 0.0
    %7314 = vmatprep.subr.mxu0 0.0
    %7315 = vmatpush2.msra.mxu0 0.0
    %7316 = vmatprep.subr.mxu0 0.0
    %7317 = vmatpush2.msra.mxu0 0.0
    %7318 = vmatprep.subr.mxu0 0.0
    %7319 = vmatpush2.msra.mxu0 0.0
    %7320 = vmatprep.subr.mxu0 0.0
    %7321 = vmatpush2.msra.mxu0 0.0
    %7322 = vmatprep.subr.mxu0 0.0
    %7323 = vmatpush2.msra.mxu0 0.0
    %7324 = vmatprep.subr.mxu0 0.0
    %7325 = vmatpush2.msra.mxu0 0.0
    %7326 = vmatprep.mubr.f32.mxu0 0.0
    %v7327 = vand.u32 %v7025, 4294901760
    %v7328 = vsub.f32 %v7025, %v7327
    %7329 = vmatmul.mubr.f32.gmra.mxu0 %v7328
    %v7330 = vpop.f32.mrf.mxu0
    %v7331 = vadd.f32 %v7233, %v7330
    %v7332 = vpop.f32.mrf.mxu0
    %7333 = vmatprep.mubr.f32.mxu0 0.0
    %v7334 = vand.u32 %v7028, 4294901760
    %v7335 = vsub.f32 %v7028, %v7334
    %7336 = vmatmul.mubr.f32.gmra.mxu0 %v7335
    %v7337 = vpop.f32.mrf.mxu0
    %v7338 = vadd.f32 %v7239, %v7337
    %v7339 = vpop.f32.mrf.mxu0
    %7340 = vmatprep.mubr.f32.mxu0 0.0
    %v7341 = vand.u32 %v7031, 4294901760
    %v7342 = vsub.f32 %v7031, %v7341
    %7343 = vmatmul.mubr.f32.gmra.mxu0 %v7342
    %v7344 = vpop.f32.mrf.mxu0
    %v7345 = vadd.f32 %v7245, %v7344
    %v7346 = vpop.f32.mrf.mxu0
    %7347 = vmatprep.mubr.f32.mxu0 0.0
    %v7348 = vand.u32 %v7034, 4294901760
    %v7349 = vsub.f32 %v7034, %v7348
    %7350 = vmatmul.mubr.f32.gmra.mxu0 %v7349
    %v7351 = vpop.f32.mrf.mxu0
    %v7352 = vadd.f32 %v7251, %v7351
    %v7353 = vpop.f32.mrf.mxu0
    %7354 = vdwg.mxu0
    %7355 = vmatprep.subr.mxu0 0.0
    %7356 = vmatpush1.msra.mxu0 0.0
    %7357 = vmatprep.subr.mxu0 0.0
    %7358 = vmatpush1.msra.mxu0 0.0
    %7359 = vmatprep.subr.mxu0 0.0
    %7360 = vmatpush1.msra.mxu0 0.0
    %7361 = vmatprep.subr.mxu0 0.0
    %7362 = vmatpush1.msra.mxu0 0.0
    %7363 = vmatprep.subr.mxu0 0.0
    %7364 = vmatpush1.msra.mxu0 0.0
    %7365 = vmatprep.subr.mxu0 0.0
    %7366 = vmatpush1.msra.mxu0 0.0
    %7367 = vmatprep.subr.mxu0 0.0
    %7368 = vmatpush1.msra.mxu0 0.0
    %7369 = vmatprep.subr.mxu0 0.0
    %7370 = vmatpush1.msra.mxu0 0.0
    %7371 = vmatprep.subr.mxu0 0.0
    %7372 = vmatpush1.msra.mxu0 0.0
    %7373 = vmatprep.subr.mxu0 0.0
    %7374 = vmatpush1.msra.mxu0 0.0
    %7375 = vmatprep.subr.mxu0 0.0
    %7376 = vmatpush1.msra.mxu0 0.0
    %7377 = vmatprep.subr.mxu0 0.0
    %7378 = vmatpush1.msra.mxu0 0.0
    %7379 = vmatprep.subr.mxu0 0.0
    %v7380 = vand.u32 %v7023, 4294901760
    %7381 = vmatpush1.msra.mxu0 %v7380
    %7382 = vmatprep.subr.mxu0 0.0
    %v7383 = vand.u32 %v7022, 4294901760
    %7384 = vmatpush1.msra.mxu0 %v7383
    %7385 = vmatprep.subr.mxu0 0.0
    %v7386 = vand.u32 %v7021, 4294901760
    %7387 = vmatpush1.msra.mxu0 %v7386
    %7388 = vmatprep.subr.mxu0 0.0
    %v7389 = vand.u32 %v7020, 4294901760
    %7390 = vmatpush1.msra.mxu0 %v7389
    %7391 = vmatprep.subr.mxu0 0.0
    %7392 = vmatpush2.msra.mxu0 0.0
    %7393 = vmatprep.subr.mxu0 0.0
    %7394 = vmatpush2.msra.mxu0 0.0
    %7395 = vmatprep.subr.mxu0 0.0
    %7396 = vmatpush2.msra.mxu0 0.0
    %7397 = vmatprep.subr.mxu0 0.0
    %7398 = vmatpush2.msra.mxu0 0.0
    %7399 = vmatprep.subr.mxu0 0.0
    %7400 = vmatpush2.msra.mxu0 0.0
    %7401 = vmatprep.subr.mxu0 0.0
    %7402 = vmatpush2.msra.mxu0 0.0
    %7403 = vmatprep.subr.mxu0 0.0
    %7404 = vmatpush2.msra.mxu0 0.0
    %7405 = vmatprep.subr.mxu0 0.0
    %7406 = vmatpush2.msra.mxu0 0.0
    %7407 = vmatprep.subr.mxu0 0.0
    %7408 = vmatpush2.msra.mxu0 0.0
    %7409 = vmatprep.subr.mxu0 0.0
    %7410 = vmatpush2.msra.mxu0 0.0
    %7411 = vmatprep.subr.mxu0 0.0
    %7412 = vmatpush2.msra.mxu0 0.0
    %7413 = vmatprep.subr.mxu0 0.0
    %7414 = vmatpush2.msra.mxu0 0.0
    %7415 = vmatprep.subr.mxu0 0.0
    %7416 = vmatpush2.msra.mxu0 0.0
    %7417 = vmatprep.subr.mxu0 0.0
    %7418 = vmatpush2.msra.mxu0 0.0
    %7419 = vmatprep.subr.mxu0 0.0
    %7420 = vmatpush2.msra.mxu0 0.0
    %7421 = vmatprep.subr.mxu0 0.0
    %7422 = vmatpush2.msra.mxu0 0.0
    %7423 = vmatprep.mubr.f32.mxu0 0.0
    %v7424 = vand.u32 %v7025, 4294901760
    %v7425 = vsub.f32 %v7025, %v7424
    %v7426 = vand.u32 %v7425, 4294901760
    %7427 = vmatmul.mubr.f32.gmra.mxu0 %v7426
    %v7428 = vpop.f32.mrf.mxu0
    %v7429 = vadd.f32 %v7331, %v7428
    %v7430 = vpop.f32.mrf.mxu0
    %7431 = vmatprep.mubr.f32.mxu0 0.0
    %v7432 = vand.u32 %v7028, 4294901760
    %v7433 = vsub.f32 %v7028, %v7432
    %v7434 = vand.u32 %v7433, 4294901760
    %7435 = vmatmul.mubr.f32.gmra.mxu0 %v7434
    %v7436 = vpop.f32.mrf.mxu0
    %v7437 = vadd.f32 %v7338, %v7436
    %v7438 = vpop.f32.mrf.mxu0
    %7439 = vmatprep.mubr.f32.mxu0 0.0
    %v7440 = vand.u32 %v7031, 4294901760
    %v7441 = vsub.f32 %v7031, %v7440
    %v7442 = vand.u32 %v7441, 4294901760
    %7443 = vmatmul.mubr.f32.gmra.mxu0 %v7442
    %v7444 = vpop.f32.mrf.mxu0
    %v7445 = vadd.f32 %v7345, %v7444
    %v7446 = vpop.f32.mrf.mxu0
    %7447 = vmatprep.mubr.f32.mxu0 0.0
    %v7448 = vand.u32 %v7034, 4294901760
    %v7449 = vsub.f32 %v7034, %v7448
    %v7450 = vand.u32 %v7449, 4294901760
    %7451 = vmatmul.mubr.f32.gmra.mxu0 %v7450
    %v7452 = vpop.f32.mrf.mxu0
    %v7453 = vadd.f32 %v7352, %v7452
    %v7454 = vpop.f32.mrf.mxu0
    %7455 = vdwg.mxu0
    %7456 = vmatprep.subr.mxu0 0.0
    %7457 = vmatpush1.msra.mxu0 0.0
    %7458 = vmatprep.subr.mxu0 0.0
    %7459 = vmatpush1.msra.mxu0 0.0
    %7460 = vmatprep.subr.mxu0 0.0
    %7461 = vmatpush1.msra.mxu0 0.0
    %7462 = vmatprep.subr.mxu0 0.0
    %7463 = vmatpush1.msra.mxu0 0.0
    %7464 = vmatprep.subr.mxu0 0.0
    %7465 = vmatpush1.msra.mxu0 0.0
    %7466 = vmatprep.subr.mxu0 0.0
    %7467 = vmatpush1.msra.mxu0 0.0
    %7468 = vmatprep.subr.mxu0 0.0
    %7469 = vmatpush1.msra.mxu0 0.0
    %7470 = vmatprep.subr.mxu0 0.0
    %7471 = vmatpush1.msra.mxu0 0.0
    %7472 = vmatprep.subr.mxu0 0.0
    %7473 = vmatpush1.msra.mxu0 0.0
    %7474 = vmatprep.subr.mxu0 0.0
    %7475 = vmatpush1.msra.mxu0 0.0
    %7476 = vmatprep.subr.mxu0 0.0
    %7477 = vmatpush1.msra.mxu0 0.0
    %7478 = vmatprep.subr.mxu0 0.0
    %7479 = vmatpush1.msra.mxu0 0.0
    %7480 = vmatprep.subr.mxu0 0.0
    %v7481 = vand.u32 %v7023, 4294901760
    %v7482 = vsub.f32 %v7023, %v7481
    %v7483 = vand.u32 %v7482, 4294901760
    %7484 = vmatpush1.msra.mxu0 %v7483
    %7485 = vmatprep.subr.mxu0 0.0
    %v7486 = vand.u32 %v7022, 4294901760
    %v7487 = vsub.f32 %v7022, %v7486
    %v7488 = vand.u32 %v7487, 4294901760
    %7489 = vmatpush1.msra.mxu0 %v7488
    %7490 = vmatprep.subr.mxu0 0.0
    %v7491 = vand.u32 %v7021, 4294901760
    %v7492 = vsub.f32 %v7021, %v7491
    %v7493 = vand.u32 %v7492, 4294901760
    %7494 = vmatpush1.msra.mxu0 %v7493
    %7495 = vmatprep.subr.mxu0 0.0
    %v7496 = vand.u32 %v7020, 4294901760
    %v7497 = vsub.f32 %v7020, %v7496
    %v7498 = vand.u32 %v7497, 4294901760
    %7499 = vmatpush1.msra.mxu0 %v7498
    %7500 = vmatprep.subr.mxu0 0.0
    %7501 = vmatpush2.msra.mxu0 0.0
    %7502 = vmatprep.subr.mxu0 0.0
    %7503 = vmatpush2.msra.mxu0 0.0
    %7504 = vmatprep.subr.mxu0 0.0
    %7505 = vmatpush2.msra.mxu0 0.0
    %7506 = vmatprep.subr.mxu0 0.0
    %7507 = vmatpush2.msra.mxu0 0.0
    %7508 = vmatprep.subr.mxu0 0.0
    %7509 = vmatpush2.msra.mxu0 0.0
    %7510 = vmatprep.subr.mxu0 0.0
    %7511 = vmatpush2.msra.mxu0 0.0
    %7512 = vmatprep.subr.mxu0 0.0
    %7513 = vmatpush2.msra.mxu0 0.0
    %7514 = vmatprep.subr.mxu0 0.0
    %7515 = vmatpush2.msra.mxu0 0.0
    %7516 = vmatprep.subr.mxu0 0.0
    %7517 = vmatpush2.msra.mxu0 0.0
    %7518 = vmatprep.subr.mxu0 0.0
    %7519 = vmatpush2.msra.mxu0 0.0
    %7520 = vmatprep.subr.mxu0 0.0
    %7521 = vmatpush2.msra.mxu0 0.0
    %7522 = vmatprep.subr.mxu0 0.0
    %7523 = vmatpush2.msra.mxu0 0.0
    %7524 = vmatprep.subr.mxu0 0.0
    %7525 = vmatpush2.msra.mxu0 0.0
    %7526 = vmatprep.subr.mxu0 0.0
    %7527 = vmatpush2.msra.mxu0 0.0
    %7528 = vmatprep.subr.mxu0 0.0
    %7529 = vmatpush2.msra.mxu0 0.0
    %7530 = vmatprep.subr.mxu0 0.0
    %7531 = vmatpush2.msra.mxu0 0.0
    %7532 = vmatprep.mubr.f32.mxu0 0.0
    %v7533 = vand.u32 %v7025, 4294901760
    %7534 = vmatmul.mubr.f32.gmra.mxu0 %v7533
    %v7535 = vpop.f32.mrf.mxu0
    %v7536 = vadd.f32 %v7429, %v7535
    %v7537 = vpop.f32.mrf.mxu0
    %7538 = vmatprep.mubr.f32.mxu0 0.0
    %v7539 = vand.u32 %v7028, 4294901760
    %7540 = vmatmul.mubr.f32.gmra.mxu0 %v7539
    %v7541 = vpop.f32.mrf.mxu0
    %v7542 = vadd.f32 %v7437, %v7541
    %v7543 = vpop.f32.mrf.mxu0
    %7544 = vmatprep.mubr.f32.mxu0 0.0
    %v7545 = vand.u32 %v7031, 4294901760
    %7546 = vmatmul.mubr.f32.gmra.mxu0 %v7545
    %v7547 = vpop.f32.mrf.mxu0
    %v7548 = vadd.f32 %v7445, %v7547
    %v7549 = vpop.f32.mrf.mxu0
    %7550 = vmatprep.mubr.f32.mxu0 0.0
    %v7551 = vand.u32 %v7034, 4294901760
    %7552 = vmatmul.mubr.f32.gmra.mxu0 %v7551
    %v7553 = vpop.f32.mrf.mxu0
    %v7554 = vadd.f32 %v7453, %v7553
    %v7555 = vpop.f32.mrf.mxu0
    %7556 = vdwg.mxu0
    %7557 = vmatprep.subr.mxu0 0.0
    %7558 = vmatpush1.msra.mxu0 0.0
    %7559 = vmatprep.subr.mxu0 0.0
    %7560 = vmatpush1.msra.mxu0 0.0
    %7561 = vmatprep.subr.mxu0 0.0
    %7562 = vmatpush1.msra.mxu0 0.0
    %7563 = vmatprep.subr.mxu0 0.0
    %7564 = vmatpush1.msra.mxu0 0.0
    %7565 = vmatprep.subr.mxu0 0.0
    %7566 = vmatpush1.msra.mxu0 0.0
    %7567 = vmatprep.subr.mxu0 0.0
    %7568 = vmatpush1.msra.mxu0 0.0
    %7569 = vmatprep.subr.mxu0 0.0
    %7570 = vmatpush1.msra.mxu0 0.0
    %7571 = vmatprep.subr.mxu0 0.0
    %7572 = vmatpush1.msra.mxu0 0.0
    %7573 = vmatprep.subr.mxu0 0.0
    %7574 = vmatpush1.msra.mxu0 0.0
    %7575 = vmatprep.subr.mxu0 0.0
    %7576 = vmatpush1.msra.mxu0 0.0
    %7577 = vmatprep.subr.mxu0 0.0
    %7578 = vmatpush1.msra.mxu0 0.0
    %7579 = vmatprep.subr.mxu0 0.0
    %7580 = vmatpush1.msra.mxu0 0.0
    %7581 = vmatprep.subr.mxu0 0.0
    %v7582 = vand.u32 %v7023, 4294901760
    %7583 = vmatpush1.msra.mxu0 %v7582
    %7584 = vmatprep.subr.mxu0 0.0
    %v7585 = vand.u32 %v7022, 4294901760
    %7586 = vmatpush1.msra.mxu0 %v7585
    %7587 = vmatprep.subr.mxu0 0.0
    %v7588 = vand.u32 %v7021, 4294901760
    %7589 = vmatpush1.msra.mxu0 %v7588
    %7590 = vmatprep.subr.mxu0 0.0
    %v7591 = vand.u32 %v7020, 4294901760
    %7592 = vmatpush1.msra.mxu0 %v7591
    %7593 = vmatprep.subr.mxu0 0.0
    %7594 = vmatpush2.msra.mxu0 0.0
    %7595 = vmatprep.subr.mxu0 0.0
    %7596 = vmatpush2.msra.mxu0 0.0
    %7597 = vmatprep.subr.mxu0 0.0
    %7598 = vmatpush2.msra.mxu0 0.0
    %7599 = vmatprep.subr.mxu0 0.0
    %7600 = vmatpush2.msra.mxu0 0.0
    %7601 = vmatprep.subr.mxu0 0.0
    %7602 = vmatpush2.msra.mxu0 0.0
    %7603 = vmatprep.subr.mxu0 0.0
    %7604 = vmatpush2.msra.mxu0 0.0
    %7605 = vmatprep.subr.mxu0 0.0
    %7606 = vmatpush2.msra.mxu0 0.0
    %7607 = vmatprep.subr.mxu0 0.0
    %7608 = vmatpush2.msra.mxu0 0.0
    %7609 = vmatprep.subr.mxu0 0.0
    %7610 = vmatpush2.msra.mxu0 0.0
    %7611 = vmatprep.subr.mxu0 0.0
    %7612 = vmatpush2.msra.mxu0 0.0
    %7613 = vmatprep.subr.mxu0 0.0
    %7614 = vmatpush2.msra.mxu0 0.0
    %7615 = vmatprep.subr.mxu0 0.0
    %7616 = vmatpush2.msra.mxu0 0.0
    %7617 = vmatprep.subr.mxu0 0.0
    %7618 = vmatpush2.msra.mxu0 0.0
    %7619 = vmatprep.subr.mxu0 0.0
    %7620 = vmatpush2.msra.mxu0 0.0
    %7621 = vmatprep.subr.mxu0 0.0
    %7622 = vmatpush2.msra.mxu0 0.0
    %7623 = vmatprep.subr.mxu0 0.0
    %7624 = vmatpush2.msra.mxu0 0.0
    %7625 = vmatprep.mubr.f32.mxu0 0.0
    %v7626 = vand.u32 %v7025, 4294901760
    %7627 = vmatmul.mubr.f32.gmra.mxu0 %v7626
    %v7628 = vpop.f32.mrf.mxu0
    %v7629 = vadd.f32 %v7536, %v7628
    %v7630 = vpop.f32.mrf.mxu0
    %7631 = vmatprep.mubr.f32.mxu0 0.0
    %v7632 = vand.u32 %v7028, 4294901760
    %7633 = vmatmul.mubr.f32.gmra.mxu0 %v7632
    %v7634 = vpop.f32.mrf.mxu0
    %v7635 = vadd.f32 %v7542, %v7634
    %v7636 = vpop.f32.mrf.mxu0
    %7637 = vmatprep.mubr.f32.mxu0 0.0
    %v7638 = vand.u32 %v7031, 4294901760
    %7639 = vmatmul.mubr.f32.gmra.mxu0 %v7638
    %v7640 = vpop.f32.mrf.mxu0
    %v7641 = vadd.f32 %v7548, %v7640
    %v7642 = vpop.f32.mrf.mxu0
    %7643 = vmatprep.mubr.f32.mxu0 0.0
    %v7644 = vand.u32 %v7034, 4294901760
    %7645 = vmatmul.mubr.f32.gmra.mxu0 %v7644
    %v7646 = vpop.f32.mrf.mxu0
    %v7647 = vadd.f32 %v7554, %v7646
    %v7648 = vpop.f32.mrf.mxu0
    %7649 = vdwg.mxu0
    %v7650 = vadd.f32 %v6999, %v7629
    %v7651 = vadd.f32 %v7005, %v7635
    %v7652 = vadd.f32 %v7011, %v7641
    %v7653 = vadd.f32 %v7017, %v7647
    %v7654 = vlaneseq
    %v7655 = vshrl.u32 %v7654, 7
    %v7656 = vsub.s32 0, %v7655
    %v7657 = vrot.slane %v98, %v7656
    %v7658 = vadd.f32 %v7650, %v7657
    %v7659 = vadd.f32 %v7651, %v7657
    %v7660 = vadd.f32 %v7652, %v7657
    %v7661 = vadd.f32 %v7653, %v7657
    %v7662 = vmul.f32 %v7658, %v7658
    %v7663 = vmul.f32 %v7659, %v7659
    %v7664 = vmul.f32 %v7660, %v7660
    %v7665 = vmul.f32 %v7661, %v7661
    %vm7666 = vcmask 523264
    %v7668 = vsel %vm7666, %v7658, 0
    %v7671 = vsel %vm7666, %v7659, 0
    %v7674 = vsel %vm7666, %v7660, 0
    %v7677 = vsel %vm7666, %v7661, 0
    %v7680 = vsel %vm7666, %v7662, 0
    %v7683 = vsel %vm7666, %v7663, 0
    %v7686 = vsel %vm7666, %v7664, 0
    %v7689 = vsel %vm7666, %v7665, 0
    %7691 = vmatprep.subr.mxu0 0.0
    %7692 = vmatpush1.msra.mxu0 0.0
    %7693 = vmatprep.subr.mxu0 0.0
    %7694 = vmatpush1.msra.mxu0 0.0
    %7695 = vmatprep.subr.mxu0 0.0
    %7696 = vmatpush1.msra.mxu0 0.0
    %7697 = vmatprep.subr.mxu0 0.0
    %7698 = vmatpush1.msra.mxu0 0.0
    %7699 = vmatprep.subr.mxu0 0.0
    %7700 = vmatpush1.msra.mxu0 0.0
    %7701 = vmatprep.subr.mxu0 0.0
    %7702 = vmatpush1.msra.mxu0 0.0
    %7703 = vmatprep.subr.mxu0 0.0
    %7704 = vmatpush1.msra.mxu0 0.0
    %7705 = vmatprep.subr.mxu0 0.0
    %7706 = vmatpush1.msra.mxu0 0.0
    %7707 = vmatprep.subr.mxu0 0.0
    %v7708 = vand.u32 %v97, 4294901760
    %7709 = vmatpush1.msra.mxu0 %v7708
    %7710 = vmatprep.subr.mxu0 0.0
    %v7711 = vand.u32 %v96, 4294901760
    %7712 = vmatpush1.msra.mxu0 %v7711
    %7713 = vmatprep.subr.mxu0 0.0
    %v7714 = vand.u32 %v95, 4294901760
    %7715 = vmatpush1.msra.mxu0 %v7714
    %7716 = vmatprep.subr.mxu0 0.0
    %v7717 = vand.u32 %v94, 4294901760
    %7718 = vmatpush1.msra.mxu0 %v7717
    %7719 = vmatprep.subr.mxu0 0.0
    %v7720 = vand.u32 %v93, 4294901760
    %7721 = vmatpush1.msra.mxu0 %v7720
    %7722 = vmatprep.subr.mxu0 0.0
    %v7723 = vand.u32 %v92, 4294901760
    %7724 = vmatpush1.msra.mxu0 %v7723
    %7725 = vmatprep.subr.mxu0 0.0
    %v7726 = vand.u32 %v91, 4294901760
    %7727 = vmatpush1.msra.mxu0 %v7726
    %7728 = vmatprep.subr.mxu0 0.0
    %v7729 = vand.u32 %v90, 4294901760
    %7730 = vmatpush1.msra.mxu0 %v7729
    %7731 = vmatprep.subr.mxu0 0.0
    %7732 = vmatpush2.msra.mxu0 0.0
    %7733 = vmatprep.subr.mxu0 0.0
    %7734 = vmatpush2.msra.mxu0 0.0
    %7735 = vmatprep.subr.mxu0 0.0
    %7736 = vmatpush2.msra.mxu0 0.0
    %7737 = vmatprep.subr.mxu0 0.0
    %7738 = vmatpush2.msra.mxu0 0.0
    %7739 = vmatprep.subr.mxu0 0.0
    %7740 = vmatpush2.msra.mxu0 0.0
    %7741 = vmatprep.subr.mxu0 0.0
    %7742 = vmatpush2.msra.mxu0 0.0
    %7743 = vmatprep.subr.mxu0 0.0
    %7744 = vmatpush2.msra.mxu0 0.0
    %7745 = vmatprep.subr.mxu0 0.0
    %7746 = vmatpush2.msra.mxu0 0.0
    %7747 = vmatprep.subr.mxu0 0.0
    %7748 = vmatpush2.msra.mxu0 0.0
    %7749 = vmatprep.subr.mxu0 0.0
    %7750 = vmatpush2.msra.mxu0 0.0
    %7751 = vmatprep.subr.mxu0 0.0
    %7752 = vmatpush2.msra.mxu0 0.0
    %7753 = vmatprep.subr.mxu0 0.0
    %7754 = vmatpush2.msra.mxu0 0.0
    %7755 = vmatprep.subr.mxu0 0.0
    %7756 = vmatpush2.msra.mxu0 0.0
    %7757 = vmatprep.subr.mxu0 0.0
    %7758 = vmatpush2.msra.mxu0 0.0
    %7759 = vmatprep.subr.mxu0 0.0
    %7760 = vmatpush2.msra.mxu0 0.0
    %7761 = vmatprep.subr.mxu0 0.0
    %7762 = vmatpush2.msra.mxu0 0.0
    %7763 = vmatprep.mubr.f32.mxu0 0.0
    %v7764 = vand.u32 %v7668, 4294901760
    %v7765 = vsub.f32 %v7668, %v7764
    %v7766 = vand.u32 %v7765, 4294901760
    %v7767 = vsub.f32 %v7765, %v7766
    %v7768 = vand.u32 %v7767, 4294901760
    %7769 = vmatmul.mubr.f32.gmra.mxu0 %v7768
    %v7770 = vpop.f32.mrf.mxu0
    %v7771 = vadd.f32 0.0, %v7770
    %v7772 = vpop.f32.mrf.mxu0
    %7773 = vmatprep.mubr.f32.mxu0 0.0
    %v7774 = vand.u32 %v7671, 4294901760
    %v7775 = vsub.f32 %v7671, %v7774
    %v7776 = vand.u32 %v7775, 4294901760
    %v7777 = vsub.f32 %v7775, %v7776
    %v7778 = vand.u32 %v7777, 4294901760
    %7779 = vmatmul.mubr.f32.gmra.mxu0 %v7778
    %v7780 = vpop.f32.mrf.mxu0
    %v7781 = vadd.f32 0.0, %v7780
    %v7782 = vpop.f32.mrf.mxu0
    %7783 = vmatprep.mubr.f32.mxu0 0.0
    %v7784 = vand.u32 %v7674, 4294901760
    %v7785 = vsub.f32 %v7674, %v7784
    %v7786 = vand.u32 %v7785, 4294901760
    %v7787 = vsub.f32 %v7785, %v7786
    %v7788 = vand.u32 %v7787, 4294901760
    %7789 = vmatmul.mubr.f32.gmra.mxu0 %v7788
    %v7790 = vpop.f32.mrf.mxu0
    %v7791 = vadd.f32 0.0, %v7790
    %v7792 = vpop.f32.mrf.mxu0
    %7793 = vmatprep.mubr.f32.mxu0 0.0
    %v7794 = vand.u32 %v7677, 4294901760
    %v7795 = vsub.f32 %v7677, %v7794
    %v7796 = vand.u32 %v7795, 4294901760
    %v7797 = vsub.f32 %v7795, %v7796
    %v7798 = vand.u32 %v7797, 4294901760
    %7799 = vmatmul.mubr.f32.gmra.mxu0 %v7798
    %v7800 = vpop.f32.mrf.mxu0
    %v7801 = vadd.f32 0.0, %v7800
    %v7802 = vpop.f32.mrf.mxu0
    %7803 = vmatprep.mubr.f32.mxu0 0.0
    %v7804 = vand.u32 %v7680, 4294901760
    %v7805 = vsub.f32 %v7680, %v7804
    %v7806 = vand.u32 %v7805, 4294901760
    %v7807 = vsub.f32 %v7805, %v7806
    %v7808 = vand.u32 %v7807, 4294901760
    %7809 = vmatmul.mubr.f32.gmra.mxu0 %v7808
    %v7810 = vpop.f32.mrf.mxu0
    %v7811 = vadd.f32 0.0, %v7810
    %v7812 = vpop.f32.mrf.mxu0
    %7813 = vmatprep.mubr.f32.mxu0 0.0
    %v7814 = vand.u32 %v7683, 4294901760
    %v7815 = vsub.f32 %v7683, %v7814
    %v7816 = vand.u32 %v7815, 4294901760
    %v7817 = vsub.f32 %v7815, %v7816
    %v7818 = vand.u32 %v7817, 4294901760
    %7819 = vmatmul.mubr.f32.gmra.mxu0 %v7818
    %v7820 = vpop.f32.mrf.mxu0
    %v7821 = vadd.f32 0.0, %v7820
    %v7822 = vpop.f32.mrf.mxu0
    %7823 = vmatprep.mubr.f32.mxu0 0.0
    %v7824 = vand.u32 %v7686, 4294901760
    %v7825 = vsub.f32 %v7686, %v7824
    %v7826 = vand.u32 %v7825, 4294901760
    %v7827 = vsub.f32 %v7825, %v7826
    %v7828 = vand.u32 %v7827, 4294901760
    %7829 = vmatmul.mubr.f32.gmra.mxu0 %v7828
    %v7830 = vpop.f32.mrf.mxu0
    %v7831 = vadd.f32 0.0, %v7830
    %v7832 = vpop.f32.mrf.mxu0
    %7833 = vmatprep.mubr.f32.mxu0 0.0
    %v7834 = vand.u32 %v7689, 4294901760
    %v7835 = vsub.f32 %v7689, %v7834
    %v7836 = vand.u32 %v7835, 4294901760
    %v7837 = vsub.f32 %v7835, %v7836
    %v7838 = vand.u32 %v7837, 4294901760
    %7839 = vmatmul.mubr.f32.gmra.mxu0 %v7838
    %v7840 = vpop.f32.mrf.mxu0
    %v7841 = vadd.f32 0.0, %v7840
    %v7842 = vpop.f32.mrf.mxu0
    %7843 = vdwg.mxu0
    %7844 = vmatprep.subr.mxu0 0.0
    %7845 = vmatpush1.msra.mxu0 0.0
    %7846 = vmatprep.subr.mxu0 0.0
    %7847 = vmatpush1.msra.mxu0 0.0
    %7848 = vmatprep.subr.mxu0 0.0
    %7849 = vmatpush1.msra.mxu0 0.0
    %7850 = vmatprep.subr.mxu0 0.0
    %7851 = vmatpush1.msra.mxu0 0.0
    %7852 = vmatprep.subr.mxu0 0.0
    %7853 = vmatpush1.msra.mxu0 0.0
    %7854 = vmatprep.subr.mxu0 0.0
    %7855 = vmatpush1.msra.mxu0 0.0
    %7856 = vmatprep.subr.mxu0 0.0
    %7857 = vmatpush1.msra.mxu0 0.0
    %7858 = vmatprep.subr.mxu0 0.0
    %7859 = vmatpush1.msra.mxu0 0.0
    %7860 = vmatprep.subr.mxu0 0.0
    %v7861 = vand.u32 %v97, 4294901760
    %v7862 = vsub.f32 %v97, %v7861
    %v7863 = vand.u32 %v7862, 4294901760
    %v7864 = vsub.f32 %v7862, %v7863
    %v7865 = vand.u32 %v7864, 4294901760
    %7866 = vmatpush1.msra.mxu0 %v7865
    %7867 = vmatprep.subr.mxu0 0.0
    %v7868 = vand.u32 %v96, 4294901760
    %v7869 = vsub.f32 %v96, %v7868
    %v7870 = vand.u32 %v7869, 4294901760
    %v7871 = vsub.f32 %v7869, %v7870
    %v7872 = vand.u32 %v7871, 4294901760
    %7873 = vmatpush1.msra.mxu0 %v7872
    %7874 = vmatprep.subr.mxu0 0.0
    %v7875 = vand.u32 %v95, 4294901760
    %v7876 = vsub.f32 %v95, %v7875
    %v7877 = vand.u32 %v7876, 4294901760
    %v7878 = vsub.f32 %v7876, %v7877
    %v7879 = vand.u32 %v7878, 4294901760
    %7880 = vmatpush1.msra.mxu0 %v7879
    %7881 = vmatprep.subr.mxu0 0.0
    %v7882 = vand.u32 %v94, 4294901760
    %v7883 = vsub.f32 %v94, %v7882
    %v7884 = vand.u32 %v7883, 4294901760
    %v7885 = vsub.f32 %v7883, %v7884
    %v7886 = vand.u32 %v7885, 4294901760
    %7887 = vmatpush1.msra.mxu0 %v7886
    %7888 = vmatprep.subr.mxu0 0.0
    %v7889 = vand.u32 %v93, 4294901760
    %v7890 = vsub.f32 %v93, %v7889
    %v7891 = vand.u32 %v7890, 4294901760
    %v7892 = vsub.f32 %v7890, %v7891
    %v7893 = vand.u32 %v7892, 4294901760
    %7894 = vmatpush1.msra.mxu0 %v7893
    %7895 = vmatprep.subr.mxu0 0.0
    %v7896 = vand.u32 %v92, 4294901760
    %v7897 = vsub.f32 %v92, %v7896
    %v7898 = vand.u32 %v7897, 4294901760
    %v7899 = vsub.f32 %v7897, %v7898
    %v7900 = vand.u32 %v7899, 4294901760
    %7901 = vmatpush1.msra.mxu0 %v7900
    %7902 = vmatprep.subr.mxu0 0.0
    %v7903 = vand.u32 %v91, 4294901760
    %v7904 = vsub.f32 %v91, %v7903
    %v7905 = vand.u32 %v7904, 4294901760
    %v7906 = vsub.f32 %v7904, %v7905
    %v7907 = vand.u32 %v7906, 4294901760
    %7908 = vmatpush1.msra.mxu0 %v7907
    %7909 = vmatprep.subr.mxu0 0.0
    %v7910 = vand.u32 %v90, 4294901760
    %v7911 = vsub.f32 %v90, %v7910
    %v7912 = vand.u32 %v7911, 4294901760
    %v7913 = vsub.f32 %v7911, %v7912
    %v7914 = vand.u32 %v7913, 4294901760
    %7915 = vmatpush1.msra.mxu0 %v7914
    %7916 = vmatprep.subr.mxu0 0.0
    %7917 = vmatpush2.msra.mxu0 0.0
    %7918 = vmatprep.subr.mxu0 0.0
    %7919 = vmatpush2.msra.mxu0 0.0
    %7920 = vmatprep.subr.mxu0 0.0
    %7921 = vmatpush2.msra.mxu0 0.0
    %7922 = vmatprep.subr.mxu0 0.0
    %7923 = vmatpush2.msra.mxu0 0.0
    %7924 = vmatprep.subr.mxu0 0.0
    %7925 = vmatpush2.msra.mxu0 0.0
    %7926 = vmatprep.subr.mxu0 0.0
    %7927 = vmatpush2.msra.mxu0 0.0
    %7928 = vmatprep.subr.mxu0 0.0
    %7929 = vmatpush2.msra.mxu0 0.0
    %7930 = vmatprep.subr.mxu0 0.0
    %7931 = vmatpush2.msra.mxu0 0.0
    %7932 = vmatprep.subr.mxu0 0.0
    %7933 = vmatpush2.msra.mxu0 0.0
    %7934 = vmatprep.subr.mxu0 0.0
    %7935 = vmatpush2.msra.mxu0 0.0
    %7936 = vmatprep.subr.mxu0 0.0
    %7937 = vmatpush2.msra.mxu0 0.0
    %7938 = vmatprep.subr.mxu0 0.0
    %7939 = vmatpush2.msra.mxu0 0.0
    %7940 = vmatprep.subr.mxu0 0.0
    %7941 = vmatpush2.msra.mxu0 0.0
    %7942 = vmatprep.subr.mxu0 0.0
    %7943 = vmatpush2.msra.mxu0 0.0
    %7944 = vmatprep.subr.mxu0 0.0
    %7945 = vmatpush2.msra.mxu0 0.0
    %7946 = vmatprep.subr.mxu0 0.0
    %7947 = vmatpush2.msra.mxu0 0.0
    %7948 = vmatprep.mubr.f32.mxu0 0.0
    %v7949 = vand.u32 %v7668, 4294901760
    %7950 = vmatmul.mubr.f32.gmra.mxu0 %v7949
    %v7951 = vpop.f32.mrf.mxu0
    %v7952 = vadd.f32 %v7771, %v7951
    %v7953 = vpop.f32.mrf.mxu0
    %7954 = vmatprep.mubr.f32.mxu0 0.0
    %v7955 = vand.u32 %v7671, 4294901760
    %7956 = vmatmul.mubr.f32.gmra.mxu0 %v7955
    %v7957 = vpop.f32.mrf.mxu0
    %v7958 = vadd.f32 %v7781, %v7957
    %v7959 = vpop.f32.mrf.mxu0
    %7960 = vmatprep.mubr.f32.mxu0 0.0
    %v7961 = vand.u32 %v7674, 4294901760
    %7962 = vmatmul.mubr.f32.gmra.mxu0 %v7961
    %v7963 = vpop.f32.mrf.mxu0
    %v7964 = vadd.f32 %v7791, %v7963
    %v7965 = vpop.f32.mrf.mxu0
    %7966 = vmatprep.mubr.f32.mxu0 0.0
    %v7967 = vand.u32 %v7677, 4294901760
    %7968 = vmatmul.mubr.f32.gmra.mxu0 %v7967
    %v7969 = vpop.f32.mrf.mxu0
    %v7970 = vadd.f32 %v7801, %v7969
    %v7971 = vpop.f32.mrf.mxu0
    %7972 = vmatprep.mubr.f32.mxu0 0.0
    %v7973 = vand.u32 %v7680, 4294901760
    %7974 = vmatmul.mubr.f32.gmra.mxu0 %v7973
    %v7975 = vpop.f32.mrf.mxu0
    %v7976 = vadd.f32 %v7811, %v7975
    %v7977 = vpop.f32.mrf.mxu0
    %7978 = vmatprep.mubr.f32.mxu0 0.0
    %v7979 = vand.u32 %v7683, 4294901760
    %7980 = vmatmul.mubr.f32.gmra.mxu0 %v7979
    %v7981 = vpop.f32.mrf.mxu0
    %v7982 = vadd.f32 %v7821, %v7981
    %v7983 = vpop.f32.mrf.mxu0
    %7984 = vmatprep.mubr.f32.mxu0 0.0
    %v7985 = vand.u32 %v7686, 4294901760
    %7986 = vmatmul.mubr.f32.gmra.mxu0 %v7985
    %v7987 = vpop.f32.mrf.mxu0
    %v7988 = vadd.f32 %v7831, %v7987
    %v7989 = vpop.f32.mrf.mxu0
    %7990 = vmatprep.mubr.f32.mxu0 0.0
    %v7991 = vand.u32 %v7689, 4294901760
    %7992 = vmatmul.mubr.f32.gmra.mxu0 %v7991
    %v7993 = vpop.f32.mrf.mxu0
    %v7994 = vadd.f32 %v7841, %v7993
    %v7995 = vpop.f32.mrf.mxu0
    %7996 = vdwg.mxu0
    %7997 = vmatprep.subr.mxu0 0.0
    %7998 = vmatpush1.msra.mxu0 0.0
    %7999 = vmatprep.subr.mxu0 0.0
    %8000 = vmatpush1.msra.mxu0 0.0
    %8001 = vmatprep.subr.mxu0 0.0
    %8002 = vmatpush1.msra.mxu0 0.0
    %8003 = vmatprep.subr.mxu0 0.0
    %8004 = vmatpush1.msra.mxu0 0.0
    %8005 = vmatprep.subr.mxu0 0.0
    %8006 = vmatpush1.msra.mxu0 0.0
    %8007 = vmatprep.subr.mxu0 0.0
    %8008 = vmatpush1.msra.mxu0 0.0
    %8009 = vmatprep.subr.mxu0 0.0
    %8010 = vmatpush1.msra.mxu0 0.0
    %8011 = vmatprep.subr.mxu0 0.0
    %8012 = vmatpush1.msra.mxu0 0.0
    %8013 = vmatprep.subr.mxu0 0.0
    %v8014 = vand.u32 %v97, 4294901760
    %v8015 = vsub.f32 %v97, %v8014
    %8016 = vmatpush1.msra.mxu0 %v8015
    %8017 = vmatprep.subr.mxu0 0.0
    %v8018 = vand.u32 %v96, 4294901760
    %v8019 = vsub.f32 %v96, %v8018
    %8020 = vmatpush1.msra.mxu0 %v8019
    %8021 = vmatprep.subr.mxu0 0.0
    %v8022 = vand.u32 %v95, 4294901760
    %v8023 = vsub.f32 %v95, %v8022
    %8024 = vmatpush1.msra.mxu0 %v8023
    %8025 = vmatprep.subr.mxu0 0.0
    %v8026 = vand.u32 %v94, 4294901760
    %v8027 = vsub.f32 %v94, %v8026
    %8028 = vmatpush1.msra.mxu0 %v8027
    %8029 = vmatprep.subr.mxu0 0.0
    %v8030 = vand.u32 %v93, 4294901760
    %v8031 = vsub.f32 %v93, %v8030
    %8032 = vmatpush1.msra.mxu0 %v8031
    %8033 = vmatprep.subr.mxu0 0.0
    %v8034 = vand.u32 %v92, 4294901760
    %v8035 = vsub.f32 %v92, %v8034
    %8036 = vmatpush1.msra.mxu0 %v8035
    %8037 = vmatprep.subr.mxu0 0.0
    %v8038 = vand.u32 %v91, 4294901760
    %v8039 = vsub.f32 %v91, %v8038
    %8040 = vmatpush1.msra.mxu0 %v8039
    %8041 = vmatprep.subr.mxu0 0.0
    %v8042 = vand.u32 %v90, 4294901760
    %v8043 = vsub.f32 %v90, %v8042
    %8044 = vmatpush1.msra.mxu0 %v8043
    %8045 = vmatprep.subr.mxu0 0.0
    %8046 = vmatpush2.msra.mxu0 0.0
    %8047 = vmatprep.subr.mxu0 0.0
    %8048 = vmatpush2.msra.mxu0 0.0
    %8049 = vmatprep.subr.mxu0 0.0
    %8050 = vmatpush2.msra.mxu0 0.0
    %8051 = vmatprep.subr.mxu0 0.0
    %8052 = vmatpush2.msra.mxu0 0.0
    %8053 = vmatprep.subr.mxu0 0.0
    %8054 = vmatpush2.msra.mxu0 0.0
    %8055 = vmatprep.subr.mxu0 0.0
    %8056 = vmatpush2.msra.mxu0 0.0
    %8057 = vmatprep.subr.mxu0 0.0
    %8058 = vmatpush2.msra.mxu0 0.0
    %8059 = vmatprep.subr.mxu0 0.0
    %8060 = vmatpush2.msra.mxu0 0.0
    %8061 = vmatprep.subr.mxu0 0.0
    %8062 = vmatpush2.msra.mxu0 0.0
    %8063 = vmatprep.subr.mxu0 0.0
    %8064 = vmatpush2.msra.mxu0 0.0
    %8065 = vmatprep.subr.mxu0 0.0
    %8066 = vmatpush2.msra.mxu0 0.0
    %8067 = vmatprep.subr.mxu0 0.0
    %8068 = vmatpush2.msra.mxu0 0.0
    %8069 = vmatprep.subr.mxu0 0.0
    %8070 = vmatpush2.msra.mxu0 0.0
    %8071 = vmatprep.subr.mxu0 0.0
    %8072 = vmatpush2.msra.mxu0 0.0
    %8073 = vmatprep.subr.mxu0 0.0
    %8074 = vmatpush2.msra.mxu0 0.0
    %8075 = vmatprep.subr.mxu0 0.0
    %8076 = vmatpush2.msra.mxu0 0.0
    %8077 = vmatprep.mubr.f32.mxu0 0.0
    %v8078 = vand.u32 %v7668, 4294901760
    %v8079 = vsub.f32 %v7668, %v8078
    %8080 = vmatmul.mubr.f32.gmra.mxu0 %v8079
    %v8081 = vpop.f32.mrf.mxu0
    %v8082 = vadd.f32 %v7952, %v8081
    %v8083 = vpop.f32.mrf.mxu0
    %8084 = vmatprep.mubr.f32.mxu0 0.0
    %v8085 = vand.u32 %v7671, 4294901760
    %v8086 = vsub.f32 %v7671, %v8085
    %8087 = vmatmul.mubr.f32.gmra.mxu0 %v8086
    %v8088 = vpop.f32.mrf.mxu0
    %v8089 = vadd.f32 %v7958, %v8088
    %v8090 = vpop.f32.mrf.mxu0
    %8091 = vmatprep.mubr.f32.mxu0 0.0
    %v8092 = vand.u32 %v7674, 4294901760
    %v8093 = vsub.f32 %v7674, %v8092
    %8094 = vmatmul.mubr.f32.gmra.mxu0 %v8093
    %v8095 = vpop.f32.mrf.mxu0
    %v8096 = vadd.f32 %v7964, %v8095
    %v8097 = vpop.f32.mrf.mxu0
    %8098 = vmatprep.mubr.f32.mxu0 0.0
    %v8099 = vand.u32 %v7677, 4294901760
    %v8100 = vsub.f32 %v7677, %v8099
    %8101 = vmatmul.mubr.f32.gmra.mxu0 %v8100
    %v8102 = vpop.f32.mrf.mxu0
    %v8103 = vadd.f32 %v7970, %v8102
    %v8104 = vpop.f32.mrf.mxu0
    %8105 = vmatprep.mubr.f32.mxu0 0.0
    %v8106 = vand.u32 %v7680, 4294901760
    %v8107 = vsub.f32 %v7680, %v8106
    %8108 = vmatmul.mubr.f32.gmra.mxu0 %v8107
    %v8109 = vpop.f32.mrf.mxu0
    %v8110 = vadd.f32 %v7976, %v8109
    %v8111 = vpop.f32.mrf.mxu0
    %8112 = vmatprep.mubr.f32.mxu0 0.0
    %v8113 = vand.u32 %v7683, 4294901760
    %v8114 = vsub.f32 %v7683, %v8113
    %8115 = vmatmul.mubr.f32.gmra.mxu0 %v8114
    %v8116 = vpop.f32.mrf.mxu0
    %v8117 = vadd.f32 %v7982, %v8116
    %v8118 = vpop.f32.mrf.mxu0
    %8119 = vmatprep.mubr.f32.mxu0 0.0
    %v8120 = vand.u32 %v7686, 4294901760
    %v8121 = vsub.f32 %v7686, %v8120
    %8122 = vmatmul.mubr.f32.gmra.mxu0 %v8121
    %v8123 = vpop.f32.mrf.mxu0
    %v8124 = vadd.f32 %v7988, %v8123
    %v8125 = vpop.f32.mrf.mxu0
    %8126 = vmatprep.mubr.f32.mxu0 0.0
    %v8127 = vand.u32 %v7689, 4294901760
    %v8128 = vsub.f32 %v7689, %v8127
    %8129 = vmatmul.mubr.f32.gmra.mxu0 %v8128
    %v8130 = vpop.f32.mrf.mxu0
    %v8131 = vadd.f32 %v7994, %v8130
    %v8132 = vpop.f32.mrf.mxu0
    %8133 = vdwg.mxu0
    %8134 = vmatprep.subr.mxu0 0.0
    %8135 = vmatpush1.msra.mxu0 0.0
    %8136 = vmatprep.subr.mxu0 0.0
    %8137 = vmatpush1.msra.mxu0 0.0
    %8138 = vmatprep.subr.mxu0 0.0
    %8139 = vmatpush1.msra.mxu0 0.0
    %8140 = vmatprep.subr.mxu0 0.0
    %8141 = vmatpush1.msra.mxu0 0.0
    %8142 = vmatprep.subr.mxu0 0.0
    %8143 = vmatpush1.msra.mxu0 0.0
    %8144 = vmatprep.subr.mxu0 0.0
    %8145 = vmatpush1.msra.mxu0 0.0
    %8146 = vmatprep.subr.mxu0 0.0
    %8147 = vmatpush1.msra.mxu0 0.0
    %8148 = vmatprep.subr.mxu0 0.0
    %8149 = vmatpush1.msra.mxu0 0.0
    %8150 = vmatprep.subr.mxu0 0.0
    %v8151 = vand.u32 %v97, 4294901760
    %8152 = vmatpush1.msra.mxu0 %v8151
    %8153 = vmatprep.subr.mxu0 0.0
    %v8154 = vand.u32 %v96, 4294901760
    %8155 = vmatpush1.msra.mxu0 %v8154
    %8156 = vmatprep.subr.mxu0 0.0
    %v8157 = vand.u32 %v95, 4294901760
    %8158 = vmatpush1.msra.mxu0 %v8157
    %8159 = vmatprep.subr.mxu0 0.0
    %v8160 = vand.u32 %v94, 4294901760
    %8161 = vmatpush1.msra.mxu0 %v8160
    %8162 = vmatprep.subr.mxu0 0.0
    %v8163 = vand.u32 %v93, 4294901760
    %8164 = vmatpush1.msra.mxu0 %v8163
    %8165 = vmatprep.subr.mxu0 0.0
    %v8166 = vand.u32 %v92, 4294901760
    %8167 = vmatpush1.msra.mxu0 %v8166
    %8168 = vmatprep.subr.mxu0 0.0
    %v8169 = vand.u32 %v91, 4294901760
    %8170 = vmatpush1.msra.mxu0 %v8169
    %8171 = vmatprep.subr.mxu0 0.0
    %v8172 = vand.u32 %v90, 4294901760
    %8173 = vmatpush1.msra.mxu0 %v8172
    %8174 = vmatprep.subr.mxu0 0.0
    %8175 = vmatpush2.msra.mxu0 0.0
    %8176 = vmatprep.subr.mxu0 0.0
    %8177 = vmatpush2.msra.mxu0 0.0
    %8178 = vmatprep.subr.mxu0 0.0
    %8179 = vmatpush2.msra.mxu0 0.0
    %8180 = vmatprep.subr.mxu0 0.0
    %8181 = vmatpush2.msra.mxu0 0.0
    %8182 = vmatprep.subr.mxu0 0.0
    %8183 = vmatpush2.msra.mxu0 0.0
    %8184 = vmatprep.subr.mxu0 0.0
    %8185 = vmatpush2.msra.mxu0 0.0
    %8186 = vmatprep.subr.mxu0 0.0
    %8187 = vmatpush2.msra.mxu0 0.0
    %8188 = vmatprep.subr.mxu0 0.0
    %8189 = vmatpush2.msra.mxu0 0.0
    %8190 = vmatprep.subr.mxu0 0.0
    %8191 = vmatpush2.msra.mxu0 0.0
    %8192 = vmatprep.subr.mxu0 0.0
    %8193 = vmatpush2.msra.mxu0 0.0
    %8194 = vmatprep.subr.mxu0 0.0
    %8195 = vmatpush2.msra.mxu0 0.0
    %8196 = vmatprep.subr.mxu0 0.0
    %8197 = vmatpush2.msra.mxu0 0.0
    %8198 = vmatprep.subr.mxu0 0.0
    %8199 = vmatpush2.msra.mxu0 0.0
    %8200 = vmatprep.subr.mxu0 0.0
    %8201 = vmatpush2.msra.mxu0 0.0
    %8202 = vmatprep.subr.mxu0 0.0
    %8203 = vmatpush2.msra.mxu0 0.0
    %8204 = vmatprep.subr.mxu0 0.0
    %8205 = vmatpush2.msra.mxu0 0.0
    %8206 = vmatprep.mubr.f32.mxu0 0.0
    %v8207 = vand.u32 %v7668, 4294901760
    %v8208 = vsub.f32 %v7668, %v8207
    %v8209 = vand.u32 %v8208, 4294901760
    %8210 = vmatmul.mubr.f32.gmra.mxu0 %v8209
    %v8211 = vpop.f32.mrf.mxu0
    %v8212 = vadd.f32 %v8082, %v8211
    %v8213 = vpop.f32.mrf.mxu0
    %8214 = vmatprep.mubr.f32.mxu0 0.0
    %v8215 = vand.u32 %v7671, 4294901760
    %v8216 = vsub.f32 %v7671, %v8215
    %v8217 = vand.u32 %v8216, 4294901760
    %8218 = vmatmul.mubr.f32.gmra.mxu0 %v8217
    %v8219 = vpop.f32.mrf.mxu0
    %v8220 = vadd.f32 %v8089, %v8219
    %v8221 = vpop.f32.mrf.mxu0
    %8222 = vmatprep.mubr.f32.mxu0 0.0
    %v8223 = vand.u32 %v7674, 4294901760
    %v8224 = vsub.f32 %v7674, %v8223
    %v8225 = vand.u32 %v8224, 4294901760
    %8226 = vmatmul.mubr.f32.gmra.mxu0 %v8225
    %v8227 = vpop.f32.mrf.mxu0
    %v8228 = vadd.f32 %v8096, %v8227
    %v8229 = vpop.f32.mrf.mxu0
    %8230 = vmatprep.mubr.f32.mxu0 0.0
    %v8231 = vand.u32 %v7677, 4294901760
    %v8232 = vsub.f32 %v7677, %v8231
    %v8233 = vand.u32 %v8232, 4294901760
    %8234 = vmatmul.mubr.f32.gmra.mxu0 %v8233
    %v8235 = vpop.f32.mrf.mxu0
    %v8236 = vadd.f32 %v8103, %v8235
    %v8237 = vpop.f32.mrf.mxu0
    %8238 = vmatprep.mubr.f32.mxu0 0.0
    %v8239 = vand.u32 %v7680, 4294901760
    %v8240 = vsub.f32 %v7680, %v8239
    %v8241 = vand.u32 %v8240, 4294901760
    %8242 = vmatmul.mubr.f32.gmra.mxu0 %v8241
    %v8243 = vpop.f32.mrf.mxu0
    %v8244 = vadd.f32 %v8110, %v8243
    %v8245 = vpop.f32.mrf.mxu0
    %8246 = vmatprep.mubr.f32.mxu0 0.0
    %v8247 = vand.u32 %v7683, 4294901760
    %v8248 = vsub.f32 %v7683, %v8247
    %v8249 = vand.u32 %v8248, 4294901760
    %8250 = vmatmul.mubr.f32.gmra.mxu0 %v8249
    %v8251 = vpop.f32.mrf.mxu0
    %v8252 = vadd.f32 %v8117, %v8251
    %v8253 = vpop.f32.mrf.mxu0
    %8254 = vmatprep.mubr.f32.mxu0 0.0
    %v8255 = vand.u32 %v7686, 4294901760
    %v8256 = vsub.f32 %v7686, %v8255
    %v8257 = vand.u32 %v8256, 4294901760
    %8258 = vmatmul.mubr.f32.gmra.mxu0 %v8257
    %v8259 = vpop.f32.mrf.mxu0
    %v8260 = vadd.f32 %v8124, %v8259
    %v8261 = vpop.f32.mrf.mxu0
    %8262 = vmatprep.mubr.f32.mxu0 0.0
    %v8263 = vand.u32 %v7689, 4294901760
    %v8264 = vsub.f32 %v7689, %v8263
    %v8265 = vand.u32 %v8264, 4294901760
    %8266 = vmatmul.mubr.f32.gmra.mxu0 %v8265
    %v8267 = vpop.f32.mrf.mxu0
    %v8268 = vadd.f32 %v8131, %v8267
    %v8269 = vpop.f32.mrf.mxu0
    %8270 = vdwg.mxu0
    %8271 = vmatprep.subr.mxu0 0.0
    %8272 = vmatpush1.msra.mxu0 0.0
    %8273 = vmatprep.subr.mxu0 0.0
    %8274 = vmatpush1.msra.mxu0 0.0
    %8275 = vmatprep.subr.mxu0 0.0
    %8276 = vmatpush1.msra.mxu0 0.0
    %8277 = vmatprep.subr.mxu0 0.0
    %8278 = vmatpush1.msra.mxu0 0.0
    %8279 = vmatprep.subr.mxu0 0.0
    %8280 = vmatpush1.msra.mxu0 0.0
    %8281 = vmatprep.subr.mxu0 0.0
    %8282 = vmatpush1.msra.mxu0 0.0
    %8283 = vmatprep.subr.mxu0 0.0
    %8284 = vmatpush1.msra.mxu0 0.0
    %8285 = vmatprep.subr.mxu0 0.0
    %8286 = vmatpush1.msra.mxu0 0.0
    %8287 = vmatprep.subr.mxu0 0.0
    %v8288 = vand.u32 %v97, 4294901760
    %v8289 = vsub.f32 %v97, %v8288
    %v8290 = vand.u32 %v8289, 4294901760
    %8291 = vmatpush1.msra.mxu0 %v8290
    %8292 = vmatprep.subr.mxu0 0.0
    %v8293 = vand.u32 %v96, 4294901760
    %v8294 = vsub.f32 %v96, %v8293
    %v8295 = vand.u32 %v8294, 4294901760
    %8296 = vmatpush1.msra.mxu0 %v8295
    %8297 = vmatprep.subr.mxu0 0.0
    %v8298 = vand.u32 %v95, 4294901760
    %v8299 = vsub.f32 %v95, %v8298
    %v8300 = vand.u32 %v8299, 4294901760
    %8301 = vmatpush1.msra.mxu0 %v8300
    %8302 = vmatprep.subr.mxu0 0.0
    %v8303 = vand.u32 %v94, 4294901760
    %v8304 = vsub.f32 %v94, %v8303
    %v8305 = vand.u32 %v8304, 4294901760
    %8306 = vmatpush1.msra.mxu0 %v8305
    %8307 = vmatprep.subr.mxu0 0.0
    %v8308 = vand.u32 %v93, 4294901760
    %v8309 = vsub.f32 %v93, %v8308
    %v8310 = vand.u32 %v8309, 4294901760
    %8311 = vmatpush1.msra.mxu0 %v8310
    %8312 = vmatprep.subr.mxu0 0.0
    %v8313 = vand.u32 %v92, 4294901760
    %v8314 = vsub.f32 %v92, %v8313
    %v8315 = vand.u32 %v8314, 4294901760
    %8316 = vmatpush1.msra.mxu0 %v8315
    %8317 = vmatprep.subr.mxu0 0.0
    %v8318 = vand.u32 %v91, 4294901760
    %v8319 = vsub.f32 %v91, %v8318
    %v8320 = vand.u32 %v8319, 4294901760
    %8321 = vmatpush1.msra.mxu0 %v8320
    %8322 = vmatprep.subr.mxu0 0.0
    %v8323 = vand.u32 %v90, 4294901760
    %v8324 = vsub.f32 %v90, %v8323
    %v8325 = vand.u32 %v8324, 4294901760
    %8326 = vmatpush1.msra.mxu0 %v8325
    %8327 = vmatprep.subr.mxu0 0.0
    %8328 = vmatpush2.msra.mxu0 0.0
    %8329 = vmatprep.subr.mxu0 0.0
    %8330 = vmatpush2.msra.mxu0 0.0
    %8331 = vmatprep.subr.mxu0 0.0
    %8332 = vmatpush2.msra.mxu0 0.0
    %8333 = vmatprep.subr.mxu0 0.0
    %8334 = vmatpush2.msra.mxu0 0.0
    %8335 = vmatprep.subr.mxu0 0.0
    %8336 = vmatpush2.msra.mxu0 0.0
    %8337 = vmatprep.subr.mxu0 0.0
    %8338 = vmatpush2.msra.mxu0 0.0
    %8339 = vmatprep.subr.mxu0 0.0
    %8340 = vmatpush2.msra.mxu0 0.0
    %8341 = vmatprep.subr.mxu0 0.0
    %8342 = vmatpush2.msra.mxu0 0.0
    %8343 = vmatprep.subr.mxu0 0.0
    %8344 = vmatpush2.msra.mxu0 0.0
    %8345 = vmatprep.subr.mxu0 0.0
    %8346 = vmatpush2.msra.mxu0 0.0
    %8347 = vmatprep.subr.mxu0 0.0
    %8348 = vmatpush2.msra.mxu0 0.0
    %8349 = vmatprep.subr.mxu0 0.0
    %8350 = vmatpush2.msra.mxu0 0.0
    %8351 = vmatprep.subr.mxu0 0.0
    %8352 = vmatpush2.msra.mxu0 0.0
    %8353 = vmatprep.subr.mxu0 0.0
    %8354 = vmatpush2.msra.mxu0 0.0
    %8355 = vmatprep.subr.mxu0 0.0
    %8356 = vmatpush2.msra.mxu0 0.0
    %8357 = vmatprep.subr.mxu0 0.0
    %8358 = vmatpush2.msra.mxu0 0.0
    %8359 = vmatprep.mubr.f32.mxu0 0.0
    %v8360 = vand.u32 %v7668, 4294901760
    %8361 = vmatmul.mubr.f32.gmra.mxu0 %v8360
    %v8362 = vpop.f32.mrf.mxu0
    %v8363 = vadd.f32 %v8212, %v8362
    %v8364 = vpop.f32.mrf.mxu0
    %8365 = vmatprep.mubr.f32.mxu0 0.0
    %v8366 = vand.u32 %v7671, 4294901760
    %8367 = vmatmul.mubr.f32.gmra.mxu0 %v8366
    %v8368 = vpop.f32.mrf.mxu0
    %v8369 = vadd.f32 %v8220, %v8368
    %v8370 = vpop.f32.mrf.mxu0
    %8371 = vmatprep.mubr.f32.mxu0 0.0
    %v8372 = vand.u32 %v7674, 4294901760
    %8373 = vmatmul.mubr.f32.gmra.mxu0 %v8372
    %v8374 = vpop.f32.mrf.mxu0
    %v8375 = vadd.f32 %v8228, %v8374
    %v8376 = vpop.f32.mrf.mxu0
    %8377 = vmatprep.mubr.f32.mxu0 0.0
    %v8378 = vand.u32 %v7677, 4294901760
    %8379 = vmatmul.mubr.f32.gmra.mxu0 %v8378
    %v8380 = vpop.f32.mrf.mxu0
    %v8381 = vadd.f32 %v8236, %v8380
    %v8382 = vpop.f32.mrf.mxu0
    %8383 = vmatprep.mubr.f32.mxu0 0.0
    %v8384 = vand.u32 %v7680, 4294901760
    %8385 = vmatmul.mubr.f32.gmra.mxu0 %v8384
    %v8386 = vpop.f32.mrf.mxu0
    %v8387 = vadd.f32 %v8244, %v8386
    %v8388 = vpop.f32.mrf.mxu0
    %8389 = vmatprep.mubr.f32.mxu0 0.0
    %v8390 = vand.u32 %v7683, 4294901760
    %8391 = vmatmul.mubr.f32.gmra.mxu0 %v8390
    %v8392 = vpop.f32.mrf.mxu0
    %v8393 = vadd.f32 %v8252, %v8392
    %v8394 = vpop.f32.mrf.mxu0
    %8395 = vmatprep.mubr.f32.mxu0 0.0
    %v8396 = vand.u32 %v7686, 4294901760
    %8397 = vmatmul.mubr.f32.gmra.mxu0 %v8396
    %v8398 = vpop.f32.mrf.mxu0
    %v8399 = vadd.f32 %v8260, %v8398
    %v8400 = vpop.f32.mrf.mxu0
    %8401 = vmatprep.mubr.f32.mxu0 0.0
    %v8402 = vand.u32 %v7689, 4294901760
    %8403 = vmatmul.mubr.f32.gmra.mxu0 %v8402
    %v8404 = vpop.f32.mrf.mxu0
    %v8405 = vadd.f32 %v8268, %v8404
    %v8406 = vpop.f32.mrf.mxu0
    %8407 = vdwg.mxu0
    %8408 = vmatprep.subr.mxu0 0.0
    %8409 = vmatpush1.msra.mxu0 0.0
    %8410 = vmatprep.subr.mxu0 0.0
    %8411 = vmatpush1.msra.mxu0 0.0
    %8412 = vmatprep.subr.mxu0 0.0
    %8413 = vmatpush1.msra.mxu0 0.0
    %8414 = vmatprep.subr.mxu0 0.0
    %8415 = vmatpush1.msra.mxu0 0.0
    %8416 = vmatprep.subr.mxu0 0.0
    %8417 = vmatpush1.msra.mxu0 0.0
    %8418 = vmatprep.subr.mxu0 0.0
    %8419 = vmatpush1.msra.mxu0 0.0
    %8420 = vmatprep.subr.mxu0 0.0
    %8421 = vmatpush1.msra.mxu0 0.0
    %8422 = vmatprep.subr.mxu0 0.0
    %8423 = vmatpush1.msra.mxu0 0.0
    %8424 = vmatprep.subr.mxu0 0.0
    %v8425 = vand.u32 %v97, 4294901760
    %8426 = vmatpush1.msra.mxu0 %v8425
    %8427 = vmatprep.subr.mxu0 0.0
    %v8428 = vand.u32 %v96, 4294901760
    %8429 = vmatpush1.msra.mxu0 %v8428
    %8430 = vmatprep.subr.mxu0 0.0
    %v8431 = vand.u32 %v95, 4294901760
    %8432 = vmatpush1.msra.mxu0 %v8431
    %8433 = vmatprep.subr.mxu0 0.0
    %v8434 = vand.u32 %v94, 4294901760
    %8435 = vmatpush1.msra.mxu0 %v8434
    %8436 = vmatprep.subr.mxu0 0.0
    %v8437 = vand.u32 %v93, 4294901760
    %8438 = vmatpush1.msra.mxu0 %v8437
    %8439 = vmatprep.subr.mxu0 0.0
    %v8440 = vand.u32 %v92, 4294901760
    %8441 = vmatpush1.msra.mxu0 %v8440
    %8442 = vmatprep.subr.mxu0 0.0
    %v8443 = vand.u32 %v91, 4294901760
    %8444 = vmatpush1.msra.mxu0 %v8443
    %8445 = vmatprep.subr.mxu0 0.0
    %v8446 = vand.u32 %v90, 4294901760
    %8447 = vmatpush1.msra.mxu0 %v8446
    %8448 = vmatprep.subr.mxu0 0.0
    %8449 = vmatpush2.msra.mxu0 0.0
    %8450 = vmatprep.subr.mxu0 0.0
    %8451 = vmatpush2.msra.mxu0 0.0
    %8452 = vmatprep.subr.mxu0 0.0
    %8453 = vmatpush2.msra.mxu0 0.0
    %8454 = vmatprep.subr.mxu0 0.0
    %8455 = vmatpush2.msra.mxu0 0.0
    %8456 = vmatprep.subr.mxu0 0.0
    %8457 = vmatpush2.msra.mxu0 0.0
    %8458 = vmatprep.subr.mxu0 0.0
    %8459 = vmatpush2.msra.mxu0 0.0
    %8460 = vmatprep.subr.mxu0 0.0
    %8461 = vmatpush2.msra.mxu0 0.0
    %8462 = vmatprep.subr.mxu0 0.0
    %8463 = vmatpush2.msra.mxu0 0.0
    %8464 = vmatprep.subr.mxu0 0.0
    %8465 = vmatpush2.msra.mxu0 0.0
    %8466 = vmatprep.subr.mxu0 0.0
    %8467 = vmatpush2.msra.mxu0 0.0
    %8468 = vmatprep.subr.mxu0 0.0
    %8469 = vmatpush2.msra.mxu0 0.0
    %8470 = vmatprep.subr.mxu0 0.0
    %8471 = vmatpush2.msra.mxu0 0.0
    %8472 = vmatprep.subr.mxu0 0.0
    %8473 = vmatpush2.msra.mxu0 0.0
    %8474 = vmatprep.subr.mxu0 0.0
    %8475 = vmatpush2.msra.mxu0 0.0
    %8476 = vmatprep.subr.mxu0 0.0
    %8477 = vmatpush2.msra.mxu0 0.0
    %8478 = vmatprep.subr.mxu0 0.0
    %8479 = vmatpush2.msra.mxu0 0.0
    %8480 = vmatprep.mubr.f32.mxu0 0.0
    %v8481 = vand.u32 %v7668, 4294901760
    %8482 = vmatmul.mubr.f32.gmra.mxu0 %v8481
    %v8483 = vpop.f32.mrf.mxu0
    %v8484 = vadd.f32 %v8363, %v8483
    %v8485 = vpop.f32.mrf.mxu0
    %8486 = vmatprep.mubr.f32.mxu0 0.0
    %v8487 = vand.u32 %v7671, 4294901760
    %8488 = vmatmul.mubr.f32.gmra.mxu0 %v8487
    %v8489 = vpop.f32.mrf.mxu0
    %v8490 = vadd.f32 %v8369, %v8489
    %v8491 = vpop.f32.mrf.mxu0
    %8492 = vmatprep.mubr.f32.mxu0 0.0
    %v8493 = vand.u32 %v7674, 4294901760
    %8494 = vmatmul.mubr.f32.gmra.mxu0 %v8493
    %v8495 = vpop.f32.mrf.mxu0
    %v8496 = vadd.f32 %v8375, %v8495
    %v8497 = vpop.f32.mrf.mxu0
    %8498 = vmatprep.mubr.f32.mxu0 0.0
    %v8499 = vand.u32 %v7677, 4294901760
    %8500 = vmatmul.mubr.f32.gmra.mxu0 %v8499
    %v8501 = vpop.f32.mrf.mxu0
    %v8502 = vadd.f32 %v8381, %v8501
    %v8503 = vpop.f32.mrf.mxu0
    %8504 = vmatprep.mubr.f32.mxu0 0.0
    %v8505 = vand.u32 %v7680, 4294901760
    %8506 = vmatmul.mubr.f32.gmra.mxu0 %v8505
    %v8507 = vpop.f32.mrf.mxu0
    %v8508 = vadd.f32 %v8387, %v8507
    %v8509 = vpop.f32.mrf.mxu0
    %8510 = vmatprep.mubr.f32.mxu0 0.0
    %v8511 = vand.u32 %v7683, 4294901760
    %8512 = vmatmul.mubr.f32.gmra.mxu0 %v8511
    %v8513 = vpop.f32.mrf.mxu0
    %v8514 = vadd.f32 %v8393, %v8513
    %v8515 = vpop.f32.mrf.mxu0
    %8516 = vmatprep.mubr.f32.mxu0 0.0
    %v8517 = vand.u32 %v7686, 4294901760
    %8518 = vmatmul.mubr.f32.gmra.mxu0 %v8517
    %v8519 = vpop.f32.mrf.mxu0
    %v8520 = vadd.f32 %v8399, %v8519
    %v8521 = vpop.f32.mrf.mxu0
    %8522 = vmatprep.mubr.f32.mxu0 0.0
    %v8523 = vand.u32 %v7689, 4294901760
    %8524 = vmatmul.mubr.f32.gmra.mxu0 %v8523
    %v8525 = vpop.f32.mrf.mxu0
    %v8526 = vadd.f32 %v8405, %v8525
    %v8527 = vpop.f32.mrf.mxu0
    %8528 = vdwg.mxu0
    %v8529 = vsel %vm7666, %v8484, 0.0
    %v8530 = vsel %vm7666, %v8490, 0.0
    %v8531 = vadd.f32 %v8529, %v8530
    %v8532 = vrot.slane %v8531, 4
    %v8533 = vadd.f32 %v8531, %v8532
    %v8534 = vrot.slane %v8533, 2
    %v8535 = vadd.f32 %v8533, %v8534
    %v8536 = vrot.slane %v8535, 1
    %v8537 = vadd.f32 %v8535, %v8536
    %v8538 = vsel %vm7666, %v8496, 0.0
    %v8539 = vsel %vm7666, %v8502, 0.0
    %v8540 = vadd.f32 %v8538, %v8539
    %v8541 = vrot.slane %v8540, 4
    %v8542 = vadd.f32 %v8540, %v8541
    %v8543 = vrot.slane %v8542, 2
    %v8544 = vadd.f32 %v8542, %v8543
    %v8545 = vrot.slane %v8544, 1
    %v8546 = vadd.f32 %v8544, %v8545
    %v8547 = vsel %vm7666, %v8508, 0.0
    %v8548 = vsel %vm7666, %v8514, 0.0
    %v8549 = vadd.f32 %v8547, %v8548
    %v8550 = vrot.slane %v8549, 4
    %v8551 = vadd.f32 %v8549, %v8550
    %v8552 = vrot.slane %v8551, 2
    %v8553 = vadd.f32 %v8551, %v8552
    %v8554 = vrot.slane %v8553, 1
    %v8555 = vadd.f32 %v8553, %v8554
    %v8556 = vsel %vm7666, %v8520, 0.0
    %v8557 = vsel %vm7666, %v8526, 0.0
    %v8558 = vadd.f32 %v8556, %v8557
    %v8559 = vrot.slane %v8558, 4
    %v8560 = vadd.f32 %v8558, %v8559
    %v8561 = vrot.slane %v8560, 2
    %v8562 = vadd.f32 %v8560, %v8561
    %v8563 = vrot.slane %v8562, 1
    %v8564 = vadd.f32 %v8562, %v8563
    %v8565 = vmul.f32 %v8537, %v8537
    %v8566 = vmul.f32 %v8546, %v8546
    %v8567 = vsub.f32 %v8555, %v8565
    %v8568 = vsub.f32 %v8564, %v8566
    %v8569 = vmax.f32 %v8567, 0.0
    %v8570 = vmax.f32 %v8568, 0.0
    %v8571 = vadd.f32 %v8569, 1e-05
    %v8572 = vadd.f32 %v8570, 1e-05
    %v8573 = vrsqrt.pop %v8571
    %v8574 = vrsqrt.pop %v8572
    %v8575 = vsub.f32 %v7658, %v8537
    %v8576 = vsub.f32 %v7659, %v8537
    %v8577 = vsub.f32 %v7660, %v8546
    %v8578 = vsub.f32 %v7661, %v8546
    %v8579 = vmul.f32 %v8575, %v8573
    %v8580 = vmul.f32 %v8576, %v8573
    %v8581 = vmul.f32 %v8577, %v8574
    %v8582 = vmul.f32 %v8578, %v8574
    %v8583 = vlaneseq
    %v8584 = vshrl.u32 %v8583, 7
    %v8585 = vsub.s32 0, %v8584
    %v8586 = vrot.slane %v99, %v8585
    %v8587 = vmul.f32 %v8579, %v8586
    %v8588 = vmul.f32 %v8580, %v8586
    %v8589 = vmul.f32 %v8581, %v8586
    %v8590 = vmul.f32 %v8582, %v8586
    %v8591 = vlaneseq
    %v8592 = vshrl.u32 %v8591, 7
    %v8593 = vsub.s32 0, %v8592
    %v8594 = vrot.slane %v100, %v8593
    %v8595 = vadd.f32 %v8587, %v8594
    %v8596 = vadd.f32 %v8588, %v8594
    %v8597 = vadd.f32 %v8589, %v8594
    %v8598 = vadd.f32 %v8590, %v8594
    %8599 = vmatprep.subr.mxu0 0.0
    %8600 = vmatpush1.msra.mxu0 0.0
    %8601 = vmatprep.subr.mxu0 0.0
    %8602 = vmatpush1.msra.mxu0 0.0
    %8603 = vmatprep.subr.mxu0 0.0
    %8604 = vmatpush1.msra.mxu0 0.0
    %8605 = vmatprep.subr.mxu0 0.0
    %8606 = vmatpush1.msra.mxu0 0.0
    %8607 = vmatprep.subr.mxu0 0.0
    %8608 = vmatpush1.msra.mxu0 0.0
    %8609 = vmatprep.subr.mxu0 0.0
    %8610 = vmatpush1.msra.mxu0 0.0
    %8611 = vmatprep.subr.mxu0 0.0
    %8612 = vmatpush1.msra.mxu0 0.0
    %8613 = vmatprep.subr.mxu0 0.0
    %8614 = vmatpush1.msra.mxu0 0.0
    %8615 = vmatprep.subr.mxu0 0.0
    %8616 = vmatpush1.msra.mxu0 0.0
    %8617 = vmatprep.subr.mxu0 0.0
    %8618 = vmatpush1.msra.mxu0 0.0
    %8619 = vmatprep.subr.mxu0 0.0
    %8620 = vmatpush1.msra.mxu0 0.0
    %8621 = vmatprep.subr.mxu0 0.0
    %8622 = vmatpush1.msra.mxu0 0.0
    %8623 = vmatprep.subr.mxu0 0.0
    %v8624 = vand.u32 %v104, 4294901760
    %8625 = vmatpush1.msra.mxu0 %v8624
    %8626 = vmatprep.subr.mxu0 0.0
    %v8627 = vand.u32 %v103, 4294901760
    %8628 = vmatpush1.msra.mxu0 %v8627
    %8629 = vmatprep.subr.mxu0 0.0
    %v8630 = vand.u32 %v102, 4294901760
    %8631 = vmatpush1.msra.mxu0 %v8630
    %8632 = vmatprep.subr.mxu0 0.0
    %v8633 = vand.u32 %v101, 4294901760
    %8634 = vmatpush1.msra.mxu0 %v8633
    %8635 = vmatprep.subr.mxu0 0.0
    %8636 = vmatpush2.msra.mxu0 0.0
    %8637 = vmatprep.subr.mxu0 0.0
    %8638 = vmatpush2.msra.mxu0 0.0
    %8639 = vmatprep.subr.mxu0 0.0
    %8640 = vmatpush2.msra.mxu0 0.0
    %8641 = vmatprep.subr.mxu0 0.0
    %8642 = vmatpush2.msra.mxu0 0.0
    %8643 = vmatprep.subr.mxu0 0.0
    %8644 = vmatpush2.msra.mxu0 0.0
    %8645 = vmatprep.subr.mxu0 0.0
    %8646 = vmatpush2.msra.mxu0 0.0
    %8647 = vmatprep.subr.mxu0 0.0
    %8648 = vmatpush2.msra.mxu0 0.0
    %8649 = vmatprep.subr.mxu0 0.0
    %8650 = vmatpush2.msra.mxu0 0.0
    %8651 = vmatprep.subr.mxu0 0.0
    %8652 = vmatpush2.msra.mxu0 0.0
    %8653 = vmatprep.subr.mxu0 0.0
    %8654 = vmatpush2.msra.mxu0 0.0
    %8655 = vmatprep.subr.mxu0 0.0
    %8656 = vmatpush2.msra.mxu0 0.0
    %8657 = vmatprep.subr.mxu0 0.0
    %8658 = vmatpush2.msra.mxu0 0.0
    %8659 = vmatprep.subr.mxu0 0.0
    %8660 = vmatpush2.msra.mxu0 0.0
    %8661 = vmatprep.subr.mxu0 0.0
    %8662 = vmatpush2.msra.mxu0 0.0
    %8663 = vmatprep.subr.mxu0 0.0
    %8664 = vmatpush2.msra.mxu0 0.0
    %8665 = vmatprep.subr.mxu0 0.0
    %8666 = vmatpush2.msra.mxu0 0.0
    %8667 = vmatprep.mubr.f32.mxu0 0.0
    %v8668 = vand.u32 %v767, 4294901760
    %v8669 = vsub.f32 %v767, %v8668
    %v8670 = vand.u32 %v8669, 4294901760
    %v8671 = vsub.f32 %v8669, %v8670
    %v8672 = vand.u32 %v8671, 4294901760
    %8673 = vmatmul.mubr.f32.gmra.mxu0 %v8672
    %v8674 = vpop.f32.mrf.mxu0
    %v8675 = vadd.f32 %v8595, %v8674
    %v8676 = vpop.f32.mrf.mxu0
    %8677 = vmatprep.mubr.f32.mxu0 0.0
    %v8678 = vand.u32 %v770, 4294901760
    %v8679 = vsub.f32 %v770, %v8678
    %v8680 = vand.u32 %v8679, 4294901760
    %v8681 = vsub.f32 %v8679, %v8680
    %v8682 = vand.u32 %v8681, 4294901760
    %8683 = vmatmul.mubr.f32.gmra.mxu0 %v8682
    %v8684 = vpop.f32.mrf.mxu0
    %v8685 = vadd.f32 %v8596, %v8684
    %v8686 = vpop.f32.mrf.mxu0
    %8687 = vmatprep.mubr.f32.mxu0 0.0
    %v8688 = vand.u32 %v773, 4294901760
    %v8689 = vsub.f32 %v773, %v8688
    %v8690 = vand.u32 %v8689, 4294901760
    %v8691 = vsub.f32 %v8689, %v8690
    %v8692 = vand.u32 %v8691, 4294901760
    %8693 = vmatmul.mubr.f32.gmra.mxu0 %v8692
    %v8694 = vpop.f32.mrf.mxu0
    %v8695 = vadd.f32 %v8597, %v8694
    %v8696 = vpop.f32.mrf.mxu0
    %8697 = vmatprep.mubr.f32.mxu0 0.0
    %v8698 = vand.u32 %v776, 4294901760
    %v8699 = vsub.f32 %v776, %v8698
    %v8700 = vand.u32 %v8699, 4294901760
    %v8701 = vsub.f32 %v8699, %v8700
    %v8702 = vand.u32 %v8701, 4294901760
    %8703 = vmatmul.mubr.f32.gmra.mxu0 %v8702
    %v8704 = vpop.f32.mrf.mxu0
    %v8705 = vadd.f32 %v8598, %v8704
    %v8706 = vpop.f32.mrf.mxu0
    %8707 = vdwg.mxu0
    %8708 = vmatprep.subr.mxu0 0.0
    %8709 = vmatpush1.msra.mxu0 0.0
    %8710 = vmatprep.subr.mxu0 0.0
    %8711 = vmatpush1.msra.mxu0 0.0
    %8712 = vmatprep.subr.mxu0 0.0
    %8713 = vmatpush1.msra.mxu0 0.0
    %8714 = vmatprep.subr.mxu0 0.0
    %8715 = vmatpush1.msra.mxu0 0.0
    %8716 = vmatprep.subr.mxu0 0.0
    %8717 = vmatpush1.msra.mxu0 0.0
    %8718 = vmatprep.subr.mxu0 0.0
    %8719 = vmatpush1.msra.mxu0 0.0
    %8720 = vmatprep.subr.mxu0 0.0
    %8721 = vmatpush1.msra.mxu0 0.0
    %8722 = vmatprep.subr.mxu0 0.0
    %8723 = vmatpush1.msra.mxu0 0.0
    %8724 = vmatprep.subr.mxu0 0.0
    %8725 = vmatpush1.msra.mxu0 0.0
    %8726 = vmatprep.subr.mxu0 0.0
    %8727 = vmatpush1.msra.mxu0 0.0
    %8728 = vmatprep.subr.mxu0 0.0
    %8729 = vmatpush1.msra.mxu0 0.0
    %8730 = vmatprep.subr.mxu0 0.0
    %8731 = vmatpush1.msra.mxu0 0.0
    %8732 = vmatprep.subr.mxu0 0.0
    %v8733 = vand.u32 %v104, 4294901760
    %v8734 = vsub.f32 %v104, %v8733
    %v8735 = vand.u32 %v8734, 4294901760
    %v8736 = vsub.f32 %v8734, %v8735
    %v8737 = vand.u32 %v8736, 4294901760
    %8738 = vmatpush1.msra.mxu0 %v8737
    %8739 = vmatprep.subr.mxu0 0.0
    %v8740 = vand.u32 %v103, 4294901760
    %v8741 = vsub.f32 %v103, %v8740
    %v8742 = vand.u32 %v8741, 4294901760
    %v8743 = vsub.f32 %v8741, %v8742
    %v8744 = vand.u32 %v8743, 4294901760
    %8745 = vmatpush1.msra.mxu0 %v8744
    %8746 = vmatprep.subr.mxu0 0.0
    %v8747 = vand.u32 %v102, 4294901760
    %v8748 = vsub.f32 %v102, %v8747
    %v8749 = vand.u32 %v8748, 4294901760
    %v8750 = vsub.f32 %v8748, %v8749
    %v8751 = vand.u32 %v8750, 4294901760
    %8752 = vmatpush1.msra.mxu0 %v8751
    %8753 = vmatprep.subr.mxu0 0.0
    %v8754 = vand.u32 %v101, 4294901760
    %v8755 = vsub.f32 %v101, %v8754
    %v8756 = vand.u32 %v8755, 4294901760
    %v8757 = vsub.f32 %v8755, %v8756
    %v8758 = vand.u32 %v8757, 4294901760
    %8759 = vmatpush1.msra.mxu0 %v8758
    %8760 = vmatprep.subr.mxu0 0.0
    %8761 = vmatpush2.msra.mxu0 0.0
    %8762 = vmatprep.subr.mxu0 0.0
    %8763 = vmatpush2.msra.mxu0 0.0
    %8764 = vmatprep.subr.mxu0 0.0
    %8765 = vmatpush2.msra.mxu0 0.0
    %8766 = vmatprep.subr.mxu0 0.0
    %8767 = vmatpush2.msra.mxu0 0.0
    %8768 = vmatprep.subr.mxu0 0.0
    %8769 = vmatpush2.msra.mxu0 0.0
    %8770 = vmatprep.subr.mxu0 0.0
    %8771 = vmatpush2.msra.mxu0 0.0
    %8772 = vmatprep.subr.mxu0 0.0
    %8773 = vmatpush2.msra.mxu0 0.0
    %8774 = vmatprep.subr.mxu0 0.0
    %8775 = vmatpush2.msra.mxu0 0.0
    %8776 = vmatprep.subr.mxu0 0.0
    %8777 = vmatpush2.msra.mxu0 0.0
    %8778 = vmatprep.subr.mxu0 0.0
    %8779 = vmatpush2.msra.mxu0 0.0
    %8780 = vmatprep.subr.mxu0 0.0
    %8781 = vmatpush2.msra.mxu0 0.0
    %8782 = vmatprep.subr.mxu0 0.0
    %8783 = vmatpush2.msra.mxu0 0.0
    %8784 = vmatprep.subr.mxu0 0.0
    %8785 = vmatpush2.msra.mxu0 0.0
    %8786 = vmatprep.subr.mxu0 0.0
    %8787 = vmatpush2.msra.mxu0 0.0
    %8788 = vmatprep.subr.mxu0 0.0
    %8789 = vmatpush2.msra.mxu0 0.0
    %8790 = vmatprep.subr.mxu0 0.0
    %8791 = vmatpush2.msra.mxu0 0.0
    %8792 = vmatprep.mubr.f32.mxu0 0.0
    %v8793 = vand.u32 %v767, 4294901760
    %8794 = vmatmul.mubr.f32.gmra.mxu0 %v8793
    %v8795 = vpop.f32.mrf.mxu0
    %v8796 = vadd.f32 %v8675, %v8795
    %v8797 = vpop.f32.mrf.mxu0
    %8798 = vmatprep.mubr.f32.mxu0 0.0
    %v8799 = vand.u32 %v770, 4294901760
    %8800 = vmatmul.mubr.f32.gmra.mxu0 %v8799
    %v8801 = vpop.f32.mrf.mxu0
    %v8802 = vadd.f32 %v8685, %v8801
    %v8803 = vpop.f32.mrf.mxu0
    %8804 = vmatprep.mubr.f32.mxu0 0.0
    %v8805 = vand.u32 %v773, 4294901760
    %8806 = vmatmul.mubr.f32.gmra.mxu0 %v8805
    %v8807 = vpop.f32.mrf.mxu0
    %v8808 = vadd.f32 %v8695, %v8807
    %v8809 = vpop.f32.mrf.mxu0
    %8810 = vmatprep.mubr.f32.mxu0 0.0
    %v8811 = vand.u32 %v776, 4294901760
    %8812 = vmatmul.mubr.f32.gmra.mxu0 %v8811
    %v8813 = vpop.f32.mrf.mxu0
    %v8814 = vadd.f32 %v8705, %v8813
    %v8815 = vpop.f32.mrf.mxu0
    %8816 = vdwg.mxu0
    %8817 = vmatprep.subr.mxu0 0.0
    %8818 = vmatpush1.msra.mxu0 0.0
    %8819 = vmatprep.subr.mxu0 0.0
    %8820 = vmatpush1.msra.mxu0 0.0
    %8821 = vmatprep.subr.mxu0 0.0
    %8822 = vmatpush1.msra.mxu0 0.0
    %8823 = vmatprep.subr.mxu0 0.0
    %8824 = vmatpush1.msra.mxu0 0.0
    %8825 = vmatprep.subr.mxu0 0.0
    %8826 = vmatpush1.msra.mxu0 0.0
    %8827 = vmatprep.subr.mxu0 0.0
    %8828 = vmatpush1.msra.mxu0 0.0
    %8829 = vmatprep.subr.mxu0 0.0
    %8830 = vmatpush1.msra.mxu0 0.0
    %8831 = vmatprep.subr.mxu0 0.0
    %8832 = vmatpush1.msra.mxu0 0.0
    %8833 = vmatprep.subr.mxu0 0.0
    %8834 = vmatpush1.msra.mxu0 0.0
    %8835 = vmatprep.subr.mxu0 0.0
    %8836 = vmatpush1.msra.mxu0 0.0
    %8837 = vmatprep.subr.mxu0 0.0
    %8838 = vmatpush1.msra.mxu0 0.0
    %8839 = vmatprep.subr.mxu0 0.0
    %8840 = vmatpush1.msra.mxu0 0.0
    %8841 = vmatprep.subr.mxu0 0.0
    %v8842 = vand.u32 %v104, 4294901760
    %v8843 = vsub.f32 %v104, %v8842
    %8844 = vmatpush1.msra.mxu0 %v8843
    %8845 = vmatprep.subr.mxu0 0.0
    %v8846 = vand.u32 %v103, 4294901760
    %v8847 = vsub.f32 %v103, %v8846
    %8848 = vmatpush1.msra.mxu0 %v8847
    %8849 = vmatprep.subr.mxu0 0.0
    %v8850 = vand.u32 %v102, 4294901760
    %v8851 = vsub.f32 %v102, %v8850
    %8852 = vmatpush1.msra.mxu0 %v8851
    %8853 = vmatprep.subr.mxu0 0.0
    %v8854 = vand.u32 %v101, 4294901760
    %v8855 = vsub.f32 %v101, %v8854
    %8856 = vmatpush1.msra.mxu0 %v8855
    %8857 = vmatprep.subr.mxu0 0.0
    %8858 = vmatpush2.msra.mxu0 0.0
    %8859 = vmatprep.subr.mxu0 0.0
    %8860 = vmatpush2.msra.mxu0 0.0
    %8861 = vmatprep.subr.mxu0 0.0
    %8862 = vmatpush2.msra.mxu0 0.0
    %8863 = vmatprep.subr.mxu0 0.0
    %8864 = vmatpush2.msra.mxu0 0.0
    %8865 = vmatprep.subr.mxu0 0.0
    %8866 = vmatpush2.msra.mxu0 0.0
    %8867 = vmatprep.subr.mxu0 0.0
    %8868 = vmatpush2.msra.mxu0 0.0
    %8869 = vmatprep.subr.mxu0 0.0
    %8870 = vmatpush2.msra.mxu0 0.0
    %8871 = vmatprep.subr.mxu0 0.0
    %8872 = vmatpush2.msra.mxu0 0.0
    %8873 = vmatprep.subr.mxu0 0.0
    %8874 = vmatpush2.msra.mxu0 0.0
    %8875 = vmatprep.subr.mxu0 0.0
    %8876 = vmatpush2.msra.mxu0 0.0
    %8877 = vmatprep.subr.mxu0 0.0
    %8878 = vmatpush2.msra.mxu0 0.0
    %8879 = vmatprep.subr.mxu0 0.0
    %8880 = vmatpush2.msra.mxu0 0.0
    %8881 = vmatprep.subr.mxu0 0.0
    %8882 = vmatpush2.msra.mxu0 0.0
    %8883 = vmatprep.subr.mxu0 0.0
    %8884 = vmatpush2.msra.mxu0 0.0
    %8885 = vmatprep.subr.mxu0 0.0
    %8886 = vmatpush2.msra.mxu0 0.0
    %8887 = vmatprep.subr.mxu0 0.0
    %8888 = vmatpush2.msra.mxu0 0.0
    %8889 = vmatprep.mubr.f32.mxu0 0.0
    %v8890 = vand.u32 %v767, 4294901760
    %v8891 = vsub.f32 %v767, %v8890
    %8892 = vmatmul.mubr.f32.gmra.mxu0 %v8891
    %v8893 = vpop.f32.mrf.mxu0
    %v8894 = vadd.f32 %v8796, %v8893
    %v8895 = vpop.f32.mrf.mxu0
    %8896 = vmatprep.mubr.f32.mxu0 0.0
    %v8897 = vand.u32 %v770, 4294901760
    %v8898 = vsub.f32 %v770, %v8897
    %8899 = vmatmul.mubr.f32.gmra.mxu0 %v8898
    %v8900 = vpop.f32.mrf.mxu0
    %v8901 = vadd.f32 %v8802, %v8900
    %v8902 = vpop.f32.mrf.mxu0
    %8903 = vmatprep.mubr.f32.mxu0 0.0
    %v8904 = vand.u32 %v773, 4294901760
    %v8905 = vsub.f32 %v773, %v8904
    %8906 = vmatmul.mubr.f32.gmra.mxu0 %v8905
    %v8907 = vpop.f32.mrf.mxu0
    %v8908 = vadd.f32 %v8808, %v8907
    %v8909 = vpop.f32.mrf.mxu0
    %8910 = vmatprep.mubr.f32.mxu0 0.0
    %v8911 = vand.u32 %v776, 4294901760
    %v8912 = vsub.f32 %v776, %v8911
    %8913 = vmatmul.mubr.f32.gmra.mxu0 %v8912
    %v8914 = vpop.f32.mrf.mxu0
    %v8915 = vadd.f32 %v8814, %v8914
    %v8916 = vpop.f32.mrf.mxu0
    %8917 = vdwg.mxu0
    %8918 = vmatprep.subr.mxu0 0.0
    %8919 = vmatpush1.msra.mxu0 0.0
    %8920 = vmatprep.subr.mxu0 0.0
    %8921 = vmatpush1.msra.mxu0 0.0
    %8922 = vmatprep.subr.mxu0 0.0
    %8923 = vmatpush1.msra.mxu0 0.0
    %8924 = vmatprep.subr.mxu0 0.0
    %8925 = vmatpush1.msra.mxu0 0.0
    %8926 = vmatprep.subr.mxu0 0.0
    %8927 = vmatpush1.msra.mxu0 0.0
    %8928 = vmatprep.subr.mxu0 0.0
    %8929 = vmatpush1.msra.mxu0 0.0
    %8930 = vmatprep.subr.mxu0 0.0
    %8931 = vmatpush1.msra.mxu0 0.0
    %8932 = vmatprep.subr.mxu0 0.0
    %8933 = vmatpush1.msra.mxu0 0.0
    %8934 = vmatprep.subr.mxu0 0.0
    %8935 = vmatpush1.msra.mxu0 0.0
    %8936 = vmatprep.subr.mxu0 0.0
    %8937 = vmatpush1.msra.mxu0 0.0
    %8938 = vmatprep.subr.mxu0 0.0
    %8939 = vmatpush1.msra.mxu0 0.0
    %8940 = vmatprep.subr.mxu0 0.0
    %8941 = vmatpush1.msra.mxu0 0.0
    %8942 = vmatprep.subr.mxu0 0.0
    %v8943 = vand.u32 %v104, 4294901760
    %8944 = vmatpush1.msra.mxu0 %v8943
    %8945 = vmatprep.subr.mxu0 0.0
    %v8946 = vand.u32 %v103, 4294901760
    %8947 = vmatpush1.msra.mxu0 %v8946
    %8948 = vmatprep.subr.mxu0 0.0
    %v8949 = vand.u32 %v102, 4294901760
    %8950 = vmatpush1.msra.mxu0 %v8949
    %8951 = vmatprep.subr.mxu0 0.0
    %v8952 = vand.u32 %v101, 4294901760
    %8953 = vmatpush1.msra.mxu0 %v8952
    %8954 = vmatprep.subr.mxu0 0.0
    %8955 = vmatpush2.msra.mxu0 0.0
    %8956 = vmatprep.subr.mxu0 0.0
    %8957 = vmatpush2.msra.mxu0 0.0
    %8958 = vmatprep.subr.mxu0 0.0
    %8959 = vmatpush2.msra.mxu0 0.0
    %8960 = vmatprep.subr.mxu0 0.0
    %8961 = vmatpush2.msra.mxu0 0.0
    %8962 = vmatprep.subr.mxu0 0.0
    %8963 = vmatpush2.msra.mxu0 0.0
    %8964 = vmatprep.subr.mxu0 0.0
    %8965 = vmatpush2.msra.mxu0 0.0
    %8966 = vmatprep.subr.mxu0 0.0
    %8967 = vmatpush2.msra.mxu0 0.0
    %8968 = vmatprep.subr.mxu0 0.0
    %8969 = vmatpush2.msra.mxu0 0.0
    %8970 = vmatprep.subr.mxu0 0.0
    %8971 = vmatpush2.msra.mxu0 0.0
    %8972 = vmatprep.subr.mxu0 0.0
    %8973 = vmatpush2.msra.mxu0 0.0
    %8974 = vmatprep.subr.mxu0 0.0
    %8975 = vmatpush2.msra.mxu0 0.0
    %8976 = vmatprep.subr.mxu0 0.0
    %8977 = vmatpush2.msra.mxu0 0.0
    %8978 = vmatprep.subr.mxu0 0.0
    %8979 = vmatpush2.msra.mxu0 0.0
    %8980 = vmatprep.subr.mxu0 0.0
    %8981 = vmatpush2.msra.mxu0 0.0
    %8982 = vmatprep.subr.mxu0 0.0
    %8983 = vmatpush2.msra.mxu0 0.0
    %8984 = vmatprep.subr.mxu0 0.0
    %8985 = vmatpush2.msra.mxu0 0.0
    %8986 = vmatprep.mubr.f32.mxu0 0.0
    %v8987 = vand.u32 %v767, 4294901760
    %v8988 = vsub.f32 %v767, %v8987
    %v8989 = vand.u32 %v8988, 4294901760
    %8990 = vmatmul.mubr.f32.gmra.mxu0 %v8989
    %v8991 = vpop.f32.mrf.mxu0
    %v8992 = vadd.f32 %v8894, %v8991
    %v8993 = vpop.f32.mrf.mxu0
    %8994 = vmatprep.mubr.f32.mxu0 0.0
    %v8995 = vand.u32 %v770, 4294901760
    %v8996 = vsub.f32 %v770, %v8995
    %v8997 = vand.u32 %v8996, 4294901760
    %8998 = vmatmul.mubr.f32.gmra.mxu0 %v8997
    %v8999 = vpop.f32.mrf.mxu0
    %v9000 = vadd.f32 %v8901, %v8999
    %v9001 = vpop.f32.mrf.mxu0
    %9002 = vmatprep.mubr.f32.mxu0 0.0
    %v9003 = vand.u32 %v773, 4294901760
    %v9004 = vsub.f32 %v773, %v9003
    %v9005 = vand.u32 %v9004, 4294901760
    %9006 = vmatmul.mubr.f32.gmra.mxu0 %v9005
    %v9007 = vpop.f32.mrf.mxu0
    %v9008 = vadd.f32 %v8908, %v9007
    %v9009 = vpop.f32.mrf.mxu0
    %9010 = vmatprep.mubr.f32.mxu0 0.0
    %v9011 = vand.u32 %v776, 4294901760
    %v9012 = vsub.f32 %v776, %v9011
    %v9013 = vand.u32 %v9012, 4294901760
    %9014 = vmatmul.mubr.f32.gmra.mxu0 %v9013
    %v9015 = vpop.f32.mrf.mxu0
    %v9016 = vadd.f32 %v8915, %v9015
    %v9017 = vpop.f32.mrf.mxu0
    %9018 = vdwg.mxu0
    %9019 = vmatprep.subr.mxu0 0.0
    %9020 = vmatpush1.msra.mxu0 0.0
    %9021 = vmatprep.subr.mxu0 0.0
    %9022 = vmatpush1.msra.mxu0 0.0
    %9023 = vmatprep.subr.mxu0 0.0
    %9024 = vmatpush1.msra.mxu0 0.0
    %9025 = vmatprep.subr.mxu0 0.0
    %9026 = vmatpush1.msra.mxu0 0.0
    %9027 = vmatprep.subr.mxu0 0.0
    %9028 = vmatpush1.msra.mxu0 0.0
    %9029 = vmatprep.subr.mxu0 0.0
    %9030 = vmatpush1.msra.mxu0 0.0
    %9031 = vmatprep.subr.mxu0 0.0
    %9032 = vmatpush1.msra.mxu0 0.0
    %9033 = vmatprep.subr.mxu0 0.0
    %9034 = vmatpush1.msra.mxu0 0.0
    %9035 = vmatprep.subr.mxu0 0.0
    %9036 = vmatpush1.msra.mxu0 0.0
    %9037 = vmatprep.subr.mxu0 0.0
    %9038 = vmatpush1.msra.mxu0 0.0
    %9039 = vmatprep.subr.mxu0 0.0
    %9040 = vmatpush1.msra.mxu0 0.0
    %9041 = vmatprep.subr.mxu0 0.0
    %9042 = vmatpush1.msra.mxu0 0.0
    %9043 = vmatprep.subr.mxu0 0.0
    %v9044 = vand.u32 %v104, 4294901760
    %v9045 = vsub.f32 %v104, %v9044
    %v9046 = vand.u32 %v9045, 4294901760
    %9047 = vmatpush1.msra.mxu0 %v9046
    %9048 = vmatprep.subr.mxu0 0.0
    %v9049 = vand.u32 %v103, 4294901760
    %v9050 = vsub.f32 %v103, %v9049
    %v9051 = vand.u32 %v9050, 4294901760
    %9052 = vmatpush1.msra.mxu0 %v9051
    %9053 = vmatprep.subr.mxu0 0.0
    %v9054 = vand.u32 %v102, 4294901760
    %v9055 = vsub.f32 %v102, %v9054
    %v9056 = vand.u32 %v9055, 4294901760
    %9057 = vmatpush1.msra.mxu0 %v9056
    %9058 = vmatprep.subr.mxu0 0.0
    %v9059 = vand.u32 %v101, 4294901760
    %v9060 = vsub.f32 %v101, %v9059
    %v9061 = vand.u32 %v9060, 4294901760
    %9062 = vmatpush1.msra.mxu0 %v9061
    %9063 = vmatprep.subr.mxu0 0.0
    %9064 = vmatpush2.msra.mxu0 0.0
    %9065 = vmatprep.subr.mxu0 0.0
    %9066 = vmatpush2.msra.mxu0 0.0
    %9067 = vmatprep.subr.mxu0 0.0
    %9068 = vmatpush2.msra.mxu0 0.0
    %9069 = vmatprep.subr.mxu0 0.0
    %9070 = vmatpush2.msra.mxu0 0.0
    %9071 = vmatprep.subr.mxu0 0.0
    %9072 = vmatpush2.msra.mxu0 0.0
    %9073 = vmatprep.subr.mxu0 0.0
    %9074 = vmatpush2.msra.mxu0 0.0
    %9075 = vmatprep.subr.mxu0 0.0
    %9076 = vmatpush2.msra.mxu0 0.0
    %9077 = vmatprep.subr.mxu0 0.0
    %9078 = vmatpush2.msra.mxu0 0.0
    %9079 = vmatprep.subr.mxu0 0.0
    %9080 = vmatpush2.msra.mxu0 0.0
    %9081 = vmatprep.subr.mxu0 0.0
    %9082 = vmatpush2.msra.mxu0 0.0
    %9083 = vmatprep.subr.mxu0 0.0
    %9084 = vmatpush2.msra.mxu0 0.0
    %9085 = vmatprep.subr.mxu0 0.0
    %9086 = vmatpush2.msra.mxu0 0.0
    %9087 = vmatprep.subr.mxu0 0.0
    %9088 = vmatpush2.msra.mxu0 0.0
    %9089 = vmatprep.subr.mxu0 0.0
    %9090 = vmatpush2.msra.mxu0 0.0
    %9091 = vmatprep.subr.mxu0 0.0
    %9092 = vmatpush2.msra.mxu0 0.0
    %9093 = vmatprep.subr.mxu0 0.0
    %9094 = vmatpush2.msra.mxu0 0.0
    %9095 = vmatprep.mubr.f32.mxu0 0.0
    %v9096 = vand.u32 %v767, 4294901760
    %9097 = vmatmul.mubr.f32.gmra.mxu0 %v9096
    %v9098 = vpop.f32.mrf.mxu0
    %v9099 = vadd.f32 %v8992, %v9098
    %v9100 = vpop.f32.mrf.mxu0
    %9101 = vmatprep.mubr.f32.mxu0 0.0
    %v9102 = vand.u32 %v770, 4294901760
    %9103 = vmatmul.mubr.f32.gmra.mxu0 %v9102
    %v9104 = vpop.f32.mrf.mxu0
    %v9105 = vadd.f32 %v9000, %v9104
    %v9106 = vpop.f32.mrf.mxu0
    %9107 = vmatprep.mubr.f32.mxu0 0.0
    %v9108 = vand.u32 %v773, 4294901760
    %9109 = vmatmul.mubr.f32.gmra.mxu0 %v9108
    %v9110 = vpop.f32.mrf.mxu0
    %v9111 = vadd.f32 %v9008, %v9110
    %v9112 = vpop.f32.mrf.mxu0
    %9113 = vmatprep.mubr.f32.mxu0 0.0
    %v9114 = vand.u32 %v776, 4294901760
    %9115 = vmatmul.mubr.f32.gmra.mxu0 %v9114
    %v9116 = vpop.f32.mrf.mxu0
    %v9117 = vadd.f32 %v9016, %v9116
    %v9118 = vpop.f32.mrf.mxu0
    %9119 = vdwg.mxu0
    %9120 = vmatprep.subr.mxu0 0.0
    %9121 = vmatpush1.msra.mxu0 0.0
    %9122 = vmatprep.subr.mxu0 0.0
    %9123 = vmatpush1.msra.mxu0 0.0
    %9124 = vmatprep.subr.mxu0 0.0
    %9125 = vmatpush1.msra.mxu0 0.0
    %9126 = vmatprep.subr.mxu0 0.0
    %9127 = vmatpush1.msra.mxu0 0.0
    %9128 = vmatprep.subr.mxu0 0.0
    %9129 = vmatpush1.msra.mxu0 0.0
    %9130 = vmatprep.subr.mxu0 0.0
    %9131 = vmatpush1.msra.mxu0 0.0
    %9132 = vmatprep.subr.mxu0 0.0
    %9133 = vmatpush1.msra.mxu0 0.0
    %9134 = vmatprep.subr.mxu0 0.0
    %9135 = vmatpush1.msra.mxu0 0.0
    %9136 = vmatprep.subr.mxu0 0.0
    %9137 = vmatpush1.msra.mxu0 0.0
    %9138 = vmatprep.subr.mxu0 0.0
    %9139 = vmatpush1.msra.mxu0 0.0
    %9140 = vmatprep.subr.mxu0 0.0
    %9141 = vmatpush1.msra.mxu0 0.0
    %9142 = vmatprep.subr.mxu0 0.0
    %9143 = vmatpush1.msra.mxu0 0.0
    %9144 = vmatprep.subr.mxu0 0.0
    %v9145 = vand.u32 %v104, 4294901760
    %9146 = vmatpush1.msra.mxu0 %v9145
    %9147 = vmatprep.subr.mxu0 0.0
    %v9148 = vand.u32 %v103, 4294901760
    %9149 = vmatpush1.msra.mxu0 %v9148
    %9150 = vmatprep.subr.mxu0 0.0
    %v9151 = vand.u32 %v102, 4294901760
    %9152 = vmatpush1.msra.mxu0 %v9151
    %9153 = vmatprep.subr.mxu0 0.0
    %v9154 = vand.u32 %v101, 4294901760
    %9155 = vmatpush1.msra.mxu0 %v9154
    %9156 = vmatprep.subr.mxu0 0.0
    %9157 = vmatpush2.msra.mxu0 0.0
    %9158 = vmatprep.subr.mxu0 0.0
    %9159 = vmatpush2.msra.mxu0 0.0
    %9160 = vmatprep.subr.mxu0 0.0
    %9161 = vmatpush2.msra.mxu0 0.0
    %9162 = vmatprep.subr.mxu0 0.0
    %9163 = vmatpush2.msra.mxu0 0.0
    %9164 = vmatprep.subr.mxu0 0.0
    %9165 = vmatpush2.msra.mxu0 0.0
    %9166 = vmatprep.subr.mxu0 0.0
    %9167 = vmatpush2.msra.mxu0 0.0
    %9168 = vmatprep.subr.mxu0 0.0
    %9169 = vmatpush2.msra.mxu0 0.0
    %9170 = vmatprep.subr.mxu0 0.0
    %9171 = vmatpush2.msra.mxu0 0.0
    %9172 = vmatprep.subr.mxu0 0.0
    %9173 = vmatpush2.msra.mxu0 0.0
    %9174 = vmatprep.subr.mxu0 0.0
    %9175 = vmatpush2.msra.mxu0 0.0
    %9176 = vmatprep.subr.mxu0 0.0
    %9177 = vmatpush2.msra.mxu0 0.0
    %9178 = vmatprep.subr.mxu0 0.0
    %9179 = vmatpush2.msra.mxu0 0.0
    %9180 = vmatprep.subr.mxu0 0.0
    %9181 = vmatpush2.msra.mxu0 0.0
    %9182 = vmatprep.subr.mxu0 0.0
    %9183 = vmatpush2.msra.mxu0 0.0
    %9184 = vmatprep.subr.mxu0 0.0
    %9185 = vmatpush2.msra.mxu0 0.0
    %9186 = vmatprep.subr.mxu0 0.0
    %9187 = vmatpush2.msra.mxu0 0.0
    %9188 = vmatprep.mubr.f32.mxu0 0.0
    %v9189 = vand.u32 %v767, 4294901760
    %9190 = vmatmul.mubr.f32.gmra.mxu0 %v9189
    %v9191 = vpop.f32.mrf.mxu0
    %v9192 = vadd.f32 %v9099, %v9191
    %v9193 = vpop.f32.mrf.mxu0
    %9194 = vmatprep.mubr.f32.mxu0 0.0
    %v9195 = vand.u32 %v770, 4294901760
    %9196 = vmatmul.mubr.f32.gmra.mxu0 %v9195
    %v9197 = vpop.f32.mrf.mxu0
    %v9198 = vadd.f32 %v9105, %v9197
    %v9199 = vpop.f32.mrf.mxu0
    %9200 = vmatprep.mubr.f32.mxu0 0.0
    %v9201 = vand.u32 %v773, 4294901760
    %9202 = vmatmul.mubr.f32.gmra.mxu0 %v9201
    %v9203 = vpop.f32.mrf.mxu0
    %v9204 = vadd.f32 %v9111, %v9203
    %v9205 = vpop.f32.mrf.mxu0
    %9206 = vmatprep.mubr.f32.mxu0 0.0
    %v9207 = vand.u32 %v776, 4294901760
    %9208 = vmatmul.mubr.f32.gmra.mxu0 %v9207
    %v9209 = vpop.f32.mrf.mxu0
    %v9210 = vadd.f32 %v9117, %v9209
    %v9211 = vpop.f32.mrf.mxu0
    %9212 = vdwg.mxu0
    %v9213 = vmax.f32 %v9192, 0.0
    %v9214 = vmax.f32 %v9198, 0.0
    %v9215 = vmax.f32 %v9204, 0.0
    %v9216 = vmax.f32 %v9210, 0.0
    %9217 = vst.msk [vmem:[#allocation2] sm:$0xff] %vm7666, %v9213
    %9218 = vst.msk [vmem:[#allocation2 + $0x8] sm:$0xff] %vm7666, %v9214
    %9219 = vst.msk [vmem:[#allocation2 + $0x10] sm:$0xff] %vm7666, %v9215
    %9220 = vst.msk [vmem:[#allocation2 + $0x18] sm:$0xff] %vm7666, %v9216
    // Predicated region
    $region14: #{deep_resnet_block1d.1} parent=1 // pred_check
      _
    $region15: #{deep_resnet_block1d.1} parent=1 // pred_check_branch
      %9222 = sbr.rel (0) target = $region17
    $region16: #{deep_resnet_block1d.1} parent=1 // pred_region
      %s9224 = ssub.s32 512, 512
      %9225 = vsyncadd [#allocation3], %s9224
      %s9226 = sshll.u32 [#allocation2], 4
      %s9227 = int_to_ptr.vmem [resolvable:$true] %s9226
      %9232 = dma.vmem_to_hbm [thread:$0]  %s9227, 512, %s3, [#allocation3], 128, 128, 8
    $region17: #{deep_resnet_block1d.1} parent=1 // pred_fallthru
      _
    // Predicated region
    $region18: #{deep_resnet_block1d.1} parent=1 // pred_check
      _
    $region19: #{deep_resnet_block1d.1} parent=1 // pred_check_branch
      %9234 = sbr.rel (0) target = $region21
    $region20: #{deep_resnet_block1d.1} parent=1 // pred_region
      %9235 = dma.done [#allocation3], 512
    $region21: #{deep_resnet_block1d.1} parent=1 // pred_fallthru
      _
    %9236 = vsyncpa [#allocation3], 1

</llo_original>
